<compile_context>
chip_gen: v6e
topology: v6e:2x2x1
jax: 0.10.0
libtpu: 0.0.40
codegen_flags: <defaults>
</compile_context>

<pallas_src>
import functools

import jax
import jax.numpy as jnp
from jax.experimental import pallas as pl
from jax.experimental.pallas import tpu as pltpu

HIDDEN = 2048


def _mlp_kernel(x_ref, w1_ref, b1_ref, w2_ref, b2_ref, w3_ref,
                o_ref, acc_ref, *, tk):
    """Grid is (n_c, n_k): axis 0 ("parallel") splits W2/W3 output columns/rows
    across TensorCores (n_c=2 only on v7x); axis 1 ("arbitrary") is the
    hidden-dim reduction of layer 2."""
    k = pl.program_id(1)

    @pl.when(k == 0)
    def _():
        acc_ref[...] = jnp.zeros_like(acc_ref)

    # Layer 1: only the tk-wide hidden slice needed this step.  x/W1/b1 are
    # small VMEM residents; slice them in-kernel (no per-step tiny DMAs).
    col0 = pl.multiple_of(k * tk, tk)
    w1_slice = w1_ref[:, pl.ds(col0, tk)]
    b1_slice = b1_ref[:, pl.ds(col0, tk)]
    h1 = jnp.tanh(
        jnp.dot(x_ref[...], w1_slice, preferred_element_type=jnp.float32)
        + b1_slice)

    # Layer 2: accumulate this hidden slice's contribution against this core's
    # (tk, H/n_c) column block of W2, streamed from HBM in bf16.  h1 is cast to
    # bf16 so the MXU runs its native bf16 path; the accumulator stays f32.
    acc_ref[...] += jnp.dot(h1.astype(w2_ref.dtype), w2_ref[...],
                            preferred_element_type=jnp.float32)

    # Finalize: tanh + layer-3 partial using this core's rows of W3.  b3 and
    # the (tiny) cross-core partial sum are applied in the wrapper.
    @pl.when(k == pl.num_programs(1) - 1)
    def _():
        h2 = jnp.tanh(acc_ref[...] + b2_ref[...])
        o_ref[...] = jnp.dot(h2, w3_ref[...],
                             preferred_element_type=jnp.float32
                             ).astype(o_ref.dtype)


def _detect_num_tensorcores():
    """2 on v7x (2 TensorCores/chip), 1 everywhere else.  Detection failure is
    harmless: we just fall back to the single-core grid."""
    try:
        kind = jax.devices()[0].device_kind.lower()
    except Exception:
        return 1
    return 2 if ("v7" in kind or "7x" in kind) else 1


@functools.partial(jax.jit, static_argnames=("tk", "n_c"))
def robot2d_calibration_nn(x, w1, b1, w2, b2, w3, b3, *, tk=1024, n_c=1):
    """x: (B, input_size) float32 -> (B, output_size) float32."""
    B, in_size = x.shape
    H = w1.shape[1]
    out_size = w3.shape[1]
    assert H % tk == 0, "hidden size must be divisible by tk"
    assert H % n_c == 0, "hidden size must be divisible by n_c"
    n_k = H // tk
    Hc = H // n_c

    # bf16 only for the HBM-dominant W2 (H x H).  W1/W3/biases stay f32.
    w2_bf16 = w2.astype(jnp.bfloat16)
    b1r = b1.reshape(1, H).astype(jnp.float32)
    b2r = b2.reshape(1, H).astype(jnp.float32)
    b3r = b3.reshape(1, out_size).astype(jnp.float32)

    grid_spec = pltpu.PrefetchScalarGridSpec(
        num_scalar_prefetch=0,
        grid=(n_c, n_k),
        in_specs=[
            pl.BlockSpec((B, in_size), lambda c, k: (0, 0)),     # x   (resident)
            pl.BlockSpec((in_size, H), lambda c, k: (0, 0)),     # W1  (resident)
            pl.BlockSpec((1, H), lambda c, k: (0, 0)),           # b1  (resident)
            pl.BlockSpec((tk, Hc), lambda c, k: (k, c)),         # W2  (streamed, bf16)
            pl.BlockSpec((1, Hc), lambda c, k: (0, c)),          # b2  (per-core cols)
            pl.BlockSpec((Hc, out_size), lambda c, k: (c, 0)),   # W3  (per-core rows)
        ],
        out_specs=pl.BlockSpec((None, B, out_size), lambda c, k: (c, 0, 0)),
        scratch_shapes=[pltpu.VMEM((B, Hc), jnp.float32)],
    )

    flops = 2 * B * (in_size * H + H * H + H * out_size)
    bytes_accessed = (x.size * 4 + w1.size * 4 + H * 4        # x, W1, b1
                      + w2.size * 2 + H * 4                   # W2 (bf16), b2
                      + w3.size * 4 + out_size * 4            # W3, b3
                      + n_c * B * out_size * 4)               # partial outputs

    partials = pl.pallas_call(
        functools.partial(_mlp_kernel, tk=tk),
        out_shape=jax.ShapeDtypeStruct((n_c, B, out_size), jnp.float32),
        grid_spec=grid_spec,
        compiler_params=pltpu.CompilerParams(
            dimension_semantics=("parallel", "arbitrary")),
        cost_estimate=pl.CostEstimate(
            flops=flops,
            transcendentals=2 * B * H,
            bytes_accessed=bytes_accessed),
    )(x, w1, b1r, w2_bf16, b2r, w3)

    # Tiny (B, out_size) epilogue: sum per-core partial logits and add b3.
    logits = jnp.sum(partials, axis=0) + b3r
    return logits.astype(x.dtype)


def _init_linear(key, fan_in, fan_out):
    # PyTorch nn.Linear default init: U(-1/sqrt(fan_in), 1/sqrt(fan_in)).
    kw, kb = jax.random.split(key)
    bound = 1.0 / jnp.sqrt(fan_in)
    w = jax.random.uniform(kw, (fan_in, fan_out), jnp.float32, -bound, bound)
    b = jax.random.uniform(kb, (fan_out,), jnp.float32, -bound, bound)
    return w, b


def _reference_matched(x, w1, b1, w2, b2, w3, b3):
    # Same mixed-precision recipe as the kernel (bf16 W2 / bf16 h1, f32 acc).
    h1 = jnp.tanh(jnp.dot(x, w1, preferred_element_type=jnp.float32) + b1)
    acc = jnp.dot(h1.astype(jnp.bfloat16), w2.astype(jnp.bfloat16),
                  preferred_element_type=jnp.float32)
    h2 = jnp.tanh(acc + b2)
    return jnp.dot(h2, w3, preferred_element_type=jnp.float32) + b3


def _reference_f32(x, w1, b1, w2, b2, w3, b3):
    h1 = jnp.tanh(x @ w1 + b1)
    h2 = jnp.tanh(h1 @ w2 + b2)
    return h2 @ w3 + b3


if __name__ == "__main__":
    # Small shapes: 2D robot calibration -> a few joint/pose features in,
    # a couple of correction values out.
    batch = 8
    input_size = 4
    output_size = 2

    key = jax.random.PRNGKey(0)
    kx, k1, k2, k3 = jax.random.split(key, 4)

    x = jax.random.normal(kx, (batch, input_size), jnp.float32)
    w1, b1 = _init_linear(k1, input_size, HIDDEN)
    w2, b2 = _init_linear(k2, HIDDEN, HIDDEN)
    w3, b3 = _init_linear(k3, HIDDEN, output_size)

    n_cores = _detect_num_tensorcores()   # 2 on v7x, 1 on v5e/v6e
    out = robot2d_calibration_nn(x, w1, b1, w2, b2, w3, b3,
                                 tk=1024, n_c=n_cores)
    out = jax.block_until_ready(out)
    assert out.shape == (batch, output_size)

    # Tight check vs. a matched-precision reference (same bf16 W2 path).
    ref_m = _reference_matched(x, w1, b1, w2, b2, w3, b3)
    err_m = float(jnp.max(jnp.abs(out - ref_m)))
    assert err_m < 2e-2, f"matched-precision max abs err {err_m}"

    # Looser check vs. the original all-f32 module semantics (bf16 W2 adds
    # ~1e-3 abs error on outputs of magnitude ~0.5).
    ref_f = _reference_f32(x, w1, b1, w2, b2, w3, b3)
    err_f = float(jnp.max(jnp.abs(out - ref_f)))
    assert err_f < 5e-2, f"f32 reference max abs err {err_f}"

    print("KERNEL_OK")
</pallas_src>

<mosaic_0001>
module attributes {stable_mosaic.version = 11 : i64} {
  func.func @_mlp_kernel(%arg0: i32, %arg1: i32, %arg2: memref<8x4xf32, #tpu.memory_space<vmem>>, %arg3: memref<4x2048xf32, #tpu.memory_space<vmem>>, %arg4: memref<1x2048xf32, #tpu.memory_space<vmem>>, %arg5: memref<1024x2048xbf16, #tpu.memory_space<vmem>>, %arg6: memref<1x2048xf32, #tpu.memory_space<vmem>>, %arg7: memref<2048x2xf32, #tpu.memory_space<vmem>>, %arg8: memref<1x8x2xf32, #tpu.memory_space<vmem>>, %arg9: memref<8x2048xf32, #tpu.memory_space<vmem>>) attributes {dimension_semantics = [#tpu.dimension_semantics<parallel>, #tpu.dimension_semantics<arbitrary>], iteration_bounds = array<i64: 1, 2>, scalar_prefetch = 0 : i64, scratch_operands = 1 : i64, tpu.core_type = #tpu.core_type<tc>, window_params = [{pipeline_mode = #tpu.pipeline_mode<synchronous>, transform_indices = @transform_0, window_bounds = array<i64: 8, 4>}, {pipeline_mode = #tpu.pipeline_mode<synchronous>, transform_indices = @transform_1, window_bounds = array<i64: 4, 2048>}, {pipeline_mode = #tpu.pipeline_mode<synchronous>, transform_indices = @transform_2, window_bounds = array<i64: 1, 2048>}, {transform_indices = @transform_3, window_bounds = array<i64: 1024, 2048>}, {transform_indices = @transform_4, window_bounds = array<i64: 1, 2048>}, {transform_indices = @transform_5, window_bounds = array<i64: 2048, 2>}, {transform_indices = @transform_6, window_bounds = array<i64: 1, 8, 2>}]} {
    %c0_i32 = arith.constant 0 : i32
    %0 = arith.cmpi eq, %arg1, %c0_i32 : i32
    %1 = arith.extui %0 : i1 to i32
    %c0_i32_0 = arith.constant 0 : i32
    %2 = arith.cmpi ne, %1, %c0_i32_0 : i32
    scf.if %2 {
      %cst_12 = arith.constant 0.000000e+00 : f32
      %23 = vector.broadcast %cst_12 : f32 to vector<8x2048xf32>
      %c0_13 = arith.constant 0 : index
      %c0_14 = arith.constant 0 : index
      %24 = vector.load %arg9[%c0_13, %c0_14] : memref<8x2048xf32, #tpu.memory_space<vmem>>, vector<8x2048xf32>
      tpu.vector_store %arg9[%c0_13, %c0_14], %23 {strides = array<i32>} : memref<8x2048xf32, #tpu.memory_space<vmem>>, vector<8x2048xf32>,
    } else {
    }
    %c1024_i32 = arith.constant 1024 : i32
    %3 = arith.muli %arg1, %c1024_i32 : i32
    %4 = tpu.assume_multiple %3, 1024 : i32
    %c0 = arith.constant 0 : index
    %5 = arith.index_cast %4 : i32 to index
    %6 = vector.load %arg3[%c0, %5] : memref<4x2048xf32, #tpu.memory_space<vmem>>, vector<4x1024xf32>
    %c0_1 = arith.constant 0 : index
    %7 = arith.index_cast %4 : i32 to index
    %8 = vector.load %arg4[%c0_1, %7] : memref<1x2048xf32, #tpu.memory_space<vmem>>, vector<1x1024xf32>
    %c0_2 = arith.constant 0 : index
    %c0_3 = arith.constant 0 : index
    %9 = vector.load %arg2[%c0_2, %c0_3] : memref<8x4xf32, #tpu.memory_space<vmem>>, vector<8x4xf32>
    %cst = arith.constant dense<0.000000e+00> : vector<8x1024xf32>
    %10 = tpu.matmul %9, %6, %cst {dimension_numbers = #tpu.dot_dimension_numbers<[1], [0], [0], [1], [0, 0, 1, 1], [], []>} : vector<8x4xf32>, vector<4x1024xf32>, vector<8x1024xf32> -> vector<8x1024xf32>
    %11 = vector.broadcast %8 : vector<1x1024xf32> to vector<8x1024xf32>
    %12 = arith.addf %10, %11 : vector<8x1024xf32>
    %13 = math.tanh %12 : vector<8x1024xf32>
    %c0_4 = arith.constant 0 : index
    %c0_5 = arith.constant 0 : index
    %14 = vector.load %arg9[%c0_4, %c0_5] : memref<8x2048xf32, #tpu.memory_space<vmem>>, vector<8x2048xf32>
    %15 = arith.truncf %13 : vector<8x1024xf32> to vector<8x1024xbf16>
    %c0_6 = arith.constant 0 : index
    %c0_7 = arith.constant 0 : index
    %16 = vector.load %arg5[%c0_6, %c0_7] : memref<1024x2048xbf16, #tpu.memory_space<vmem>>, vector<1024x2048xbf16>
    %cst_8 = arith.constant dense<0.000000e+00> : vector<8x2048xf32>
    %17 = tpu.matmul %15, %16, %cst_8 {dimension_numbers = #tpu.dot_dimension_numbers<[1], [0], [0], [1], [0, 0, 1, 1], [], []>} : vector<8x1024xbf16>, vector<1024x2048xbf16>, vector<8x2048xf32> -> vector<8x2048xf32>
    %18 = arith.addf %14, %17 : vector<8x2048xf32>
    %c0_9 = arith.constant 0 : index
    %c0_10 = arith.constant 0 : index
    %19 = vector.load %arg9[%c0_9, %c0_10] : memref<8x2048xf32, #tpu.memory_space<vmem>>, vector<8x2048xf32>
    tpu.vector_store %arg9[%c0_9, %c0_10], %18 {strides = array<i32>} : memref<8x2048xf32, #tpu.memory_space<vmem>>, vector<8x2048xf32>,
    %c1_i32 = arith.constant 1 : i32
    %20 = arith.cmpi eq, %arg1, %c1_i32 : i32
    %21 = arith.extui %20 : i1 to i32
    %c0_i32_11 = arith.constant 0 : i32
    %22 = arith.cmpi ne, %21, %c0_i32_11 : i32
    scf.if %22 {
      %c0_12 = arith.constant 0 : index
      %c0_13 = arith.constant 0 : index
      %23 = vector.load %arg9[%c0_12, %c0_13] : memref<8x2048xf32, #tpu.memory_space<vmem>>, vector<8x2048xf32>
      %c0_14 = arith.constant 0 : index
      %c0_15 = arith.constant 0 : index
      %24 = vector.load %arg6[%c0_14, %c0_15] : memref<1x2048xf32, #tpu.memory_space<vmem>>, vector<1x2048xf32>
      %25 = vector.broadcast %24 : vector<1x2048xf32> to vector<8x2048xf32>
      %26 = arith.addf %23, %25 : vector<8x2048xf32>
      %27 = math.tanh %26 : vector<8x2048xf32>
      %c0_16 = arith.constant 0 : index
      %c0_17 = arith.constant 0 : index
      %28 = vector.load %arg7[%c0_16, %c0_17] : memref<2048x2xf32, #tpu.memory_space<vmem>>, vector<2048x2xf32>
      %cst_18 = arith.constant dense<0.000000e+00> : vector<8x2xf32>
      %29 = tpu.matmul %27, %28, %cst_18 {dimension_numbers = #tpu.dot_dimension_numbers<[1], [0], [0], [1], [0, 0, 1, 1], [], []>} : vector<8x2048xf32>, vector<2048x2xf32>, vector<8x2xf32> -> vector<8x2xf32>
      %c0_19 = arith.constant 0 : index
      %c0_20 = arith.constant 0 : index
      %c0_21 = arith.constant 0 : index
      %30 = vector.load %arg8[%c0_19, %c0_20, %c0_21] : memref<1x8x2xf32, #tpu.memory_space<vmem>>, vector<1x8x2xf32>
      %31 = vector.shape_cast %30 : vector<1x8x2xf32> to vector<8x2xf32>
      %32 = vector.shape_cast %29 : vector<8x2xf32> to vector<1x8x2xf32>
      tpu.vector_store %arg8[%c0_19, %c0_20, %c0_21], %32 {strides = array<i32>} : memref<1x8x2xf32, #tpu.memory_space<vmem>>, vector<1x8x2xf32>,
    } else {
    }
    return
  }
  func.func @transform_0(%arg0: i32, %arg1: i32) -> (i32, i32) {
    %c0_i32 = arith.constant 0 : i32
    %c0_i32_0 = arith.constant 0 : i32
    %c0_i32_1 = arith.constant 0 : i32
    return %c0_i32, %c0_i32_0 : i32, i32
  }
  func.func @transform_1(%arg0: i32, %arg1: i32) -> (i32, i32) {
    %c0_i32 = arith.constant 0 : i32
    %c0_i32_0 = arith.constant 0 : i32
    %c0_i32_1 = arith.constant 0 : i32
    return %c0_i32, %c0_i32_0 : i32, i32
  }
  func.func @transform_2(%arg0: i32, %arg1: i32) -> (i32, i32) {
    %c0_i32 = arith.constant 0 : i32
    %c0_i32_0 = arith.constant 0 : i32
    %c0_i32_1 = arith.constant 0 : i32
    return %c0_i32, %c0_i32_0 : i32, i32
  }
  func.func @transform_3(%arg0: i32, %arg1: i32) -> (i32, i32) {
    %c0_i32 = arith.constant 0 : i32
    return %arg1, %arg0 : i32, i32
  }
  func.func @transform_4(%arg0: i32, %arg1: i32) -> (i32, i32) {
    %c0_i32 = arith.constant 0 : i32
    %c0_i32_0 = arith.constant 0 : i32
    return %c0_i32, %arg0 : i32, i32
  }
  func.func @transform_5(%arg0: i32, %arg1: i32) -> (i32, i32) {
    %c0_i32 = arith.constant 0 : i32
    %c0_i32_0 = arith.constant 0 : i32
    return %arg0, %c0_i32 : i32, i32
  }
  func.func @transform_6(%arg0: i32, %arg1: i32) -> (i32, i32, i32) {
    %c0_i32 = arith.constant 0 : i32
    %c0_i32_0 = arith.constant 0 : i32
    %c0_i32_1 = arith.constant 0 : i32
    return %arg0, %c0_i32, %c0_i32_0 : i32, i32, i32
  }
}

</mosaic_0001>

<llo_original>
// kernel: robot2d_calibration_nn.1
$region0: #{robot2d_calibration_nn.1}
  #allocation0 [shape = 'u32[]', space=smem, size = 0x4, offset = 0x4, fixed_abs, tag = 'smem constant byte address 0x4 - core index']
  #allocation1 [shape = 'u32[144,128]{1,0:T(1,128)}', space=vmem, size = 0x12000, scoped, tag = 'internal scratch']
  #allocation2 [shape = 'f32[8,2048]{1,0:T(8,128)}', space=vmem, size = 0x10000, scoped, tag = 'scratch operand']
  %s0 = inlined_call_operand.vmem [shape: f32[8,4], index: 0, kind: input, shape index: {}]
  %s1 = inlined_call_operand.vmem [shape: f32[4,2048], index: 1, kind: input, shape index: {}]
  %s2 = inlined_call_operand.vmem [shape: f32[1,2048], index: 2, kind: input, shape index: {}]
  %s3 = inlined_call_operand.vmem [shape: bf16[2048,2048], index: 3, kind: input, shape index: {}]
  %s4 = inlined_call_operand.vmem [shape: f32[1,2048], index: 4, kind: input, shape index: {}]
  %s5 = inlined_call_operand.vmem [shape: f32[2048,2], index: 5, kind: input, shape index: {}]
  %s6 = inlined_call_operand.vmem [shape: f32[1,8,2], index: 6, kind: output, shape index: {}]
  %s7 = sld [smem:[#allocation0]]
  $region65: #{robot2d_calibration_nn.1} parent=0
    _
  %s9 = ssub.s32 1, %s7
  %s10 = scalar_select 0, %s9, %s7
  loop: start=0, step=1, limit=4
  $region2: #{robot2d_calibration_nn.1} parent=0 // loop_pre_header
    _
  $region3: #{robot2d_calibration_nn.1} parent=0 // loop_header
    %s12 = sphi 0, %s16
    %p13 = scmp.ge.s32.totalorder %s12, 4
    %s19 = sphi 0, %s31
    %s20 = sphi 0, %s27
    %s21 = sphi 0, %s19
    %s22 = sphi 0, %s20
    %s23 = sphi 0, %s21
    %s24 = sphi 0, %s22
    %s32 = sphi 0, %s32
    %s34 = sphi 0, %s32
    %s35 = sphi 0, %s34
    %s49 = sphi 0, %s35
    %s53 = sphi 0, %s53
    %s55 = sphi 0, %s53
    %s56 = sphi 0, %s55
    %s70 = sphi 0, %s56
    %s74 = sphi 0, %s74
    %s76 = sphi 0, %s74
    %s77 = sphi 0, %s76
    %s91 = sphi 0, %s77
    %s99 = sphi 0, %s101
    %s102 = sphi 0, %s99
    %s103 = sphi 0, %s102
    %s119 = sphi 0, %s103
    %s125 = sphi 0, %s127
    %s128 = sphi 0, %s125
    %s129 = sphi 0, %s128
    %s145 = sphi 0, %s129
    %s151 = sphi 0, %s153
    %s154 = sphi 0, %s151
    %s155 = sphi 0, %s154
    %s171 = sphi 0, %s155
    %s177 = sphi 0, %s179
    %s180 = sphi 0, %s177
    %s181 = sphi 0, %s180
    %s197 = sphi 0, %s181
  $region4: #{robot2d_calibration_nn.1} parent=0 // loop_header_branch
    %15 = sbr.rel (%p13) target = $region8
  $region5: #{robot2d_calibration_nn.1} parent=0 // loop_body
    %s17 = ssub.s32 %s12, 1
    %s18 = ssub.s32 %s12, 2
    %s25 = sadd.s32 1, %s20
    %p26 = scmp.ge.s32.totalorder %s25, 2
    %s27 = scalar_select %p26, 0, %s25
    %s28 = sadd.s32 1, %s19
    %s29 = scalar_select %p26, %s28, %s19
    %p30 = scmp.ge.s32.totalorder %s29, 1
    %s31 = scalar_select %p30, 0, %s29
    %s33 = sadd.s32 %s32, 1
    %p36 = scmp.eq.s32.totalorder %s12, 1
    %p37 = scmp.ne.s32.totalorder %s32, %s34
    %p38 = scmp.eq.s32.totalorder %s12, 0
    %p39 = por %p37, %p38
    %p40 = scmp.ne.s32.totalorder %s32, %s34
    %p41 = scmp.eq.s32.totalorder %s17, 1
    %p42 = por %p40, %p41
    %p43 = scmp.ne.s32.totalorder %s34, %s35
    %p44 = scmp.eq.s32.totalorder %s17, 0
    %p45 = por %p43, %p44
    %p46 = scmp.ne.s32.totalorder %s34, %s35
    %p47 = scmp.eq.s32.totalorder %s18, 1
    %p48 = por %p46, %p47
    %p50 = scmp.ne.s32.totalorder %s35, %s49
    %p51 = scmp.eq.s32.totalorder %s18, 0
    %p52 = por %p50, %p51
    %s54 = sadd.s32 %s53, 1
    %p57 = scmp.eq.s32.totalorder %s12, 1
    %p58 = scmp.ne.s32.totalorder %s53, %s55
    %p59 = scmp.eq.s32.totalorder %s12, 0
    %p60 = por %p58, %p59
    %p61 = scmp.ne.s32.totalorder %s53, %s55
    %p62 = scmp.eq.s32.totalorder %s17, 1
    %p63 = por %p61, %p62
    %p64 = scmp.ne.s32.totalorder %s55, %s56
    %p65 = scmp.eq.s32.totalorder %s17, 0
    %p66 = por %p64, %p65
    %p67 = scmp.ne.s32.totalorder %s55, %s56
    %p68 = scmp.eq.s32.totalorder %s18, 1
    %p69 = por %p67, %p68
    %p71 = scmp.ne.s32.totalorder %s56, %s70
    %p72 = scmp.eq.s32.totalorder %s18, 0
    %p73 = por %p71, %p72
    %s75 = sadd.s32 %s74, 1
    %p78 = scmp.eq.s32.totalorder %s12, 1
    %p79 = scmp.ne.s32.totalorder %s74, %s76
    %p80 = scmp.eq.s32.totalorder %s12, 0
    %p81 = por %p79, %p80
    %p82 = scmp.ne.s32.totalorder %s74, %s76
    %p83 = scmp.eq.s32.totalorder %s17, 1
    %p84 = por %p82, %p83
    %p85 = scmp.ne.s32.totalorder %s76, %s77
    %p86 = scmp.eq.s32.totalorder %s17, 0
    %p87 = por %p85, %p86
    %p88 = scmp.ne.s32.totalorder %s76, %s77
    %p89 = scmp.eq.s32.totalorder %s18, 1
    %p90 = por %p88, %p89
    %p92 = scmp.ne.s32.totalorder %s77, %s91
    %p93 = scmp.eq.s32.totalorder %s18, 0
    %p94 = por %p92, %p93
    %s95 = ssub.s32 %s20, %s27
    %s96 = ssub.s32 %s19, %s31
    %s97 = sor.u32 %s95, %s96
    %p98 = scmp.eq.s32.totalorder %s97, 0
    %s100 = sadd.s32 %s99, 1
    %s101 = scalar_select %p98, %s99, %s100
    %p104 = pneg %p98
    %p105 = scmp.eq.s32.totalorder %s12, 1
    %p106 = por %p104, %p105
    %p107 = scmp.ne.s32.totalorder %s99, %s102
    %p108 = scmp.eq.s32.totalorder %s12, 0
    %p109 = por %p107, %p108
    %p110 = scmp.ne.s32.totalorder %s99, %s102
    %p111 = scmp.eq.s32.totalorder %s17, 1
    %p112 = por %p110, %p111
    %p113 = scmp.ne.s32.totalorder %s102, %s103
    %p114 = scmp.eq.s32.totalorder %s17, 0
    %p115 = por %p113, %p114
    %p116 = scmp.ne.s32.totalorder %s102, %s103
    %p117 = scmp.eq.s32.totalorder %s18, 1
    %p118 = por %p116, %p117
    %p120 = scmp.ne.s32.totalorder %s103, %s119
    %p121 = scmp.eq.s32.totalorder %s18, 0
    %p122 = por %p120, %p121
    %s123 = ssub.s32 %s19, %s31
    %p124 = scmp.eq.s32.totalorder %s123, 0
    %s126 = sadd.s32 %s125, 1
    %s127 = scalar_select %p124, %s125, %s126
    %p130 = pneg %p124
    %p131 = scmp.eq.s32.totalorder %s12, 1
    %p132 = por %p130, %p131
    %p133 = scmp.ne.s32.totalorder %s125, %s128
    %p134 = scmp.eq.s32.totalorder %s12, 0
    %p135 = por %p133, %p134
    %p136 = scmp.ne.s32.totalorder %s125, %s128
    %p137 = scmp.eq.s32.totalorder %s17, 1
    %p138 = por %p136, %p137
    %p139 = scmp.ne.s32.totalorder %s128, %s129
    %p140 = scmp.eq.s32.totalorder %s17, 0
    %p141 = por %p139, %p140
    %p142 = scmp.ne.s32.totalorder %s128, %s129
    %p143 = scmp.eq.s32.totalorder %s18, 1
    %p144 = por %p142, %p143
    %p146 = scmp.ne.s32.totalorder %s129, %s145
    %p147 = scmp.eq.s32.totalorder %s18, 0
    %p148 = por %p146, %p147
    %s149 = ssub.s32 %s19, %s31
    %p150 = scmp.eq.s32.totalorder %s149, 0
    %s152 = sadd.s32 %s151, 1
    %s153 = scalar_select %p150, %s151, %s152
    %p156 = pneg %p150
    %p157 = scmp.eq.s32.totalorder %s12, 1
    %p158 = por %p156, %p157
    %p159 = scmp.ne.s32.totalorder %s151, %s154
    %p160 = scmp.eq.s32.totalorder %s12, 0
    %p161 = por %p159, %p160
    %p162 = scmp.ne.s32.totalorder %s151, %s154
    %p163 = scmp.eq.s32.totalorder %s17, 1
    %p164 = por %p162, %p163
    %p165 = scmp.ne.s32.totalorder %s154, %s155
    %p166 = scmp.eq.s32.totalorder %s17, 0
    %p167 = por %p165, %p166
    %p168 = scmp.ne.s32.totalorder %s154, %s155
    %p169 = scmp.eq.s32.totalorder %s18, 1
    %p170 = por %p168, %p169
    %p172 = scmp.ne.s32.totalorder %s155, %s171
    %p173 = scmp.eq.s32.totalorder %s18, 0
    %p174 = por %p172, %p173
    %s175 = ssub.s32 %s19, %s31
    %p176 = scmp.eq.s32.totalorder %s175, 0
    %s178 = sadd.s32 %s177, 1
    %s179 = scalar_select %p176, %s177, %s178
    %p182 = pneg %p176
    %p183 = scmp.eq.s32.totalorder %s12, 1
    %p184 = por %p182, %p183
    %p185 = scmp.ne.s32.totalorder %s177, %s180
    %p186 = scmp.eq.s32.totalorder %s12, 0
    %p187 = por %p185, %p186
    %p188 = scmp.ne.s32.totalorder %s177, %s180
    %p189 = scmp.eq.s32.totalorder %s17, 1
    %p190 = por %p188, %p189
    %p191 = scmp.ne.s32.totalorder %s180, %s181
    %p192 = scmp.eq.s32.totalorder %s17, 0
    %p193 = por %p191, %p192
    %p194 = scmp.ne.s32.totalorder %s180, %s181
    %p195 = scmp.eq.s32.totalorder %s18, 1
    %p196 = por %p194, %p195
    %p198 = scmp.ne.s32.totalorder %s181, %s197
    %p199 = scmp.eq.s32.totalorder %s18, 0
    %p200 = por %p198, %p199
    %p201 = scmp.le.s32.totalorder 1, %s12
    %p202 = scmp.lt.s32.totalorder %s12, 3
    %p203 = pnand %p201, %p202
    %p204 = pneg %p203
    // Predicated region
    $region9: #{robot2d_calibration_nn.1} parent=5 // pred_check
      _
    $region10: #{robot2d_calibration_nn.1} parent=5 // pred_check_branch
      %206 = sbr.rel (%p203) target = $region12
    $region11: #{robot2d_calibration_nn.1} parent=5 // pred_region
      %s207 = ssub.s32 %s12, 1
      // Predicated region
      $region13: #{robot2d_calibration_nn.1} parent=11 // pred_check
        %p208 = pneg %p45
      $region14: #{robot2d_calibration_nn.1} parent=11 // pred_check_branch
        %210 = sbr.rel (%p208) target = $region16
      $region15: #{robot2d_calibration_nn.1} parent=11 // pred_region
        _
      $region16: #{robot2d_calibration_nn.1} parent=11 // pred_fallthru
        _
      // Predicated region
      $region17: #{robot2d_calibration_nn.1} parent=11 // pred_check
        %p211 = pneg %p66
      $region18: #{robot2d_calibration_nn.1} parent=11 // pred_check_branch
        %213 = sbr.rel (%p211) target = $region20
      $region19: #{robot2d_calibration_nn.1} parent=11 // pred_region
        _
      $region20: #{robot2d_calibration_nn.1} parent=11 // pred_fallthru
        _
      // Predicated region
      $region21: #{robot2d_calibration_nn.1} parent=11 // pred_check
        %p214 = pneg %p87
      $region22: #{robot2d_calibration_nn.1} parent=11 // pred_check_branch
        %216 = sbr.rel (%p214) target = $region24
      $region23: #{robot2d_calibration_nn.1} parent=11 // pred_region
        _
      $region24: #{robot2d_calibration_nn.1} parent=11 // pred_fallthru
        _
      // Predicated region
      $region25: #{robot2d_calibration_nn.1} parent=11 // pred_check
        %p217 = pneg %p141
      $region26: #{robot2d_calibration_nn.1} parent=11 // pred_check_branch
        %219 = sbr.rel (%p217) target = $region28
      $region27: #{robot2d_calibration_nn.1} parent=11 // pred_region
        %s220 = smul.u32 16, %s21
        %p221 = scmp.lt.s32.totalorder %s220, 15
        %s222 = scalar_select %p221, %s220, 15
        %s223 = scalar_lea.vmem %s4, %s222
        %s224 = smul.u32 16, %s21
      $region28: #{robot2d_calibration_nn.1} parent=11 // pred_fallthru
        _
      // Predicated region
      $region29: #{robot2d_calibration_nn.1} parent=11 // pred_check
        %p225 = pneg %p167
      $region30: #{robot2d_calibration_nn.1} parent=11 // pred_check_branch
        %227 = sbr.rel (%p225) target = $region32
      $region31: #{robot2d_calibration_nn.1} parent=11 // pred_region
        %s228 = smul.u32 256, %s21
        %p229 = scmp.lt.s32.totalorder %s228, 255
        %s230 = scalar_select %p229, %s228, 255
        %s231 = smul.addr %s230, 8
        %s232 = scalar_lea.vmem %s5, %s231
        %s233 = smul.u32 256, %s21
      $region32: #{robot2d_calibration_nn.1} parent=11 // pred_fallthru
        _
    $region12: #{robot2d_calibration_nn.1} parent=5 // pred_fallthru
      _
    %p234 = scmp.lt.s32.totalorder %s12, 2
    // Predicated region
    $region33: #{robot2d_calibration_nn.1} parent=5 // pred_check
      %p235 = pneg %p234
    $region34: #{robot2d_calibration_nn.1} parent=5 // pred_check_branch
      %237 = sbr.rel (%p235) target = $region36
    $region35: #{robot2d_calibration_nn.1} parent=5 // pred_region
      // Predicated region
      $region37: #{robot2d_calibration_nn.1} parent=35 // pred_check
        %p238 = pneg %p109
      $region38: #{robot2d_calibration_nn.1} parent=35 // pred_check_branch
        %240 = sbr.rel (%p238) target = $region40
      $region39: #{robot2d_calibration_nn.1} parent=35 // pred_region
        %s241 = smul.u32 128, %s20
        %s242 = smul.u32 16, %s19
        %p243 = scmp.lt.s32.totalorder %s241, 255
        %s244 = scalar_select %p243, %s241, 255
        %p245 = scmp.lt.s32.totalorder %s242, 15
        %s246 = scalar_select %p245, %s242, 15
        %s247 = smul.addr %s244, 16
        %s248 = sadd.s32 %s246, %s247
        %s249 = smul.addr %s248, 4
        %s250 = scalar_lea.vmem %s3, %s249
        %s251 = smul.u32 128, %s20
        %s252 = smul.u32 16, %s19
      $region40: #{robot2d_calibration_nn.1} parent=35 // pred_fallthru
        _
    $region36: #{robot2d_calibration_nn.1} parent=5 // pred_fallthru
      _
    %p253 = scmp.le.s32.totalorder 1, %s12
    %p254 = scmp.lt.s32.totalorder %s12, 3
    %p255 = pnand %p253, %p254
    %p256 = pneg %p255
    // Predicated region
    $region41: #{robot2d_calibration_nn.1} parent=5 // pred_check
      _
    $region42: #{robot2d_calibration_nn.1} parent=5 // pred_check_branch
      %258 = sbr.rel (%p255) target = $region44
    $region43: #{robot2d_calibration_nn.1} parent=5 // pred_region
      %s259 = ssub.s32 %s12, 1
      %p260 = pneg %p45
      %p261 = pneg %p42
      %p262 = pneg %p66
      %p263 = pneg %p63
      %p264 = pneg %p87
      %p265 = pneg %p84
      %s266 = smul.u32 128, %s22
      %s267 = smul.u32 16, %s21
      %p268 = scmp.lt.s32.totalorder %s266, 255
      %s269 = scalar_select %p268, %s266, 255
      %p270 = scmp.lt.s32.totalorder %s267, 15
      %s271 = scalar_select %p270, %s267, 15
      %s272 = smul.addr %s269, 16
      %s273 = sadd.s32 %s271, %s272
      %s274 = smul.addr %s273, 4
      %s275 = scalar_lea.vmem %s3, %s274
      %p276 = pneg %p115
      %p277 = pneg %p112
      %s278 = smul.u32 16, %s21
      %p279 = scmp.lt.s32.totalorder %s278, 15
      %s280 = scalar_select %p279, %s278, 15
      %s281 = scalar_lea.vmem %s4, %s280
      %p282 = pneg %p141
      %p283 = pneg %p138
      %s284 = smul.u32 256, %s21
      %p285 = scmp.lt.s32.totalorder %s284, 255
      %s286 = scalar_select %p285, %s284, 255
      %s287 = smul.addr %s286, 8
      %s288 = scalar_lea.vmem %s5, %s287
      %p289 = pneg %p167
      %p290 = pneg %p164
      %p291 = pneg %p193
      %p292 = pneg %p190
      %p293 = scmp.lt.s32.totalorder %s21, 0
      %s294 = scalar_select %p293, %s21, 0
      %s295 = smul.addr %s294, 8
      %s296 = scalar_lea.vmem %s6, %s295
      %s297 = smul.u32 128, %s22
      %s298 = smul.u32 16, %s21
      %p299 = scmp.lt.s32.totalorder %s297, 255
      %s300 = scalar_select %p299, %s297, 255
      %p301 = scmp.lt.s32.totalorder %s298, 15
      %s302 = scalar_select %p301, %s298, 15
      %s303 = smul.addr %s300, 16
      %s304 = sadd.s32 %s302, %s303
      %s305 = smul.addr %s304, 4
      %s306 = scalar_lea.vmem %s3, %s305
      %s307 = smul.u32 128, %s22
      %s308 = smul.u32 16, %s21
      %s309 = smul.u32 16, %s21
      %p310 = scmp.lt.s32.totalorder %s309, 15
      %s311 = scalar_select %p310, %s309, 15
      %s312 = scalar_lea.vmem %s4, %s311
      %s313 = smul.u32 16, %s21
      %s314 = smul.u32 256, %s21
      %p315 = scmp.lt.s32.totalorder %s314, 255
      %s316 = scalar_select %p315, %s314, 255
      %s317 = smul.addr %s316, 8
      %s318 = scalar_lea.vmem %s5, %s317
      %s319 = smul.u32 256, %s21
      %p320 = scmp.lt.s32.totalorder %s21, 0
      %s321 = scalar_select %p320, %s21, 0
      %s322 = smul.addr %s321, 8
      %s323 = scalar_lea.vmem %s6, %s322
      %p324 = scmp.eq.s32.totalorder %s22, 0
      // Predicated region
      $region45: #{robot2d_calibration_nn.1} parent=43 // pred_check
        %p325 = pneg %p324
      $region46: #{robot2d_calibration_nn.1} parent=43 // pred_check_branch
        %327 = sbr.rel (%p325) target = $region48
      $region47: #{robot2d_calibration_nn.1} parent=43 // pred_region
        %328 = vst [vmem:[#allocation2] sm:$0xff] 0.0
        %329 = vst [vmem:[#allocation2 + $0x8] sm:$0xff] 0.0
        %330 = vst [vmem:[#allocation2 + $0x10] sm:$0xff] 0.0
        %331 = vst [vmem:[#allocation2 + $0x18] sm:$0xff] 0.0
        %332 = vst [vmem:[#allocation2 + $0x20] sm:$0xff] 0.0
        %333 = vst [vmem:[#allocation2 + $0x28] sm:$0xff] 0.0
        %334 = vst [vmem:[#allocation2 + $0x30] sm:$0xff] 0.0
        %335 = vst [vmem:[#allocation2 + $0x38] sm:$0xff] 0.0
        %336 = vst [vmem:[#allocation2 + $0x40] sm:$0xff] 0.0
        %337 = vst [vmem:[#allocation2 + $0x48] sm:$0xff] 0.0
        %338 = vst [vmem:[#allocation2 + $0x50] sm:$0xff] 0.0
        %339 = vst [vmem:[#allocation2 + $0x58] sm:$0xff] 0.0
        %340 = vst [vmem:[#allocation2 + $0x60] sm:$0xff] 0.0
        %341 = vst [vmem:[#allocation2 + $0x68] sm:$0xff] 0.0
        %342 = vst [vmem:[#allocation2 + $0x70] sm:$0xff] 0.0
        %343 = vst [vmem:[#allocation2 + $0x78] sm:$0xff] 0.0
      $region48: #{robot2d_calibration_nn.1} parent=43 // pred_fallthru
        _
      %s344 = smul.u32 %s22, 1024
      %s345 = sshra.s32 %s344, 7
      %s346 = sand.u32 %s344, 127
      %s347 = smul.addr %s345, 4
      %s348 = scalar_lea.vmem %s1, %s347
      %v349 = vld [vmem:[%s348] sm:$0xff]
      %v350 = vld [vmem:[%s348 + $0x8] sm:$0xff]
      %v351 = vld [vmem:[%s348 + $0x10] sm:$0xff]
      %v352 = vld [vmem:[%s348 + $0x18] sm:$0xff]
      %s353 = scalar_lea.vmem %s2, %s345
      %v354 = vld [vmem:[%s353] sm:$0xff]
      %v355 = vld [vmem:[%s0] sm:$0xff]
      %v357 = vlaneseq
      %v358 = vshrl.u32 %v357, 7
      %v359 = vsub.s32 0, %v358
      %v360 = vrot.slane %v354, %v359
      %v361 = vlaneseq
      %v362 = vshrl.u32 %v361, 7
      %v363 = vsub.s32 1, %v362
      %v364 = vrot.slane %v354, %v363
      %v365 = vlaneseq
      %v366 = vshrl.u32 %v365, 7
      %v367 = vsub.s32 2, %v366
      %v368 = vrot.slane %v354, %v367
      %v369 = vlaneseq
      %v370 = vshrl.u32 %v369, 7
      %v371 = vsub.s32 3, %v370
      %v372 = vrot.slane %v354, %v371
      %v373 = vlaneseq
      %v374 = vshrl.u32 %v373, 7
      %v375 = vsub.s32 4, %v374
      %v376 = vrot.slane %v354, %v375
      %v377 = vlaneseq
      %v378 = vshrl.u32 %v377, 7
      %v379 = vsub.s32 5, %v378
      %v380 = vrot.slane %v354, %v379
      %v381 = vlaneseq
      %v382 = vshrl.u32 %v381, 7
      %v383 = vsub.s32 6, %v382
      %v384 = vrot.slane %v354, %v383
      %v385 = vlaneseq
      %v386 = vshrl.u32 %v385, 7
      %v387 = vsub.s32 7, %v386
      %v388 = vrot.slane %v354, %v387
      %v401 = vcombine.high %v349, %v349
      %v402 = vcombine.high %v350, %v350
      %v403 = vcombine.high %v351, %v351
      %v404 = vcombine.high %v352, %v352
      %vm405 = vcmask 31744
      %v407 = vsel %vm405, %v355, 0
      %vm409 = vcmask 1043456
      %v410 = vsel %vm409, %v349, 0
      %v412 = vsel %vm409, %v401, 0
      %v414 = vsel %vm409, %v350, 0
      %v416 = vsel %vm409, %v402, 0
      %v418 = vsel %vm409, %v351, 0
      %v420 = vsel %vm409, %v403, 0
      %v422 = vsel %vm409, %v352, 0
      %v424 = vsel %vm409, %v404, 0
      %426 = vmatprep.subr.mxu0 0.0
      %427 = vmatpush1.msra.mxu0 0.0
      %428 = vmatprep.subr.mxu0 0.0
      %429 = vmatpush1.msra.mxu0 0.0
      %430 = vmatprep.subr.mxu0 0.0
      %431 = vmatpush1.msra.mxu0 0.0
      %432 = vmatprep.subr.mxu0 0.0
      %433 = vmatpush1.msra.mxu0 0.0
      %434 = vmatprep.subr.mxu0 0.0
      %435 = vmatpush1.msra.mxu0 0.0
      %436 = vmatprep.subr.mxu0 0.0
      %437 = vmatpush1.msra.mxu0 0.0
      %438 = vmatprep.subr.mxu0 0.0
      %439 = vmatpush1.msra.mxu0 0.0
      %440 = vmatprep.subr.mxu0 0.0
      %441 = vmatpush1.msra.mxu0 0.0
      %442 = vmatprep.subr.mxu0 0.0
      %443 = vmatpush1.msra.mxu0 0.0
      %444 = vmatprep.subr.mxu0 0.0
      %445 = vmatpush1.msra.mxu0 0.0
      %446 = vmatprep.subr.mxu0 0.0
      %447 = vmatpush1.msra.mxu0 0.0
      %448 = vmatprep.subr.mxu0 0.0
      %449 = vmatpush1.msra.mxu0 0.0
      %450 = vmatprep.subr.mxu0 0.0
      %451 = vmatpush1.msra.mxu0 0.0
      %452 = vmatprep.subr.mxu0 0.0
      %453 = vmatpush1.msra.mxu0 0.0
      %454 = vmatprep.subr.mxu0 0.0
      %455 = vmatpush1.msra.mxu0 0.0
      %456 = vmatprep.subr.mxu0 %v412
      %457 = vmatpush1.msra.mxu0 %v410
      %458 = vmatprep.subr.mxu0 0.0
      %459 = vmatpush2.msra.mxu0 0.0
      %460 = vmatprep.subr.mxu0 0.0
      %461 = vmatpush2.msra.mxu0 0.0
      %462 = vmatprep.subr.mxu0 0.0
      %463 = vmatpush2.msra.mxu0 0.0
      %464 = vmatprep.subr.mxu0 0.0
      %465 = vmatpush2.msra.mxu0 0.0
      %466 = vmatprep.subr.mxu0 0.0
      %467 = vmatpush2.msra.mxu0 0.0
      %468 = vmatprep.subr.mxu0 0.0
      %469 = vmatpush2.msra.mxu0 0.0
      %470 = vmatprep.subr.mxu0 0.0
      %471 = vmatpush2.msra.mxu0 0.0
      %472 = vmatprep.subr.mxu0 0.0
      %473 = vmatpush2.msra.mxu0 0.0
      %474 = vmatprep.subr.mxu0 0.0
      %475 = vmatpush2.msra.mxu0 0.0
      %476 = vmatprep.subr.mxu0 0.0
      %477 = vmatpush2.msra.mxu0 0.0
      %478 = vmatprep.subr.mxu0 0.0
      %479 = vmatpush2.msra.mxu0 0.0
      %480 = vmatprep.subr.mxu0 0.0
      %481 = vmatpush2.msra.mxu0 0.0
      %482 = vmatprep.subr.mxu0 0.0
      %483 = vmatpush2.msra.mxu0 0.0
      %484 = vmatprep.subr.mxu0 0.0
      %485 = vmatpush2.msra.mxu0 0.0
      %486 = vmatprep.subr.mxu0 0.0
      %487 = vmatpush2.msra.mxu0 0.0
      %488 = vmatprep.subr.mxu0 0.0
      %489 = vmatpush2.msra.mxu0 0.0
      %490 = vmatprep.mubr.f32.mxu0 0.0
      %491 = vmatmul.mubr.f32.gmra.mxu0 %v407
      %v492 = vpop.f32.mrf.mxu0
      %v493 = vadd.f32 %v360, %v492
      %v494 = vpop.f32.mrf.mxu0
      %v495 = vadd.f32 %v364, %v494
      %496 = vdwg.mxu0
      %497 = vmatprep.subr.mxu0 0.0
      %498 = vmatpush1.msra.mxu0 0.0
      %499 = vmatprep.subr.mxu0 0.0
      %500 = vmatpush1.msra.mxu0 0.0
      %501 = vmatprep.subr.mxu0 0.0
      %502 = vmatpush1.msra.mxu0 0.0
      %503 = vmatprep.subr.mxu0 0.0
      %504 = vmatpush1.msra.mxu0 0.0
      %505 = vmatprep.subr.mxu0 0.0
      %506 = vmatpush1.msra.mxu0 0.0
      %507 = vmatprep.subr.mxu0 0.0
      %508 = vmatpush1.msra.mxu0 0.0
      %509 = vmatprep.subr.mxu0 0.0
      %510 = vmatpush1.msra.mxu0 0.0
      %511 = vmatprep.subr.mxu0 0.0
      %512 = vmatpush1.msra.mxu0 0.0
      %513 = vmatprep.subr.mxu0 0.0
      %514 = vmatpush1.msra.mxu0 0.0
      %515 = vmatprep.subr.mxu0 0.0
      %516 = vmatpush1.msra.mxu0 0.0
      %517 = vmatprep.subr.mxu0 0.0
      %518 = vmatpush1.msra.mxu0 0.0
      %519 = vmatprep.subr.mxu0 0.0
      %520 = vmatpush1.msra.mxu0 0.0
      %521 = vmatprep.subr.mxu0 0.0
      %522 = vmatpush1.msra.mxu0 0.0
      %523 = vmatprep.subr.mxu0 0.0
      %524 = vmatpush1.msra.mxu0 0.0
      %525 = vmatprep.subr.mxu0 0.0
      %526 = vmatpush1.msra.mxu0 0.0
      %527 = vmatprep.subr.mxu0 %v416
      %528 = vmatpush1.msra.mxu0 %v414
      %529 = vmatprep.subr.mxu0 0.0
      %530 = vmatpush2.msra.mxu0 0.0
      %531 = vmatprep.subr.mxu0 0.0
      %532 = vmatpush2.msra.mxu0 0.0
      %533 = vmatprep.subr.mxu0 0.0
      %534 = vmatpush2.msra.mxu0 0.0
      %535 = vmatprep.subr.mxu0 0.0
      %536 = vmatpush2.msra.mxu0 0.0
      %537 = vmatprep.subr.mxu0 0.0
      %538 = vmatpush2.msra.mxu0 0.0
      %539 = vmatprep.subr.mxu0 0.0
      %540 = vmatpush2.msra.mxu0 0.0
      %541 = vmatprep.subr.mxu0 0.0
      %542 = vmatpush2.msra.mxu0 0.0
      %543 = vmatprep.subr.mxu0 0.0
      %544 = vmatpush2.msra.mxu0 0.0
      %545 = vmatprep.subr.mxu0 0.0
      %546 = vmatpush2.msra.mxu0 0.0
      %547 = vmatprep.subr.mxu0 0.0
      %548 = vmatpush2.msra.mxu0 0.0
      %549 = vmatprep.subr.mxu0 0.0
      %550 = vmatpush2.msra.mxu0 0.0
      %551 = vmatprep.subr.mxu0 0.0
      %552 = vmatpush2.msra.mxu0 0.0
      %553 = vmatprep.subr.mxu0 0.0
      %554 = vmatpush2.msra.mxu0 0.0
      %555 = vmatprep.subr.mxu0 0.0
      %556 = vmatpush2.msra.mxu0 0.0
      %557 = vmatprep.subr.mxu0 0.0
      %558 = vmatpush2.msra.mxu0 0.0
      %559 = vmatprep.subr.mxu0 0.0
      %560 = vmatpush2.msra.mxu0 0.0
      %561 = vmatprep.mubr.f32.mxu0 0.0
      %562 = vmatmul.mubr.f32.gmra.mxu0 %v407
      %v563 = vpop.f32.mrf.mxu0
      %v564 = vadd.f32 %v368, %v563
      %v565 = vpop.f32.mrf.mxu0
      %v566 = vadd.f32 %v372, %v565
      %567 = vdwg.mxu0
      %568 = vmatprep.subr.mxu0 0.0
      %569 = vmatpush1.msra.mxu0 0.0
      %570 = vmatprep.subr.mxu0 0.0
      %571 = vmatpush1.msra.mxu0 0.0
      %572 = vmatprep.subr.mxu0 0.0
      %573 = vmatpush1.msra.mxu0 0.0
      %574 = vmatprep.subr.mxu0 0.0
      %575 = vmatpush1.msra.mxu0 0.0
      %576 = vmatprep.subr.mxu0 0.0
      %577 = vmatpush1.msra.mxu0 0.0
      %578 = vmatprep.subr.mxu0 0.0
      %579 = vmatpush1.msra.mxu0 0.0
      %580 = vmatprep.subr.mxu0 0.0
      %581 = vmatpush1.msra.mxu0 0.0
      %582 = vmatprep.subr.mxu0 0.0
      %583 = vmatpush1.msra.mxu0 0.0
      %584 = vmatprep.subr.mxu0 0.0
      %585 = vmatpush1.msra.mxu0 0.0
      %586 = vmatprep.subr.mxu0 0.0
      %587 = vmatpush1.msra.mxu0 0.0
      %588 = vmatprep.subr.mxu0 0.0
      %589 = vmatpush1.msra.mxu0 0.0
      %590 = vmatprep.subr.mxu0 0.0
      %591 = vmatpush1.msra.mxu0 0.0
      %592 = vmatprep.subr.mxu0 0.0
      %593 = vmatpush1.msra.mxu0 0.0
      %594 = vmatprep.subr.mxu0 0.0
      %595 = vmatpush1.msra.mxu0 0.0
      %596 = vmatprep.subr.mxu0 0.0
      %597 = vmatpush1.msra.mxu0 0.0
      %598 = vmatprep.subr.mxu0 %v420
      %599 = vmatpush1.msra.mxu0 %v418
      %600 = vmatprep.subr.mxu0 0.0
      %601 = vmatpush2.msra.mxu0 0.0
      %602 = vmatprep.subr.mxu0 0.0
      %603 = vmatpush2.msra.mxu0 0.0
      %604 = vmatprep.subr.mxu0 0.0
      %605 = vmatpush2.msra.mxu0 0.0
      %606 = vmatprep.subr.mxu0 0.0
      %607 = vmatpush2.msra.mxu0 0.0
      %608 = vmatprep.subr.mxu0 0.0
      %609 = vmatpush2.msra.mxu0 0.0
      %610 = vmatprep.subr.mxu0 0.0
      %611 = vmatpush2.msra.mxu0 0.0
      %612 = vmatprep.subr.mxu0 0.0
      %613 = vmatpush2.msra.mxu0 0.0
      %614 = vmatprep.subr.mxu0 0.0
      %615 = vmatpush2.msra.mxu0 0.0
      %616 = vmatprep.subr.mxu0 0.0
      %617 = vmatpush2.msra.mxu0 0.0
      %618 = vmatprep.subr.mxu0 0.0
      %619 = vmatpush2.msra.mxu0 0.0
      %620 = vmatprep.subr.mxu0 0.0
      %621 = vmatpush2.msra.mxu0 0.0
      %622 = vmatprep.subr.mxu0 0.0
      %623 = vmatpush2.msra.mxu0 0.0
      %624 = vmatprep.subr.mxu0 0.0
      %625 = vmatpush2.msra.mxu0 0.0
      %626 = vmatprep.subr.mxu0 0.0
      %627 = vmatpush2.msra.mxu0 0.0
      %628 = vmatprep.subr.mxu0 0.0
      %629 = vmatpush2.msra.mxu0 0.0
      %630 = vmatprep.subr.mxu0 0.0
      %631 = vmatpush2.msra.mxu0 0.0
      %632 = vmatprep.mubr.f32.mxu0 0.0
      %633 = vmatmul.mubr.f32.gmra.mxu0 %v407
      %v634 = vpop.f32.mrf.mxu0
      %v635 = vadd.f32 %v376, %v634
      %v636 = vpop.f32.mrf.mxu0
      %v637 = vadd.f32 %v380, %v636
      %638 = vdwg.mxu0
      %639 = vmatprep.subr.mxu0 0.0
      %640 = vmatpush1.msra.mxu0 0.0
      %641 = vmatprep.subr.mxu0 0.0
      %642 = vmatpush1.msra.mxu0 0.0
      %643 = vmatprep.subr.mxu0 0.0
      %644 = vmatpush1.msra.mxu0 0.0
      %645 = vmatprep.subr.mxu0 0.0
      %646 = vmatpush1.msra.mxu0 0.0
      %647 = vmatprep.subr.mxu0 0.0
      %648 = vmatpush1.msra.mxu0 0.0
      %649 = vmatprep.subr.mxu0 0.0
      %650 = vmatpush1.msra.mxu0 0.0
      %651 = vmatprep.subr.mxu0 0.0
      %652 = vmatpush1.msra.mxu0 0.0
      %653 = vmatprep.subr.mxu0 0.0
      %654 = vmatpush1.msra.mxu0 0.0
      %655 = vmatprep.subr.mxu0 0.0
      %656 = vmatpush1.msra.mxu0 0.0
      %657 = vmatprep.subr.mxu0 0.0
      %658 = vmatpush1.msra.mxu0 0.0
      %659 = vmatprep.subr.mxu0 0.0
      %660 = vmatpush1.msra.mxu0 0.0
      %661 = vmatprep.subr.mxu0 0.0
      %662 = vmatpush1.msra.mxu0 0.0
      %663 = vmatprep.subr.mxu0 0.0
      %664 = vmatpush1.msra.mxu0 0.0
      %665 = vmatprep.subr.mxu0 0.0
      %666 = vmatpush1.msra.mxu0 0.0
      %667 = vmatprep.subr.mxu0 0.0
      %668 = vmatpush1.msra.mxu0 0.0
      %669 = vmatprep.subr.mxu0 %v424
      %670 = vmatpush1.msra.mxu0 %v422
      %671 = vmatprep.subr.mxu0 0.0
      %672 = vmatpush2.msra.mxu0 0.0
      %673 = vmatprep.subr.mxu0 0.0
      %674 = vmatpush2.msra.mxu0 0.0
      %675 = vmatprep.subr.mxu0 0.0
      %676 = vmatpush2.msra.mxu0 0.0
      %677 = vmatprep.subr.mxu0 0.0
      %678 = vmatpush2.msra.mxu0 0.0
      %679 = vmatprep.subr.mxu0 0.0
      %680 = vmatpush2.msra.mxu0 0.0
      %681 = vmatprep.subr.mxu0 0.0
      %682 = vmatpush2.msra.mxu0 0.0
      %683 = vmatprep.subr.mxu0 0.0
      %684 = vmatpush2.msra.mxu0 0.0
      %685 = vmatprep.subr.mxu0 0.0
      %686 = vmatpush2.msra.mxu0 0.0
      %687 = vmatprep.subr.mxu0 0.0
      %688 = vmatpush2.msra.mxu0 0.0
      %689 = vmatprep.subr.mxu0 0.0
      %690 = vmatpush2.msra.mxu0 0.0
      %691 = vmatprep.subr.mxu0 0.0
      %692 = vmatpush2.msra.mxu0 0.0
      %693 = vmatprep.subr.mxu0 0.0
      %694 = vmatpush2.msra.mxu0 0.0
      %695 = vmatprep.subr.mxu0 0.0
      %696 = vmatpush2.msra.mxu0 0.0
      %697 = vmatprep.subr.mxu0 0.0
      %698 = vmatpush2.msra.mxu0 0.0
      %699 = vmatprep.subr.mxu0 0.0
      %700 = vmatpush2.msra.mxu0 0.0
      %701 = vmatprep.subr.mxu0 0.0
      %702 = vmatpush2.msra.mxu0 0.0
      %703 = vmatprep.mubr.f32.mxu0 0.0
      %704 = vmatmul.mubr.f32.gmra.mxu0 %v407
      %v705 = vpop.f32.mrf.mxu0
      %v706 = vadd.f32 %v384, %v705
      %v707 = vpop.f32.mrf.mxu0
      %v708 = vadd.f32 %v388, %v707
      %709 = vdwg.mxu0
      %v710 = vtanh.pop %v493
      %v711 = vtanh.pop %v495
      %v712 = vtanh.pop %v564
      %v713 = vtanh.pop %v566
      %v714 = vtanh.pop %v635
      %v715 = vtanh.pop %v637
      %v716 = vtanh.pop %v706
      %v717 = vtanh.pop %v708
      %v718 = vld [vmem:[#allocation2] sm:$0xff]
      %v719 = vld [vmem:[#allocation2 + $0x8] sm:$0xff]
      %v720 = vld [vmem:[#allocation2 + $0x10] sm:$0xff]
      %v721 = vld [vmem:[#allocation2 + $0x18] sm:$0xff]
      %v722 = vld [vmem:[#allocation2 + $0x20] sm:$0xff]
      %v723 = vld [vmem:[#allocation2 + $0x28] sm:$0xff]
      %v724 = vld [vmem:[#allocation2 + $0x30] sm:$0xff]
      %v725 = vld [vmem:[#allocation2 + $0x38] sm:$0xff]
      %v726 = vld [vmem:[#allocation2 + $0x40] sm:$0xff]
      %v727 = vld [vmem:[#allocation2 + $0x48] sm:$0xff]
      %v728 = vld [vmem:[#allocation2 + $0x50] sm:$0xff]
      %v729 = vld [vmem:[#allocation2 + $0x58] sm:$0xff]
      %v730 = vld [vmem:[#allocation2 + $0x60] sm:$0xff]
      %v731 = vld [vmem:[#allocation2 + $0x68] sm:$0xff]
      %v732 = vld [vmem:[#allocation2 + $0x70] sm:$0xff]
      %v733 = vld [vmem:[#allocation2 + $0x78] sm:$0xff]
      %v734 = vpack.c.bf16 %v710, %v710
      %v735 = vpack.c.bf16 %v711, %v711
      %v736 = vpack.c.bf16 %v712, %v712
      %v737 = vpack.c.bf16 %v713, %v713
      %v738 = vpack.c.bf16 %v714, %v714
      %v739 = vpack.c.bf16 %v715, %v715
      %v740 = vpack.c.bf16 %v716, %v716
      %v741 = vpack.c.bf16 %v717, %v717
      %v742 = vld [vmem:[%s306] sm:$0xff]
      %v743 = vld [vmem:[%s306 + $0x8] sm:$0xff]
      %v744 = vld [vmem:[%s306 + $0x10] sm:$0xff]
      %v745 = vld [vmem:[%s306 + $0x18] sm:$0xff]
      %v746 = vld [vmem:[%s306 + $0x20] sm:$0xff]
      %v747 = vld [vmem:[%s306 + $0x28] sm:$0xff]
      %v748 = vld [vmem:[%s306 + $0x30] sm:$0xff]
      %v749 = vld [vmem:[%s306 + $0x38] sm:$0xff]
      %v750 = vld [vmem:[%s306 + $0x40] sm:$0xff]
      %v751 = vld [vmem:[%s306 + $0x48] sm:$0xff]
      %v752 = vld [vmem:[%s306 + $0x50] sm:$0xff]
      %v753 = vld [vmem:[%s306 + $0x58] sm:$0xff]
      %v754 = vld [vmem:[%s306 + $0x60] sm:$0xff]
      %v755 = vld [vmem:[%s306 + $0x68] sm:$0xff]
      %v756 = vld [vmem:[%s306 + $0x70] sm:$0xff]
      %v757 = vld [vmem:[%s306 + $0x78] sm:$0xff]
      %v758 = vld [vmem:[%s306 + $0x80] sm:$0xff]
      %v759 = vld [vmem:[%s306 + $0x88] sm:$0xff]
      %v760 = vld [vmem:[%s306 + $0x90] sm:$0xff]
      %v761 = vld [vmem:[%s306 + $0x98] sm:$0xff]
      %v762 = vld [vmem:[%s306 + $0xa0] sm:$0xff]
      %v763 = vld [vmem:[%s306 + $0xa8] sm:$0xff]
      %v764 = vld [vmem:[%s306 + $0xb0] sm:$0xff]
      %v765 = vld [vmem:[%s306 + $0xb8] sm:$0xff]
      %v766 = vld [vmem:[%s306 + $0xc0] sm:$0xff]
      %v767 = vld [vmem:[%s306 + $0xc8] sm:$0xff]
      %v768 = vld [vmem:[%s306 + $0xd0] sm:$0xff]
      %v769 = vld [vmem:[%s306 + $0xd8] sm:$0xff]
      %v770 = vld [vmem:[%s306 + $0xe0] sm:$0xff]
      %v771 = vld [vmem:[%s306 + $0xe8] sm:$0xff]
      %v772 = vld [vmem:[%s306 + $0xf0] sm:$0xff]
      %v773 = vld [vmem:[%s306 + $0xf8] sm:$0xff]
      %v774 = vld [vmem:[%s306 + $0x100] sm:$0xff]
      %v775 = vld [vmem:[%s306 + $0x108] sm:$0xff]
      %v776 = vld [vmem:[%s306 + $0x110] sm:$0xff]
      %v777 = vld [vmem:[%s306 + $0x118] sm:$0xff]
      %v778 = vld [vmem:[%s306 + $0x120] sm:$0xff]
      %v779 = vld [vmem:[%s306 + $0x128] sm:$0xff]
      %v780 = vld [vmem:[%s306 + $0x130] sm:$0xff]
      %v781 = vld [vmem:[%s306 + $0x138] sm:$0xff]
      %v782 = vld [vmem:[%s306 + $0x140] sm:$0xff]
      %v783 = vld [vmem:[%s306 + $0x148] sm:$0xff]
      %v784 = vld [vmem:[%s306 + $0x150] sm:$0xff]
      %v785 = vld [vmem:[%s306 + $0x158] sm:$0xff]
      %v786 = vld [vmem:[%s306 + $0x160] sm:$0xff]
      %v787 = vld [vmem:[%s306 + $0x168] sm:$0xff]
      %v788 = vld [vmem:[%s306 + $0x170] sm:$0xff]
      %v789 = vld [vmem:[%s306 + $0x178] sm:$0xff]
      %v790 = vld [vmem:[%s306 + $0x180] sm:$0xff]
      %v791 = vld [vmem:[%s306 + $0x188] sm:$0xff]
      %v792 = vld [vmem:[%s306 + $0x190] sm:$0xff]
      %v793 = vld [vmem:[%s306 + $0x198] sm:$0xff]
      %v794 = vld [vmem:[%s306 + $0x1a0] sm:$0xff]
      %v795 = vld [vmem:[%s306 + $0x1a8] sm:$0xff]
      %v796 = vld [vmem:[%s306 + $0x1b0] sm:$0xff]
      %v797 = vld [vmem:[%s306 + $0x1b8] sm:$0xff]
      %v798 = vld [vmem:[%s306 + $0x1c0] sm:$0xff]
      %v799 = vld [vmem:[%s306 + $0x1c8] sm:$0xff]
      %v800 = vld [vmem:[%s306 + $0x1d0] sm:$0xff]
      %v801 = vld [vmem:[%s306 + $0x1d8] sm:$0xff]
      %v802 = vld [vmem:[%s306 + $0x1e0] sm:$0xff]
      %v803 = vld [vmem:[%s306 + $0x1e8] sm:$0xff]
      %v804 = vld [vmem:[%s306 + $0x1f0] sm:$0xff]
      %v805 = vld [vmem:[%s306 + $0x1f8] sm:$0xff]
      %v806 = vld [vmem:[%s306 + $0x200] sm:$0xff]
      %v807 = vld [vmem:[%s306 + $0x208] sm:$0xff]
      %v808 = vld [vmem:[%s306 + $0x210] sm:$0xff]
      %v809 = vld [vmem:[%s306 + $0x218] sm:$0xff]
      %v810 = vld [vmem:[%s306 + $0x220] sm:$0xff]
      %v811 = vld [vmem:[%s306 + $0x228] sm:$0xff]
      %v812 = vld [vmem:[%s306 + $0x230] sm:$0xff]
      %v813 = vld [vmem:[%s306 + $0x238] sm:$0xff]
      %v814 = vld [vmem:[%s306 + $0x240] sm:$0xff]
      %v815 = vld [vmem:[%s306 + $0x248] sm:$0xff]
      %v816 = vld [vmem:[%s306 + $0x250] sm:$0xff]
      %v817 = vld [vmem:[%s306 + $0x258] sm:$0xff]
      %v818 = vld [vmem:[%s306 + $0x260] sm:$0xff]
      %v819 = vld [vmem:[%s306 + $0x268] sm:$0xff]
      %v820 = vld [vmem:[%s306 + $0x270] sm:$0xff]
      %v821 = vld [vmem:[%s306 + $0x278] sm:$0xff]
      %v822 = vld [vmem:[%s306 + $0x280] sm:$0xff]
      %v823 = vld [vmem:[%s306 + $0x288] sm:$0xff]
      %v824 = vld [vmem:[%s306 + $0x290] sm:$0xff]
      %v825 = vld [vmem:[%s306 + $0x298] sm:$0xff]
      %v826 = vld [vmem:[%s306 + $0x2a0] sm:$0xff]
      %v827 = vld [vmem:[%s306 + $0x2a8] sm:$0xff]
      %v828 = vld [vmem:[%s306 + $0x2b0] sm:$0xff]
      %v829 = vld [vmem:[%s306 + $0x2b8] sm:$0xff]
      %v830 = vld [vmem:[%s306 + $0x2c0] sm:$0xff]
      %v831 = vld [vmem:[%s306 + $0x2c8] sm:$0xff]
      %v832 = vld [vmem:[%s306 + $0x2d0] sm:$0xff]
      %v833 = vld [vmem:[%s306 + $0x2d8] sm:$0xff]
      %v834 = vld [vmem:[%s306 + $0x2e0] sm:$0xff]
      %v835 = vld [vmem:[%s306 + $0x2e8] sm:$0xff]
      %v836 = vld [vmem:[%s306 + $0x2f0] sm:$0xff]
      %v837 = vld [vmem:[%s306 + $0x2f8] sm:$0xff]
      %v838 = vld [vmem:[%s306 + $0x300] sm:$0xff]
      %v839 = vld [vmem:[%s306 + $0x308] sm:$0xff]
      %v840 = vld [vmem:[%s306 + $0x310] sm:$0xff]
      %v841 = vld [vmem:[%s306 + $0x318] sm:$0xff]
      %v842 = vld [vmem:[%s306 + $0x320] sm:$0xff]
      %v843 = vld [vmem:[%s306 + $0x328] sm:$0xff]
      %v844 = vld [vmem:[%s306 + $0x330] sm:$0xff]
      %v845 = vld [vmem:[%s306 + $0x338] sm:$0xff]
      %v846 = vld [vmem:[%s306 + $0x340] sm:$0xff]
      %v847 = vld [vmem:[%s306 + $0x348] sm:$0xff]
      %v848 = vld [vmem:[%s306 + $0x350] sm:$0xff]
      %v849 = vld [vmem:[%s306 + $0x358] sm:$0xff]
      %v850 = vld [vmem:[%s306 + $0x360] sm:$0xff]
      %v851 = vld [vmem:[%s306 + $0x368] sm:$0xff]
      %v852 = vld [vmem:[%s306 + $0x370] sm:$0xff]
      %v853 = vld [vmem:[%s306 + $0x378] sm:$0xff]
      %v854 = vld [vmem:[%s306 + $0x380] sm:$0xff]
      %v855 = vld [vmem:[%s306 + $0x388] sm:$0xff]
      %v856 = vld [vmem:[%s306 + $0x390] sm:$0xff]
      %v857 = vld [vmem:[%s306 + $0x398] sm:$0xff]
      %v858 = vld [vmem:[%s306 + $0x3a0] sm:$0xff]
      %v859 = vld [vmem:[%s306 + $0x3a8] sm:$0xff]
      %v860 = vld [vmem:[%s306 + $0x3b0] sm:$0xff]
      %v861 = vld [vmem:[%s306 + $0x3b8] sm:$0xff]
      %v862 = vld [vmem:[%s306 + $0x3c0] sm:$0xff]
      %v863 = vld [vmem:[%s306 + $0x3c8] sm:$0xff]
      %v864 = vld [vmem:[%s306 + $0x3d0] sm:$0xff]
      %v865 = vld [vmem:[%s306 + $0x3d8] sm:$0xff]
      %v866 = vld [vmem:[%s306 + $0x3e0] sm:$0xff]
      %v867 = vld [vmem:[%s306 + $0x3e8] sm:$0xff]
      %v868 = vld [vmem:[%s306 + $0x3f0] sm:$0xff]
      %v869 = vld [vmem:[%s306 + $0x3f8] sm:$0xff]
      %v870 = vld [vmem:[%s306 + $0x400] sm:$0xff]
      %v871 = vld [vmem:[%s306 + $0x408] sm:$0xff]
      %v872 = vld [vmem:[%s306 + $0x410] sm:$0xff]
      %v873 = vld [vmem:[%s306 + $0x418] sm:$0xff]
      %v874 = vld [vmem:[%s306 + $0x420] sm:$0xff]
      %v875 = vld [vmem:[%s306 + $0x428] sm:$0xff]
      %v876 = vld [vmem:[%s306 + $0x430] sm:$0xff]
      %v877 = vld [vmem:[%s306 + $0x438] sm:$0xff]
      %v878 = vld [vmem:[%s306 + $0x440] sm:$0xff]
      %v879 = vld [vmem:[%s306 + $0x448] sm:$0xff]
      %v880 = vld [vmem:[%s306 + $0x450] sm:$0xff]
      %v881 = vld [vmem:[%s306 + $0x458] sm:$0xff]
      %v882 = vld [vmem:[%s306 + $0x460] sm:$0xff]
      %v883 = vld [vmem:[%s306 + $0x468] sm:$0xff]
      %v884 = vld [vmem:[%s306 + $0x470] sm:$0xff]
      %v885 = vld [vmem:[%s306 + $0x478] sm:$0xff]
      %v886 = vld [vmem:[%s306 + $0x480] sm:$0xff]
      %v887 = vld [vmem:[%s306 + $0x488] sm:$0xff]
      %v888 = vld [vmem:[%s306 + $0x490] sm:$0xff]
      %v889 = vld [vmem:[%s306 + $0x498] sm:$0xff]
      %v890 = vld [vmem:[%s306 + $0x4a0] sm:$0xff]
      %v891 = vld [vmem:[%s306 + $0x4a8] sm:$0xff]
      %v892 = vld [vmem:[%s306 + $0x4b0] sm:$0xff]
      %v893 = vld [vmem:[%s306 + $0x4b8] sm:$0xff]
      %v894 = vld [vmem:[%s306 + $0x4c0] sm:$0xff]
      %v895 = vld [vmem:[%s306 + $0x4c8] sm:$0xff]
      %v896 = vld [vmem:[%s306 + $0x4d0] sm:$0xff]
      %v897 = vld [vmem:[%s306 + $0x4d8] sm:$0xff]
      %v898 = vld [vmem:[%s306 + $0x4e0] sm:$0xff]
      %v899 = vld [vmem:[%s306 + $0x4e8] sm:$0xff]
      %v900 = vld [vmem:[%s306 + $0x4f0] sm:$0xff]
      %v901 = vld [vmem:[%s306 + $0x4f8] sm:$0xff]
      %v902 = vld [vmem:[%s306 + $0x500] sm:$0xff]
      %v903 = vld [vmem:[%s306 + $0x508] sm:$0xff]
      %v904 = vld [vmem:[%s306 + $0x510] sm:$0xff]
      %v905 = vld [vmem:[%s306 + $0x518] sm:$0xff]
      %v906 = vld [vmem:[%s306 + $0x520] sm:$0xff]
      %v907 = vld [vmem:[%s306 + $0x528] sm:$0xff]
      %v908 = vld [vmem:[%s306 + $0x530] sm:$0xff]
      %v909 = vld [vmem:[%s306 + $0x538] sm:$0xff]
      %v910 = vld [vmem:[%s306 + $0x540] sm:$0xff]
      %v911 = vld [vmem:[%s306 + $0x548] sm:$0xff]
      %v912 = vld [vmem:[%s306 + $0x550] sm:$0xff]
      %v913 = vld [vmem:[%s306 + $0x558] sm:$0xff]
      %v914 = vld [vmem:[%s306 + $0x560] sm:$0xff]
      %v915 = vld [vmem:[%s306 + $0x568] sm:$0xff]
      %v916 = vld [vmem:[%s306 + $0x570] sm:$0xff]
      %v917 = vld [vmem:[%s306 + $0x578] sm:$0xff]
      %v918 = vld [vmem:[%s306 + $0x580] sm:$0xff]
      %v919 = vld [vmem:[%s306 + $0x588] sm:$0xff]
      %v920 = vld [vmem:[%s306 + $0x590] sm:$0xff]
      %v921 = vld [vmem:[%s306 + $0x598] sm:$0xff]
      %v922 = vld [vmem:[%s306 + $0x5a0] sm:$0xff]
      %v923 = vld [vmem:[%s306 + $0x5a8] sm:$0xff]
      %v924 = vld [vmem:[%s306 + $0x5b0] sm:$0xff]
      %v925 = vld [vmem:[%s306 + $0x5b8] sm:$0xff]
      %v926 = vld [vmem:[%s306 + $0x5c0] sm:$0xff]
      %v927 = vld [vmem:[%s306 + $0x5c8] sm:$0xff]
      %v928 = vld [vmem:[%s306 + $0x5d0] sm:$0xff]
      %v929 = vld [vmem:[%s306 + $0x5d8] sm:$0xff]
      %v930 = vld [vmem:[%s306 + $0x5e0] sm:$0xff]
      %v931 = vld [vmem:[%s306 + $0x5e8] sm:$0xff]
      %v932 = vld [vmem:[%s306 + $0x5f0] sm:$0xff]
      %v933 = vld [vmem:[%s306 + $0x5f8] sm:$0xff]
      %v934 = vld [vmem:[%s306 + $0x600] sm:$0xff]
      %v935 = vld [vmem:[%s306 + $0x608] sm:$0xff]
      %v936 = vld [vmem:[%s306 + $0x610] sm:$0xff]
      %v937 = vld [vmem:[%s306 + $0x618] sm:$0xff]
      %v938 = vld [vmem:[%s306 + $0x620] sm:$0xff]
      %v939 = vld [vmem:[%s306 + $0x628] sm:$0xff]
      %v940 = vld [vmem:[%s306 + $0x630] sm:$0xff]
      %v941 = vld [vmem:[%s306 + $0x638] sm:$0xff]
      %v942 = vld [vmem:[%s306 + $0x640] sm:$0xff]
      %v943 = vld [vmem:[%s306 + $0x648] sm:$0xff]
      %v944 = vld [vmem:[%s306 + $0x650] sm:$0xff]
      %v945 = vld [vmem:[%s306 + $0x658] sm:$0xff]
      %v946 = vld [vmem:[%s306 + $0x660] sm:$0xff]
      %v947 = vld [vmem:[%s306 + $0x668] sm:$0xff]
      %v948 = vld [vmem:[%s306 + $0x670] sm:$0xff]
      %v949 = vld [vmem:[%s306 + $0x678] sm:$0xff]
      %v950 = vld [vmem:[%s306 + $0x680] sm:$0xff]
      %v951 = vld [vmem:[%s306 + $0x688] sm:$0xff]
      %v952 = vld [vmem:[%s306 + $0x690] sm:$0xff]
      %v953 = vld [vmem:[%s306 + $0x698] sm:$0xff]
      %v954 = vld [vmem:[%s306 + $0x6a0] sm:$0xff]
      %v955 = vld [vmem:[%s306 + $0x6a8] sm:$0xff]
      %v956 = vld [vmem:[%s306 + $0x6b0] sm:$0xff]
      %v957 = vld [vmem:[%s306 + $0x6b8] sm:$0xff]
      %v958 = vld [vmem:[%s306 + $0x6c0] sm:$0xff]
      %v959 = vld [vmem:[%s306 + $0x6c8] sm:$0xff]
      %v960 = vld [vmem:[%s306 + $0x6d0] sm:$0xff]
      %v961 = vld [vmem:[%s306 + $0x6d8] sm:$0xff]
      %v962 = vld [vmem:[%s306 + $0x6e0] sm:$0xff]
      %v963 = vld [vmem:[%s306 + $0x6e8] sm:$0xff]
      %v964 = vld [vmem:[%s306 + $0x6f0] sm:$0xff]
      %v965 = vld [vmem:[%s306 + $0x6f8] sm:$0xff]
      %v966 = vld [vmem:[%s306 + $0x700] sm:$0xff]
      %v967 = vld [vmem:[%s306 + $0x708] sm:$0xff]
      %v968 = vld [vmem:[%s306 + $0x710] sm:$0xff]
      %v969 = vld [vmem:[%s306 + $0x718] sm:$0xff]
      %v970 = vld [vmem:[%s306 + $0x720] sm:$0xff]
      %v971 = vld [vmem:[%s306 + $0x728] sm:$0xff]
      %v972 = vld [vmem:[%s306 + $0x730] sm:$0xff]
      %v973 = vld [vmem:[%s306 + $0x738] sm:$0xff]
      %v974 = vld [vmem:[%s306 + $0x740] sm:$0xff]
      %v975 = vld [vmem:[%s306 + $0x748] sm:$0xff]
      %v976 = vld [vmem:[%s306 + $0x750] sm:$0xff]
      %v977 = vld [vmem:[%s306 + $0x758] sm:$0xff]
      %v978 = vld [vmem:[%s306 + $0x760] sm:$0xff]
      %v979 = vld [vmem:[%s306 + $0x768] sm:$0xff]
      %v980 = vld [vmem:[%s306 + $0x770] sm:$0xff]
      %v981 = vld [vmem:[%s306 + $0x778] sm:$0xff]
      %v982 = vld [vmem:[%s306 + $0x780] sm:$0xff]
      %v983 = vld [vmem:[%s306 + $0x788] sm:$0xff]
      %v984 = vld [vmem:[%s306 + $0x790] sm:$0xff]
      %v985 = vld [vmem:[%s306 + $0x798] sm:$0xff]
      %v986 = vld [vmem:[%s306 + $0x7a0] sm:$0xff]
      %v987 = vld [vmem:[%s306 + $0x7a8] sm:$0xff]
      %v988 = vld [vmem:[%s306 + $0x7b0] sm:$0xff]
      %v989 = vld [vmem:[%s306 + $0x7b8] sm:$0xff]
      %v990 = vld [vmem:[%s306 + $0x7c0] sm:$0xff]
      %v991 = vld [vmem:[%s306 + $0x7c8] sm:$0xff]
      %v992 = vld [vmem:[%s306 + $0x7d0] sm:$0xff]
      %v993 = vld [vmem:[%s306 + $0x7d8] sm:$0xff]
      %v994 = vld [vmem:[%s306 + $0x7e0] sm:$0xff]
      %v995 = vld [vmem:[%s306 + $0x7e8] sm:$0xff]
      %v996 = vld [vmem:[%s306 + $0x7f0] sm:$0xff]
      %v997 = vld [vmem:[%s306 + $0x7f8] sm:$0xff]
      %v998 = vld [vmem:[%s306 + $0x800] sm:$0xff]
      %v999 = vld [vmem:[%s306 + $0x808] sm:$0xff]
      %v1000 = vld [vmem:[%s306 + $0x810] sm:$0xff]
      %v1001 = vld [vmem:[%s306 + $0x818] sm:$0xff]
      %v1002 = vld [vmem:[%s306 + $0x820] sm:$0xff]
      %v1003 = vld [vmem:[%s306 + $0x828] sm:$0xff]
      %v1004 = vld [vmem:[%s306 + $0x830] sm:$0xff]
      %v1005 = vld [vmem:[%s306 + $0x838] sm:$0xff]
      %v1006 = vld [vmem:[%s306 + $0x840] sm:$0xff]
      %v1007 = vld [vmem:[%s306 + $0x848] sm:$0xff]
      %v1008 = vld [vmem:[%s306 + $0x850] sm:$0xff]
      %v1009 = vld [vmem:[%s306 + $0x858] sm:$0xff]
      %v1010 = vld [vmem:[%s306 + $0x860] sm:$0xff]
      %v1011 = vld [vmem:[%s306 + $0x868] sm:$0xff]
      %v1012 = vld [vmem:[%s306 + $0x870] sm:$0xff]
      %v1013 = vld [vmem:[%s306 + $0x878] sm:$0xff]
      %v1014 = vld [vmem:[%s306 + $0x880] sm:$0xff]
      %v1015 = vld [vmem:[%s306 + $0x888] sm:$0xff]
      %v1016 = vld [vmem:[%s306 + $0x890] sm:$0xff]
      %v1017 = vld [vmem:[%s306 + $0x898] sm:$0xff]
      %v1018 = vld [vmem:[%s306 + $0x8a0] sm:$0xff]
      %v1019 = vld [vmem:[%s306 + $0x8a8] sm:$0xff]
      %v1020 = vld [vmem:[%s306 + $0x8b0] sm:$0xff]
      %v1021 = vld [vmem:[%s306 + $0x8b8] sm:$0xff]
      %v1022 = vld [vmem:[%s306 + $0x8c0] sm:$0xff]
      %v1023 = vld [vmem:[%s306 + $0x8c8] sm:$0xff]
      %v1024 = vld [vmem:[%s306 + $0x8d0] sm:$0xff]
      %v1025 = vld [vmem:[%s306 + $0x8d8] sm:$0xff]
      %v1026 = vld [vmem:[%s306 + $0x8e0] sm:$0xff]
      %v1027 = vld [vmem:[%s306 + $0x8e8] sm:$0xff]
      %v1028 = vld [vmem:[%s306 + $0x8f0] sm:$0xff]
      %v1029 = vld [vmem:[%s306 + $0x8f8] sm:$0xff]
      %v1030 = vld [vmem:[%s306 + $0x900] sm:$0xff]
      %v1031 = vld [vmem:[%s306 + $0x908] sm:$0xff]
      %v1032 = vld [vmem:[%s306 + $0x910] sm:$0xff]
      %v1033 = vld [vmem:[%s306 + $0x918] sm:$0xff]
      %v1034 = vld [vmem:[%s306 + $0x920] sm:$0xff]
      %v1035 = vld [vmem:[%s306 + $0x928] sm:$0xff]
      %v1036 = vld [vmem:[%s306 + $0x930] sm:$0xff]
      %v1037 = vld [vmem:[%s306 + $0x938] sm:$0xff]
      %v1038 = vld [vmem:[%s306 + $0x940] sm:$0xff]
      %v1039 = vld [vmem:[%s306 + $0x948] sm:$0xff]
      %v1040 = vld [vmem:[%s306 + $0x950] sm:$0xff]
      %v1041 = vld [vmem:[%s306 + $0x958] sm:$0xff]
      %v1042 = vld [vmem:[%s306 + $0x960] sm:$0xff]
      %v1043 = vld [vmem:[%s306 + $0x968] sm:$0xff]
      %v1044 = vld [vmem:[%s306 + $0x970] sm:$0xff]
      %v1045 = vld [vmem:[%s306 + $0x978] sm:$0xff]
      %v1046 = vld [vmem:[%s306 + $0x980] sm:$0xff]
      %v1047 = vld [vmem:[%s306 + $0x988] sm:$0xff]
      %v1048 = vld [vmem:[%s306 + $0x990] sm:$0xff]
      %v1049 = vld [vmem:[%s306 + $0x998] sm:$0xff]
      %v1050 = vld [vmem:[%s306 + $0x9a0] sm:$0xff]
      %v1051 = vld [vmem:[%s306 + $0x9a8] sm:$0xff]
      %v1052 = vld [vmem:[%s306 + $0x9b0] sm:$0xff]
      %v1053 = vld [vmem:[%s306 + $0x9b8] sm:$0xff]
      %v1054 = vld [vmem:[%s306 + $0x9c0] sm:$0xff]
      %v1055 = vld [vmem:[%s306 + $0x9c8] sm:$0xff]
      %v1056 = vld [vmem:[%s306 + $0x9d0] sm:$0xff]
      %v1057 = vld [vmem:[%s306 + $0x9d8] sm:$0xff]
      %v1058 = vld [vmem:[%s306 + $0x9e0] sm:$0xff]
      %v1059 = vld [vmem:[%s306 + $0x9e8] sm:$0xff]
      %v1060 = vld [vmem:[%s306 + $0x9f0] sm:$0xff]
      %v1061 = vld [vmem:[%s306 + $0x9f8] sm:$0xff]
      %v1062 = vld [vmem:[%s306 + $0xa00] sm:$0xff]
      %v1063 = vld [vmem:[%s306 + $0xa08] sm:$0xff]
      %v1064 = vld [vmem:[%s306 + $0xa10] sm:$0xff]
      %v1065 = vld [vmem:[%s306 + $0xa18] sm:$0xff]
      %v1066 = vld [vmem:[%s306 + $0xa20] sm:$0xff]
      %v1067 = vld [vmem:[%s306 + $0xa28] sm:$0xff]
      %v1068 = vld [vmem:[%s306 + $0xa30] sm:$0xff]
      %v1069 = vld [vmem:[%s306 + $0xa38] sm:$0xff]
      %v1070 = vld [vmem:[%s306 + $0xa40] sm:$0xff]
      %v1071 = vld [vmem:[%s306 + $0xa48] sm:$0xff]
      %v1072 = vld [vmem:[%s306 + $0xa50] sm:$0xff]
      %v1073 = vld [vmem:[%s306 + $0xa58] sm:$0xff]
      %v1074 = vld [vmem:[%s306 + $0xa60] sm:$0xff]
      %v1075 = vld [vmem:[%s306 + $0xa68] sm:$0xff]
      %v1076 = vld [vmem:[%s306 + $0xa70] sm:$0xff]
      %v1077 = vld [vmem:[%s306 + $0xa78] sm:$0xff]
      %v1078 = vld [vmem:[%s306 + $0xa80] sm:$0xff]
      %v1079 = vld [vmem:[%s306 + $0xa88] sm:$0xff]
      %v1080 = vld [vmem:[%s306 + $0xa90] sm:$0xff]
      %v1081 = vld [vmem:[%s306 + $0xa98] sm:$0xff]
      %v1082 = vld [vmem:[%s306 + $0xaa0] sm:$0xff]
      %v1083 = vld [vmem:[%s306 + $0xaa8] sm:$0xff]
      %v1084 = vld [vmem:[%s306 + $0xab0] sm:$0xff]
      %v1085 = vld [vmem:[%s306 + $0xab8] sm:$0xff]
      %v1086 = vld [vmem:[%s306 + $0xac0] sm:$0xff]
      %v1087 = vld [vmem:[%s306 + $0xac8] sm:$0xff]
      %v1088 = vld [vmem:[%s306 + $0xad0] sm:$0xff]
      %v1089 = vld [vmem:[%s306 + $0xad8] sm:$0xff]
      %v1090 = vld [vmem:[%s306 + $0xae0] sm:$0xff]
      %v1091 = vld [vmem:[%s306 + $0xae8] sm:$0xff]
      %v1092 = vld [vmem:[%s306 + $0xaf0] sm:$0xff]
      %v1093 = vld [vmem:[%s306 + $0xaf8] sm:$0xff]
      %v1094 = vld [vmem:[%s306 + $0xb00] sm:$0xff]
      %v1095 = vld [vmem:[%s306 + $0xb08] sm:$0xff]
      %v1096 = vld [vmem:[%s306 + $0xb10] sm:$0xff]
      %v1097 = vld [vmem:[%s306 + $0xb18] sm:$0xff]
      %v1098 = vld [vmem:[%s306 + $0xb20] sm:$0xff]
      %v1099 = vld [vmem:[%s306 + $0xb28] sm:$0xff]
      %v1100 = vld [vmem:[%s306 + $0xb30] sm:$0xff]
      %v1101 = vld [vmem:[%s306 + $0xb38] sm:$0xff]
      %v1102 = vld [vmem:[%s306 + $0xb40] sm:$0xff]
      %v1103 = vld [vmem:[%s306 + $0xb48] sm:$0xff]
      %v1104 = vld [vmem:[%s306 + $0xb50] sm:$0xff]
      %v1105 = vld [vmem:[%s306 + $0xb58] sm:$0xff]
      %v1106 = vld [vmem:[%s306 + $0xb60] sm:$0xff]
      %v1107 = vld [vmem:[%s306 + $0xb68] sm:$0xff]
      %v1108 = vld [vmem:[%s306 + $0xb70] sm:$0xff]
      %v1109 = vld [vmem:[%s306 + $0xb78] sm:$0xff]
      %v1110 = vld [vmem:[%s306 + $0xb80] sm:$0xff]
      %v1111 = vld [vmem:[%s306 + $0xb88] sm:$0xff]
      %v1112 = vld [vmem:[%s306 + $0xb90] sm:$0xff]
      %v1113 = vld [vmem:[%s306 + $0xb98] sm:$0xff]
      %v1114 = vld [vmem:[%s306 + $0xba0] sm:$0xff]
      %v1115 = vld [vmem:[%s306 + $0xba8] sm:$0xff]
      %v1116 = vld [vmem:[%s306 + $0xbb0] sm:$0xff]
      %v1117 = vld [vmem:[%s306 + $0xbb8] sm:$0xff]
      %v1118 = vld [vmem:[%s306 + $0xbc0] sm:$0xff]
      %v1119 = vld [vmem:[%s306 + $0xbc8] sm:$0xff]
      %v1120 = vld [vmem:[%s306 + $0xbd0] sm:$0xff]
      %v1121 = vld [vmem:[%s306 + $0xbd8] sm:$0xff]
      %v1122 = vld [vmem:[%s306 + $0xbe0] sm:$0xff]
      %v1123 = vld [vmem:[%s306 + $0xbe8] sm:$0xff]
      %v1124 = vld [vmem:[%s306 + $0xbf0] sm:$0xff]
      %v1125 = vld [vmem:[%s306 + $0xbf8] sm:$0xff]
      %v1126 = vld [vmem:[%s306 + $0xc00] sm:$0xff]
      %v1127 = vld [vmem:[%s306 + $0xc08] sm:$0xff]
      %v1128 = vld [vmem:[%s306 + $0xc10] sm:$0xff]
      %v1129 = vld [vmem:[%s306 + $0xc18] sm:$0xff]
      %v1130 = vld [vmem:[%s306 + $0xc20] sm:$0xff]
      %v1131 = vld [vmem:[%s306 + $0xc28] sm:$0xff]
      %v1132 = vld [vmem:[%s306 + $0xc30] sm:$0xff]
      %v1133 = vld [vmem:[%s306 + $0xc38] sm:$0xff]
      %v1134 = vld [vmem:[%s306 + $0xc40] sm:$0xff]
      %v1135 = vld [vmem:[%s306 + $0xc48] sm:$0xff]
      %v1136 = vld [vmem:[%s306 + $0xc50] sm:$0xff]
      %v1137 = vld [vmem:[%s306 + $0xc58] sm:$0xff]
      %v1138 = vld [vmem:[%s306 + $0xc60] sm:$0xff]
      %v1139 = vld [vmem:[%s306 + $0xc68] sm:$0xff]
      %v1140 = vld [vmem:[%s306 + $0xc70] sm:$0xff]
      %v1141 = vld [vmem:[%s306 + $0xc78] sm:$0xff]
      %v1142 = vld [vmem:[%s306 + $0xc80] sm:$0xff]
      %v1143 = vld [vmem:[%s306 + $0xc88] sm:$0xff]
      %v1144 = vld [vmem:[%s306 + $0xc90] sm:$0xff]
      %v1145 = vld [vmem:[%s306 + $0xc98] sm:$0xff]
      %v1146 = vld [vmem:[%s306 + $0xca0] sm:$0xff]
      %v1147 = vld [vmem:[%s306 + $0xca8] sm:$0xff]
      %v1148 = vld [vmem:[%s306 + $0xcb0] sm:$0xff]
      %v1149 = vld [vmem:[%s306 + $0xcb8] sm:$0xff]
      %v1150 = vld [vmem:[%s306 + $0xcc0] sm:$0xff]
      %v1151 = vld [vmem:[%s306 + $0xcc8] sm:$0xff]
      %v1152 = vld [vmem:[%s306 + $0xcd0] sm:$0xff]
      %v1153 = vld [vmem:[%s306 + $0xcd8] sm:$0xff]
      %v1154 = vld [vmem:[%s306 + $0xce0] sm:$0xff]
      %v1155 = vld [vmem:[%s306 + $0xce8] sm:$0xff]
      %v1156 = vld [vmem:[%s306 + $0xcf0] sm:$0xff]
      %v1157 = vld [vmem:[%s306 + $0xcf8] sm:$0xff]
      %v1158 = vld [vmem:[%s306 + $0xd00] sm:$0xff]
      %v1159 = vld [vmem:[%s306 + $0xd08] sm:$0xff]
      %v1160 = vld [vmem:[%s306 + $0xd10] sm:$0xff]
      %v1161 = vld [vmem:[%s306 + $0xd18] sm:$0xff]
      %v1162 = vld [vmem:[%s306 + $0xd20] sm:$0xff]
      %v1163 = vld [vmem:[%s306 + $0xd28] sm:$0xff]
      %v1164 = vld [vmem:[%s306 + $0xd30] sm:$0xff]
      %v1165 = vld [vmem:[%s306 + $0xd38] sm:$0xff]
      %v1166 = vld [vmem:[%s306 + $0xd40] sm:$0xff]
      %v1167 = vld [vmem:[%s306 + $0xd48] sm:$0xff]
      %v1168 = vld [vmem:[%s306 + $0xd50] sm:$0xff]
      %v1169 = vld [vmem:[%s306 + $0xd58] sm:$0xff]
      %v1170 = vld [vmem:[%s306 + $0xd60] sm:$0xff]
      %v1171 = vld [vmem:[%s306 + $0xd68] sm:$0xff]
      %v1172 = vld [vmem:[%s306 + $0xd70] sm:$0xff]
      %v1173 = vld [vmem:[%s306 + $0xd78] sm:$0xff]
      %v1174 = vld [vmem:[%s306 + $0xd80] sm:$0xff]
      %v1175 = vld [vmem:[%s306 + $0xd88] sm:$0xff]
      %v1176 = vld [vmem:[%s306 + $0xd90] sm:$0xff]
      %v1177 = vld [vmem:[%s306 + $0xd98] sm:$0xff]
      %v1178 = vld [vmem:[%s306 + $0xda0] sm:$0xff]
      %v1179 = vld [vmem:[%s306 + $0xda8] sm:$0xff]
      %v1180 = vld [vmem:[%s306 + $0xdb0] sm:$0xff]
      %v1181 = vld [vmem:[%s306 + $0xdb8] sm:$0xff]
      %v1182 = vld [vmem:[%s306 + $0xdc0] sm:$0xff]
      %v1183 = vld [vmem:[%s306 + $0xdc8] sm:$0xff]
      %v1184 = vld [vmem:[%s306 + $0xdd0] sm:$0xff]
      %v1185 = vld [vmem:[%s306 + $0xdd8] sm:$0xff]
      %v1186 = vld [vmem:[%s306 + $0xde0] sm:$0xff]
      %v1187 = vld [vmem:[%s306 + $0xde8] sm:$0xff]
      %v1188 = vld [vmem:[%s306 + $0xdf0] sm:$0xff]
      %v1189 = vld [vmem:[%s306 + $0xdf8] sm:$0xff]
      %v1190 = vld [vmem:[%s306 + $0xe00] sm:$0xff]
      %v1191 = vld [vmem:[%s306 + $0xe08] sm:$0xff]
      %v1192 = vld [vmem:[%s306 + $0xe10] sm:$0xff]
      %v1193 = vld [vmem:[%s306 + $0xe18] sm:$0xff]
      %v1194 = vld [vmem:[%s306 + $0xe20] sm:$0xff]
      %v1195 = vld [vmem:[%s306 + $0xe28] sm:$0xff]
      %v1196 = vld [vmem:[%s306 + $0xe30] sm:$0xff]
      %v1197 = vld [vmem:[%s306 + $0xe38] sm:$0xff]
      %v1198 = vld [vmem:[%s306 + $0xe40] sm:$0xff]
      %v1199 = vld [vmem:[%s306 + $0xe48] sm:$0xff]
      %v1200 = vld [vmem:[%s306 + $0xe50] sm:$0xff]
      %v1201 = vld [vmem:[%s306 + $0xe58] sm:$0xff]
      %v1202 = vld [vmem:[%s306 + $0xe60] sm:$0xff]
      %v1203 = vld [vmem:[%s306 + $0xe68] sm:$0xff]
      %v1204 = vld [vmem:[%s306 + $0xe70] sm:$0xff]
      %v1205 = vld [vmem:[%s306 + $0xe78] sm:$0xff]
      %v1206 = vld [vmem:[%s306 + $0xe80] sm:$0xff]
      %v1207 = vld [vmem:[%s306 + $0xe88] sm:$0xff]
      %v1208 = vld [vmem:[%s306 + $0xe90] sm:$0xff]
      %v1209 = vld [vmem:[%s306 + $0xe98] sm:$0xff]
      %v1210 = vld [vmem:[%s306 + $0xea0] sm:$0xff]
      %v1211 = vld [vmem:[%s306 + $0xea8] sm:$0xff]
      %v1212 = vld [vmem:[%s306 + $0xeb0] sm:$0xff]
      %v1213 = vld [vmem:[%s306 + $0xeb8] sm:$0xff]
      %v1214 = vld [vmem:[%s306 + $0xec0] sm:$0xff]
      %v1215 = vld [vmem:[%s306 + $0xec8] sm:$0xff]
      %v1216 = vld [vmem:[%s306 + $0xed0] sm:$0xff]
      %v1217 = vld [vmem:[%s306 + $0xed8] sm:$0xff]
      %v1218 = vld [vmem:[%s306 + $0xee0] sm:$0xff]
      %v1219 = vld [vmem:[%s306 + $0xee8] sm:$0xff]
      %v1220 = vld [vmem:[%s306 + $0xef0] sm:$0xff]
      %v1221 = vld [vmem:[%s306 + $0xef8] sm:$0xff]
      %v1222 = vld [vmem:[%s306 + $0xf00] sm:$0xff]
      %v1223 = vld [vmem:[%s306 + $0xf08] sm:$0xff]
      %v1224 = vld [vmem:[%s306 + $0xf10] sm:$0xff]
      %v1225 = vld [vmem:[%s306 + $0xf18] sm:$0xff]
      %v1226 = vld [vmem:[%s306 + $0xf20] sm:$0xff]
      %v1227 = vld [vmem:[%s306 + $0xf28] sm:$0xff]
      %v1228 = vld [vmem:[%s306 + $0xf30] sm:$0xff]
      %v1229 = vld [vmem:[%s306 + $0xf38] sm:$0xff]
      %v1230 = vld [vmem:[%s306 + $0xf40] sm:$0xff]
      %v1231 = vld [vmem:[%s306 + $0xf48] sm:$0xff]
      %v1232 = vld [vmem:[%s306 + $0xf50] sm:$0xff]
      %v1233 = vld [vmem:[%s306 + $0xf58] sm:$0xff]
      %v1234 = vld [vmem:[%s306 + $0xf60] sm:$0xff]
      %v1235 = vld [vmem:[%s306 + $0xf68] sm:$0xff]
      %v1236 = vld [vmem:[%s306 + $0xf70] sm:$0xff]
      %v1237 = vld [vmem:[%s306 + $0xf78] sm:$0xff]
      %v1238 = vld [vmem:[%s306 + $0xf80] sm:$0xff]
      %v1239 = vld [vmem:[%s306 + $0xf88] sm:$0xff]
      %v1240 = vld [vmem:[%s306 + $0xf90] sm:$0xff]
      %v1241 = vld [vmem:[%s306 + $0xf98] sm:$0xff]
      %v1242 = vld [vmem:[%s306 + $0xfa0] sm:$0xff]
      %v1243 = vld [vmem:[%s306 + $0xfa8] sm:$0xff]
      %v1244 = vld [vmem:[%s306 + $0xfb0] sm:$0xff]
      %v1245 = vld [vmem:[%s306 + $0xfb8] sm:$0xff]
      %v1246 = vld [vmem:[%s306 + $0xfc0] sm:$0xff]
      %v1247 = vld [vmem:[%s306 + $0xfc8] sm:$0xff]
      %v1248 = vld [vmem:[%s306 + $0xfd0] sm:$0xff]
      %v1249 = vld [vmem:[%s306 + $0xfd8] sm:$0xff]
      %v1250 = vld [vmem:[%s306 + $0xfe0] sm:$0xff]
      %v1251 = vld [vmem:[%s306 + $0xfe8] sm:$0xff]
      %v1252 = vld [vmem:[%s306 + $0xff0] sm:$0xff]
      %v1253 = vld [vmem:[%s306 + $0xff8] sm:$0xff]
      %v1254 = vld [vmem:[%s306 + $0x1000] sm:$0xff]
      %v1255 = vld [vmem:[%s306 + $0x1008] sm:$0xff]
      %v1256 = vld [vmem:[%s306 + $0x1010] sm:$0xff]
      %v1257 = vld [vmem:[%s306 + $0x1018] sm:$0xff]
      %v1258 = vld [vmem:[%s306 + $0x1020] sm:$0xff]
      %v1259 = vld [vmem:[%s306 + $0x1028] sm:$0xff]
      %v1260 = vld [vmem:[%s306 + $0x1030] sm:$0xff]
      %v1261 = vld [vmem:[%s306 + $0x1038] sm:$0xff]
      %v1262 = vld [vmem:[%s306 + $0x1040] sm:$0xff]
      %v1263 = vld [vmem:[%s306 + $0x1048] sm:$0xff]
      %v1264 = vld [vmem:[%s306 + $0x1050] sm:$0xff]
      %v1265 = vld [vmem:[%s306 + $0x1058] sm:$0xff]
      %v1266 = vld [vmem:[%s306 + $0x1060] sm:$0xff]
      %v1267 = vld [vmem:[%s306 + $0x1068] sm:$0xff]
      %v1268 = vld [vmem:[%s306 + $0x1070] sm:$0xff]
      %v1269 = vld [vmem:[%s306 + $0x1078] sm:$0xff]
      %v1270 = vld [vmem:[%s306 + $0x1080] sm:$0xff]
      %v1271 = vld [vmem:[%s306 + $0x1088] sm:$0xff]
      %v1272 = vld [vmem:[%s306 + $0x1090] sm:$0xff]
      %v1273 = vld [vmem:[%s306 + $0x1098] sm:$0xff]
      %v1274 = vld [vmem:[%s306 + $0x10a0] sm:$0xff]
      %v1275 = vld [vmem:[%s306 + $0x10a8] sm:$0xff]
      %v1276 = vld [vmem:[%s306 + $0x10b0] sm:$0xff]
      %v1277 = vld [vmem:[%s306 + $0x10b8] sm:$0xff]
      %v1278 = vld [vmem:[%s306 + $0x10c0] sm:$0xff]
      %v1279 = vld [vmem:[%s306 + $0x10c8] sm:$0xff]
      %v1280 = vld [vmem:[%s306 + $0x10d0] sm:$0xff]
      %v1281 = vld [vmem:[%s306 + $0x10d8] sm:$0xff]
      %v1282 = vld [vmem:[%s306 + $0x10e0] sm:$0xff]
      %v1283 = vld [vmem:[%s306 + $0x10e8] sm:$0xff]
      %v1284 = vld [vmem:[%s306 + $0x10f0] sm:$0xff]
      %v1285 = vld [vmem:[%s306 + $0x10f8] sm:$0xff]
      %v1286 = vld [vmem:[%s306 + $0x1100] sm:$0xff]
      %v1287 = vld [vmem:[%s306 + $0x1108] sm:$0xff]
      %v1288 = vld [vmem:[%s306 + $0x1110] sm:$0xff]
      %v1289 = vld [vmem:[%s306 + $0x1118] sm:$0xff]
      %v1290 = vld [vmem:[%s306 + $0x1120] sm:$0xff]
      %v1291 = vld [vmem:[%s306 + $0x1128] sm:$0xff]
      %v1292 = vld [vmem:[%s306 + $0x1130] sm:$0xff]
      %v1293 = vld [vmem:[%s306 + $0x1138] sm:$0xff]
      %v1294 = vld [vmem:[%s306 + $0x1140] sm:$0xff]
      %v1295 = vld [vmem:[%s306 + $0x1148] sm:$0xff]
      %v1296 = vld [vmem:[%s306 + $0x1150] sm:$0xff]
      %v1297 = vld [vmem:[%s306 + $0x1158] sm:$0xff]
      %v1298 = vld [vmem:[%s306 + $0x1160] sm:$0xff]
      %v1299 = vld [vmem:[%s306 + $0x1168] sm:$0xff]
      %v1300 = vld [vmem:[%s306 + $0x1170] sm:$0xff]
      %v1301 = vld [vmem:[%s306 + $0x1178] sm:$0xff]
      %v1302 = vld [vmem:[%s306 + $0x1180] sm:$0xff]
      %v1303 = vld [vmem:[%s306 + $0x1188] sm:$0xff]
      %v1304 = vld [vmem:[%s306 + $0x1190] sm:$0xff]
      %v1305 = vld [vmem:[%s306 + $0x1198] sm:$0xff]
      %v1306 = vld [vmem:[%s306 + $0x11a0] sm:$0xff]
      %v1307 = vld [vmem:[%s306 + $0x11a8] sm:$0xff]
      %v1308 = vld [vmem:[%s306 + $0x11b0] sm:$0xff]
      %v1309 = vld [vmem:[%s306 + $0x11b8] sm:$0xff]
      %v1310 = vld [vmem:[%s306 + $0x11c0] sm:$0xff]
      %v1311 = vld [vmem:[%s306 + $0x11c8] sm:$0xff]
      %v1312 = vld [vmem:[%s306 + $0x11d0] sm:$0xff]
      %v1313 = vld [vmem:[%s306 + $0x11d8] sm:$0xff]
      %v1314 = vld [vmem:[%s306 + $0x11e0] sm:$0xff]
      %v1315 = vld [vmem:[%s306 + $0x11e8] sm:$0xff]
      %v1316 = vld [vmem:[%s306 + $0x11f0] sm:$0xff]
      %v1317 = vld [vmem:[%s306 + $0x11f8] sm:$0xff]
      %v1318 = vld [vmem:[%s306 + $0x1200] sm:$0xff]
      %v1319 = vld [vmem:[%s306 + $0x1208] sm:$0xff]
      %v1320 = vld [vmem:[%s306 + $0x1210] sm:$0xff]
      %v1321 = vld [vmem:[%s306 + $0x1218] sm:$0xff]
      %v1322 = vld [vmem:[%s306 + $0x1220] sm:$0xff]
      %v1323 = vld [vmem:[%s306 + $0x1228] sm:$0xff]
      %v1324 = vld [vmem:[%s306 + $0x1230] sm:$0xff]
      %v1325 = vld [vmem:[%s306 + $0x1238] sm:$0xff]
      %v1326 = vld [vmem:[%s306 + $0x1240] sm:$0xff]
      %v1327 = vld [vmem:[%s306 + $0x1248] sm:$0xff]
      %v1328 = vld [vmem:[%s306 + $0x1250] sm:$0xff]
      %v1329 = vld [vmem:[%s306 + $0x1258] sm:$0xff]
      %v1330 = vld [vmem:[%s306 + $0x1260] sm:$0xff]
      %v1331 = vld [vmem:[%s306 + $0x1268] sm:$0xff]
      %v1332 = vld [vmem:[%s306 + $0x1270] sm:$0xff]
      %v1333 = vld [vmem:[%s306 + $0x1278] sm:$0xff]
      %v1334 = vld [vmem:[%s306 + $0x1280] sm:$0xff]
      %v1335 = vld [vmem:[%s306 + $0x1288] sm:$0xff]
      %v1336 = vld [vmem:[%s306 + $0x1290] sm:$0xff]
      %v1337 = vld [vmem:[%s306 + $0x1298] sm:$0xff]
      %v1338 = vld [vmem:[%s306 + $0x12a0] sm:$0xff]
      %v1339 = vld [vmem:[%s306 + $0x12a8] sm:$0xff]
      %v1340 = vld [vmem:[%s306 + $0x12b0] sm:$0xff]
      %v1341 = vld [vmem:[%s306 + $0x12b8] sm:$0xff]
      %v1342 = vld [vmem:[%s306 + $0x12c0] sm:$0xff]
      %v1343 = vld [vmem:[%s306 + $0x12c8] sm:$0xff]
      %v1344 = vld [vmem:[%s306 + $0x12d0] sm:$0xff]
      %v1345 = vld [vmem:[%s306 + $0x12d8] sm:$0xff]
      %v1346 = vld [vmem:[%s306 + $0x12e0] sm:$0xff]
      %v1347 = vld [vmem:[%s306 + $0x12e8] sm:$0xff]
      %v1348 = vld [vmem:[%s306 + $0x12f0] sm:$0xff]
      %v1349 = vld [vmem:[%s306 + $0x12f8] sm:$0xff]
      %v1350 = vld [vmem:[%s306 + $0x1300] sm:$0xff]
      %v1351 = vld [vmem:[%s306 + $0x1308] sm:$0xff]
      %v1352 = vld [vmem:[%s306 + $0x1310] sm:$0xff]
      %v1353 = vld [vmem:[%s306 + $0x1318] sm:$0xff]
      %v1354 = vld [vmem:[%s306 + $0x1320] sm:$0xff]
      %v1355 = vld [vmem:[%s306 + $0x1328] sm:$0xff]
      %v1356 = vld [vmem:[%s306 + $0x1330] sm:$0xff]
      %v1357 = vld [vmem:[%s306 + $0x1338] sm:$0xff]
      %v1358 = vld [vmem:[%s306 + $0x1340] sm:$0xff]
      %v1359 = vld [vmem:[%s306 + $0x1348] sm:$0xff]
      %v1360 = vld [vmem:[%s306 + $0x1350] sm:$0xff]
      %v1361 = vld [vmem:[%s306 + $0x1358] sm:$0xff]
      %v1362 = vld [vmem:[%s306 + $0x1360] sm:$0xff]
      %v1363 = vld [vmem:[%s306 + $0x1368] sm:$0xff]
      %v1364 = vld [vmem:[%s306 + $0x1370] sm:$0xff]
      %v1365 = vld [vmem:[%s306 + $0x1378] sm:$0xff]
      %v1366 = vld [vmem:[%s306 + $0x1380] sm:$0xff]
      %v1367 = vld [vmem:[%s306 + $0x1388] sm:$0xff]
      %v1368 = vld [vmem:[%s306 + $0x1390] sm:$0xff]
      %v1369 = vld [vmem:[%s306 + $0x1398] sm:$0xff]
      %v1370 = vld [vmem:[%s306 + $0x13a0] sm:$0xff]
      %v1371 = vld [vmem:[%s306 + $0x13a8] sm:$0xff]
      %v1372 = vld [vmem:[%s306 + $0x13b0] sm:$0xff]
      %v1373 = vld [vmem:[%s306 + $0x13b8] sm:$0xff]
      %v1374 = vld [vmem:[%s306 + $0x13c0] sm:$0xff]
      %v1375 = vld [vmem:[%s306 + $0x13c8] sm:$0xff]
      %v1376 = vld [vmem:[%s306 + $0x13d0] sm:$0xff]
      %v1377 = vld [vmem:[%s306 + $0x13d8] sm:$0xff]
      %v1378 = vld [vmem:[%s306 + $0x13e0] sm:$0xff]
      %v1379 = vld [vmem:[%s306 + $0x13e8] sm:$0xff]
      %v1380 = vld [vmem:[%s306 + $0x13f0] sm:$0xff]
      %v1381 = vld [vmem:[%s306 + $0x13f8] sm:$0xff]
      %v1382 = vld [vmem:[%s306 + $0x1400] sm:$0xff]
      %v1383 = vld [vmem:[%s306 + $0x1408] sm:$0xff]
      %v1384 = vld [vmem:[%s306 + $0x1410] sm:$0xff]
      %v1385 = vld [vmem:[%s306 + $0x1418] sm:$0xff]
      %v1386 = vld [vmem:[%s306 + $0x1420] sm:$0xff]
      %v1387 = vld [vmem:[%s306 + $0x1428] sm:$0xff]
      %v1388 = vld [vmem:[%s306 + $0x1430] sm:$0xff]
      %v1389 = vld [vmem:[%s306 + $0x1438] sm:$0xff]
      %v1390 = vld [vmem:[%s306 + $0x1440] sm:$0xff]
      %v1391 = vld [vmem:[%s306 + $0x1448] sm:$0xff]
      %v1392 = vld [vmem:[%s306 + $0x1450] sm:$0xff]
      %v1393 = vld [vmem:[%s306 + $0x1458] sm:$0xff]
      %v1394 = vld [vmem:[%s306 + $0x1460] sm:$0xff]
      %v1395 = vld [vmem:[%s306 + $0x1468] sm:$0xff]
      %v1396 = vld [vmem:[%s306 + $0x1470] sm:$0xff]
      %v1397 = vld [vmem:[%s306 + $0x1478] sm:$0xff]
      %v1398 = vld [vmem:[%s306 + $0x1480] sm:$0xff]
      %v1399 = vld [vmem:[%s306 + $0x1488] sm:$0xff]
      %v1400 = vld [vmem:[%s306 + $0x1490] sm:$0xff]
      %v1401 = vld [vmem:[%s306 + $0x1498] sm:$0xff]
      %v1402 = vld [vmem:[%s306 + $0x14a0] sm:$0xff]
      %v1403 = vld [vmem:[%s306 + $0x14a8] sm:$0xff]
      %v1404 = vld [vmem:[%s306 + $0x14b0] sm:$0xff]
      %v1405 = vld [vmem:[%s306 + $0x14b8] sm:$0xff]
      %v1406 = vld [vmem:[%s306 + $0x14c0] sm:$0xff]
      %v1407 = vld [vmem:[%s306 + $0x14c8] sm:$0xff]
      %v1408 = vld [vmem:[%s306 + $0x14d0] sm:$0xff]
      %v1409 = vld [vmem:[%s306 + $0x14d8] sm:$0xff]
      %v1410 = vld [vmem:[%s306 + $0x14e0] sm:$0xff]
      %v1411 = vld [vmem:[%s306 + $0x14e8] sm:$0xff]
      %v1412 = vld [vmem:[%s306 + $0x14f0] sm:$0xff]
      %v1413 = vld [vmem:[%s306 + $0x14f8] sm:$0xff]
      %v1414 = vld [vmem:[%s306 + $0x1500] sm:$0xff]
      %v1415 = vld [vmem:[%s306 + $0x1508] sm:$0xff]
      %v1416 = vld [vmem:[%s306 + $0x1510] sm:$0xff]
      %v1417 = vld [vmem:[%s306 + $0x1518] sm:$0xff]
      %v1418 = vld [vmem:[%s306 + $0x1520] sm:$0xff]
      %v1419 = vld [vmem:[%s306 + $0x1528] sm:$0xff]
      %v1420 = vld [vmem:[%s306 + $0x1530] sm:$0xff]
      %v1421 = vld [vmem:[%s306 + $0x1538] sm:$0xff]
      %v1422 = vld [vmem:[%s306 + $0x1540] sm:$0xff]
      %v1423 = vld [vmem:[%s306 + $0x1548] sm:$0xff]
      %v1424 = vld [vmem:[%s306 + $0x1550] sm:$0xff]
      %v1425 = vld [vmem:[%s306 + $0x1558] sm:$0xff]
      %v1426 = vld [vmem:[%s306 + $0x1560] sm:$0xff]
      %v1427 = vld [vmem:[%s306 + $0x1568] sm:$0xff]
      %v1428 = vld [vmem:[%s306 + $0x1570] sm:$0xff]
      %v1429 = vld [vmem:[%s306 + $0x1578] sm:$0xff]
      %v1430 = vld [vmem:[%s306 + $0x1580] sm:$0xff]
      %v1431 = vld [vmem:[%s306 + $0x1588] sm:$0xff]
      %v1432 = vld [vmem:[%s306 + $0x1590] sm:$0xff]
      %v1433 = vld [vmem:[%s306 + $0x1598] sm:$0xff]
      %v1434 = vld [vmem:[%s306 + $0x15a0] sm:$0xff]
      %v1435 = vld [vmem:[%s306 + $0x15a8] sm:$0xff]
      %v1436 = vld [vmem:[%s306 + $0x15b0] sm:$0xff]
      %v1437 = vld [vmem:[%s306 + $0x15b8] sm:$0xff]
      %v1438 = vld [vmem:[%s306 + $0x15c0] sm:$0xff]
      %v1439 = vld [vmem:[%s306 + $0x15c8] sm:$0xff]
      %v1440 = vld [vmem:[%s306 + $0x15d0] sm:$0xff]
      %v1441 = vld [vmem:[%s306 + $0x15d8] sm:$0xff]
      %v1442 = vld [vmem:[%s306 + $0x15e0] sm:$0xff]
      %v1443 = vld [vmem:[%s306 + $0x15e8] sm:$0xff]
      %v1444 = vld [vmem:[%s306 + $0x15f0] sm:$0xff]
      %v1445 = vld [vmem:[%s306 + $0x15f8] sm:$0xff]
      %v1446 = vld [vmem:[%s306 + $0x1600] sm:$0xff]
      %v1447 = vld [vmem:[%s306 + $0x1608] sm:$0xff]
      %v1448 = vld [vmem:[%s306 + $0x1610] sm:$0xff]
      %v1449 = vld [vmem:[%s306 + $0x1618] sm:$0xff]
      %v1450 = vld [vmem:[%s306 + $0x1620] sm:$0xff]
      %v1451 = vld [vmem:[%s306 + $0x1628] sm:$0xff]
      %v1452 = vld [vmem:[%s306 + $0x1630] sm:$0xff]
      %v1453 = vld [vmem:[%s306 + $0x1638] sm:$0xff]
      %v1454 = vld [vmem:[%s306 + $0x1640] sm:$0xff]
      %v1455 = vld [vmem:[%s306 + $0x1648] sm:$0xff]
      %v1456 = vld [vmem:[%s306 + $0x1650] sm:$0xff]
      %v1457 = vld [vmem:[%s306 + $0x1658] sm:$0xff]
      %v1458 = vld [vmem:[%s306 + $0x1660] sm:$0xff]
      %v1459 = vld [vmem:[%s306 + $0x1668] sm:$0xff]
      %v1460 = vld [vmem:[%s306 + $0x1670] sm:$0xff]
      %v1461 = vld [vmem:[%s306 + $0x1678] sm:$0xff]
      %v1462 = vld [vmem:[%s306 + $0x1680] sm:$0xff]
      %v1463 = vld [vmem:[%s306 + $0x1688] sm:$0xff]
      %v1464 = vld [vmem:[%s306 + $0x1690] sm:$0xff]
      %v1465 = vld [vmem:[%s306 + $0x1698] sm:$0xff]
      %v1466 = vld [vmem:[%s306 + $0x16a0] sm:$0xff]
      %v1467 = vld [vmem:[%s306 + $0x16a8] sm:$0xff]
      %v1468 = vld [vmem:[%s306 + $0x16b0] sm:$0xff]
      %v1469 = vld [vmem:[%s306 + $0x16b8] sm:$0xff]
      %v1470 = vld [vmem:[%s306 + $0x16c0] sm:$0xff]
      %v1471 = vld [vmem:[%s306 + $0x16c8] sm:$0xff]
      %v1472 = vld [vmem:[%s306 + $0x16d0] sm:$0xff]
      %v1473 = vld [vmem:[%s306 + $0x16d8] sm:$0xff]
      %v1474 = vld [vmem:[%s306 + $0x16e0] sm:$0xff]
      %v1475 = vld [vmem:[%s306 + $0x16e8] sm:$0xff]
      %v1476 = vld [vmem:[%s306 + $0x16f0] sm:$0xff]
      %v1477 = vld [vmem:[%s306 + $0x16f8] sm:$0xff]
      %v1478 = vld [vmem:[%s306 + $0x1700] sm:$0xff]
      %v1479 = vld [vmem:[%s306 + $0x1708] sm:$0xff]
      %v1480 = vld [vmem:[%s306 + $0x1710] sm:$0xff]
      %v1481 = vld [vmem:[%s306 + $0x1718] sm:$0xff]
      %v1482 = vld [vmem:[%s306 + $0x1720] sm:$0xff]
      %v1483 = vld [vmem:[%s306 + $0x1728] sm:$0xff]
      %v1484 = vld [vmem:[%s306 + $0x1730] sm:$0xff]
      %v1485 = vld [vmem:[%s306 + $0x1738] sm:$0xff]
      %v1486 = vld [vmem:[%s306 + $0x1740] sm:$0xff]
      %v1487 = vld [vmem:[%s306 + $0x1748] sm:$0xff]
      %v1488 = vld [vmem:[%s306 + $0x1750] sm:$0xff]
      %v1489 = vld [vmem:[%s306 + $0x1758] sm:$0xff]
      %v1490 = vld [vmem:[%s306 + $0x1760] sm:$0xff]
      %v1491 = vld [vmem:[%s306 + $0x1768] sm:$0xff]
      %v1492 = vld [vmem:[%s306 + $0x1770] sm:$0xff]
      %v1493 = vld [vmem:[%s306 + $0x1778] sm:$0xff]
      %v1494 = vld [vmem:[%s306 + $0x1780] sm:$0xff]
      %v1495 = vld [vmem:[%s306 + $0x1788] sm:$0xff]
      %v1496 = vld [vmem:[%s306 + $0x1790] sm:$0xff]
      %v1497 = vld [vmem:[%s306 + $0x1798] sm:$0xff]
      %v1498 = vld [vmem:[%s306 + $0x17a0] sm:$0xff]
      %v1499 = vld [vmem:[%s306 + $0x17a8] sm:$0xff]
      %v1500 = vld [vmem:[%s306 + $0x17b0] sm:$0xff]
      %v1501 = vld [vmem:[%s306 + $0x17b8] sm:$0xff]
      %v1502 = vld [vmem:[%s306 + $0x17c0] sm:$0xff]
      %v1503 = vld [vmem:[%s306 + $0x17c8] sm:$0xff]
      %v1504 = vld [vmem:[%s306 + $0x17d0] sm:$0xff]
      %v1505 = vld [vmem:[%s306 + $0x17d8] sm:$0xff]
      %v1506 = vld [vmem:[%s306 + $0x17e0] sm:$0xff]
      %v1507 = vld [vmem:[%s306 + $0x17e8] sm:$0xff]
      %v1508 = vld [vmem:[%s306 + $0x17f0] sm:$0xff]
      %v1509 = vld [vmem:[%s306 + $0x17f8] sm:$0xff]
      %v1510 = vld [vmem:[%s306 + $0x1800] sm:$0xff]
      %v1511 = vld [vmem:[%s306 + $0x1808] sm:$0xff]
      %v1512 = vld [vmem:[%s306 + $0x1810] sm:$0xff]
      %v1513 = vld [vmem:[%s306 + $0x1818] sm:$0xff]
      %v1514 = vld [vmem:[%s306 + $0x1820] sm:$0xff]
      %v1515 = vld [vmem:[%s306 + $0x1828] sm:$0xff]
      %v1516 = vld [vmem:[%s306 + $0x1830] sm:$0xff]
      %v1517 = vld [vmem:[%s306 + $0x1838] sm:$0xff]
      %v1518 = vld [vmem:[%s306 + $0x1840] sm:$0xff]
      %v1519 = vld [vmem:[%s306 + $0x1848] sm:$0xff]
      %v1520 = vld [vmem:[%s306 + $0x1850] sm:$0xff]
      %v1521 = vld [vmem:[%s306 + $0x1858] sm:$0xff]
      %v1522 = vld [vmem:[%s306 + $0x1860] sm:$0xff]
      %v1523 = vld [vmem:[%s306 + $0x1868] sm:$0xff]
      %v1524 = vld [vmem:[%s306 + $0x1870] sm:$0xff]
      %v1525 = vld [vmem:[%s306 + $0x1878] sm:$0xff]
      %v1526 = vld [vmem:[%s306 + $0x1880] sm:$0xff]
      %v1527 = vld [vmem:[%s306 + $0x1888] sm:$0xff]
      %v1528 = vld [vmem:[%s306 + $0x1890] sm:$0xff]
      %v1529 = vld [vmem:[%s306 + $0x1898] sm:$0xff]
      %v1530 = vld [vmem:[%s306 + $0x18a0] sm:$0xff]
      %v1531 = vld [vmem:[%s306 + $0x18a8] sm:$0xff]
      %v1532 = vld [vmem:[%s306 + $0x18b0] sm:$0xff]
      %v1533 = vld [vmem:[%s306 + $0x18b8] sm:$0xff]
      %v1534 = vld [vmem:[%s306 + $0x18c0] sm:$0xff]
      %v1535 = vld [vmem:[%s306 + $0x18c8] sm:$0xff]
      %v1536 = vld [vmem:[%s306 + $0x18d0] sm:$0xff]
      %v1537 = vld [vmem:[%s306 + $0x18d8] sm:$0xff]
      %v1538 = vld [vmem:[%s306 + $0x18e0] sm:$0xff]
      %v1539 = vld [vmem:[%s306 + $0x18e8] sm:$0xff]
      %v1540 = vld [vmem:[%s306 + $0x18f0] sm:$0xff]
      %v1541 = vld [vmem:[%s306 + $0x18f8] sm:$0xff]
      %v1542 = vld [vmem:[%s306 + $0x1900] sm:$0xff]
      %v1543 = vld [vmem:[%s306 + $0x1908] sm:$0xff]
      %v1544 = vld [vmem:[%s306 + $0x1910] sm:$0xff]
      %v1545 = vld [vmem:[%s306 + $0x1918] sm:$0xff]
      %v1546 = vld [vmem:[%s306 + $0x1920] sm:$0xff]
      %v1547 = vld [vmem:[%s306 + $0x1928] sm:$0xff]
      %v1548 = vld [vmem:[%s306 + $0x1930] sm:$0xff]
      %v1549 = vld [vmem:[%s306 + $0x1938] sm:$0xff]
      %v1550 = vld [vmem:[%s306 + $0x1940] sm:$0xff]
      %v1551 = vld [vmem:[%s306 + $0x1948] sm:$0xff]
      %v1552 = vld [vmem:[%s306 + $0x1950] sm:$0xff]
      %v1553 = vld [vmem:[%s306 + $0x1958] sm:$0xff]
      %v1554 = vld [vmem:[%s306 + $0x1960] sm:$0xff]
      %v1555 = vld [vmem:[%s306 + $0x1968] sm:$0xff]
      %v1556 = vld [vmem:[%s306 + $0x1970] sm:$0xff]
      %v1557 = vld [vmem:[%s306 + $0x1978] sm:$0xff]
      %v1558 = vld [vmem:[%s306 + $0x1980] sm:$0xff]
      %v1559 = vld [vmem:[%s306 + $0x1988] sm:$0xff]
      %v1560 = vld [vmem:[%s306 + $0x1990] sm:$0xff]
      %v1561 = vld [vmem:[%s306 + $0x1998] sm:$0xff]
      %v1562 = vld [vmem:[%s306 + $0x19a0] sm:$0xff]
      %v1563 = vld [vmem:[%s306 + $0x19a8] sm:$0xff]
      %v1564 = vld [vmem:[%s306 + $0x19b0] sm:$0xff]
      %v1565 = vld [vmem:[%s306 + $0x19b8] sm:$0xff]
      %v1566 = vld [vmem:[%s306 + $0x19c0] sm:$0xff]
      %v1567 = vld [vmem:[%s306 + $0x19c8] sm:$0xff]
      %v1568 = vld [vmem:[%s306 + $0x19d0] sm:$0xff]
      %v1569 = vld [vmem:[%s306 + $0x19d8] sm:$0xff]
      %v1570 = vld [vmem:[%s306 + $0x19e0] sm:$0xff]
      %v1571 = vld [vmem:[%s306 + $0x19e8] sm:$0xff]
      %v1572 = vld [vmem:[%s306 + $0x19f0] sm:$0xff]
      %v1573 = vld [vmem:[%s306 + $0x19f8] sm:$0xff]
      %v1574 = vld [vmem:[%s306 + $0x1a00] sm:$0xff]
      %v1575 = vld [vmem:[%s306 + $0x1a08] sm:$0xff]
      %v1576 = vld [vmem:[%s306 + $0x1a10] sm:$0xff]
      %v1577 = vld [vmem:[%s306 + $0x1a18] sm:$0xff]
      %v1578 = vld [vmem:[%s306 + $0x1a20] sm:$0xff]
      %v1579 = vld [vmem:[%s306 + $0x1a28] sm:$0xff]
      %v1580 = vld [vmem:[%s306 + $0x1a30] sm:$0xff]
      %v1581 = vld [vmem:[%s306 + $0x1a38] sm:$0xff]
      %v1582 = vld [vmem:[%s306 + $0x1a40] sm:$0xff]
      %v1583 = vld [vmem:[%s306 + $0x1a48] sm:$0xff]
      %v1584 = vld [vmem:[%s306 + $0x1a50] sm:$0xff]
      %v1585 = vld [vmem:[%s306 + $0x1a58] sm:$0xff]
      %v1586 = vld [vmem:[%s306 + $0x1a60] sm:$0xff]
      %v1587 = vld [vmem:[%s306 + $0x1a68] sm:$0xff]
      %v1588 = vld [vmem:[%s306 + $0x1a70] sm:$0xff]
      %v1589 = vld [vmem:[%s306 + $0x1a78] sm:$0xff]
      %v1590 = vld [vmem:[%s306 + $0x1a80] sm:$0xff]
      %v1591 = vld [vmem:[%s306 + $0x1a88] sm:$0xff]
      %v1592 = vld [vmem:[%s306 + $0x1a90] sm:$0xff]
      %v1593 = vld [vmem:[%s306 + $0x1a98] sm:$0xff]
      %v1594 = vld [vmem:[%s306 + $0x1aa0] sm:$0xff]
      %v1595 = vld [vmem:[%s306 + $0x1aa8] sm:$0xff]
      %v1596 = vld [vmem:[%s306 + $0x1ab0] sm:$0xff]
      %v1597 = vld [vmem:[%s306 + $0x1ab8] sm:$0xff]
      %v1598 = vld [vmem:[%s306 + $0x1ac0] sm:$0xff]
      %v1599 = vld [vmem:[%s306 + $0x1ac8] sm:$0xff]
      %v1600 = vld [vmem:[%s306 + $0x1ad0] sm:$0xff]
      %v1601 = vld [vmem:[%s306 + $0x1ad8] sm:$0xff]
      %v1602 = vld [vmem:[%s306 + $0x1ae0] sm:$0xff]
      %v1603 = vld [vmem:[%s306 + $0x1ae8] sm:$0xff]
      %v1604 = vld [vmem:[%s306 + $0x1af0] sm:$0xff]
      %v1605 = vld [vmem:[%s306 + $0x1af8] sm:$0xff]
      %v1606 = vld [vmem:[%s306 + $0x1b00] sm:$0xff]
      %v1607 = vld [vmem:[%s306 + $0x1b08] sm:$0xff]
      %v1608 = vld [vmem:[%s306 + $0x1b10] sm:$0xff]
      %v1609 = vld [vmem:[%s306 + $0x1b18] sm:$0xff]
      %v1610 = vld [vmem:[%s306 + $0x1b20] sm:$0xff]
      %v1611 = vld [vmem:[%s306 + $0x1b28] sm:$0xff]
      %v1612 = vld [vmem:[%s306 + $0x1b30] sm:$0xff]
      %v1613 = vld [vmem:[%s306 + $0x1b38] sm:$0xff]
      %v1614 = vld [vmem:[%s306 + $0x1b40] sm:$0xff]
      %v1615 = vld [vmem:[%s306 + $0x1b48] sm:$0xff]
      %v1616 = vld [vmem:[%s306 + $0x1b50] sm:$0xff]
      %v1617 = vld [vmem:[%s306 + $0x1b58] sm:$0xff]
      %v1618 = vld [vmem:[%s306 + $0x1b60] sm:$0xff]
      %v1619 = vld [vmem:[%s306 + $0x1b68] sm:$0xff]
      %v1620 = vld [vmem:[%s306 + $0x1b70] sm:$0xff]
      %v1621 = vld [vmem:[%s306 + $0x1b78] sm:$0xff]
      %v1622 = vld [vmem:[%s306 + $0x1b80] sm:$0xff]
      %v1623 = vld [vmem:[%s306 + $0x1b88] sm:$0xff]
      %v1624 = vld [vmem:[%s306 + $0x1b90] sm:$0xff]
      %v1625 = vld [vmem:[%s306 + $0x1b98] sm:$0xff]
      %v1626 = vld [vmem:[%s306 + $0x1ba0] sm:$0xff]
      %v1627 = vld [vmem:[%s306 + $0x1ba8] sm:$0xff]
      %v1628 = vld [vmem:[%s306 + $0x1bb0] sm:$0xff]
      %v1629 = vld [vmem:[%s306 + $0x1bb8] sm:$0xff]
      %v1630 = vld [vmem:[%s306 + $0x1bc0] sm:$0xff]
      %v1631 = vld [vmem:[%s306 + $0x1bc8] sm:$0xff]
      %v1632 = vld [vmem:[%s306 + $0x1bd0] sm:$0xff]
      %v1633 = vld [vmem:[%s306 + $0x1bd8] sm:$0xff]
      %v1634 = vld [vmem:[%s306 + $0x1be0] sm:$0xff]
      %v1635 = vld [vmem:[%s306 + $0x1be8] sm:$0xff]
      %v1636 = vld [vmem:[%s306 + $0x1bf0] sm:$0xff]
      %v1637 = vld [vmem:[%s306 + $0x1bf8] sm:$0xff]
      %v1638 = vld [vmem:[%s306 + $0x1c00] sm:$0xff]
      %v1639 = vld [vmem:[%s306 + $0x1c08] sm:$0xff]
      %v1640 = vld [vmem:[%s306 + $0x1c10] sm:$0xff]
      %v1641 = vld [vmem:[%s306 + $0x1c18] sm:$0xff]
      %v1642 = vld [vmem:[%s306 + $0x1c20] sm:$0xff]
      %v1643 = vld [vmem:[%s306 + $0x1c28] sm:$0xff]
      %v1644 = vld [vmem:[%s306 + $0x1c30] sm:$0xff]
      %v1645 = vld [vmem:[%s306 + $0x1c38] sm:$0xff]
      %v1646 = vld [vmem:[%s306 + $0x1c40] sm:$0xff]
      %v1647 = vld [vmem:[%s306 + $0x1c48] sm:$0xff]
      %v1648 = vld [vmem:[%s306 + $0x1c50] sm:$0xff]
      %v1649 = vld [vmem:[%s306 + $0x1c58] sm:$0xff]
      %v1650 = vld [vmem:[%s306 + $0x1c60] sm:$0xff]
      %v1651 = vld [vmem:[%s306 + $0x1c68] sm:$0xff]
      %v1652 = vld [vmem:[%s306 + $0x1c70] sm:$0xff]
      %v1653 = vld [vmem:[%s306 + $0x1c78] sm:$0xff]
      %v1654 = vld [vmem:[%s306 + $0x1c80] sm:$0xff]
      %v1655 = vld [vmem:[%s306 + $0x1c88] sm:$0xff]
      %v1656 = vld [vmem:[%s306 + $0x1c90] sm:$0xff]
      %v1657 = vld [vmem:[%s306 + $0x1c98] sm:$0xff]
      %v1658 = vld [vmem:[%s306 + $0x1ca0] sm:$0xff]
      %v1659 = vld [vmem:[%s306 + $0x1ca8] sm:$0xff]
      %v1660 = vld [vmem:[%s306 + $0x1cb0] sm:$0xff]
      %v1661 = vld [vmem:[%s306 + $0x1cb8] sm:$0xff]
      %v1662 = vld [vmem:[%s306 + $0x1cc0] sm:$0xff]
      %v1663 = vld [vmem:[%s306 + $0x1cc8] sm:$0xff]
      %v1664 = vld [vmem:[%s306 + $0x1cd0] sm:$0xff]
      %v1665 = vld [vmem:[%s306 + $0x1cd8] sm:$0xff]
      %v1666 = vld [vmem:[%s306 + $0x1ce0] sm:$0xff]
      %v1667 = vld [vmem:[%s306 + $0x1ce8] sm:$0xff]
      %v1668 = vld [vmem:[%s306 + $0x1cf0] sm:$0xff]
      %v1669 = vld [vmem:[%s306 + $0x1cf8] sm:$0xff]
      %v1670 = vld [vmem:[%s306 + $0x1d00] sm:$0xff]
      %v1671 = vld [vmem:[%s306 + $0x1d08] sm:$0xff]
      %v1672 = vld [vmem:[%s306 + $0x1d10] sm:$0xff]
      %v1673 = vld [vmem:[%s306 + $0x1d18] sm:$0xff]
      %v1674 = vld [vmem:[%s306 + $0x1d20] sm:$0xff]
      %v1675 = vld [vmem:[%s306 + $0x1d28] sm:$0xff]
      %v1676 = vld [vmem:[%s306 + $0x1d30] sm:$0xff]
      %v1677 = vld [vmem:[%s306 + $0x1d38] sm:$0xff]
      %v1678 = vld [vmem:[%s306 + $0x1d40] sm:$0xff]
      %v1679 = vld [vmem:[%s306 + $0x1d48] sm:$0xff]
      %v1680 = vld [vmem:[%s306 + $0x1d50] sm:$0xff]
      %v1681 = vld [vmem:[%s306 + $0x1d58] sm:$0xff]
      %v1682 = vld [vmem:[%s306 + $0x1d60] sm:$0xff]
      %v1683 = vld [vmem:[%s306 + $0x1d68] sm:$0xff]
      %v1684 = vld [vmem:[%s306 + $0x1d70] sm:$0xff]
      %v1685 = vld [vmem:[%s306 + $0x1d78] sm:$0xff]
      %v1686 = vld [vmem:[%s306 + $0x1d80] sm:$0xff]
      %v1687 = vld [vmem:[%s306 + $0x1d88] sm:$0xff]
      %v1688 = vld [vmem:[%s306 + $0x1d90] sm:$0xff]
      %v1689 = vld [vmem:[%s306 + $0x1d98] sm:$0xff]
      %v1690 = vld [vmem:[%s306 + $0x1da0] sm:$0xff]
      %v1691 = vld [vmem:[%s306 + $0x1da8] sm:$0xff]
      %v1692 = vld [vmem:[%s306 + $0x1db0] sm:$0xff]
      %v1693 = vld [vmem:[%s306 + $0x1db8] sm:$0xff]
      %v1694 = vld [vmem:[%s306 + $0x1dc0] sm:$0xff]
      %v1695 = vld [vmem:[%s306 + $0x1dc8] sm:$0xff]
      %v1696 = vld [vmem:[%s306 + $0x1dd0] sm:$0xff]
      %v1697 = vld [vmem:[%s306 + $0x1dd8] sm:$0xff]
      %v1698 = vld [vmem:[%s306 + $0x1de0] sm:$0xff]
      %v1699 = vld [vmem:[%s306 + $0x1de8] sm:$0xff]
      %v1700 = vld [vmem:[%s306 + $0x1df0] sm:$0xff]
      %v1701 = vld [vmem:[%s306 + $0x1df8] sm:$0xff]
      %v1702 = vld [vmem:[%s306 + $0x1e00] sm:$0xff]
      %v1703 = vld [vmem:[%s306 + $0x1e08] sm:$0xff]
      %v1704 = vld [vmem:[%s306 + $0x1e10] sm:$0xff]
      %v1705 = vld [vmem:[%s306 + $0x1e18] sm:$0xff]
      %v1706 = vld [vmem:[%s306 + $0x1e20] sm:$0xff]
      %v1707 = vld [vmem:[%s306 + $0x1e28] sm:$0xff]
      %v1708 = vld [vmem:[%s306 + $0x1e30] sm:$0xff]
      %v1709 = vld [vmem:[%s306 + $0x1e38] sm:$0xff]
      %v1710 = vld [vmem:[%s306 + $0x1e40] sm:$0xff]
      %v1711 = vld [vmem:[%s306 + $0x1e48] sm:$0xff]
      %v1712 = vld [vmem:[%s306 + $0x1e50] sm:$0xff]
      %v1713 = vld [vmem:[%s306 + $0x1e58] sm:$0xff]
      %v1714 = vld [vmem:[%s306 + $0x1e60] sm:$0xff]
      %v1715 = vld [vmem:[%s306 + $0x1e68] sm:$0xff]
      %v1716 = vld [vmem:[%s306 + $0x1e70] sm:$0xff]
      %v1717 = vld [vmem:[%s306 + $0x1e78] sm:$0xff]
      %v1718 = vld [vmem:[%s306 + $0x1e80] sm:$0xff]
      %v1719 = vld [vmem:[%s306 + $0x1e88] sm:$0xff]
      %v1720 = vld [vmem:[%s306 + $0x1e90] sm:$0xff]
      %v1721 = vld [vmem:[%s306 + $0x1e98] sm:$0xff]
      %v1722 = vld [vmem:[%s306 + $0x1ea0] sm:$0xff]
      %v1723 = vld [vmem:[%s306 + $0x1ea8] sm:$0xff]
      %v1724 = vld [vmem:[%s306 + $0x1eb0] sm:$0xff]
      %v1725 = vld [vmem:[%s306 + $0x1eb8] sm:$0xff]
      %v1726 = vld [vmem:[%s306 + $0x1ec0] sm:$0xff]
      %v1727 = vld [vmem:[%s306 + $0x1ec8] sm:$0xff]
      %v1728 = vld [vmem:[%s306 + $0x1ed0] sm:$0xff]
      %v1729 = vld [vmem:[%s306 + $0x1ed8] sm:$0xff]
      %v1730 = vld [vmem:[%s306 + $0x1ee0] sm:$0xff]
      %v1731 = vld [vmem:[%s306 + $0x1ee8] sm:$0xff]
      %v1732 = vld [vmem:[%s306 + $0x1ef0] sm:$0xff]
      %v1733 = vld [vmem:[%s306 + $0x1ef8] sm:$0xff]
      %v1734 = vld [vmem:[%s306 + $0x1f00] sm:$0xff]
      %v1735 = vld [vmem:[%s306 + $0x1f08] sm:$0xff]
      %v1736 = vld [vmem:[%s306 + $0x1f10] sm:$0xff]
      %v1737 = vld [vmem:[%s306 + $0x1f18] sm:$0xff]
      %v1738 = vld [vmem:[%s306 + $0x1f20] sm:$0xff]
      %v1739 = vld [vmem:[%s306 + $0x1f28] sm:$0xff]
      %v1740 = vld [vmem:[%s306 + $0x1f30] sm:$0xff]
      %v1741 = vld [vmem:[%s306 + $0x1f38] sm:$0xff]
      %v1742 = vld [vmem:[%s306 + $0x1f40] sm:$0xff]
      %v1743 = vld [vmem:[%s306 + $0x1f48] sm:$0xff]
      %v1744 = vld [vmem:[%s306 + $0x1f50] sm:$0xff]
      %v1745 = vld [vmem:[%s306 + $0x1f58] sm:$0xff]
      %v1746 = vld [vmem:[%s306 + $0x1f60] sm:$0xff]
      %v1747 = vld [vmem:[%s306 + $0x1f68] sm:$0xff]
      %v1748 = vld [vmem:[%s306 + $0x1f70] sm:$0xff]
      %v1749 = vld [vmem:[%s306 + $0x1f78] sm:$0xff]
      %v1750 = vld [vmem:[%s306 + $0x1f80] sm:$0xff]
      %v1751 = vld [vmem:[%s306 + $0x1f88] sm:$0xff]
      %v1752 = vld [vmem:[%s306 + $0x1f90] sm:$0xff]
      %v1753 = vld [vmem:[%s306 + $0x1f98] sm:$0xff]
      %v1754 = vld [vmem:[%s306 + $0x1fa0] sm:$0xff]
      %v1755 = vld [vmem:[%s306 + $0x1fa8] sm:$0xff]
      %v1756 = vld [vmem:[%s306 + $0x1fb0] sm:$0xff]
      %v1757 = vld [vmem:[%s306 + $0x1fb8] sm:$0xff]
      %v1758 = vld [vmem:[%s306 + $0x1fc0] sm:$0xff]
      %v1759 = vld [vmem:[%s306 + $0x1fc8] sm:$0xff]
      %v1760 = vld [vmem:[%s306 + $0x1fd0] sm:$0xff]
      %v1761 = vld [vmem:[%s306 + $0x1fd8] sm:$0xff]
      %v1762 = vld [vmem:[%s306 + $0x1fe0] sm:$0xff]
      %v1763 = vld [vmem:[%s306 + $0x1fe8] sm:$0xff]
      %v1764 = vld [vmem:[%s306 + $0x1ff0] sm:$0xff]
      %v1765 = vld [vmem:[%s306 + $0x1ff8] sm:$0xff]
      %v2790 = vunpack.c.l.b16 %v742
      %v2791 = vunpack.c.h.b16 %v742
      %v2792 = vunpack.c.l.b16 %v743
      %v2793 = vunpack.c.h.b16 %v743
      %v2794 = vunpack.c.l.b16 %v744
      %v2795 = vunpack.c.h.b16 %v744
      %v2796 = vunpack.c.l.b16 %v745
      %v2797 = vunpack.c.h.b16 %v745
      %v2798 = vunpack.c.l.b16 %v746
      %v2799 = vunpack.c.h.b16 %v746
      %v2800 = vunpack.c.l.b16 %v747
      %v2801 = vunpack.c.h.b16 %v747
      %v2802 = vunpack.c.l.b16 %v748
      %v2803 = vunpack.c.h.b16 %v748
      %v2804 = vunpack.c.l.b16 %v749
      %v2805 = vunpack.c.h.b16 %v749
      %v2806 = vunpack.c.l.b16 %v750
      %v2807 = vunpack.c.h.b16 %v750
      %v2808 = vunpack.c.l.b16 %v751
      %v2809 = vunpack.c.h.b16 %v751
      %v2810 = vunpack.c.l.b16 %v752
      %v2811 = vunpack.c.h.b16 %v752
      %v2812 = vunpack.c.l.b16 %v753
      %v2813 = vunpack.c.h.b16 %v753
      %v2814 = vunpack.c.l.b16 %v754
      %v2815 = vunpack.c.h.b16 %v754
      %v2816 = vunpack.c.l.b16 %v755
      %v2817 = vunpack.c.h.b16 %v755
      %v2818 = vunpack.c.l.b16 %v756
      %v2819 = vunpack.c.h.b16 %v756
      %v2820 = vunpack.c.l.b16 %v757
      %v2821 = vunpack.c.h.b16 %v757
      %v2822 = vunpack.c.l.b16 %v758
      %v2823 = vunpack.c.h.b16 %v758
      %v2824 = vunpack.c.l.b16 %v759
      %v2825 = vunpack.c.h.b16 %v759
      %v2826 = vunpack.c.l.b16 %v760
      %v2827 = vunpack.c.h.b16 %v760
      %v2828 = vunpack.c.l.b16 %v761
      %v2829 = vunpack.c.h.b16 %v761
      %v2830 = vunpack.c.l.b16 %v762
      %v2831 = vunpack.c.h.b16 %v762
      %v2832 = vunpack.c.l.b16 %v763
      %v2833 = vunpack.c.h.b16 %v763
      %v2834 = vunpack.c.l.b16 %v764
      %v2835 = vunpack.c.h.b16 %v764
      %v2836 = vunpack.c.l.b16 %v765
      %v2837 = vunpack.c.h.b16 %v765
      %v2838 = vunpack.c.l.b16 %v766
      %v2839 = vunpack.c.h.b16 %v766
      %v2840 = vunpack.c.l.b16 %v767
      %v2841 = vunpack.c.h.b16 %v767
      %v2842 = vunpack.c.l.b16 %v768
      %v2843 = vunpack.c.h.b16 %v768
      %v2844 = vunpack.c.l.b16 %v769
      %v2845 = vunpack.c.h.b16 %v769
      %v2846 = vunpack.c.l.b16 %v770
      %v2847 = vunpack.c.h.b16 %v770
      %v2848 = vunpack.c.l.b16 %v771
      %v2849 = vunpack.c.h.b16 %v771
      %v2850 = vunpack.c.l.b16 %v772
      %v2851 = vunpack.c.h.b16 %v772
      %v2852 = vunpack.c.l.b16 %v773
      %v2853 = vunpack.c.h.b16 %v773
      %v2854 = vunpack.c.l.b16 %v774
      %v2855 = vunpack.c.h.b16 %v774
      %v2856 = vunpack.c.l.b16 %v775
      %v2857 = vunpack.c.h.b16 %v775
      %v2858 = vunpack.c.l.b16 %v776
      %v2859 = vunpack.c.h.b16 %v776
      %v2860 = vunpack.c.l.b16 %v777
      %v2861 = vunpack.c.h.b16 %v777
      %v2862 = vunpack.c.l.b16 %v778
      %v2863 = vunpack.c.h.b16 %v778
      %v2864 = vunpack.c.l.b16 %v779
      %v2865 = vunpack.c.h.b16 %v779
      %v2866 = vunpack.c.l.b16 %v780
      %v2867 = vunpack.c.h.b16 %v780
      %v2868 = vunpack.c.l.b16 %v781
      %v2869 = vunpack.c.h.b16 %v781
      %v2870 = vunpack.c.l.b16 %v782
      %v2871 = vunpack.c.h.b16 %v782
      %v2872 = vunpack.c.l.b16 %v783
      %v2873 = vunpack.c.h.b16 %v783
      %v2874 = vunpack.c.l.b16 %v784
      %v2875 = vunpack.c.h.b16 %v784
      %v2876 = vunpack.c.l.b16 %v785
      %v2877 = vunpack.c.h.b16 %v785
      %v2878 = vunpack.c.l.b16 %v786
      %v2879 = vunpack.c.h.b16 %v786
      %v2880 = vunpack.c.l.b16 %v787
      %v2881 = vunpack.c.h.b16 %v787
      %v2882 = vunpack.c.l.b16 %v788
      %v2883 = vunpack.c.h.b16 %v788
      %v2884 = vunpack.c.l.b16 %v789
      %v2885 = vunpack.c.h.b16 %v789
      %v2886 = vunpack.c.l.b16 %v790
      %v2887 = vunpack.c.h.b16 %v790
      %v2888 = vunpack.c.l.b16 %v791
      %v2889 = vunpack.c.h.b16 %v791
      %v2890 = vunpack.c.l.b16 %v792
      %v2891 = vunpack.c.h.b16 %v792
      %v2892 = vunpack.c.l.b16 %v793
      %v2893 = vunpack.c.h.b16 %v793
      %v2894 = vunpack.c.l.b16 %v794
      %v2895 = vunpack.c.h.b16 %v794
      %v2896 = vunpack.c.l.b16 %v795
      %v2897 = vunpack.c.h.b16 %v795
      %v2898 = vunpack.c.l.b16 %v796
      %v2899 = vunpack.c.h.b16 %v796
      %v2900 = vunpack.c.l.b16 %v797
      %v2901 = vunpack.c.h.b16 %v797
      %v2902 = vunpack.c.l.b16 %v798
      %v2903 = vunpack.c.h.b16 %v798
      %v2904 = vunpack.c.l.b16 %v799
      %v2905 = vunpack.c.h.b16 %v799
      %v2906 = vunpack.c.l.b16 %v800
      %v2907 = vunpack.c.h.b16 %v800
      %v2908 = vunpack.c.l.b16 %v801
      %v2909 = vunpack.c.h.b16 %v801
      %v2910 = vunpack.c.l.b16 %v802
      %v2911 = vunpack.c.h.b16 %v802
      %v2912 = vunpack.c.l.b16 %v803
      %v2913 = vunpack.c.h.b16 %v803
      %v2914 = vunpack.c.l.b16 %v804
      %v2915 = vunpack.c.h.b16 %v804
      %v2916 = vunpack.c.l.b16 %v805
      %v2917 = vunpack.c.h.b16 %v805
      %v2918 = vunpack.c.l.b16 %v806
      %v2919 = vunpack.c.h.b16 %v806
      %v2920 = vunpack.c.l.b16 %v807
      %v2921 = vunpack.c.h.b16 %v807
      %v2922 = vunpack.c.l.b16 %v808
      %v2923 = vunpack.c.h.b16 %v808
      %v2924 = vunpack.c.l.b16 %v809
      %v2925 = vunpack.c.h.b16 %v809
      %v2926 = vunpack.c.l.b16 %v810
      %v2927 = vunpack.c.h.b16 %v810
      %v2928 = vunpack.c.l.b16 %v811
      %v2929 = vunpack.c.h.b16 %v811
      %v2930 = vunpack.c.l.b16 %v812
      %v2931 = vunpack.c.h.b16 %v812
      %v2932 = vunpack.c.l.b16 %v813
      %v2933 = vunpack.c.h.b16 %v813
      %v2934 = vunpack.c.l.b16 %v814
      %v2935 = vunpack.c.h.b16 %v814
      %v2936 = vunpack.c.l.b16 %v815
      %v2937 = vunpack.c.h.b16 %v815
      %v2938 = vunpack.c.l.b16 %v816
      %v2939 = vunpack.c.h.b16 %v816
      %v2940 = vunpack.c.l.b16 %v817
      %v2941 = vunpack.c.h.b16 %v817
      %v2942 = vunpack.c.l.b16 %v818
      %v2943 = vunpack.c.h.b16 %v818
      %v2944 = vunpack.c.l.b16 %v819
      %v2945 = vunpack.c.h.b16 %v819
      %v2946 = vunpack.c.l.b16 %v820
      %v2947 = vunpack.c.h.b16 %v820
      %v2948 = vunpack.c.l.b16 %v821
      %v2949 = vunpack.c.h.b16 %v821
      %v2950 = vunpack.c.l.b16 %v822
      %v2951 = vunpack.c.h.b16 %v822
      %v2952 = vunpack.c.l.b16 %v823
      %v2953 = vunpack.c.h.b16 %v823
      %v2954 = vunpack.c.l.b16 %v824
      %v2955 = vunpack.c.h.b16 %v824
      %v2956 = vunpack.c.l.b16 %v825
      %v2957 = vunpack.c.h.b16 %v825
      %v2958 = vunpack.c.l.b16 %v826
      %v2959 = vunpack.c.h.b16 %v826
      %v2960 = vunpack.c.l.b16 %v827
      %v2961 = vunpack.c.h.b16 %v827
      %v2962 = vunpack.c.l.b16 %v828
      %v2963 = vunpack.c.h.b16 %v828
      %v2964 = vunpack.c.l.b16 %v829
      %v2965 = vunpack.c.h.b16 %v829
      %v2966 = vunpack.c.l.b16 %v830
      %v2967 = vunpack.c.h.b16 %v830
      %v2968 = vunpack.c.l.b16 %v831
      %v2969 = vunpack.c.h.b16 %v831
      %v2970 = vunpack.c.l.b16 %v832
      %v2971 = vunpack.c.h.b16 %v832
      %v2972 = vunpack.c.l.b16 %v833
      %v2973 = vunpack.c.h.b16 %v833
      %v2974 = vunpack.c.l.b16 %v834
      %v2975 = vunpack.c.h.b16 %v834
      %v2976 = vunpack.c.l.b16 %v835
      %v2977 = vunpack.c.h.b16 %v835
      %v2978 = vunpack.c.l.b16 %v836
      %v2979 = vunpack.c.h.b16 %v836
      %v2980 = vunpack.c.l.b16 %v837
      %v2981 = vunpack.c.h.b16 %v837
      %v2982 = vunpack.c.l.b16 %v838
      %v2983 = vunpack.c.h.b16 %v838
      %v2984 = vunpack.c.l.b16 %v839
      %v2985 = vunpack.c.h.b16 %v839
      %v2986 = vunpack.c.l.b16 %v840
      %v2987 = vunpack.c.h.b16 %v840
      %v2988 = vunpack.c.l.b16 %v841
      %v2989 = vunpack.c.h.b16 %v841
      %v2990 = vunpack.c.l.b16 %v842
      %v2991 = vunpack.c.h.b16 %v842
      %v2992 = vunpack.c.l.b16 %v843
      %v2993 = vunpack.c.h.b16 %v843
      %v2994 = vunpack.c.l.b16 %v844
      %v2995 = vunpack.c.h.b16 %v844
      %v2996 = vunpack.c.l.b16 %v845
      %v2997 = vunpack.c.h.b16 %v845
      %v2998 = vunpack.c.l.b16 %v846
      %v2999 = vunpack.c.h.b16 %v846
      %v3000 = vunpack.c.l.b16 %v847
      %v3001 = vunpack.c.h.b16 %v847
      %v3002 = vunpack.c.l.b16 %v848
      %v3003 = vunpack.c.h.b16 %v848
      %v3004 = vunpack.c.l.b16 %v849
      %v3005 = vunpack.c.h.b16 %v849
      %v3006 = vunpack.c.l.b16 %v850
      %v3007 = vunpack.c.h.b16 %v850
      %v3008 = vunpack.c.l.b16 %v851
      %v3009 = vunpack.c.h.b16 %v851
      %v3010 = vunpack.c.l.b16 %v852
      %v3011 = vunpack.c.h.b16 %v852
      %v3012 = vunpack.c.l.b16 %v853
      %v3013 = vunpack.c.h.b16 %v853
      %v3014 = vunpack.c.l.b16 %v854
      %v3015 = vunpack.c.h.b16 %v854
      %v3016 = vunpack.c.l.b16 %v855
      %v3017 = vunpack.c.h.b16 %v855
      %v3018 = vunpack.c.l.b16 %v856
      %v3019 = vunpack.c.h.b16 %v856
      %v3020 = vunpack.c.l.b16 %v857
      %v3021 = vunpack.c.h.b16 %v857
      %v3022 = vunpack.c.l.b16 %v858
      %v3023 = vunpack.c.h.b16 %v858
      %v3024 = vunpack.c.l.b16 %v859
      %v3025 = vunpack.c.h.b16 %v859
      %v3026 = vunpack.c.l.b16 %v860
      %v3027 = vunpack.c.h.b16 %v860
      %v3028 = vunpack.c.l.b16 %v861
      %v3029 = vunpack.c.h.b16 %v861
      %v3030 = vunpack.c.l.b16 %v862
      %v3031 = vunpack.c.h.b16 %v862
      %v3032 = vunpack.c.l.b16 %v863
      %v3033 = vunpack.c.h.b16 %v863
      %v3034 = vunpack.c.l.b16 %v864
      %v3035 = vunpack.c.h.b16 %v864
      %v3036 = vunpack.c.l.b16 %v865
      %v3037 = vunpack.c.h.b16 %v865
      %v3038 = vunpack.c.l.b16 %v866
      %v3039 = vunpack.c.h.b16 %v866
      %v3040 = vunpack.c.l.b16 %v867
      %v3041 = vunpack.c.h.b16 %v867
      %v3042 = vunpack.c.l.b16 %v868
      %v3043 = vunpack.c.h.b16 %v868
      %v3044 = vunpack.c.l.b16 %v869
      %v3045 = vunpack.c.h.b16 %v869
      %v3046 = vunpack.c.l.b16 %v870
      %v3047 = vunpack.c.h.b16 %v870
      %v3048 = vunpack.c.l.b16 %v871
      %v3049 = vunpack.c.h.b16 %v871
      %v3050 = vunpack.c.l.b16 %v872
      %v3051 = vunpack.c.h.b16 %v872
      %v3052 = vunpack.c.l.b16 %v873
      %v3053 = vunpack.c.h.b16 %v873
      %v3054 = vunpack.c.l.b16 %v874
      %v3055 = vunpack.c.h.b16 %v874
      %v3056 = vunpack.c.l.b16 %v875
      %v3057 = vunpack.c.h.b16 %v875
      %v3058 = vunpack.c.l.b16 %v876
      %v3059 = vunpack.c.h.b16 %v876
      %v3060 = vunpack.c.l.b16 %v877
      %v3061 = vunpack.c.h.b16 %v877
      %v3062 = vunpack.c.l.b16 %v878
      %v3063 = vunpack.c.h.b16 %v878
      %v3064 = vunpack.c.l.b16 %v879
      %v3065 = vunpack.c.h.b16 %v879
      %v3066 = vunpack.c.l.b16 %v880
      %v3067 = vunpack.c.h.b16 %v880
      %v3068 = vunpack.c.l.b16 %v881
      %v3069 = vunpack.c.h.b16 %v881
      %v3070 = vunpack.c.l.b16 %v882
      %v3071 = vunpack.c.h.b16 %v882
      %v3072 = vunpack.c.l.b16 %v883
      %v3073 = vunpack.c.h.b16 %v883
      %v3074 = vunpack.c.l.b16 %v884
      %v3075 = vunpack.c.h.b16 %v884
      %v3076 = vunpack.c.l.b16 %v885
      %v3077 = vunpack.c.h.b16 %v885
      %v3078 = vunpack.c.l.b16 %v886
      %v3079 = vunpack.c.h.b16 %v886
      %v3080 = vunpack.c.l.b16 %v887
      %v3081 = vunpack.c.h.b16 %v887
      %v3082 = vunpack.c.l.b16 %v888
      %v3083 = vunpack.c.h.b16 %v888
      %v3084 = vunpack.c.l.b16 %v889
      %v3085 = vunpack.c.h.b16 %v889
      %v3086 = vunpack.c.l.b16 %v890
      %v3087 = vunpack.c.h.b16 %v890
      %v3088 = vunpack.c.l.b16 %v891
      %v3089 = vunpack.c.h.b16 %v891
      %v3090 = vunpack.c.l.b16 %v892
      %v3091 = vunpack.c.h.b16 %v892
      %v3092 = vunpack.c.l.b16 %v893
      %v3093 = vunpack.c.h.b16 %v893
      %v3094 = vunpack.c.l.b16 %v894
      %v3095 = vunpack.c.h.b16 %v894
      %v3096 = vunpack.c.l.b16 %v895
      %v3097 = vunpack.c.h.b16 %v895
      %v3098 = vunpack.c.l.b16 %v896
      %v3099 = vunpack.c.h.b16 %v896
      %v3100 = vunpack.c.l.b16 %v897
      %v3101 = vunpack.c.h.b16 %v897
      %v3102 = vunpack.c.l.b16 %v898
      %v3103 = vunpack.c.h.b16 %v898
      %v3104 = vunpack.c.l.b16 %v899
      %v3105 = vunpack.c.h.b16 %v899
      %v3106 = vunpack.c.l.b16 %v900
      %v3107 = vunpack.c.h.b16 %v900
      %v3108 = vunpack.c.l.b16 %v901
      %v3109 = vunpack.c.h.b16 %v901
      %v3110 = vunpack.c.l.b16 %v902
      %v3111 = vunpack.c.h.b16 %v902
      %v3112 = vunpack.c.l.b16 %v903
      %v3113 = vunpack.c.h.b16 %v903
      %v3114 = vunpack.c.l.b16 %v904
      %v3115 = vunpack.c.h.b16 %v904
      %v3116 = vunpack.c.l.b16 %v905
      %v3117 = vunpack.c.h.b16 %v905
      %v3118 = vunpack.c.l.b16 %v906
      %v3119 = vunpack.c.h.b16 %v906
      %v3120 = vunpack.c.l.b16 %v907
      %v3121 = vunpack.c.h.b16 %v907
      %v3122 = vunpack.c.l.b16 %v908
      %v3123 = vunpack.c.h.b16 %v908
      %v3124 = vunpack.c.l.b16 %v909
      %v3125 = vunpack.c.h.b16 %v909
      %v3126 = vunpack.c.l.b16 %v910
      %v3127 = vunpack.c.h.b16 %v910
      %v3128 = vunpack.c.l.b16 %v911
      %v3129 = vunpack.c.h.b16 %v911
      %v3130 = vunpack.c.l.b16 %v912
      %v3131 = vunpack.c.h.b16 %v912
      %v3132 = vunpack.c.l.b16 %v913
      %v3133 = vunpack.c.h.b16 %v913
      %v3134 = vunpack.c.l.b16 %v914
      %v3135 = vunpack.c.h.b16 %v914
      %v3136 = vunpack.c.l.b16 %v915
      %v3137 = vunpack.c.h.b16 %v915
      %v3138 = vunpack.c.l.b16 %v916
      %v3139 = vunpack.c.h.b16 %v916
      %v3140 = vunpack.c.l.b16 %v917
      %v3141 = vunpack.c.h.b16 %v917
      %v3142 = vunpack.c.l.b16 %v918
      %v3143 = vunpack.c.h.b16 %v918
      %v3144 = vunpack.c.l.b16 %v919
      %v3145 = vunpack.c.h.b16 %v919
      %v3146 = vunpack.c.l.b16 %v920
      %v3147 = vunpack.c.h.b16 %v920
      %v3148 = vunpack.c.l.b16 %v921
      %v3149 = vunpack.c.h.b16 %v921
      %v3150 = vunpack.c.l.b16 %v922
      %v3151 = vunpack.c.h.b16 %v922
      %v3152 = vunpack.c.l.b16 %v923
      %v3153 = vunpack.c.h.b16 %v923
      %v3154 = vunpack.c.l.b16 %v924
      %v3155 = vunpack.c.h.b16 %v924
      %v3156 = vunpack.c.l.b16 %v925
      %v3157 = vunpack.c.h.b16 %v925
      %v3158 = vunpack.c.l.b16 %v926
      %v3159 = vunpack.c.h.b16 %v926
      %v3160 = vunpack.c.l.b16 %v927
      %v3161 = vunpack.c.h.b16 %v927
      %v3162 = vunpack.c.l.b16 %v928
      %v3163 = vunpack.c.h.b16 %v928
      %v3164 = vunpack.c.l.b16 %v929
      %v3165 = vunpack.c.h.b16 %v929
      %v3166 = vunpack.c.l.b16 %v930
      %v3167 = vunpack.c.h.b16 %v930
      %v3168 = vunpack.c.l.b16 %v931
      %v3169 = vunpack.c.h.b16 %v931
      %v3170 = vunpack.c.l.b16 %v932
      %v3171 = vunpack.c.h.b16 %v932
      %v3172 = vunpack.c.l.b16 %v933
      %v3173 = vunpack.c.h.b16 %v933
      %v3174 = vunpack.c.l.b16 %v934
      %v3175 = vunpack.c.h.b16 %v934
      %v3176 = vunpack.c.l.b16 %v935
      %v3177 = vunpack.c.h.b16 %v935
      %v3178 = vunpack.c.l.b16 %v936
      %v3179 = vunpack.c.h.b16 %v936
      %v3180 = vunpack.c.l.b16 %v937
      %v3181 = vunpack.c.h.b16 %v937
      %v3182 = vunpack.c.l.b16 %v938
      %v3183 = vunpack.c.h.b16 %v938
      %v3184 = vunpack.c.l.b16 %v939
      %v3185 = vunpack.c.h.b16 %v939
      %v3186 = vunpack.c.l.b16 %v940
      %v3187 = vunpack.c.h.b16 %v940
      %v3188 = vunpack.c.l.b16 %v941
      %v3189 = vunpack.c.h.b16 %v941
      %v3190 = vunpack.c.l.b16 %v942
      %v3191 = vunpack.c.h.b16 %v942
      %v3192 = vunpack.c.l.b16 %v943
      %v3193 = vunpack.c.h.b16 %v943
      %v3194 = vunpack.c.l.b16 %v944
      %v3195 = vunpack.c.h.b16 %v944
      %v3196 = vunpack.c.l.b16 %v945
      %v3197 = vunpack.c.h.b16 %v945
      %v3198 = vunpack.c.l.b16 %v946
      %v3199 = vunpack.c.h.b16 %v946
      %v3200 = vunpack.c.l.b16 %v947
      %v3201 = vunpack.c.h.b16 %v947
      %v3202 = vunpack.c.l.b16 %v948
      %v3203 = vunpack.c.h.b16 %v948
      %v3204 = vunpack.c.l.b16 %v949
      %v3205 = vunpack.c.h.b16 %v949
      %v3206 = vunpack.c.l.b16 %v950
      %v3207 = vunpack.c.h.b16 %v950
      %v3208 = vunpack.c.l.b16 %v951
      %v3209 = vunpack.c.h.b16 %v951
      %v3210 = vunpack.c.l.b16 %v952
      %v3211 = vunpack.c.h.b16 %v952
      %v3212 = vunpack.c.l.b16 %v953
      %v3213 = vunpack.c.h.b16 %v953
      %v3214 = vunpack.c.l.b16 %v954
      %v3215 = vunpack.c.h.b16 %v954
      %v3216 = vunpack.c.l.b16 %v955
      %v3217 = vunpack.c.h.b16 %v955
      %v3218 = vunpack.c.l.b16 %v956
      %v3219 = vunpack.c.h.b16 %v956
      %v3220 = vunpack.c.l.b16 %v957
      %v3221 = vunpack.c.h.b16 %v957
      %v3222 = vunpack.c.l.b16 %v958
      %v3223 = vunpack.c.h.b16 %v958
      %v3224 = vunpack.c.l.b16 %v959
      %v3225 = vunpack.c.h.b16 %v959
      %v3226 = vunpack.c.l.b16 %v960
      %v3227 = vunpack.c.h.b16 %v960
      %v3228 = vunpack.c.l.b16 %v961
      %v3229 = vunpack.c.h.b16 %v961
      %v3230 = vunpack.c.l.b16 %v962
      %v3231 = vunpack.c.h.b16 %v962
      %v3232 = vunpack.c.l.b16 %v963
      %v3233 = vunpack.c.h.b16 %v963
      %v3234 = vunpack.c.l.b16 %v964
      %v3235 = vunpack.c.h.b16 %v964
      %v3236 = vunpack.c.l.b16 %v965
      %v3237 = vunpack.c.h.b16 %v965
      %v3238 = vunpack.c.l.b16 %v966
      %v3239 = vunpack.c.h.b16 %v966
      %v3240 = vunpack.c.l.b16 %v967
      %v3241 = vunpack.c.h.b16 %v967
      %v3242 = vunpack.c.l.b16 %v968
      %v3243 = vunpack.c.h.b16 %v968
      %v3244 = vunpack.c.l.b16 %v969
      %v3245 = vunpack.c.h.b16 %v969
      %v3246 = vunpack.c.l.b16 %v970
      %v3247 = vunpack.c.h.b16 %v970
      %v3248 = vunpack.c.l.b16 %v971
      %v3249 = vunpack.c.h.b16 %v971
      %v3250 = vunpack.c.l.b16 %v972
      %v3251 = vunpack.c.h.b16 %v972
      %v3252 = vunpack.c.l.b16 %v973
      %v3253 = vunpack.c.h.b16 %v973
      %v3254 = vunpack.c.l.b16 %v974
      %v3255 = vunpack.c.h.b16 %v974
      %v3256 = vunpack.c.l.b16 %v975
      %v3257 = vunpack.c.h.b16 %v975
      %v3258 = vunpack.c.l.b16 %v976
      %v3259 = vunpack.c.h.b16 %v976
      %v3260 = vunpack.c.l.b16 %v977
      %v3261 = vunpack.c.h.b16 %v977
      %v3262 = vunpack.c.l.b16 %v978
      %v3263 = vunpack.c.h.b16 %v978
      %v3264 = vunpack.c.l.b16 %v979
      %v3265 = vunpack.c.h.b16 %v979
      %v3266 = vunpack.c.l.b16 %v980
      %v3267 = vunpack.c.h.b16 %v980
      %v3268 = vunpack.c.l.b16 %v981
      %v3269 = vunpack.c.h.b16 %v981
      %v3270 = vunpack.c.l.b16 %v982
      %v3271 = vunpack.c.h.b16 %v982
      %v3272 = vunpack.c.l.b16 %v983
      %v3273 = vunpack.c.h.b16 %v983
      %v3274 = vunpack.c.l.b16 %v984
      %v3275 = vunpack.c.h.b16 %v984
      %v3276 = vunpack.c.l.b16 %v985
      %v3277 = vunpack.c.h.b16 %v985
      %v3278 = vunpack.c.l.b16 %v986
      %v3279 = vunpack.c.h.b16 %v986
      %v3280 = vunpack.c.l.b16 %v987
      %v3281 = vunpack.c.h.b16 %v987
      %v3282 = vunpack.c.l.b16 %v988
      %v3283 = vunpack.c.h.b16 %v988
      %v3284 = vunpack.c.l.b16 %v989
      %v3285 = vunpack.c.h.b16 %v989
      %v3286 = vunpack.c.l.b16 %v990
      %v3287 = vunpack.c.h.b16 %v990
      %v3288 = vunpack.c.l.b16 %v991
      %v3289 = vunpack.c.h.b16 %v991
      %v3290 = vunpack.c.l.b16 %v992
      %v3291 = vunpack.c.h.b16 %v992
      %v3292 = vunpack.c.l.b16 %v993
      %v3293 = vunpack.c.h.b16 %v993
      %v3294 = vunpack.c.l.b16 %v994
      %v3295 = vunpack.c.h.b16 %v994
      %v3296 = vunpack.c.l.b16 %v995
      %v3297 = vunpack.c.h.b16 %v995
      %v3298 = vunpack.c.l.b16 %v996
      %v3299 = vunpack.c.h.b16 %v996
      %v3300 = vunpack.c.l.b16 %v997
      %v3301 = vunpack.c.h.b16 %v997
      %v3302 = vunpack.c.l.b16 %v998
      %v3303 = vunpack.c.h.b16 %v998
      %v3304 = vunpack.c.l.b16 %v999
      %v3305 = vunpack.c.h.b16 %v999
      %v3306 = vunpack.c.l.b16 %v1000
      %v3307 = vunpack.c.h.b16 %v1000
      %v3308 = vunpack.c.l.b16 %v1001
      %v3309 = vunpack.c.h.b16 %v1001
      %v3310 = vunpack.c.l.b16 %v1002
      %v3311 = vunpack.c.h.b16 %v1002
      %v3312 = vunpack.c.l.b16 %v1003
      %v3313 = vunpack.c.h.b16 %v1003
      %v3314 = vunpack.c.l.b16 %v1004
      %v3315 = vunpack.c.h.b16 %v1004
      %v3316 = vunpack.c.l.b16 %v1005
      %v3317 = vunpack.c.h.b16 %v1005
      %v3318 = vunpack.c.l.b16 %v1006
      %v3319 = vunpack.c.h.b16 %v1006
      %v3320 = vunpack.c.l.b16 %v1007
      %v3321 = vunpack.c.h.b16 %v1007
      %v3322 = vunpack.c.l.b16 %v1008
      %v3323 = vunpack.c.h.b16 %v1008
      %v3324 = vunpack.c.l.b16 %v1009
      %v3325 = vunpack.c.h.b16 %v1009
      %v3326 = vunpack.c.l.b16 %v1010
      %v3327 = vunpack.c.h.b16 %v1010
      %v3328 = vunpack.c.l.b16 %v1011
      %v3329 = vunpack.c.h.b16 %v1011
      %v3330 = vunpack.c.l.b16 %v1012
      %v3331 = vunpack.c.h.b16 %v1012
      %v3332 = vunpack.c.l.b16 %v1013
      %v3333 = vunpack.c.h.b16 %v1013
      %v3334 = vunpack.c.l.b16 %v1014
      %v3335 = vunpack.c.h.b16 %v1014
      %v3336 = vunpack.c.l.b16 %v1015
      %v3337 = vunpack.c.h.b16 %v1015
      %v3338 = vunpack.c.l.b16 %v1016
      %v3339 = vunpack.c.h.b16 %v1016
      %v3340 = vunpack.c.l.b16 %v1017
      %v3341 = vunpack.c.h.b16 %v1017
      %v3342 = vunpack.c.l.b16 %v1018
      %v3343 = vunpack.c.h.b16 %v1018
      %v3344 = vunpack.c.l.b16 %v1019
      %v3345 = vunpack.c.h.b16 %v1019
      %v3346 = vunpack.c.l.b16 %v1020
      %v3347 = vunpack.c.h.b16 %v1020
      %v3348 = vunpack.c.l.b16 %v1021
      %v3349 = vunpack.c.h.b16 %v1021
      %v3350 = vunpack.c.l.b16 %v1022
      %v3351 = vunpack.c.h.b16 %v1022
      %v3352 = vunpack.c.l.b16 %v1023
      %v3353 = vunpack.c.h.b16 %v1023
      %v3354 = vunpack.c.l.b16 %v1024
      %v3355 = vunpack.c.h.b16 %v1024
      %v3356 = vunpack.c.l.b16 %v1025
      %v3357 = vunpack.c.h.b16 %v1025
      %v3358 = vunpack.c.l.b16 %v1026
      %v3359 = vunpack.c.h.b16 %v1026
      %v3360 = vunpack.c.l.b16 %v1027
      %v3361 = vunpack.c.h.b16 %v1027
      %v3362 = vunpack.c.l.b16 %v1028
      %v3363 = vunpack.c.h.b16 %v1028
      %v3364 = vunpack.c.l.b16 %v1029
      %v3365 = vunpack.c.h.b16 %v1029
      %v3366 = vunpack.c.l.b16 %v1030
      %v3367 = vunpack.c.h.b16 %v1030
      %v3368 = vunpack.c.l.b16 %v1031
      %v3369 = vunpack.c.h.b16 %v1031
      %v3370 = vunpack.c.l.b16 %v1032
      %v3371 = vunpack.c.h.b16 %v1032
      %v3372 = vunpack.c.l.b16 %v1033
      %v3373 = vunpack.c.h.b16 %v1033
      %v3374 = vunpack.c.l.b16 %v1034
      %v3375 = vunpack.c.h.b16 %v1034
      %v3376 = vunpack.c.l.b16 %v1035
      %v3377 = vunpack.c.h.b16 %v1035
      %v3378 = vunpack.c.l.b16 %v1036
      %v3379 = vunpack.c.h.b16 %v1036
      %v3380 = vunpack.c.l.b16 %v1037
      %v3381 = vunpack.c.h.b16 %v1037
      %v3382 = vunpack.c.l.b16 %v1038
      %v3383 = vunpack.c.h.b16 %v1038
      %v3384 = vunpack.c.l.b16 %v1039
      %v3385 = vunpack.c.h.b16 %v1039
      %v3386 = vunpack.c.l.b16 %v1040
      %v3387 = vunpack.c.h.b16 %v1040
      %v3388 = vunpack.c.l.b16 %v1041
      %v3389 = vunpack.c.h.b16 %v1041
      %v3390 = vunpack.c.l.b16 %v1042
      %v3391 = vunpack.c.h.b16 %v1042
      %v3392 = vunpack.c.l.b16 %v1043
      %v3393 = vunpack.c.h.b16 %v1043
      %v3394 = vunpack.c.l.b16 %v1044
      %v3395 = vunpack.c.h.b16 %v1044
      %v3396 = vunpack.c.l.b16 %v1045
      %v3397 = vunpack.c.h.b16 %v1045
      %v3398 = vunpack.c.l.b16 %v1046
      %v3399 = vunpack.c.h.b16 %v1046
      %v3400 = vunpack.c.l.b16 %v1047
      %v3401 = vunpack.c.h.b16 %v1047
      %v3402 = vunpack.c.l.b16 %v1048
      %v3403 = vunpack.c.h.b16 %v1048
      %v3404 = vunpack.c.l.b16 %v1049
      %v3405 = vunpack.c.h.b16 %v1049
      %v3406 = vunpack.c.l.b16 %v1050
      %v3407 = vunpack.c.h.b16 %v1050
      %v3408 = vunpack.c.l.b16 %v1051
      %v3409 = vunpack.c.h.b16 %v1051
      %v3410 = vunpack.c.l.b16 %v1052
      %v3411 = vunpack.c.h.b16 %v1052
      %v3412 = vunpack.c.l.b16 %v1053
      %v3413 = vunpack.c.h.b16 %v1053
      %v3414 = vunpack.c.l.b16 %v1054
      %v3415 = vunpack.c.h.b16 %v1054
      %v3416 = vunpack.c.l.b16 %v1055
      %v3417 = vunpack.c.h.b16 %v1055
      %v3418 = vunpack.c.l.b16 %v1056
      %v3419 = vunpack.c.h.b16 %v1056
      %v3420 = vunpack.c.l.b16 %v1057
      %v3421 = vunpack.c.h.b16 %v1057
      %v3422 = vunpack.c.l.b16 %v1058
      %v3423 = vunpack.c.h.b16 %v1058
      %v3424 = vunpack.c.l.b16 %v1059
      %v3425 = vunpack.c.h.b16 %v1059
      %v3426 = vunpack.c.l.b16 %v1060
      %v3427 = vunpack.c.h.b16 %v1060
      %v3428 = vunpack.c.l.b16 %v1061
      %v3429 = vunpack.c.h.b16 %v1061
      %v3430 = vunpack.c.l.b16 %v1062
      %v3431 = vunpack.c.h.b16 %v1062
      %v3432 = vunpack.c.l.b16 %v1063
      %v3433 = vunpack.c.h.b16 %v1063
      %v3434 = vunpack.c.l.b16 %v1064
      %v3435 = vunpack.c.h.b16 %v1064
      %v3436 = vunpack.c.l.b16 %v1065
      %v3437 = vunpack.c.h.b16 %v1065
      %v3438 = vunpack.c.l.b16 %v1066
      %v3439 = vunpack.c.h.b16 %v1066
      %v3440 = vunpack.c.l.b16 %v1067
      %v3441 = vunpack.c.h.b16 %v1067
      %v3442 = vunpack.c.l.b16 %v1068
      %v3443 = vunpack.c.h.b16 %v1068
      %v3444 = vunpack.c.l.b16 %v1069
      %v3445 = vunpack.c.h.b16 %v1069
      %v3446 = vunpack.c.l.b16 %v1070
      %v3447 = vunpack.c.h.b16 %v1070
      %v3448 = vunpack.c.l.b16 %v1071
      %v3449 = vunpack.c.h.b16 %v1071
      %v3450 = vunpack.c.l.b16 %v1072
      %v3451 = vunpack.c.h.b16 %v1072
      %v3452 = vunpack.c.l.b16 %v1073
      %v3453 = vunpack.c.h.b16 %v1073
      %v3454 = vunpack.c.l.b16 %v1074
      %v3455 = vunpack.c.h.b16 %v1074
      %v3456 = vunpack.c.l.b16 %v1075
      %v3457 = vunpack.c.h.b16 %v1075
      %v3458 = vunpack.c.l.b16 %v1076
      %v3459 = vunpack.c.h.b16 %v1076
      %v3460 = vunpack.c.l.b16 %v1077
      %v3461 = vunpack.c.h.b16 %v1077
      %v3462 = vunpack.c.l.b16 %v1078
      %v3463 = vunpack.c.h.b16 %v1078
      %v3464 = vunpack.c.l.b16 %v1079
      %v3465 = vunpack.c.h.b16 %v1079
      %v3466 = vunpack.c.l.b16 %v1080
      %v3467 = vunpack.c.h.b16 %v1080
      %v3468 = vunpack.c.l.b16 %v1081
      %v3469 = vunpack.c.h.b16 %v1081
      %v3470 = vunpack.c.l.b16 %v1082
      %v3471 = vunpack.c.h.b16 %v1082
      %v3472 = vunpack.c.l.b16 %v1083
      %v3473 = vunpack.c.h.b16 %v1083
      %v3474 = vunpack.c.l.b16 %v1084
      %v3475 = vunpack.c.h.b16 %v1084
      %v3476 = vunpack.c.l.b16 %v1085
      %v3477 = vunpack.c.h.b16 %v1085
      %v3478 = vunpack.c.l.b16 %v1086
      %v3479 = vunpack.c.h.b16 %v1086
      %v3480 = vunpack.c.l.b16 %v1087
      %v3481 = vunpack.c.h.b16 %v1087
      %v3482 = vunpack.c.l.b16 %v1088
      %v3483 = vunpack.c.h.b16 %v1088
      %v3484 = vunpack.c.l.b16 %v1089
      %v3485 = vunpack.c.h.b16 %v1089
      %v3486 = vunpack.c.l.b16 %v1090
      %v3487 = vunpack.c.h.b16 %v1090
      %v3488 = vunpack.c.l.b16 %v1091
      %v3489 = vunpack.c.h.b16 %v1091
      %v3490 = vunpack.c.l.b16 %v1092
      %v3491 = vunpack.c.h.b16 %v1092
      %v3492 = vunpack.c.l.b16 %v1093
      %v3493 = vunpack.c.h.b16 %v1093
      %v3494 = vunpack.c.l.b16 %v1094
      %v3495 = vunpack.c.h.b16 %v1094
      %v3496 = vunpack.c.l.b16 %v1095
      %v3497 = vunpack.c.h.b16 %v1095
      %v3498 = vunpack.c.l.b16 %v1096
      %v3499 = vunpack.c.h.b16 %v1096
      %v3500 = vunpack.c.l.b16 %v1097
      %v3501 = vunpack.c.h.b16 %v1097
      %v3502 = vunpack.c.l.b16 %v1098
      %v3503 = vunpack.c.h.b16 %v1098
      %v3504 = vunpack.c.l.b16 %v1099
      %v3505 = vunpack.c.h.b16 %v1099
      %v3506 = vunpack.c.l.b16 %v1100
      %v3507 = vunpack.c.h.b16 %v1100
      %v3508 = vunpack.c.l.b16 %v1101
      %v3509 = vunpack.c.h.b16 %v1101
      %v3510 = vunpack.c.l.b16 %v1102
      %v3511 = vunpack.c.h.b16 %v1102
      %v3512 = vunpack.c.l.b16 %v1103
      %v3513 = vunpack.c.h.b16 %v1103
      %v3514 = vunpack.c.l.b16 %v1104
      %v3515 = vunpack.c.h.b16 %v1104
      %v3516 = vunpack.c.l.b16 %v1105
      %v3517 = vunpack.c.h.b16 %v1105
      %v3518 = vunpack.c.l.b16 %v1106
      %v3519 = vunpack.c.h.b16 %v1106
      %v3520 = vunpack.c.l.b16 %v1107
      %v3521 = vunpack.c.h.b16 %v1107
      %v3522 = vunpack.c.l.b16 %v1108
      %v3523 = vunpack.c.h.b16 %v1108
      %v3524 = vunpack.c.l.b16 %v1109
      %v3525 = vunpack.c.h.b16 %v1109
      %v3526 = vunpack.c.l.b16 %v1110
      %v3527 = vunpack.c.h.b16 %v1110
      %v3528 = vunpack.c.l.b16 %v1111
      %v3529 = vunpack.c.h.b16 %v1111
      %v3530 = vunpack.c.l.b16 %v1112
      %v3531 = vunpack.c.h.b16 %v1112
      %v3532 = vunpack.c.l.b16 %v1113
      %v3533 = vunpack.c.h.b16 %v1113
      %v3534 = vunpack.c.l.b16 %v1114
      %v3535 = vunpack.c.h.b16 %v1114
      %v3536 = vunpack.c.l.b16 %v1115
      %v3537 = vunpack.c.h.b16 %v1115
      %v3538 = vunpack.c.l.b16 %v1116
      %v3539 = vunpack.c.h.b16 %v1116
      %v3540 = vunpack.c.l.b16 %v1117
      %v3541 = vunpack.c.h.b16 %v1117
      %v3542 = vunpack.c.l.b16 %v1118
      %v3543 = vunpack.c.h.b16 %v1118
      %v3544 = vunpack.c.l.b16 %v1119
      %v3545 = vunpack.c.h.b16 %v1119
      %v3546 = vunpack.c.l.b16 %v1120
      %v3547 = vunpack.c.h.b16 %v1120
      %v3548 = vunpack.c.l.b16 %v1121
      %v3549 = vunpack.c.h.b16 %v1121
      %v3550 = vunpack.c.l.b16 %v1122
      %v3551 = vunpack.c.h.b16 %v1122
      %v3552 = vunpack.c.l.b16 %v1123
      %v3553 = vunpack.c.h.b16 %v1123
      %v3554 = vunpack.c.l.b16 %v1124
      %v3555 = vunpack.c.h.b16 %v1124
      %v3556 = vunpack.c.l.b16 %v1125
      %v3557 = vunpack.c.h.b16 %v1125
      %v3558 = vunpack.c.l.b16 %v1126
      %v3559 = vunpack.c.h.b16 %v1126
      %v3560 = vunpack.c.l.b16 %v1127
      %v3561 = vunpack.c.h.b16 %v1127
      %v3562 = vunpack.c.l.b16 %v1128
      %v3563 = vunpack.c.h.b16 %v1128
      %v3564 = vunpack.c.l.b16 %v1129
      %v3565 = vunpack.c.h.b16 %v1129
      %v3566 = vunpack.c.l.b16 %v1130
      %v3567 = vunpack.c.h.b16 %v1130
      %v3568 = vunpack.c.l.b16 %v1131
      %v3569 = vunpack.c.h.b16 %v1131
      %v3570 = vunpack.c.l.b16 %v1132
      %v3571 = vunpack.c.h.b16 %v1132
      %v3572 = vunpack.c.l.b16 %v1133
      %v3573 = vunpack.c.h.b16 %v1133
      %v3574 = vunpack.c.l.b16 %v1134
      %v3575 = vunpack.c.h.b16 %v1134
      %v3576 = vunpack.c.l.b16 %v1135
      %v3577 = vunpack.c.h.b16 %v1135
      %v3578 = vunpack.c.l.b16 %v1136
      %v3579 = vunpack.c.h.b16 %v1136
      %v3580 = vunpack.c.l.b16 %v1137
      %v3581 = vunpack.c.h.b16 %v1137
      %v3582 = vunpack.c.l.b16 %v1138
      %v3583 = vunpack.c.h.b16 %v1138
      %v3584 = vunpack.c.l.b16 %v1139
      %v3585 = vunpack.c.h.b16 %v1139
      %v3586 = vunpack.c.l.b16 %v1140
      %v3587 = vunpack.c.h.b16 %v1140
      %v3588 = vunpack.c.l.b16 %v1141
      %v3589 = vunpack.c.h.b16 %v1141
      %v3590 = vunpack.c.l.b16 %v1142
      %v3591 = vunpack.c.h.b16 %v1142
      %v3592 = vunpack.c.l.b16 %v1143
      %v3593 = vunpack.c.h.b16 %v1143
      %v3594 = vunpack.c.l.b16 %v1144
      %v3595 = vunpack.c.h.b16 %v1144
      %v3596 = vunpack.c.l.b16 %v1145
      %v3597 = vunpack.c.h.b16 %v1145
      %v3598 = vunpack.c.l.b16 %v1146
      %v3599 = vunpack.c.h.b16 %v1146
      %v3600 = vunpack.c.l.b16 %v1147
      %v3601 = vunpack.c.h.b16 %v1147
      %v3602 = vunpack.c.l.b16 %v1148
      %v3603 = vunpack.c.h.b16 %v1148
      %v3604 = vunpack.c.l.b16 %v1149
      %v3605 = vunpack.c.h.b16 %v1149
      %v3606 = vunpack.c.l.b16 %v1150
      %v3607 = vunpack.c.h.b16 %v1150
      %v3608 = vunpack.c.l.b16 %v1151
      %v3609 = vunpack.c.h.b16 %v1151
      %v3610 = vunpack.c.l.b16 %v1152
      %v3611 = vunpack.c.h.b16 %v1152
      %v3612 = vunpack.c.l.b16 %v1153
      %v3613 = vunpack.c.h.b16 %v1153
      %v3614 = vunpack.c.l.b16 %v1154
      %v3615 = vunpack.c.h.b16 %v1154
      %v3616 = vunpack.c.l.b16 %v1155
      %v3617 = vunpack.c.h.b16 %v1155
      %v3618 = vunpack.c.l.b16 %v1156
      %v3619 = vunpack.c.h.b16 %v1156
      %v3620 = vunpack.c.l.b16 %v1157
      %v3621 = vunpack.c.h.b16 %v1157
      %v3622 = vunpack.c.l.b16 %v1158
      %v3623 = vunpack.c.h.b16 %v1158
      %v3624 = vunpack.c.l.b16 %v1159
      %v3625 = vunpack.c.h.b16 %v1159
      %v3626 = vunpack.c.l.b16 %v1160
      %v3627 = vunpack.c.h.b16 %v1160
      %v3628 = vunpack.c.l.b16 %v1161
      %v3629 = vunpack.c.h.b16 %v1161
      %v3630 = vunpack.c.l.b16 %v1162
      %v3631 = vunpack.c.h.b16 %v1162
      %v3632 = vunpack.c.l.b16 %v1163
      %v3633 = vunpack.c.h.b16 %v1163
      %v3634 = vunpack.c.l.b16 %v1164
      %v3635 = vunpack.c.h.b16 %v1164
      %v3636 = vunpack.c.l.b16 %v1165
      %v3637 = vunpack.c.h.b16 %v1165
      %v3638 = vunpack.c.l.b16 %v1166
      %v3639 = vunpack.c.h.b16 %v1166
      %v3640 = vunpack.c.l.b16 %v1167
      %v3641 = vunpack.c.h.b16 %v1167
      %v3642 = vunpack.c.l.b16 %v1168
      %v3643 = vunpack.c.h.b16 %v1168
      %v3644 = vunpack.c.l.b16 %v1169
      %v3645 = vunpack.c.h.b16 %v1169
      %v3646 = vunpack.c.l.b16 %v1170
      %v3647 = vunpack.c.h.b16 %v1170
      %v3648 = vunpack.c.l.b16 %v1171
      %v3649 = vunpack.c.h.b16 %v1171
      %v3650 = vunpack.c.l.b16 %v1172
      %v3651 = vunpack.c.h.b16 %v1172
      %v3652 = vunpack.c.l.b16 %v1173
      %v3653 = vunpack.c.h.b16 %v1173
      %v3654 = vunpack.c.l.b16 %v1174
      %v3655 = vunpack.c.h.b16 %v1174
      %v3656 = vunpack.c.l.b16 %v1175
      %v3657 = vunpack.c.h.b16 %v1175
      %v3658 = vunpack.c.l.b16 %v1176
      %v3659 = vunpack.c.h.b16 %v1176
      %v3660 = vunpack.c.l.b16 %v1177
      %v3661 = vunpack.c.h.b16 %v1177
      %v3662 = vunpack.c.l.b16 %v1178
      %v3663 = vunpack.c.h.b16 %v1178
      %v3664 = vunpack.c.l.b16 %v1179
      %v3665 = vunpack.c.h.b16 %v1179
      %v3666 = vunpack.c.l.b16 %v1180
      %v3667 = vunpack.c.h.b16 %v1180
      %v3668 = vunpack.c.l.b16 %v1181
      %v3669 = vunpack.c.h.b16 %v1181
      %v3670 = vunpack.c.l.b16 %v1182
      %v3671 = vunpack.c.h.b16 %v1182
      %v3672 = vunpack.c.l.b16 %v1183
      %v3673 = vunpack.c.h.b16 %v1183
      %v3674 = vunpack.c.l.b16 %v1184
      %v3675 = vunpack.c.h.b16 %v1184
      %v3676 = vunpack.c.l.b16 %v1185
      %v3677 = vunpack.c.h.b16 %v1185
      %v3678 = vunpack.c.l.b16 %v1186
      %v3679 = vunpack.c.h.b16 %v1186
      %v3680 = vunpack.c.l.b16 %v1187
      %v3681 = vunpack.c.h.b16 %v1187
      %v3682 = vunpack.c.l.b16 %v1188
      %v3683 = vunpack.c.h.b16 %v1188
      %v3684 = vunpack.c.l.b16 %v1189
      %v3685 = vunpack.c.h.b16 %v1189
      %v3686 = vunpack.c.l.b16 %v1190
      %v3687 = vunpack.c.h.b16 %v1190
      %v3688 = vunpack.c.l.b16 %v1191
      %v3689 = vunpack.c.h.b16 %v1191
      %v3690 = vunpack.c.l.b16 %v1192
      %v3691 = vunpack.c.h.b16 %v1192
      %v3692 = vunpack.c.l.b16 %v1193
      %v3693 = vunpack.c.h.b16 %v1193
      %v3694 = vunpack.c.l.b16 %v1194
      %v3695 = vunpack.c.h.b16 %v1194
      %v3696 = vunpack.c.l.b16 %v1195
      %v3697 = vunpack.c.h.b16 %v1195
      %v3698 = vunpack.c.l.b16 %v1196
      %v3699 = vunpack.c.h.b16 %v1196
      %v3700 = vunpack.c.l.b16 %v1197
      %v3701 = vunpack.c.h.b16 %v1197
      %v3702 = vunpack.c.l.b16 %v1198
      %v3703 = vunpack.c.h.b16 %v1198
      %v3704 = vunpack.c.l.b16 %v1199
      %v3705 = vunpack.c.h.b16 %v1199
      %v3706 = vunpack.c.l.b16 %v1200
      %v3707 = vunpack.c.h.b16 %v1200
      %v3708 = vunpack.c.l.b16 %v1201
      %v3709 = vunpack.c.h.b16 %v1201
      %v3710 = vunpack.c.l.b16 %v1202
      %v3711 = vunpack.c.h.b16 %v1202
      %v3712 = vunpack.c.l.b16 %v1203
      %v3713 = vunpack.c.h.b16 %v1203
      %v3714 = vunpack.c.l.b16 %v1204
      %v3715 = vunpack.c.h.b16 %v1204
      %v3716 = vunpack.c.l.b16 %v1205
      %v3717 = vunpack.c.h.b16 %v1205
      %v3718 = vunpack.c.l.b16 %v1206
      %v3719 = vunpack.c.h.b16 %v1206
      %v3720 = vunpack.c.l.b16 %v1207
      %v3721 = vunpack.c.h.b16 %v1207
      %v3722 = vunpack.c.l.b16 %v1208
      %v3723 = vunpack.c.h.b16 %v1208
      %v3724 = vunpack.c.l.b16 %v1209
      %v3725 = vunpack.c.h.b16 %v1209
      %v3726 = vunpack.c.l.b16 %v1210
      %v3727 = vunpack.c.h.b16 %v1210
      %v3728 = vunpack.c.l.b16 %v1211
      %v3729 = vunpack.c.h.b16 %v1211
      %v3730 = vunpack.c.l.b16 %v1212
      %v3731 = vunpack.c.h.b16 %v1212
      %v3732 = vunpack.c.l.b16 %v1213
      %v3733 = vunpack.c.h.b16 %v1213
      %v3734 = vunpack.c.l.b16 %v1214
      %v3735 = vunpack.c.h.b16 %v1214
      %v3736 = vunpack.c.l.b16 %v1215
      %v3737 = vunpack.c.h.b16 %v1215
      %v3738 = vunpack.c.l.b16 %v1216
      %v3739 = vunpack.c.h.b16 %v1216
      %v3740 = vunpack.c.l.b16 %v1217
      %v3741 = vunpack.c.h.b16 %v1217
      %v3742 = vunpack.c.l.b16 %v1218
      %v3743 = vunpack.c.h.b16 %v1218
      %v3744 = vunpack.c.l.b16 %v1219
      %v3745 = vunpack.c.h.b16 %v1219
      %v3746 = vunpack.c.l.b16 %v1220
      %v3747 = vunpack.c.h.b16 %v1220
      %v3748 = vunpack.c.l.b16 %v1221
      %v3749 = vunpack.c.h.b16 %v1221
      %v3750 = vunpack.c.l.b16 %v1222
      %v3751 = vunpack.c.h.b16 %v1222
      %v3752 = vunpack.c.l.b16 %v1223
      %v3753 = vunpack.c.h.b16 %v1223
      %v3754 = vunpack.c.l.b16 %v1224
      %v3755 = vunpack.c.h.b16 %v1224
      %v3756 = vunpack.c.l.b16 %v1225
      %v3757 = vunpack.c.h.b16 %v1225
      %v3758 = vunpack.c.l.b16 %v1226
      %v3759 = vunpack.c.h.b16 %v1226
      %v3760 = vunpack.c.l.b16 %v1227
      %v3761 = vunpack.c.h.b16 %v1227
      %v3762 = vunpack.c.l.b16 %v1228
      %v3763 = vunpack.c.h.b16 %v1228
      %v3764 = vunpack.c.l.b16 %v1229
      %v3765 = vunpack.c.h.b16 %v1229
      %v3766 = vunpack.c.l.b16 %v1230
      %v3767 = vunpack.c.h.b16 %v1230
      %v3768 = vunpack.c.l.b16 %v1231
      %v3769 = vunpack.c.h.b16 %v1231
      %v3770 = vunpack.c.l.b16 %v1232
      %v3771 = vunpack.c.h.b16 %v1232
      %v3772 = vunpack.c.l.b16 %v1233
      %v3773 = vunpack.c.h.b16 %v1233
      %v3774 = vunpack.c.l.b16 %v1234
      %v3775 = vunpack.c.h.b16 %v1234
      %v3776 = vunpack.c.l.b16 %v1235
      %v3777 = vunpack.c.h.b16 %v1235
      %v3778 = vunpack.c.l.b16 %v1236
      %v3779 = vunpack.c.h.b16 %v1236
      %v3780 = vunpack.c.l.b16 %v1237
      %v3781 = vunpack.c.h.b16 %v1237
      %v3782 = vunpack.c.l.b16 %v1238
      %v3783 = vunpack.c.h.b16 %v1238
      %v3784 = vunpack.c.l.b16 %v1239
      %v3785 = vunpack.c.h.b16 %v1239
      %v3786 = vunpack.c.l.b16 %v1240
      %v3787 = vunpack.c.h.b16 %v1240
      %v3788 = vunpack.c.l.b16 %v1241
      %v3789 = vunpack.c.h.b16 %v1241
      %v3790 = vunpack.c.l.b16 %v1242
      %v3791 = vunpack.c.h.b16 %v1242
      %v3792 = vunpack.c.l.b16 %v1243
      %v3793 = vunpack.c.h.b16 %v1243
      %v3794 = vunpack.c.l.b16 %v1244
      %v3795 = vunpack.c.h.b16 %v1244
      %v3796 = vunpack.c.l.b16 %v1245
      %v3797 = vunpack.c.h.b16 %v1245
      %v3798 = vunpack.c.l.b16 %v1246
      %v3799 = vunpack.c.h.b16 %v1246
      %v3800 = vunpack.c.l.b16 %v1247
      %v3801 = vunpack.c.h.b16 %v1247
      %v3802 = vunpack.c.l.b16 %v1248
      %v3803 = vunpack.c.h.b16 %v1248
      %v3804 = vunpack.c.l.b16 %v1249
      %v3805 = vunpack.c.h.b16 %v1249
      %v3806 = vunpack.c.l.b16 %v1250
      %v3807 = vunpack.c.h.b16 %v1250
      %v3808 = vunpack.c.l.b16 %v1251
      %v3809 = vunpack.c.h.b16 %v1251
      %v3810 = vunpack.c.l.b16 %v1252
      %v3811 = vunpack.c.h.b16 %v1252
      %v3812 = vunpack.c.l.b16 %v1253
      %v3813 = vunpack.c.h.b16 %v1253
      %v3814 = vunpack.c.l.b16 %v1254
      %v3815 = vunpack.c.h.b16 %v1254
      %v3816 = vunpack.c.l.b16 %v1255
      %v3817 = vunpack.c.h.b16 %v1255
      %v3818 = vunpack.c.l.b16 %v1256
      %v3819 = vunpack.c.h.b16 %v1256
      %v3820 = vunpack.c.l.b16 %v1257
      %v3821 = vunpack.c.h.b16 %v1257
      %v3822 = vunpack.c.l.b16 %v1258
      %v3823 = vunpack.c.h.b16 %v1258
      %v3824 = vunpack.c.l.b16 %v1259
      %v3825 = vunpack.c.h.b16 %v1259
      %v3826 = vunpack.c.l.b16 %v1260
      %v3827 = vunpack.c.h.b16 %v1260
      %v3828 = vunpack.c.l.b16 %v1261
      %v3829 = vunpack.c.h.b16 %v1261
      %v3830 = vunpack.c.l.b16 %v1262
      %v3831 = vunpack.c.h.b16 %v1262
      %v3832 = vunpack.c.l.b16 %v1263
      %v3833 = vunpack.c.h.b16 %v1263
      %v3834 = vunpack.c.l.b16 %v1264
      %v3835 = vunpack.c.h.b16 %v1264
      %v3836 = vunpack.c.l.b16 %v1265
      %v3837 = vunpack.c.h.b16 %v1265
      %v3838 = vunpack.c.l.b16 %v1266
      %v3839 = vunpack.c.h.b16 %v1266
      %v3840 = vunpack.c.l.b16 %v1267
      %v3841 = vunpack.c.h.b16 %v1267
      %v3842 = vunpack.c.l.b16 %v1268
      %v3843 = vunpack.c.h.b16 %v1268
      %v3844 = vunpack.c.l.b16 %v1269
      %v3845 = vunpack.c.h.b16 %v1269
      %v3846 = vunpack.c.l.b16 %v1270
      %v3847 = vunpack.c.h.b16 %v1270
      %v3848 = vunpack.c.l.b16 %v1271
      %v3849 = vunpack.c.h.b16 %v1271
      %v3850 = vunpack.c.l.b16 %v1272
      %v3851 = vunpack.c.h.b16 %v1272
      %v3852 = vunpack.c.l.b16 %v1273
      %v3853 = vunpack.c.h.b16 %v1273
      %v3854 = vunpack.c.l.b16 %v1274
      %v3855 = vunpack.c.h.b16 %v1274
      %v3856 = vunpack.c.l.b16 %v1275
      %v3857 = vunpack.c.h.b16 %v1275
      %v3858 = vunpack.c.l.b16 %v1276
      %v3859 = vunpack.c.h.b16 %v1276
      %v3860 = vunpack.c.l.b16 %v1277
      %v3861 = vunpack.c.h.b16 %v1277
      %v3862 = vunpack.c.l.b16 %v1278
      %v3863 = vunpack.c.h.b16 %v1278
      %v3864 = vunpack.c.l.b16 %v1279
      %v3865 = vunpack.c.h.b16 %v1279
      %v3866 = vunpack.c.l.b16 %v1280
      %v3867 = vunpack.c.h.b16 %v1280
      %v3868 = vunpack.c.l.b16 %v1281
      %v3869 = vunpack.c.h.b16 %v1281
      %v3870 = vunpack.c.l.b16 %v1282
      %v3871 = vunpack.c.h.b16 %v1282
      %v3872 = vunpack.c.l.b16 %v1283
      %v3873 = vunpack.c.h.b16 %v1283
      %v3874 = vunpack.c.l.b16 %v1284
      %v3875 = vunpack.c.h.b16 %v1284
      %v3876 = vunpack.c.l.b16 %v1285
      %v3877 = vunpack.c.h.b16 %v1285
      %v3878 = vunpack.c.l.b16 %v1286
      %v3879 = vunpack.c.h.b16 %v1286
      %v3880 = vunpack.c.l.b16 %v1287
      %v3881 = vunpack.c.h.b16 %v1287
      %v3882 = vunpack.c.l.b16 %v1288
      %v3883 = vunpack.c.h.b16 %v1288
      %v3884 = vunpack.c.l.b16 %v1289
      %v3885 = vunpack.c.h.b16 %v1289
      %v3886 = vunpack.c.l.b16 %v1290
      %v3887 = vunpack.c.h.b16 %v1290
      %v3888 = vunpack.c.l.b16 %v1291
      %v3889 = vunpack.c.h.b16 %v1291
      %v3890 = vunpack.c.l.b16 %v1292
      %v3891 = vunpack.c.h.b16 %v1292
      %v3892 = vunpack.c.l.b16 %v1293
      %v3893 = vunpack.c.h.b16 %v1293
      %v3894 = vunpack.c.l.b16 %v1294
      %v3895 = vunpack.c.h.b16 %v1294
      %v3896 = vunpack.c.l.b16 %v1295
      %v3897 = vunpack.c.h.b16 %v1295
      %v3898 = vunpack.c.l.b16 %v1296
      %v3899 = vunpack.c.h.b16 %v1296
      %v3900 = vunpack.c.l.b16 %v1297
      %v3901 = vunpack.c.h.b16 %v1297
      %v3902 = vunpack.c.l.b16 %v1298
      %v3903 = vunpack.c.h.b16 %v1298
      %v3904 = vunpack.c.l.b16 %v1299
      %v3905 = vunpack.c.h.b16 %v1299
      %v3906 = vunpack.c.l.b16 %v1300
      %v3907 = vunpack.c.h.b16 %v1300
      %v3908 = vunpack.c.l.b16 %v1301
      %v3909 = vunpack.c.h.b16 %v1301
      %v3910 = vunpack.c.l.b16 %v1302
      %v3911 = vunpack.c.h.b16 %v1302
      %v3912 = vunpack.c.l.b16 %v1303
      %v3913 = vunpack.c.h.b16 %v1303
      %v3914 = vunpack.c.l.b16 %v1304
      %v3915 = vunpack.c.h.b16 %v1304
      %v3916 = vunpack.c.l.b16 %v1305
      %v3917 = vunpack.c.h.b16 %v1305
      %v3918 = vunpack.c.l.b16 %v1306
      %v3919 = vunpack.c.h.b16 %v1306
      %v3920 = vunpack.c.l.b16 %v1307
      %v3921 = vunpack.c.h.b16 %v1307
      %v3922 = vunpack.c.l.b16 %v1308
      %v3923 = vunpack.c.h.b16 %v1308
      %v3924 = vunpack.c.l.b16 %v1309
      %v3925 = vunpack.c.h.b16 %v1309
      %v3926 = vunpack.c.l.b16 %v1310
      %v3927 = vunpack.c.h.b16 %v1310
      %v3928 = vunpack.c.l.b16 %v1311
      %v3929 = vunpack.c.h.b16 %v1311
      %v3930 = vunpack.c.l.b16 %v1312
      %v3931 = vunpack.c.h.b16 %v1312
      %v3932 = vunpack.c.l.b16 %v1313
      %v3933 = vunpack.c.h.b16 %v1313
      %v3934 = vunpack.c.l.b16 %v1314
      %v3935 = vunpack.c.h.b16 %v1314
      %v3936 = vunpack.c.l.b16 %v1315
      %v3937 = vunpack.c.h.b16 %v1315
      %v3938 = vunpack.c.l.b16 %v1316
      %v3939 = vunpack.c.h.b16 %v1316
      %v3940 = vunpack.c.l.b16 %v1317
      %v3941 = vunpack.c.h.b16 %v1317
      %v3942 = vunpack.c.l.b16 %v1318
      %v3943 = vunpack.c.h.b16 %v1318
      %v3944 = vunpack.c.l.b16 %v1319
      %v3945 = vunpack.c.h.b16 %v1319
      %v3946 = vunpack.c.l.b16 %v1320
      %v3947 = vunpack.c.h.b16 %v1320
      %v3948 = vunpack.c.l.b16 %v1321
      %v3949 = vunpack.c.h.b16 %v1321
      %v3950 = vunpack.c.l.b16 %v1322
      %v3951 = vunpack.c.h.b16 %v1322
      %v3952 = vunpack.c.l.b16 %v1323
      %v3953 = vunpack.c.h.b16 %v1323
      %v3954 = vunpack.c.l.b16 %v1324
      %v3955 = vunpack.c.h.b16 %v1324
      %v3956 = vunpack.c.l.b16 %v1325
      %v3957 = vunpack.c.h.b16 %v1325
      %v3958 = vunpack.c.l.b16 %v1326
      %v3959 = vunpack.c.h.b16 %v1326
      %v3960 = vunpack.c.l.b16 %v1327
      %v3961 = vunpack.c.h.b16 %v1327
      %v3962 = vunpack.c.l.b16 %v1328
      %v3963 = vunpack.c.h.b16 %v1328
      %v3964 = vunpack.c.l.b16 %v1329
      %v3965 = vunpack.c.h.b16 %v1329
      %v3966 = vunpack.c.l.b16 %v1330
      %v3967 = vunpack.c.h.b16 %v1330
      %v3968 = vunpack.c.l.b16 %v1331
      %v3969 = vunpack.c.h.b16 %v1331
      %v3970 = vunpack.c.l.b16 %v1332
      %v3971 = vunpack.c.h.b16 %v1332
      %v3972 = vunpack.c.l.b16 %v1333
      %v3973 = vunpack.c.h.b16 %v1333
      %v3974 = vunpack.c.l.b16 %v1334
      %v3975 = vunpack.c.h.b16 %v1334
      %v3976 = vunpack.c.l.b16 %v1335
      %v3977 = vunpack.c.h.b16 %v1335
      %v3978 = vunpack.c.l.b16 %v1336
      %v3979 = vunpack.c.h.b16 %v1336
      %v3980 = vunpack.c.l.b16 %v1337
      %v3981 = vunpack.c.h.b16 %v1337
      %v3982 = vunpack.c.l.b16 %v1338
      %v3983 = vunpack.c.h.b16 %v1338
      %v3984 = vunpack.c.l.b16 %v1339
      %v3985 = vunpack.c.h.b16 %v1339
      %v3986 = vunpack.c.l.b16 %v1340
      %v3987 = vunpack.c.h.b16 %v1340
      %v3988 = vunpack.c.l.b16 %v1341
      %v3989 = vunpack.c.h.b16 %v1341
      %v3990 = vunpack.c.l.b16 %v1342
      %v3991 = vunpack.c.h.b16 %v1342
      %v3992 = vunpack.c.l.b16 %v1343
      %v3993 = vunpack.c.h.b16 %v1343
      %v3994 = vunpack.c.l.b16 %v1344
      %v3995 = vunpack.c.h.b16 %v1344
      %v3996 = vunpack.c.l.b16 %v1345
      %v3997 = vunpack.c.h.b16 %v1345
      %v3998 = vunpack.c.l.b16 %v1346
      %v3999 = vunpack.c.h.b16 %v1346
      %v4000 = vunpack.c.l.b16 %v1347
      %v4001 = vunpack.c.h.b16 %v1347
      %v4002 = vunpack.c.l.b16 %v1348
      %v4003 = vunpack.c.h.b16 %v1348
      %v4004 = vunpack.c.l.b16 %v1349
      %v4005 = vunpack.c.h.b16 %v1349
      %v4006 = vunpack.c.l.b16 %v1350
      %v4007 = vunpack.c.h.b16 %v1350
      %v4008 = vunpack.c.l.b16 %v1351
      %v4009 = vunpack.c.h.b16 %v1351
      %v4010 = vunpack.c.l.b16 %v1352
      %v4011 = vunpack.c.h.b16 %v1352
      %v4012 = vunpack.c.l.b16 %v1353
      %v4013 = vunpack.c.h.b16 %v1353
      %v4014 = vunpack.c.l.b16 %v1354
      %v4015 = vunpack.c.h.b16 %v1354
      %v4016 = vunpack.c.l.b16 %v1355
      %v4017 = vunpack.c.h.b16 %v1355
      %v4018 = vunpack.c.l.b16 %v1356
      %v4019 = vunpack.c.h.b16 %v1356
      %v4020 = vunpack.c.l.b16 %v1357
      %v4021 = vunpack.c.h.b16 %v1357
      %v4022 = vunpack.c.l.b16 %v1358
      %v4023 = vunpack.c.h.b16 %v1358
      %v4024 = vunpack.c.l.b16 %v1359
      %v4025 = vunpack.c.h.b16 %v1359
      %v4026 = vunpack.c.l.b16 %v1360
      %v4027 = vunpack.c.h.b16 %v1360
      %v4028 = vunpack.c.l.b16 %v1361
      %v4029 = vunpack.c.h.b16 %v1361
      %v4030 = vunpack.c.l.b16 %v1362
      %v4031 = vunpack.c.h.b16 %v1362
      %v4032 = vunpack.c.l.b16 %v1363
      %v4033 = vunpack.c.h.b16 %v1363
      %v4034 = vunpack.c.l.b16 %v1364
      %v4035 = vunpack.c.h.b16 %v1364
      %v4036 = vunpack.c.l.b16 %v1365
      %v4037 = vunpack.c.h.b16 %v1365
      %v4038 = vunpack.c.l.b16 %v1366
      %v4039 = vunpack.c.h.b16 %v1366
      %v4040 = vunpack.c.l.b16 %v1367
      %v4041 = vunpack.c.h.b16 %v1367
      %v4042 = vunpack.c.l.b16 %v1368
      %v4043 = vunpack.c.h.b16 %v1368
      %v4044 = vunpack.c.l.b16 %v1369
      %v4045 = vunpack.c.h.b16 %v1369
      %v4046 = vunpack.c.l.b16 %v1370
      %v4047 = vunpack.c.h.b16 %v1370
      %v4048 = vunpack.c.l.b16 %v1371
      %v4049 = vunpack.c.h.b16 %v1371
      %v4050 = vunpack.c.l.b16 %v1372
      %v4051 = vunpack.c.h.b16 %v1372
      %v4052 = vunpack.c.l.b16 %v1373
      %v4053 = vunpack.c.h.b16 %v1373
      %v4054 = vunpack.c.l.b16 %v1374
      %v4055 = vunpack.c.h.b16 %v1374
      %v4056 = vunpack.c.l.b16 %v1375
      %v4057 = vunpack.c.h.b16 %v1375
      %v4058 = vunpack.c.l.b16 %v1376
      %v4059 = vunpack.c.h.b16 %v1376
      %v4060 = vunpack.c.l.b16 %v1377
      %v4061 = vunpack.c.h.b16 %v1377
      %v4062 = vunpack.c.l.b16 %v1378
      %v4063 = vunpack.c.h.b16 %v1378
      %v4064 = vunpack.c.l.b16 %v1379
      %v4065 = vunpack.c.h.b16 %v1379
      %v4066 = vunpack.c.l.b16 %v1380
      %v4067 = vunpack.c.h.b16 %v1380
      %v4068 = vunpack.c.l.b16 %v1381
      %v4069 = vunpack.c.h.b16 %v1381
      %v4070 = vunpack.c.l.b16 %v1382
      %v4071 = vunpack.c.h.b16 %v1382
      %v4072 = vunpack.c.l.b16 %v1383
      %v4073 = vunpack.c.h.b16 %v1383
      %v4074 = vunpack.c.l.b16 %v1384
      %v4075 = vunpack.c.h.b16 %v1384
      %v4076 = vunpack.c.l.b16 %v1385
      %v4077 = vunpack.c.h.b16 %v1385
      %v4078 = vunpack.c.l.b16 %v1386
      %v4079 = vunpack.c.h.b16 %v1386
      %v4080 = vunpack.c.l.b16 %v1387
      %v4081 = vunpack.c.h.b16 %v1387
      %v4082 = vunpack.c.l.b16 %v1388
      %v4083 = vunpack.c.h.b16 %v1388
      %v4084 = vunpack.c.l.b16 %v1389
      %v4085 = vunpack.c.h.b16 %v1389
      %v4086 = vunpack.c.l.b16 %v1390
      %v4087 = vunpack.c.h.b16 %v1390
      %v4088 = vunpack.c.l.b16 %v1391
      %v4089 = vunpack.c.h.b16 %v1391
      %v4090 = vunpack.c.l.b16 %v1392
      %v4091 = vunpack.c.h.b16 %v1392
      %v4092 = vunpack.c.l.b16 %v1393
      %v4093 = vunpack.c.h.b16 %v1393
      %v4094 = vunpack.c.l.b16 %v1394
      %v4095 = vunpack.c.h.b16 %v1394
      %v4096 = vunpack.c.l.b16 %v1395
      %v4097 = vunpack.c.h.b16 %v1395
      %v4098 = vunpack.c.l.b16 %v1396
      %v4099 = vunpack.c.h.b16 %v1396
      %v4100 = vunpack.c.l.b16 %v1397
      %v4101 = vunpack.c.h.b16 %v1397
      %v4102 = vunpack.c.l.b16 %v1398
      %v4103 = vunpack.c.h.b16 %v1398
      %v4104 = vunpack.c.l.b16 %v1399
      %v4105 = vunpack.c.h.b16 %v1399
      %v4106 = vunpack.c.l.b16 %v1400
      %v4107 = vunpack.c.h.b16 %v1400
      %v4108 = vunpack.c.l.b16 %v1401
      %v4109 = vunpack.c.h.b16 %v1401
      %v4110 = vunpack.c.l.b16 %v1402
      %v4111 = vunpack.c.h.b16 %v1402
      %v4112 = vunpack.c.l.b16 %v1403
      %v4113 = vunpack.c.h.b16 %v1403
      %v4114 = vunpack.c.l.b16 %v1404
      %v4115 = vunpack.c.h.b16 %v1404
      %v4116 = vunpack.c.l.b16 %v1405
      %v4117 = vunpack.c.h.b16 %v1405
      %v4118 = vunpack.c.l.b16 %v1406
      %v4119 = vunpack.c.h.b16 %v1406
      %v4120 = vunpack.c.l.b16 %v1407
      %v4121 = vunpack.c.h.b16 %v1407
      %v4122 = vunpack.c.l.b16 %v1408
      %v4123 = vunpack.c.h.b16 %v1408
      %v4124 = vunpack.c.l.b16 %v1409
      %v4125 = vunpack.c.h.b16 %v1409
      %v4126 = vunpack.c.l.b16 %v1410
      %v4127 = vunpack.c.h.b16 %v1410
      %v4128 = vunpack.c.l.b16 %v1411
      %v4129 = vunpack.c.h.b16 %v1411
      %v4130 = vunpack.c.l.b16 %v1412
      %v4131 = vunpack.c.h.b16 %v1412
      %v4132 = vunpack.c.l.b16 %v1413
      %v4133 = vunpack.c.h.b16 %v1413
      %v4134 = vunpack.c.l.b16 %v1414
      %v4135 = vunpack.c.h.b16 %v1414
      %v4136 = vunpack.c.l.b16 %v1415
      %v4137 = vunpack.c.h.b16 %v1415
      %v4138 = vunpack.c.l.b16 %v1416
      %v4139 = vunpack.c.h.b16 %v1416
      %v4140 = vunpack.c.l.b16 %v1417
      %v4141 = vunpack.c.h.b16 %v1417
      %v4142 = vunpack.c.l.b16 %v1418
      %v4143 = vunpack.c.h.b16 %v1418
      %v4144 = vunpack.c.l.b16 %v1419
      %v4145 = vunpack.c.h.b16 %v1419
      %v4146 = vunpack.c.l.b16 %v1420
      %v4147 = vunpack.c.h.b16 %v1420
      %v4148 = vunpack.c.l.b16 %v1421
      %v4149 = vunpack.c.h.b16 %v1421
      %v4150 = vunpack.c.l.b16 %v1422
      %v4151 = vunpack.c.h.b16 %v1422
      %v4152 = vunpack.c.l.b16 %v1423
      %v4153 = vunpack.c.h.b16 %v1423
      %v4154 = vunpack.c.l.b16 %v1424
      %v4155 = vunpack.c.h.b16 %v1424
      %v4156 = vunpack.c.l.b16 %v1425
      %v4157 = vunpack.c.h.b16 %v1425
      %v4158 = vunpack.c.l.b16 %v1426
      %v4159 = vunpack.c.h.b16 %v1426
      %v4160 = vunpack.c.l.b16 %v1427
      %v4161 = vunpack.c.h.b16 %v1427
      %v4162 = vunpack.c.l.b16 %v1428
      %v4163 = vunpack.c.h.b16 %v1428
      %v4164 = vunpack.c.l.b16 %v1429
      %v4165 = vunpack.c.h.b16 %v1429
      %v4166 = vunpack.c.l.b16 %v1430
      %v4167 = vunpack.c.h.b16 %v1430
      %v4168 = vunpack.c.l.b16 %v1431
      %v4169 = vunpack.c.h.b16 %v1431
      %v4170 = vunpack.c.l.b16 %v1432
      %v4171 = vunpack.c.h.b16 %v1432
      %v4172 = vunpack.c.l.b16 %v1433
      %v4173 = vunpack.c.h.b16 %v1433
      %v4174 = vunpack.c.l.b16 %v1434
      %v4175 = vunpack.c.h.b16 %v1434
      %v4176 = vunpack.c.l.b16 %v1435
      %v4177 = vunpack.c.h.b16 %v1435
      %v4178 = vunpack.c.l.b16 %v1436
      %v4179 = vunpack.c.h.b16 %v1436
      %v4180 = vunpack.c.l.b16 %v1437
      %v4181 = vunpack.c.h.b16 %v1437
      %v4182 = vunpack.c.l.b16 %v1438
      %v4183 = vunpack.c.h.b16 %v1438
      %v4184 = vunpack.c.l.b16 %v1439
      %v4185 = vunpack.c.h.b16 %v1439
      %v4186 = vunpack.c.l.b16 %v1440
      %v4187 = vunpack.c.h.b16 %v1440
      %v4188 = vunpack.c.l.b16 %v1441
      %v4189 = vunpack.c.h.b16 %v1441
      %v4190 = vunpack.c.l.b16 %v1442
      %v4191 = vunpack.c.h.b16 %v1442
      %v4192 = vunpack.c.l.b16 %v1443
      %v4193 = vunpack.c.h.b16 %v1443
      %v4194 = vunpack.c.l.b16 %v1444
      %v4195 = vunpack.c.h.b16 %v1444
      %v4196 = vunpack.c.l.b16 %v1445
      %v4197 = vunpack.c.h.b16 %v1445
      %v4198 = vunpack.c.l.b16 %v1446
      %v4199 = vunpack.c.h.b16 %v1446
      %v4200 = vunpack.c.l.b16 %v1447
      %v4201 = vunpack.c.h.b16 %v1447
      %v4202 = vunpack.c.l.b16 %v1448
      %v4203 = vunpack.c.h.b16 %v1448
      %v4204 = vunpack.c.l.b16 %v1449
      %v4205 = vunpack.c.h.b16 %v1449
      %v4206 = vunpack.c.l.b16 %v1450
      %v4207 = vunpack.c.h.b16 %v1450
      %v4208 = vunpack.c.l.b16 %v1451
      %v4209 = vunpack.c.h.b16 %v1451
      %v4210 = vunpack.c.l.b16 %v1452
      %v4211 = vunpack.c.h.b16 %v1452
      %v4212 = vunpack.c.l.b16 %v1453
      %v4213 = vunpack.c.h.b16 %v1453
      %v4214 = vunpack.c.l.b16 %v1454
      %v4215 = vunpack.c.h.b16 %v1454
      %v4216 = vunpack.c.l.b16 %v1455
      %v4217 = vunpack.c.h.b16 %v1455
      %v4218 = vunpack.c.l.b16 %v1456
      %v4219 = vunpack.c.h.b16 %v1456
      %v4220 = vunpack.c.l.b16 %v1457
      %v4221 = vunpack.c.h.b16 %v1457
      %v4222 = vunpack.c.l.b16 %v1458
      %v4223 = vunpack.c.h.b16 %v1458
      %v4224 = vunpack.c.l.b16 %v1459
      %v4225 = vunpack.c.h.b16 %v1459
      %v4226 = vunpack.c.l.b16 %v1460
      %v4227 = vunpack.c.h.b16 %v1460
      %v4228 = vunpack.c.l.b16 %v1461
      %v4229 = vunpack.c.h.b16 %v1461
      %v4230 = vunpack.c.l.b16 %v1462
      %v4231 = vunpack.c.h.b16 %v1462
      %v4232 = vunpack.c.l.b16 %v1463
      %v4233 = vunpack.c.h.b16 %v1463
      %v4234 = vunpack.c.l.b16 %v1464
      %v4235 = vunpack.c.h.b16 %v1464
      %v4236 = vunpack.c.l.b16 %v1465
      %v4237 = vunpack.c.h.b16 %v1465
      %v4238 = vunpack.c.l.b16 %v1466
      %v4239 = vunpack.c.h.b16 %v1466
      %v4240 = vunpack.c.l.b16 %v1467
      %v4241 = vunpack.c.h.b16 %v1467
      %v4242 = vunpack.c.l.b16 %v1468
      %v4243 = vunpack.c.h.b16 %v1468
      %v4244 = vunpack.c.l.b16 %v1469
      %v4245 = vunpack.c.h.b16 %v1469
      %v4246 = vunpack.c.l.b16 %v1470
      %v4247 = vunpack.c.h.b16 %v1470
      %v4248 = vunpack.c.l.b16 %v1471
      %v4249 = vunpack.c.h.b16 %v1471
      %v4250 = vunpack.c.l.b16 %v1472
      %v4251 = vunpack.c.h.b16 %v1472
      %v4252 = vunpack.c.l.b16 %v1473
      %v4253 = vunpack.c.h.b16 %v1473
      %v4254 = vunpack.c.l.b16 %v1474
      %v4255 = vunpack.c.h.b16 %v1474
      %v4256 = vunpack.c.l.b16 %v1475
      %v4257 = vunpack.c.h.b16 %v1475
      %v4258 = vunpack.c.l.b16 %v1476
      %v4259 = vunpack.c.h.b16 %v1476
      %v4260 = vunpack.c.l.b16 %v1477
      %v4261 = vunpack.c.h.b16 %v1477
      %v4262 = vunpack.c.l.b16 %v1478
      %v4263 = vunpack.c.h.b16 %v1478
      %v4264 = vunpack.c.l.b16 %v1479
      %v4265 = vunpack.c.h.b16 %v1479
      %v4266 = vunpack.c.l.b16 %v1480
      %v4267 = vunpack.c.h.b16 %v1480
      %v4268 = vunpack.c.l.b16 %v1481
      %v4269 = vunpack.c.h.b16 %v1481
      %v4270 = vunpack.c.l.b16 %v1482
      %v4271 = vunpack.c.h.b16 %v1482
      %v4272 = vunpack.c.l.b16 %v1483
      %v4273 = vunpack.c.h.b16 %v1483
      %v4274 = vunpack.c.l.b16 %v1484
      %v4275 = vunpack.c.h.b16 %v1484
      %v4276 = vunpack.c.l.b16 %v1485
      %v4277 = vunpack.c.h.b16 %v1485
      %v4278 = vunpack.c.l.b16 %v1486
      %v4279 = vunpack.c.h.b16 %v1486
      %v4280 = vunpack.c.l.b16 %v1487
      %v4281 = vunpack.c.h.b16 %v1487
      %v4282 = vunpack.c.l.b16 %v1488
      %v4283 = vunpack.c.h.b16 %v1488
      %v4284 = vunpack.c.l.b16 %v1489
      %v4285 = vunpack.c.h.b16 %v1489
      %v4286 = vunpack.c.l.b16 %v1490
      %v4287 = vunpack.c.h.b16 %v1490
      %v4288 = vunpack.c.l.b16 %v1491
      %v4289 = vunpack.c.h.b16 %v1491
      %v4290 = vunpack.c.l.b16 %v1492
      %v4291 = vunpack.c.h.b16 %v1492
      %v4292 = vunpack.c.l.b16 %v1493
      %v4293 = vunpack.c.h.b16 %v1493
      %v4294 = vunpack.c.l.b16 %v1494
      %v4295 = vunpack.c.h.b16 %v1494
      %v4296 = vunpack.c.l.b16 %v1495
      %v4297 = vunpack.c.h.b16 %v1495
      %v4298 = vunpack.c.l.b16 %v1496
      %v4299 = vunpack.c.h.b16 %v1496
      %v4300 = vunpack.c.l.b16 %v1497
      %v4301 = vunpack.c.h.b16 %v1497
      %v4302 = vunpack.c.l.b16 %v1498
      %v4303 = vunpack.c.h.b16 %v1498
      %v4304 = vunpack.c.l.b16 %v1499
      %v4305 = vunpack.c.h.b16 %v1499
      %v4306 = vunpack.c.l.b16 %v1500
      %v4307 = vunpack.c.h.b16 %v1500
      %v4308 = vunpack.c.l.b16 %v1501
      %v4309 = vunpack.c.h.b16 %v1501
      %v4310 = vunpack.c.l.b16 %v1502
      %v4311 = vunpack.c.h.b16 %v1502
      %v4312 = vunpack.c.l.b16 %v1503
      %v4313 = vunpack.c.h.b16 %v1503
      %v4314 = vunpack.c.l.b16 %v1504
      %v4315 = vunpack.c.h.b16 %v1504
      %v4316 = vunpack.c.l.b16 %v1505
      %v4317 = vunpack.c.h.b16 %v1505
      %v4318 = vunpack.c.l.b16 %v1506
      %v4319 = vunpack.c.h.b16 %v1506
      %v4320 = vunpack.c.l.b16 %v1507
      %v4321 = vunpack.c.h.b16 %v1507
      %v4322 = vunpack.c.l.b16 %v1508
      %v4323 = vunpack.c.h.b16 %v1508
      %v4324 = vunpack.c.l.b16 %v1509
      %v4325 = vunpack.c.h.b16 %v1509
      %v4326 = vunpack.c.l.b16 %v1510
      %v4327 = vunpack.c.h.b16 %v1510
      %v4328 = vunpack.c.l.b16 %v1511
      %v4329 = vunpack.c.h.b16 %v1511
      %v4330 = vunpack.c.l.b16 %v1512
      %v4331 = vunpack.c.h.b16 %v1512
      %v4332 = vunpack.c.l.b16 %v1513
      %v4333 = vunpack.c.h.b16 %v1513
      %v4334 = vunpack.c.l.b16 %v1514
      %v4335 = vunpack.c.h.b16 %v1514
      %v4336 = vunpack.c.l.b16 %v1515
      %v4337 = vunpack.c.h.b16 %v1515
      %v4338 = vunpack.c.l.b16 %v1516
      %v4339 = vunpack.c.h.b16 %v1516
      %v4340 = vunpack.c.l.b16 %v1517
      %v4341 = vunpack.c.h.b16 %v1517
      %v4342 = vunpack.c.l.b16 %v1518
      %v4343 = vunpack.c.h.b16 %v1518
      %v4344 = vunpack.c.l.b16 %v1519
      %v4345 = vunpack.c.h.b16 %v1519
      %v4346 = vunpack.c.l.b16 %v1520
      %v4347 = vunpack.c.h.b16 %v1520
      %v4348 = vunpack.c.l.b16 %v1521
      %v4349 = vunpack.c.h.b16 %v1521
      %v4350 = vunpack.c.l.b16 %v1522
      %v4351 = vunpack.c.h.b16 %v1522
      %v4352 = vunpack.c.l.b16 %v1523
      %v4353 = vunpack.c.h.b16 %v1523
      %v4354 = vunpack.c.l.b16 %v1524
      %v4355 = vunpack.c.h.b16 %v1524
      %v4356 = vunpack.c.l.b16 %v1525
      %v4357 = vunpack.c.h.b16 %v1525
      %v4358 = vunpack.c.l.b16 %v1526
      %v4359 = vunpack.c.h.b16 %v1526
      %v4360 = vunpack.c.l.b16 %v1527
      %v4361 = vunpack.c.h.b16 %v1527
      %v4362 = vunpack.c.l.b16 %v1528
      %v4363 = vunpack.c.h.b16 %v1528
      %v4364 = vunpack.c.l.b16 %v1529
      %v4365 = vunpack.c.h.b16 %v1529
      %v4366 = vunpack.c.l.b16 %v1530
      %v4367 = vunpack.c.h.b16 %v1530
      %v4368 = vunpack.c.l.b16 %v1531
      %v4369 = vunpack.c.h.b16 %v1531
      %v4370 = vunpack.c.l.b16 %v1532
      %v4371 = vunpack.c.h.b16 %v1532
      %v4372 = vunpack.c.l.b16 %v1533
      %v4373 = vunpack.c.h.b16 %v1533
      %v4374 = vunpack.c.l.b16 %v1534
      %v4375 = vunpack.c.h.b16 %v1534
      %v4376 = vunpack.c.l.b16 %v1535
      %v4377 = vunpack.c.h.b16 %v1535
      %v4378 = vunpack.c.l.b16 %v1536
      %v4379 = vunpack.c.h.b16 %v1536
      %v4380 = vunpack.c.l.b16 %v1537
      %v4381 = vunpack.c.h.b16 %v1537
      %v4382 = vunpack.c.l.b16 %v1538
      %v4383 = vunpack.c.h.b16 %v1538
      %v4384 = vunpack.c.l.b16 %v1539
      %v4385 = vunpack.c.h.b16 %v1539
      %v4386 = vunpack.c.l.b16 %v1540
      %v4387 = vunpack.c.h.b16 %v1540
      %v4388 = vunpack.c.l.b16 %v1541
      %v4389 = vunpack.c.h.b16 %v1541
      %v4390 = vunpack.c.l.b16 %v1542
      %v4391 = vunpack.c.h.b16 %v1542
      %v4392 = vunpack.c.l.b16 %v1543
      %v4393 = vunpack.c.h.b16 %v1543
      %v4394 = vunpack.c.l.b16 %v1544
      %v4395 = vunpack.c.h.b16 %v1544
      %v4396 = vunpack.c.l.b16 %v1545
      %v4397 = vunpack.c.h.b16 %v1545
      %v4398 = vunpack.c.l.b16 %v1546
      %v4399 = vunpack.c.h.b16 %v1546
      %v4400 = vunpack.c.l.b16 %v1547
      %v4401 = vunpack.c.h.b16 %v1547
      %v4402 = vunpack.c.l.b16 %v1548
      %v4403 = vunpack.c.h.b16 %v1548
      %v4404 = vunpack.c.l.b16 %v1549
      %v4405 = vunpack.c.h.b16 %v1549
      %v4406 = vunpack.c.l.b16 %v1550
      %v4407 = vunpack.c.h.b16 %v1550
      %v4408 = vunpack.c.l.b16 %v1551
      %v4409 = vunpack.c.h.b16 %v1551
      %v4410 = vunpack.c.l.b16 %v1552
      %v4411 = vunpack.c.h.b16 %v1552
      %v4412 = vunpack.c.l.b16 %v1553
      %v4413 = vunpack.c.h.b16 %v1553
      %v4414 = vunpack.c.l.b16 %v1554
      %v4415 = vunpack.c.h.b16 %v1554
      %v4416 = vunpack.c.l.b16 %v1555
      %v4417 = vunpack.c.h.b16 %v1555
      %v4418 = vunpack.c.l.b16 %v1556
      %v4419 = vunpack.c.h.b16 %v1556
      %v4420 = vunpack.c.l.b16 %v1557
      %v4421 = vunpack.c.h.b16 %v1557
      %v4422 = vunpack.c.l.b16 %v1558
      %v4423 = vunpack.c.h.b16 %v1558
      %v4424 = vunpack.c.l.b16 %v1559
      %v4425 = vunpack.c.h.b16 %v1559
      %v4426 = vunpack.c.l.b16 %v1560
      %v4427 = vunpack.c.h.b16 %v1560
      %v4428 = vunpack.c.l.b16 %v1561
      %v4429 = vunpack.c.h.b16 %v1561
      %v4430 = vunpack.c.l.b16 %v1562
      %v4431 = vunpack.c.h.b16 %v1562
      %v4432 = vunpack.c.l.b16 %v1563
      %v4433 = vunpack.c.h.b16 %v1563
      %v4434 = vunpack.c.l.b16 %v1564
      %v4435 = vunpack.c.h.b16 %v1564
      %v4436 = vunpack.c.l.b16 %v1565
      %v4437 = vunpack.c.h.b16 %v1565
      %v4438 = vunpack.c.l.b16 %v1566
      %v4439 = vunpack.c.h.b16 %v1566
      %v4440 = vunpack.c.l.b16 %v1567
      %v4441 = vunpack.c.h.b16 %v1567
      %v4442 = vunpack.c.l.b16 %v1568
      %v4443 = vunpack.c.h.b16 %v1568
      %v4444 = vunpack.c.l.b16 %v1569
      %v4445 = vunpack.c.h.b16 %v1569
      %v4446 = vunpack.c.l.b16 %v1570
      %v4447 = vunpack.c.h.b16 %v1570
      %v4448 = vunpack.c.l.b16 %v1571
      %v4449 = vunpack.c.h.b16 %v1571
      %v4450 = vunpack.c.l.b16 %v1572
      %v4451 = vunpack.c.h.b16 %v1572
      %v4452 = vunpack.c.l.b16 %v1573
      %v4453 = vunpack.c.h.b16 %v1573
      %v4454 = vunpack.c.l.b16 %v1574
      %v4455 = vunpack.c.h.b16 %v1574
      %v4456 = vunpack.c.l.b16 %v1575
      %v4457 = vunpack.c.h.b16 %v1575
      %v4458 = vunpack.c.l.b16 %v1576
      %v4459 = vunpack.c.h.b16 %v1576
      %v4460 = vunpack.c.l.b16 %v1577
      %v4461 = vunpack.c.h.b16 %v1577
      %v4462 = vunpack.c.l.b16 %v1578
      %v4463 = vunpack.c.h.b16 %v1578
      %v4464 = vunpack.c.l.b16 %v1579
      %v4465 = vunpack.c.h.b16 %v1579
      %v4466 = vunpack.c.l.b16 %v1580
      %v4467 = vunpack.c.h.b16 %v1580
      %v4468 = vunpack.c.l.b16 %v1581
      %v4469 = vunpack.c.h.b16 %v1581
      %v4470 = vunpack.c.l.b16 %v1582
      %v4471 = vunpack.c.h.b16 %v1582
      %v4472 = vunpack.c.l.b16 %v1583
      %v4473 = vunpack.c.h.b16 %v1583
      %v4474 = vunpack.c.l.b16 %v1584
      %v4475 = vunpack.c.h.b16 %v1584
      %v4476 = vunpack.c.l.b16 %v1585
      %v4477 = vunpack.c.h.b16 %v1585
      %v4478 = vunpack.c.l.b16 %v1586
      %v4479 = vunpack.c.h.b16 %v1586
      %v4480 = vunpack.c.l.b16 %v1587
      %v4481 = vunpack.c.h.b16 %v1587
      %v4482 = vunpack.c.l.b16 %v1588
      %v4483 = vunpack.c.h.b16 %v1588
      %v4484 = vunpack.c.l.b16 %v1589
      %v4485 = vunpack.c.h.b16 %v1589
      %v4486 = vunpack.c.l.b16 %v1590
      %v4487 = vunpack.c.h.b16 %v1590
      %v4488 = vunpack.c.l.b16 %v1591
      %v4489 = vunpack.c.h.b16 %v1591
      %v4490 = vunpack.c.l.b16 %v1592
      %v4491 = vunpack.c.h.b16 %v1592
      %v4492 = vunpack.c.l.b16 %v1593
      %v4493 = vunpack.c.h.b16 %v1593
      %v4494 = vunpack.c.l.b16 %v1594
      %v4495 = vunpack.c.h.b16 %v1594
      %v4496 = vunpack.c.l.b16 %v1595
      %v4497 = vunpack.c.h.b16 %v1595
      %v4498 = vunpack.c.l.b16 %v1596
      %v4499 = vunpack.c.h.b16 %v1596
      %v4500 = vunpack.c.l.b16 %v1597
      %v4501 = vunpack.c.h.b16 %v1597
      %v4502 = vunpack.c.l.b16 %v1598
      %v4503 = vunpack.c.h.b16 %v1598
      %v4504 = vunpack.c.l.b16 %v1599
      %v4505 = vunpack.c.h.b16 %v1599
      %v4506 = vunpack.c.l.b16 %v1600
      %v4507 = vunpack.c.h.b16 %v1600
      %v4508 = vunpack.c.l.b16 %v1601
      %v4509 = vunpack.c.h.b16 %v1601
      %v4510 = vunpack.c.l.b16 %v1602
      %v4511 = vunpack.c.h.b16 %v1602
      %v4512 = vunpack.c.l.b16 %v1603
      %v4513 = vunpack.c.h.b16 %v1603
      %v4514 = vunpack.c.l.b16 %v1604
      %v4515 = vunpack.c.h.b16 %v1604
      %v4516 = vunpack.c.l.b16 %v1605
      %v4517 = vunpack.c.h.b16 %v1605
      %v4518 = vunpack.c.l.b16 %v1606
      %v4519 = vunpack.c.h.b16 %v1606
      %v4520 = vunpack.c.l.b16 %v1607
      %v4521 = vunpack.c.h.b16 %v1607
      %v4522 = vunpack.c.l.b16 %v1608
      %v4523 = vunpack.c.h.b16 %v1608
      %v4524 = vunpack.c.l.b16 %v1609
      %v4525 = vunpack.c.h.b16 %v1609
      %v4526 = vunpack.c.l.b16 %v1610
      %v4527 = vunpack.c.h.b16 %v1610
      %v4528 = vunpack.c.l.b16 %v1611
      %v4529 = vunpack.c.h.b16 %v1611
      %v4530 = vunpack.c.l.b16 %v1612
      %v4531 = vunpack.c.h.b16 %v1612
      %v4532 = vunpack.c.l.b16 %v1613
      %v4533 = vunpack.c.h.b16 %v1613
      %v4534 = vunpack.c.l.b16 %v1614
      %v4535 = vunpack.c.h.b16 %v1614
      %v4536 = vunpack.c.l.b16 %v1615
      %v4537 = vunpack.c.h.b16 %v1615
      %v4538 = vunpack.c.l.b16 %v1616
      %v4539 = vunpack.c.h.b16 %v1616
      %v4540 = vunpack.c.l.b16 %v1617
      %v4541 = vunpack.c.h.b16 %v1617
      %v4542 = vunpack.c.l.b16 %v1618
      %v4543 = vunpack.c.h.b16 %v1618
      %v4544 = vunpack.c.l.b16 %v1619
      %v4545 = vunpack.c.h.b16 %v1619
      %v4546 = vunpack.c.l.b16 %v1620
      %v4547 = vunpack.c.h.b16 %v1620
      %v4548 = vunpack.c.l.b16 %v1621
      %v4549 = vunpack.c.h.b16 %v1621
      %v4550 = vunpack.c.l.b16 %v1622
      %v4551 = vunpack.c.h.b16 %v1622
      %v4552 = vunpack.c.l.b16 %v1623
      %v4553 = vunpack.c.h.b16 %v1623
      %v4554 = vunpack.c.l.b16 %v1624
      %v4555 = vunpack.c.h.b16 %v1624
      %v4556 = vunpack.c.l.b16 %v1625
      %v4557 = vunpack.c.h.b16 %v1625
      %v4558 = vunpack.c.l.b16 %v1626
      %v4559 = vunpack.c.h.b16 %v1626
      %v4560 = vunpack.c.l.b16 %v1627
      %v4561 = vunpack.c.h.b16 %v1627
      %v4562 = vunpack.c.l.b16 %v1628
      %v4563 = vunpack.c.h.b16 %v1628
      %v4564 = vunpack.c.l.b16 %v1629
      %v4565 = vunpack.c.h.b16 %v1629
      %v4566 = vunpack.c.l.b16 %v1630
      %v4567 = vunpack.c.h.b16 %v1630
      %v4568 = vunpack.c.l.b16 %v1631
      %v4569 = vunpack.c.h.b16 %v1631
      %v4570 = vunpack.c.l.b16 %v1632
      %v4571 = vunpack.c.h.b16 %v1632
      %v4572 = vunpack.c.l.b16 %v1633
      %v4573 = vunpack.c.h.b16 %v1633
      %v4574 = vunpack.c.l.b16 %v1634
      %v4575 = vunpack.c.h.b16 %v1634
      %v4576 = vunpack.c.l.b16 %v1635
      %v4577 = vunpack.c.h.b16 %v1635
      %v4578 = vunpack.c.l.b16 %v1636
      %v4579 = vunpack.c.h.b16 %v1636
      %v4580 = vunpack.c.l.b16 %v1637
      %v4581 = vunpack.c.h.b16 %v1637
      %v4582 = vunpack.c.l.b16 %v1638
      %v4583 = vunpack.c.h.b16 %v1638
      %v4584 = vunpack.c.l.b16 %v1639
      %v4585 = vunpack.c.h.b16 %v1639
      %v4586 = vunpack.c.l.b16 %v1640
      %v4587 = vunpack.c.h.b16 %v1640
      %v4588 = vunpack.c.l.b16 %v1641
      %v4589 = vunpack.c.h.b16 %v1641
      %v4590 = vunpack.c.l.b16 %v1642
      %v4591 = vunpack.c.h.b16 %v1642
      %v4592 = vunpack.c.l.b16 %v1643
      %v4593 = vunpack.c.h.b16 %v1643
      %v4594 = vunpack.c.l.b16 %v1644
      %v4595 = vunpack.c.h.b16 %v1644
      %v4596 = vunpack.c.l.b16 %v1645
      %v4597 = vunpack.c.h.b16 %v1645
      %v4598 = vunpack.c.l.b16 %v1646
      %v4599 = vunpack.c.h.b16 %v1646
      %v4600 = vunpack.c.l.b16 %v1647
      %v4601 = vunpack.c.h.b16 %v1647
      %v4602 = vunpack.c.l.b16 %v1648
      %v4603 = vunpack.c.h.b16 %v1648
      %v4604 = vunpack.c.l.b16 %v1649
      %v4605 = vunpack.c.h.b16 %v1649
      %v4606 = vunpack.c.l.b16 %v1650
      %v4607 = vunpack.c.h.b16 %v1650
      %v4608 = vunpack.c.l.b16 %v1651
      %v4609 = vunpack.c.h.b16 %v1651
      %v4610 = vunpack.c.l.b16 %v1652
      %v4611 = vunpack.c.h.b16 %v1652
      %v4612 = vunpack.c.l.b16 %v1653
      %v4613 = vunpack.c.h.b16 %v1653
      %v4614 = vunpack.c.l.b16 %v1654
      %v4615 = vunpack.c.h.b16 %v1654
      %v4616 = vunpack.c.l.b16 %v1655
      %v4617 = vunpack.c.h.b16 %v1655
      %v4618 = vunpack.c.l.b16 %v1656
      %v4619 = vunpack.c.h.b16 %v1656
      %v4620 = vunpack.c.l.b16 %v1657
      %v4621 = vunpack.c.h.b16 %v1657
      %v4622 = vunpack.c.l.b16 %v1658
      %v4623 = vunpack.c.h.b16 %v1658
      %v4624 = vunpack.c.l.b16 %v1659
      %v4625 = vunpack.c.h.b16 %v1659
      %v4626 = vunpack.c.l.b16 %v1660
      %v4627 = vunpack.c.h.b16 %v1660
      %v4628 = vunpack.c.l.b16 %v1661
      %v4629 = vunpack.c.h.b16 %v1661
      %v4630 = vunpack.c.l.b16 %v1662
      %v4631 = vunpack.c.h.b16 %v1662
      %v4632 = vunpack.c.l.b16 %v1663
      %v4633 = vunpack.c.h.b16 %v1663
      %v4634 = vunpack.c.l.b16 %v1664
      %v4635 = vunpack.c.h.b16 %v1664
      %v4636 = vunpack.c.l.b16 %v1665
      %v4637 = vunpack.c.h.b16 %v1665
      %v4638 = vunpack.c.l.b16 %v1666
      %v4639 = vunpack.c.h.b16 %v1666
      %v4640 = vunpack.c.l.b16 %v1667
      %v4641 = vunpack.c.h.b16 %v1667
      %v4642 = vunpack.c.l.b16 %v1668
      %v4643 = vunpack.c.h.b16 %v1668
      %v4644 = vunpack.c.l.b16 %v1669
      %v4645 = vunpack.c.h.b16 %v1669
      %v4646 = vunpack.c.l.b16 %v1670
      %v4647 = vunpack.c.h.b16 %v1670
      %v4648 = vunpack.c.l.b16 %v1671
      %v4649 = vunpack.c.h.b16 %v1671
      %v4650 = vunpack.c.l.b16 %v1672
      %v4651 = vunpack.c.h.b16 %v1672
      %v4652 = vunpack.c.l.b16 %v1673
      %v4653 = vunpack.c.h.b16 %v1673
      %v4654 = vunpack.c.l.b16 %v1674
      %v4655 = vunpack.c.h.b16 %v1674
      %v4656 = vunpack.c.l.b16 %v1675
      %v4657 = vunpack.c.h.b16 %v1675
      %v4658 = vunpack.c.l.b16 %v1676
      %v4659 = vunpack.c.h.b16 %v1676
      %v4660 = vunpack.c.l.b16 %v1677
      %v4661 = vunpack.c.h.b16 %v1677
      %v4662 = vunpack.c.l.b16 %v1678
      %v4663 = vunpack.c.h.b16 %v1678
      %v4664 = vunpack.c.l.b16 %v1679
      %v4665 = vunpack.c.h.b16 %v1679
      %v4666 = vunpack.c.l.b16 %v1680
      %v4667 = vunpack.c.h.b16 %v1680
      %v4668 = vunpack.c.l.b16 %v1681
      %v4669 = vunpack.c.h.b16 %v1681
      %v4670 = vunpack.c.l.b16 %v1682
      %v4671 = vunpack.c.h.b16 %v1682
      %v4672 = vunpack.c.l.b16 %v1683
      %v4673 = vunpack.c.h.b16 %v1683
      %v4674 = vunpack.c.l.b16 %v1684
      %v4675 = vunpack.c.h.b16 %v1684
      %v4676 = vunpack.c.l.b16 %v1685
      %v4677 = vunpack.c.h.b16 %v1685
      %v4678 = vunpack.c.l.b16 %v1686
      %v4679 = vunpack.c.h.b16 %v1686
      %v4680 = vunpack.c.l.b16 %v1687
      %v4681 = vunpack.c.h.b16 %v1687
      %v4682 = vunpack.c.l.b16 %v1688
      %v4683 = vunpack.c.h.b16 %v1688
      %v4684 = vunpack.c.l.b16 %v1689
      %v4685 = vunpack.c.h.b16 %v1689
      %v4686 = vunpack.c.l.b16 %v1690
      %v4687 = vunpack.c.h.b16 %v1690
      %v4688 = vunpack.c.l.b16 %v1691
      %v4689 = vunpack.c.h.b16 %v1691
      %v4690 = vunpack.c.l.b16 %v1692
      %v4691 = vunpack.c.h.b16 %v1692
      %v4692 = vunpack.c.l.b16 %v1693
      %v4693 = vunpack.c.h.b16 %v1693
      %v4694 = vunpack.c.l.b16 %v1694
      %v4695 = vunpack.c.h.b16 %v1694
      %v4696 = vunpack.c.l.b16 %v1695
      %v4697 = vunpack.c.h.b16 %v1695
      %v4698 = vunpack.c.l.b16 %v1696
      %v4699 = vunpack.c.h.b16 %v1696
      %v4700 = vunpack.c.l.b16 %v1697
      %v4701 = vunpack.c.h.b16 %v1697
      %v4702 = vunpack.c.l.b16 %v1698
      %v4703 = vunpack.c.h.b16 %v1698
      %v4704 = vunpack.c.l.b16 %v1699
      %v4705 = vunpack.c.h.b16 %v1699
      %v4706 = vunpack.c.l.b16 %v1700
      %v4707 = vunpack.c.h.b16 %v1700
      %v4708 = vunpack.c.l.b16 %v1701
      %v4709 = vunpack.c.h.b16 %v1701
      %v4710 = vunpack.c.l.b16 %v1702
      %v4711 = vunpack.c.h.b16 %v1702
      %v4712 = vunpack.c.l.b16 %v1703
      %v4713 = vunpack.c.h.b16 %v1703
      %v4714 = vunpack.c.l.b16 %v1704
      %v4715 = vunpack.c.h.b16 %v1704
      %v4716 = vunpack.c.l.b16 %v1705
      %v4717 = vunpack.c.h.b16 %v1705
      %v4718 = vunpack.c.l.b16 %v1706
      %v4719 = vunpack.c.h.b16 %v1706
      %v4720 = vunpack.c.l.b16 %v1707
      %v4721 = vunpack.c.h.b16 %v1707
      %v4722 = vunpack.c.l.b16 %v1708
      %v4723 = vunpack.c.h.b16 %v1708
      %v4724 = vunpack.c.l.b16 %v1709
      %v4725 = vunpack.c.h.b16 %v1709
      %v4726 = vunpack.c.l.b16 %v1710
      %v4727 = vunpack.c.h.b16 %v1710
      %v4728 = vunpack.c.l.b16 %v1711
      %v4729 = vunpack.c.h.b16 %v1711
      %v4730 = vunpack.c.l.b16 %v1712
      %v4731 = vunpack.c.h.b16 %v1712
      %v4732 = vunpack.c.l.b16 %v1713
      %v4733 = vunpack.c.h.b16 %v1713
      %v4734 = vunpack.c.l.b16 %v1714
      %v4735 = vunpack.c.h.b16 %v1714
      %v4736 = vunpack.c.l.b16 %v1715
      %v4737 = vunpack.c.h.b16 %v1715
      %v4738 = vunpack.c.l.b16 %v1716
      %v4739 = vunpack.c.h.b16 %v1716
      %v4740 = vunpack.c.l.b16 %v1717
      %v4741 = vunpack.c.h.b16 %v1717
      %v4742 = vunpack.c.l.b16 %v1718
      %v4743 = vunpack.c.h.b16 %v1718
      %v4744 = vunpack.c.l.b16 %v1719
      %v4745 = vunpack.c.h.b16 %v1719
      %v4746 = vunpack.c.l.b16 %v1720
      %v4747 = vunpack.c.h.b16 %v1720
      %v4748 = vunpack.c.l.b16 %v1721
      %v4749 = vunpack.c.h.b16 %v1721
      %v4750 = vunpack.c.l.b16 %v1722
      %v4751 = vunpack.c.h.b16 %v1722
      %v4752 = vunpack.c.l.b16 %v1723
      %v4753 = vunpack.c.h.b16 %v1723
      %v4754 = vunpack.c.l.b16 %v1724
      %v4755 = vunpack.c.h.b16 %v1724
      %v4756 = vunpack.c.l.b16 %v1725
      %v4757 = vunpack.c.h.b16 %v1725
      %v4758 = vunpack.c.l.b16 %v1726
      %v4759 = vunpack.c.h.b16 %v1726
      %v4760 = vunpack.c.l.b16 %v1727
      %v4761 = vunpack.c.h.b16 %v1727
      %v4762 = vunpack.c.l.b16 %v1728
      %v4763 = vunpack.c.h.b16 %v1728
      %v4764 = vunpack.c.l.b16 %v1729
      %v4765 = vunpack.c.h.b16 %v1729
      %v4766 = vunpack.c.l.b16 %v1730
      %v4767 = vunpack.c.h.b16 %v1730
      %v4768 = vunpack.c.l.b16 %v1731
      %v4769 = vunpack.c.h.b16 %v1731
      %v4770 = vunpack.c.l.b16 %v1732
      %v4771 = vunpack.c.h.b16 %v1732
      %v4772 = vunpack.c.l.b16 %v1733
      %v4773 = vunpack.c.h.b16 %v1733
      %v4774 = vunpack.c.l.b16 %v1734
      %v4775 = vunpack.c.h.b16 %v1734
      %v4776 = vunpack.c.l.b16 %v1735
      %v4777 = vunpack.c.h.b16 %v1735
      %v4778 = vunpack.c.l.b16 %v1736
      %v4779 = vunpack.c.h.b16 %v1736
      %v4780 = vunpack.c.l.b16 %v1737
      %v4781 = vunpack.c.h.b16 %v1737
      %v4782 = vunpack.c.l.b16 %v1738
      %v4783 = vunpack.c.h.b16 %v1738
      %v4784 = vunpack.c.l.b16 %v1739
      %v4785 = vunpack.c.h.b16 %v1739
      %v4786 = vunpack.c.l.b16 %v1740
      %v4787 = vunpack.c.h.b16 %v1740
      %v4788 = vunpack.c.l.b16 %v1741
      %v4789 = vunpack.c.h.b16 %v1741
      %v4790 = vunpack.c.l.b16 %v1742
      %v4791 = vunpack.c.h.b16 %v1742
      %v4792 = vunpack.c.l.b16 %v1743
      %v4793 = vunpack.c.h.b16 %v1743
      %v4794 = vunpack.c.l.b16 %v1744
      %v4795 = vunpack.c.h.b16 %v1744
      %v4796 = vunpack.c.l.b16 %v1745
      %v4797 = vunpack.c.h.b16 %v1745
      %v4798 = vunpack.c.l.b16 %v1746
      %v4799 = vunpack.c.h.b16 %v1746
      %v4800 = vunpack.c.l.b16 %v1747
      %v4801 = vunpack.c.h.b16 %v1747
      %v4802 = vunpack.c.l.b16 %v1748
      %v4803 = vunpack.c.h.b16 %v1748
      %v4804 = vunpack.c.l.b16 %v1749
      %v4805 = vunpack.c.h.b16 %v1749
      %v4806 = vunpack.c.l.b16 %v1750
      %v4807 = vunpack.c.h.b16 %v1750
      %v4808 = vunpack.c.l.b16 %v1751
      %v4809 = vunpack.c.h.b16 %v1751
      %v4810 = vunpack.c.l.b16 %v1752
      %v4811 = vunpack.c.h.b16 %v1752
      %v4812 = vunpack.c.l.b16 %v1753
      %v4813 = vunpack.c.h.b16 %v1753
      %v4814 = vunpack.c.l.b16 %v1754
      %v4815 = vunpack.c.h.b16 %v1754
      %v4816 = vunpack.c.l.b16 %v1755
      %v4817 = vunpack.c.h.b16 %v1755
      %v4818 = vunpack.c.l.b16 %v1756
      %v4819 = vunpack.c.h.b16 %v1756
      %v4820 = vunpack.c.l.b16 %v1757
      %v4821 = vunpack.c.h.b16 %v1757
      %v4822 = vunpack.c.l.b16 %v1758
      %v4823 = vunpack.c.h.b16 %v1758
      %v4824 = vunpack.c.l.b16 %v1759
      %v4825 = vunpack.c.h.b16 %v1759
      %v4826 = vunpack.c.l.b16 %v1760
      %v4827 = vunpack.c.h.b16 %v1760
      %v4828 = vunpack.c.l.b16 %v1761
      %v4829 = vunpack.c.h.b16 %v1761
      %v4830 = vunpack.c.l.b16 %v1762
      %v4831 = vunpack.c.h.b16 %v1762
      %v4832 = vunpack.c.l.b16 %v1763
      %v4833 = vunpack.c.h.b16 %v1763
      %v4834 = vunpack.c.l.b16 %v1764
      %v4835 = vunpack.c.h.b16 %v1764
      %v4836 = vunpack.c.l.b16 %v1765
      %v4837 = vunpack.c.h.b16 %v1765
      %v4838 = vpack.c.b16 %v2806, %v2790
      %v4839 = vpack.c.b16 %v2807, %v2791
      %v4840 = vpack.c.b16 %v2808, %v2792
      %v4841 = vpack.c.b16 %v2809, %v2793
      %v4842 = vpack.c.b16 %v2810, %v2794
      %v4843 = vpack.c.b16 %v2811, %v2795
      %v4844 = vpack.c.b16 %v2812, %v2796
      %v4845 = vpack.c.b16 %v2813, %v2797
      %v4846 = vpack.c.b16 %v2814, %v2798
      %v4847 = vpack.c.b16 %v2815, %v2799
      %v4848 = vpack.c.b16 %v2816, %v2800
      %v4849 = vpack.c.b16 %v2817, %v2801
      %v4850 = vpack.c.b16 %v2818, %v2802
      %v4851 = vpack.c.b16 %v2819, %v2803
      %v4852 = vpack.c.b16 %v2820, %v2804
      %v4853 = vpack.c.b16 %v2821, %v2805
      %v4854 = vpack.c.b16 %v2838, %v2822
      %v4855 = vpack.c.b16 %v2839, %v2823
      %v4856 = vpack.c.b16 %v2840, %v2824
      %v4857 = vpack.c.b16 %v2841, %v2825
      %v4858 = vpack.c.b16 %v2842, %v2826
      %v4859 = vpack.c.b16 %v2843, %v2827
      %v4860 = vpack.c.b16 %v2844, %v2828
      %v4861 = vpack.c.b16 %v2845, %v2829
      %v4862 = vpack.c.b16 %v2846, %v2830
      %v4863 = vpack.c.b16 %v2847, %v2831
      %v4864 = vpack.c.b16 %v2848, %v2832
      %v4865 = vpack.c.b16 %v2849, %v2833
      %v4866 = vpack.c.b16 %v2850, %v2834
      %v4867 = vpack.c.b16 %v2851, %v2835
      %v4868 = vpack.c.b16 %v2852, %v2836
      %v4869 = vpack.c.b16 %v2853, %v2837
      %v4870 = vpack.c.b16 %v2870, %v2854
      %v4871 = vpack.c.b16 %v2871, %v2855
      %v4872 = vpack.c.b16 %v2872, %v2856
      %v4873 = vpack.c.b16 %v2873, %v2857
      %v4874 = vpack.c.b16 %v2874, %v2858
      %v4875 = vpack.c.b16 %v2875, %v2859
      %v4876 = vpack.c.b16 %v2876, %v2860
      %v4877 = vpack.c.b16 %v2877, %v2861
      %v4878 = vpack.c.b16 %v2878, %v2862
      %v4879 = vpack.c.b16 %v2879, %v2863
      %v4880 = vpack.c.b16 %v2880, %v2864
      %v4881 = vpack.c.b16 %v2881, %v2865
      %v4882 = vpack.c.b16 %v2882, %v2866
      %v4883 = vpack.c.b16 %v2883, %v2867
      %v4884 = vpack.c.b16 %v2884, %v2868
      %v4885 = vpack.c.b16 %v2885, %v2869
      %v4886 = vpack.c.b16 %v2902, %v2886
      %v4887 = vpack.c.b16 %v2903, %v2887
      %v4888 = vpack.c.b16 %v2904, %v2888
      %v4889 = vpack.c.b16 %v2905, %v2889
      %v4890 = vpack.c.b16 %v2906, %v2890
      %v4891 = vpack.c.b16 %v2907, %v2891
      %v4892 = vpack.c.b16 %v2908, %v2892
      %v4893 = vpack.c.b16 %v2909, %v2893
      %v4894 = vpack.c.b16 %v2910, %v2894
      %v4895 = vpack.c.b16 %v2911, %v2895
      %v4896 = vpack.c.b16 %v2912, %v2896
      %v4897 = vpack.c.b16 %v2913, %v2897
      %v4898 = vpack.c.b16 %v2914, %v2898
      %v4899 = vpack.c.b16 %v2915, %v2899
      %v4900 = vpack.c.b16 %v2916, %v2900
      %v4901 = vpack.c.b16 %v2917, %v2901
      %v4902 = vpack.c.b16 %v2934, %v2918
      %v4903 = vpack.c.b16 %v2935, %v2919
      %v4904 = vpack.c.b16 %v2936, %v2920
      %v4905 = vpack.c.b16 %v2937, %v2921
      %v4906 = vpack.c.b16 %v2938, %v2922
      %v4907 = vpack.c.b16 %v2939, %v2923
      %v4908 = vpack.c.b16 %v2940, %v2924
      %v4909 = vpack.c.b16 %v2941, %v2925
      %v4910 = vpack.c.b16 %v2942, %v2926
      %v4911 = vpack.c.b16 %v2943, %v2927
      %v4912 = vpack.c.b16 %v2944, %v2928
      %v4913 = vpack.c.b16 %v2945, %v2929
      %v4914 = vpack.c.b16 %v2946, %v2930
      %v4915 = vpack.c.b16 %v2947, %v2931
      %v4916 = vpack.c.b16 %v2948, %v2932
      %v4917 = vpack.c.b16 %v2949, %v2933
      %v4918 = vpack.c.b16 %v2966, %v2950
      %v4919 = vpack.c.b16 %v2967, %v2951
      %v4920 = vpack.c.b16 %v2968, %v2952
      %v4921 = vpack.c.b16 %v2969, %v2953
      %v4922 = vpack.c.b16 %v2970, %v2954
      %v4923 = vpack.c.b16 %v2971, %v2955
      %v4924 = vpack.c.b16 %v2972, %v2956
      %v4925 = vpack.c.b16 %v2973, %v2957
      %v4926 = vpack.c.b16 %v2974, %v2958
      %v4927 = vpack.c.b16 %v2975, %v2959
      %v4928 = vpack.c.b16 %v2976, %v2960
      %v4929 = vpack.c.b16 %v2977, %v2961
      %v4930 = vpack.c.b16 %v2978, %v2962
      %v4931 = vpack.c.b16 %v2979, %v2963
      %v4932 = vpack.c.b16 %v2980, %v2964
      %v4933 = vpack.c.b16 %v2981, %v2965
      %v4934 = vpack.c.b16 %v2998, %v2982
      %v4935 = vpack.c.b16 %v2999, %v2983
      %v4936 = vpack.c.b16 %v3000, %v2984
      %v4937 = vpack.c.b16 %v3001, %v2985
      %v4938 = vpack.c.b16 %v3002, %v2986
      %v4939 = vpack.c.b16 %v3003, %v2987
      %v4940 = vpack.c.b16 %v3004, %v2988
      %v4941 = vpack.c.b16 %v3005, %v2989
      %v4942 = vpack.c.b16 %v3006, %v2990
      %v4943 = vpack.c.b16 %v3007, %v2991
      %v4944 = vpack.c.b16 %v3008, %v2992
      %v4945 = vpack.c.b16 %v3009, %v2993
      %v4946 = vpack.c.b16 %v3010, %v2994
      %v4947 = vpack.c.b16 %v3011, %v2995
      %v4948 = vpack.c.b16 %v3012, %v2996
      %v4949 = vpack.c.b16 %v3013, %v2997
      %v4950 = vpack.c.b16 %v3030, %v3014
      %v4951 = vpack.c.b16 %v3031, %v3015
      %v4952 = vpack.c.b16 %v3032, %v3016
      %v4953 = vpack.c.b16 %v3033, %v3017
      %v4954 = vpack.c.b16 %v3034, %v3018
      %v4955 = vpack.c.b16 %v3035, %v3019
      %v4956 = vpack.c.b16 %v3036, %v3020
      %v4957 = vpack.c.b16 %v3037, %v3021
      %v4958 = vpack.c.b16 %v3038, %v3022
      %v4959 = vpack.c.b16 %v3039, %v3023
      %v4960 = vpack.c.b16 %v3040, %v3024
      %v4961 = vpack.c.b16 %v3041, %v3025
      %v4962 = vpack.c.b16 %v3042, %v3026
      %v4963 = vpack.c.b16 %v3043, %v3027
      %v4964 = vpack.c.b16 %v3044, %v3028
      %v4965 = vpack.c.b16 %v3045, %v3029
      %v4966 = vpack.c.b16 %v3062, %v3046
      %v4967 = vpack.c.b16 %v3063, %v3047
      %v4968 = vpack.c.b16 %v3064, %v3048
      %v4969 = vpack.c.b16 %v3065, %v3049
      %v4970 = vpack.c.b16 %v3066, %v3050
      %v4971 = vpack.c.b16 %v3067, %v3051
      %v4972 = vpack.c.b16 %v3068, %v3052
      %v4973 = vpack.c.b16 %v3069, %v3053
      %v4974 = vpack.c.b16 %v3070, %v3054
      %v4975 = vpack.c.b16 %v3071, %v3055
      %v4976 = vpack.c.b16 %v3072, %v3056
      %v4977 = vpack.c.b16 %v3073, %v3057
      %v4978 = vpack.c.b16 %v3074, %v3058
      %v4979 = vpack.c.b16 %v3075, %v3059
      %v4980 = vpack.c.b16 %v3076, %v3060
      %v4981 = vpack.c.b16 %v3077, %v3061
      %v4982 = vpack.c.b16 %v3094, %v3078
      %v4983 = vpack.c.b16 %v3095, %v3079
      %v4984 = vpack.c.b16 %v3096, %v3080
      %v4985 = vpack.c.b16 %v3097, %v3081
      %v4986 = vpack.c.b16 %v3098, %v3082
      %v4987 = vpack.c.b16 %v3099, %v3083
      %v4988 = vpack.c.b16 %v3100, %v3084
      %v4989 = vpack.c.b16 %v3101, %v3085
      %v4990 = vpack.c.b16 %v3102, %v3086
      %v4991 = vpack.c.b16 %v3103, %v3087
      %v4992 = vpack.c.b16 %v3104, %v3088
      %v4993 = vpack.c.b16 %v3105, %v3089
      %v4994 = vpack.c.b16 %v3106, %v3090
      %v4995 = vpack.c.b16 %v3107, %v3091
      %v4996 = vpack.c.b16 %v3108, %v3092
      %v4997 = vpack.c.b16 %v3109, %v3093
      %v4998 = vpack.c.b16 %v3126, %v3110
      %v4999 = vpack.c.b16 %v3127, %v3111
      %v5000 = vpack.c.b16 %v3128, %v3112
      %v5001 = vpack.c.b16 %v3129, %v3113
      %v5002 = vpack.c.b16 %v3130, %v3114
      %v5003 = vpack.c.b16 %v3131, %v3115
      %v5004 = vpack.c.b16 %v3132, %v3116
      %v5005 = vpack.c.b16 %v3133, %v3117
      %v5006 = vpack.c.b16 %v3134, %v3118
      %v5007 = vpack.c.b16 %v3135, %v3119
      %v5008 = vpack.c.b16 %v3136, %v3120
      %v5009 = vpack.c.b16 %v3137, %v3121
      %v5010 = vpack.c.b16 %v3138, %v3122
      %v5011 = vpack.c.b16 %v3139, %v3123
      %v5012 = vpack.c.b16 %v3140, %v3124
      %v5013 = vpack.c.b16 %v3141, %v3125
      %v5014 = vpack.c.b16 %v3158, %v3142
      %v5015 = vpack.c.b16 %v3159, %v3143
      %v5016 = vpack.c.b16 %v3160, %v3144
      %v5017 = vpack.c.b16 %v3161, %v3145
      %v5018 = vpack.c.b16 %v3162, %v3146
      %v5019 = vpack.c.b16 %v3163, %v3147
      %v5020 = vpack.c.b16 %v3164, %v3148
      %v5021 = vpack.c.b16 %v3165, %v3149
      %v5022 = vpack.c.b16 %v3166, %v3150
      %v5023 = vpack.c.b16 %v3167, %v3151
      %v5024 = vpack.c.b16 %v3168, %v3152
      %v5025 = vpack.c.b16 %v3169, %v3153
      %v5026 = vpack.c.b16 %v3170, %v3154
      %v5027 = vpack.c.b16 %v3171, %v3155
      %v5028 = vpack.c.b16 %v3172, %v3156
      %v5029 = vpack.c.b16 %v3173, %v3157
      %v5030 = vpack.c.b16 %v3190, %v3174
      %v5031 = vpack.c.b16 %v3191, %v3175
      %v5032 = vpack.c.b16 %v3192, %v3176
      %v5033 = vpack.c.b16 %v3193, %v3177
      %v5034 = vpack.c.b16 %v3194, %v3178
      %v5035 = vpack.c.b16 %v3195, %v3179
      %v5036 = vpack.c.b16 %v3196, %v3180
      %v5037 = vpack.c.b16 %v3197, %v3181
      %v5038 = vpack.c.b16 %v3198, %v3182
      %v5039 = vpack.c.b16 %v3199, %v3183
      %v5040 = vpack.c.b16 %v3200, %v3184
      %v5041 = vpack.c.b16 %v3201, %v3185
      %v5042 = vpack.c.b16 %v3202, %v3186
      %v5043 = vpack.c.b16 %v3203, %v3187
      %v5044 = vpack.c.b16 %v3204, %v3188
      %v5045 = vpack.c.b16 %v3205, %v3189
      %v5046 = vpack.c.b16 %v3222, %v3206
      %v5047 = vpack.c.b16 %v3223, %v3207
      %v5048 = vpack.c.b16 %v3224, %v3208
      %v5049 = vpack.c.b16 %v3225, %v3209
      %v5050 = vpack.c.b16 %v3226, %v3210
      %v5051 = vpack.c.b16 %v3227, %v3211
      %v5052 = vpack.c.b16 %v3228, %v3212
      %v5053 = vpack.c.b16 %v3229, %v3213
      %v5054 = vpack.c.b16 %v3230, %v3214
      %v5055 = vpack.c.b16 %v3231, %v3215
      %v5056 = vpack.c.b16 %v3232, %v3216
      %v5057 = vpack.c.b16 %v3233, %v3217
      %v5058 = vpack.c.b16 %v3234, %v3218
      %v5059 = vpack.c.b16 %v3235, %v3219
      %v5060 = vpack.c.b16 %v3236, %v3220
      %v5061 = vpack.c.b16 %v3237, %v3221
      %v5062 = vpack.c.b16 %v3254, %v3238
      %v5063 = vpack.c.b16 %v3255, %v3239
      %v5064 = vpack.c.b16 %v3256, %v3240
      %v5065 = vpack.c.b16 %v3257, %v3241
      %v5066 = vpack.c.b16 %v3258, %v3242
      %v5067 = vpack.c.b16 %v3259, %v3243
      %v5068 = vpack.c.b16 %v3260, %v3244
      %v5069 = vpack.c.b16 %v3261, %v3245
      %v5070 = vpack.c.b16 %v3262, %v3246
      %v5071 = vpack.c.b16 %v3263, %v3247
      %v5072 = vpack.c.b16 %v3264, %v3248
      %v5073 = vpack.c.b16 %v3265, %v3249
      %v5074 = vpack.c.b16 %v3266, %v3250
      %v5075 = vpack.c.b16 %v3267, %v3251
      %v5076 = vpack.c.b16 %v3268, %v3252
      %v5077 = vpack.c.b16 %v3269, %v3253
      %v5078 = vpack.c.b16 %v3286, %v3270
      %v5079 = vpack.c.b16 %v3287, %v3271
      %v5080 = vpack.c.b16 %v3288, %v3272
      %v5081 = vpack.c.b16 %v3289, %v3273
      %v5082 = vpack.c.b16 %v3290, %v3274
      %v5083 = vpack.c.b16 %v3291, %v3275
      %v5084 = vpack.c.b16 %v3292, %v3276
      %v5085 = vpack.c.b16 %v3293, %v3277
      %v5086 = vpack.c.b16 %v3294, %v3278
      %v5087 = vpack.c.b16 %v3295, %v3279
      %v5088 = vpack.c.b16 %v3296, %v3280
      %v5089 = vpack.c.b16 %v3297, %v3281
      %v5090 = vpack.c.b16 %v3298, %v3282
      %v5091 = vpack.c.b16 %v3299, %v3283
      %v5092 = vpack.c.b16 %v3300, %v3284
      %v5093 = vpack.c.b16 %v3301, %v3285
      %v5094 = vpack.c.b16 %v3318, %v3302
      %v5095 = vpack.c.b16 %v3319, %v3303
      %v5096 = vpack.c.b16 %v3320, %v3304
      %v5097 = vpack.c.b16 %v3321, %v3305
      %v5098 = vpack.c.b16 %v3322, %v3306
      %v5099 = vpack.c.b16 %v3323, %v3307
      %v5100 = vpack.c.b16 %v3324, %v3308
      %v5101 = vpack.c.b16 %v3325, %v3309
      %v5102 = vpack.c.b16 %v3326, %v3310
      %v5103 = vpack.c.b16 %v3327, %v3311
      %v5104 = vpack.c.b16 %v3328, %v3312
      %v5105 = vpack.c.b16 %v3329, %v3313
      %v5106 = vpack.c.b16 %v3330, %v3314
      %v5107 = vpack.c.b16 %v3331, %v3315
      %v5108 = vpack.c.b16 %v3332, %v3316
      %v5109 = vpack.c.b16 %v3333, %v3317
      %v5110 = vpack.c.b16 %v3350, %v3334
      %v5111 = vpack.c.b16 %v3351, %v3335
      %v5112 = vpack.c.b16 %v3352, %v3336
      %v5113 = vpack.c.b16 %v3353, %v3337
      %v5114 = vpack.c.b16 %v3354, %v3338
      %v5115 = vpack.c.b16 %v3355, %v3339
      %v5116 = vpack.c.b16 %v3356, %v3340
      %v5117 = vpack.c.b16 %v3357, %v3341
      %v5118 = vpack.c.b16 %v3358, %v3342
      %v5119 = vpack.c.b16 %v3359, %v3343
      %v5120 = vpack.c.b16 %v3360, %v3344
      %v5121 = vpack.c.b16 %v3361, %v3345
      %v5122 = vpack.c.b16 %v3362, %v3346
      %v5123 = vpack.c.b16 %v3363, %v3347
      %v5124 = vpack.c.b16 %v3364, %v3348
      %v5125 = vpack.c.b16 %v3365, %v3349
      %v5126 = vpack.c.b16 %v3382, %v3366
      %v5127 = vpack.c.b16 %v3383, %v3367
      %v5128 = vpack.c.b16 %v3384, %v3368
      %v5129 = vpack.c.b16 %v3385, %v3369
      %v5130 = vpack.c.b16 %v3386, %v3370
      %v5131 = vpack.c.b16 %v3387, %v3371
      %v5132 = vpack.c.b16 %v3388, %v3372
      %v5133 = vpack.c.b16 %v3389, %v3373
      %v5134 = vpack.c.b16 %v3390, %v3374
      %v5135 = vpack.c.b16 %v3391, %v3375
      %v5136 = vpack.c.b16 %v3392, %v3376
      %v5137 = vpack.c.b16 %v3393, %v3377
      %v5138 = vpack.c.b16 %v3394, %v3378
      %v5139 = vpack.c.b16 %v3395, %v3379
      %v5140 = vpack.c.b16 %v3396, %v3380
      %v5141 = vpack.c.b16 %v3397, %v3381
      %v5142 = vpack.c.b16 %v3414, %v3398
      %v5143 = vpack.c.b16 %v3415, %v3399
      %v5144 = vpack.c.b16 %v3416, %v3400
      %v5145 = vpack.c.b16 %v3417, %v3401
      %v5146 = vpack.c.b16 %v3418, %v3402
      %v5147 = vpack.c.b16 %v3419, %v3403
      %v5148 = vpack.c.b16 %v3420, %v3404
      %v5149 = vpack.c.b16 %v3421, %v3405
      %v5150 = vpack.c.b16 %v3422, %v3406
      %v5151 = vpack.c.b16 %v3423, %v3407
      %v5152 = vpack.c.b16 %v3424, %v3408
      %v5153 = vpack.c.b16 %v3425, %v3409
      %v5154 = vpack.c.b16 %v3426, %v3410
      %v5155 = vpack.c.b16 %v3427, %v3411
      %v5156 = vpack.c.b16 %v3428, %v3412
      %v5157 = vpack.c.b16 %v3429, %v3413
      %v5158 = vpack.c.b16 %v3446, %v3430
      %v5159 = vpack.c.b16 %v3447, %v3431
      %v5160 = vpack.c.b16 %v3448, %v3432
      %v5161 = vpack.c.b16 %v3449, %v3433
      %v5162 = vpack.c.b16 %v3450, %v3434
      %v5163 = vpack.c.b16 %v3451, %v3435
      %v5164 = vpack.c.b16 %v3452, %v3436
      %v5165 = vpack.c.b16 %v3453, %v3437
      %v5166 = vpack.c.b16 %v3454, %v3438
      %v5167 = vpack.c.b16 %v3455, %v3439
      %v5168 = vpack.c.b16 %v3456, %v3440
      %v5169 = vpack.c.b16 %v3457, %v3441
      %v5170 = vpack.c.b16 %v3458, %v3442
      %v5171 = vpack.c.b16 %v3459, %v3443
      %v5172 = vpack.c.b16 %v3460, %v3444
      %v5173 = vpack.c.b16 %v3461, %v3445
      %v5174 = vpack.c.b16 %v3478, %v3462
      %v5175 = vpack.c.b16 %v3479, %v3463
      %v5176 = vpack.c.b16 %v3480, %v3464
      %v5177 = vpack.c.b16 %v3481, %v3465
      %v5178 = vpack.c.b16 %v3482, %v3466
      %v5179 = vpack.c.b16 %v3483, %v3467
      %v5180 = vpack.c.b16 %v3484, %v3468
      %v5181 = vpack.c.b16 %v3485, %v3469
      %v5182 = vpack.c.b16 %v3486, %v3470
      %v5183 = vpack.c.b16 %v3487, %v3471
      %v5184 = vpack.c.b16 %v3488, %v3472
      %v5185 = vpack.c.b16 %v3489, %v3473
      %v5186 = vpack.c.b16 %v3490, %v3474
      %v5187 = vpack.c.b16 %v3491, %v3475
      %v5188 = vpack.c.b16 %v3492, %v3476
      %v5189 = vpack.c.b16 %v3493, %v3477
      %v5190 = vpack.c.b16 %v3510, %v3494
      %v5191 = vpack.c.b16 %v3511, %v3495
      %v5192 = vpack.c.b16 %v3512, %v3496
      %v5193 = vpack.c.b16 %v3513, %v3497
      %v5194 = vpack.c.b16 %v3514, %v3498
      %v5195 = vpack.c.b16 %v3515, %v3499
      %v5196 = vpack.c.b16 %v3516, %v3500
      %v5197 = vpack.c.b16 %v3517, %v3501
      %v5198 = vpack.c.b16 %v3518, %v3502
      %v5199 = vpack.c.b16 %v3519, %v3503
      %v5200 = vpack.c.b16 %v3520, %v3504
      %v5201 = vpack.c.b16 %v3521, %v3505
      %v5202 = vpack.c.b16 %v3522, %v3506
      %v5203 = vpack.c.b16 %v3523, %v3507
      %v5204 = vpack.c.b16 %v3524, %v3508
      %v5205 = vpack.c.b16 %v3525, %v3509
      %v5206 = vpack.c.b16 %v3542, %v3526
      %v5207 = vpack.c.b16 %v3543, %v3527
      %v5208 = vpack.c.b16 %v3544, %v3528
      %v5209 = vpack.c.b16 %v3545, %v3529
      %v5210 = vpack.c.b16 %v3546, %v3530
      %v5211 = vpack.c.b16 %v3547, %v3531
      %v5212 = vpack.c.b16 %v3548, %v3532
      %v5213 = vpack.c.b16 %v3549, %v3533
      %v5214 = vpack.c.b16 %v3550, %v3534
      %v5215 = vpack.c.b16 %v3551, %v3535
      %v5216 = vpack.c.b16 %v3552, %v3536
      %v5217 = vpack.c.b16 %v3553, %v3537
      %v5218 = vpack.c.b16 %v3554, %v3538
      %v5219 = vpack.c.b16 %v3555, %v3539
      %v5220 = vpack.c.b16 %v3556, %v3540
      %v5221 = vpack.c.b16 %v3557, %v3541
      %v5222 = vpack.c.b16 %v3574, %v3558
      %v5223 = vpack.c.b16 %v3575, %v3559
      %v5224 = vpack.c.b16 %v3576, %v3560
      %v5225 = vpack.c.b16 %v3577, %v3561
      %v5226 = vpack.c.b16 %v3578, %v3562
      %v5227 = vpack.c.b16 %v3579, %v3563
      %v5228 = vpack.c.b16 %v3580, %v3564
      %v5229 = vpack.c.b16 %v3581, %v3565
      %v5230 = vpack.c.b16 %v3582, %v3566
      %v5231 = vpack.c.b16 %v3583, %v3567
      %v5232 = vpack.c.b16 %v3584, %v3568
      %v5233 = vpack.c.b16 %v3585, %v3569
      %v5234 = vpack.c.b16 %v3586, %v3570
      %v5235 = vpack.c.b16 %v3587, %v3571
      %v5236 = vpack.c.b16 %v3588, %v3572
      %v5237 = vpack.c.b16 %v3589, %v3573
      %v5238 = vpack.c.b16 %v3606, %v3590
      %v5239 = vpack.c.b16 %v3607, %v3591
      %v5240 = vpack.c.b16 %v3608, %v3592
      %v5241 = vpack.c.b16 %v3609, %v3593
      %v5242 = vpack.c.b16 %v3610, %v3594
      %v5243 = vpack.c.b16 %v3611, %v3595
      %v5244 = vpack.c.b16 %v3612, %v3596
      %v5245 = vpack.c.b16 %v3613, %v3597
      %v5246 = vpack.c.b16 %v3614, %v3598
      %v5247 = vpack.c.b16 %v3615, %v3599
      %v5248 = vpack.c.b16 %v3616, %v3600
      %v5249 = vpack.c.b16 %v3617, %v3601
      %v5250 = vpack.c.b16 %v3618, %v3602
      %v5251 = vpack.c.b16 %v3619, %v3603
      %v5252 = vpack.c.b16 %v3620, %v3604
      %v5253 = vpack.c.b16 %v3621, %v3605
      %v5254 = vpack.c.b16 %v3638, %v3622
      %v5255 = vpack.c.b16 %v3639, %v3623
      %v5256 = vpack.c.b16 %v3640, %v3624
      %v5257 = vpack.c.b16 %v3641, %v3625
      %v5258 = vpack.c.b16 %v3642, %v3626
      %v5259 = vpack.c.b16 %v3643, %v3627
      %v5260 = vpack.c.b16 %v3644, %v3628
      %v5261 = vpack.c.b16 %v3645, %v3629
      %v5262 = vpack.c.b16 %v3646, %v3630
      %v5263 = vpack.c.b16 %v3647, %v3631
      %v5264 = vpack.c.b16 %v3648, %v3632
      %v5265 = vpack.c.b16 %v3649, %v3633
      %v5266 = vpack.c.b16 %v3650, %v3634
      %v5267 = vpack.c.b16 %v3651, %v3635
      %v5268 = vpack.c.b16 %v3652, %v3636
      %v5269 = vpack.c.b16 %v3653, %v3637
      %v5270 = vpack.c.b16 %v3670, %v3654
      %v5271 = vpack.c.b16 %v3671, %v3655
      %v5272 = vpack.c.b16 %v3672, %v3656
      %v5273 = vpack.c.b16 %v3673, %v3657
      %v5274 = vpack.c.b16 %v3674, %v3658
      %v5275 = vpack.c.b16 %v3675, %v3659
      %v5276 = vpack.c.b16 %v3676, %v3660
      %v5277 = vpack.c.b16 %v3677, %v3661
      %v5278 = vpack.c.b16 %v3678, %v3662
      %v5279 = vpack.c.b16 %v3679, %v3663
      %v5280 = vpack.c.b16 %v3680, %v3664
      %v5281 = vpack.c.b16 %v3681, %v3665
      %v5282 = vpack.c.b16 %v3682, %v3666
      %v5283 = vpack.c.b16 %v3683, %v3667
      %v5284 = vpack.c.b16 %v3684, %v3668
      %v5285 = vpack.c.b16 %v3685, %v3669
      %v5286 = vpack.c.b16 %v3702, %v3686
      %v5287 = vpack.c.b16 %v3703, %v3687
      %v5288 = vpack.c.b16 %v3704, %v3688
      %v5289 = vpack.c.b16 %v3705, %v3689
      %v5290 = vpack.c.b16 %v3706, %v3690
      %v5291 = vpack.c.b16 %v3707, %v3691
      %v5292 = vpack.c.b16 %v3708, %v3692
      %v5293 = vpack.c.b16 %v3709, %v3693
      %v5294 = vpack.c.b16 %v3710, %v3694
      %v5295 = vpack.c.b16 %v3711, %v3695
      %v5296 = vpack.c.b16 %v3712, %v3696
      %v5297 = vpack.c.b16 %v3713, %v3697
      %v5298 = vpack.c.b16 %v3714, %v3698
      %v5299 = vpack.c.b16 %v3715, %v3699
      %v5300 = vpack.c.b16 %v3716, %v3700
      %v5301 = vpack.c.b16 %v3717, %v3701
      %v5302 = vpack.c.b16 %v3734, %v3718
      %v5303 = vpack.c.b16 %v3735, %v3719
      %v5304 = vpack.c.b16 %v3736, %v3720
      %v5305 = vpack.c.b16 %v3737, %v3721
      %v5306 = vpack.c.b16 %v3738, %v3722
      %v5307 = vpack.c.b16 %v3739, %v3723
      %v5308 = vpack.c.b16 %v3740, %v3724
      %v5309 = vpack.c.b16 %v3741, %v3725
      %v5310 = vpack.c.b16 %v3742, %v3726
      %v5311 = vpack.c.b16 %v3743, %v3727
      %v5312 = vpack.c.b16 %v3744, %v3728
      %v5313 = vpack.c.b16 %v3745, %v3729
      %v5314 = vpack.c.b16 %v3746, %v3730
      %v5315 = vpack.c.b16 %v3747, %v3731
      %v5316 = vpack.c.b16 %v3748, %v3732
      %v5317 = vpack.c.b16 %v3749, %v3733
      %v5318 = vpack.c.b16 %v3766, %v3750
      %v5319 = vpack.c.b16 %v3767, %v3751
      %v5320 = vpack.c.b16 %v3768, %v3752
      %v5321 = vpack.c.b16 %v3769, %v3753
      %v5322 = vpack.c.b16 %v3770, %v3754
      %v5323 = vpack.c.b16 %v3771, %v3755
      %v5324 = vpack.c.b16 %v3772, %v3756
      %v5325 = vpack.c.b16 %v3773, %v3757
      %v5326 = vpack.c.b16 %v3774, %v3758
      %v5327 = vpack.c.b16 %v3775, %v3759
      %v5328 = vpack.c.b16 %v3776, %v3760
      %v5329 = vpack.c.b16 %v3777, %v3761
      %v5330 = vpack.c.b16 %v3778, %v3762
      %v5331 = vpack.c.b16 %v3779, %v3763
      %v5332 = vpack.c.b16 %v3780, %v3764
      %v5333 = vpack.c.b16 %v3781, %v3765
      %v5334 = vpack.c.b16 %v3798, %v3782
      %v5335 = vpack.c.b16 %v3799, %v3783
      %v5336 = vpack.c.b16 %v3800, %v3784
      %v5337 = vpack.c.b16 %v3801, %v3785
      %v5338 = vpack.c.b16 %v3802, %v3786
      %v5339 = vpack.c.b16 %v3803, %v3787
      %v5340 = vpack.c.b16 %v3804, %v3788
      %v5341 = vpack.c.b16 %v3805, %v3789
      %v5342 = vpack.c.b16 %v3806, %v3790
      %v5343 = vpack.c.b16 %v3807, %v3791
      %v5344 = vpack.c.b16 %v3808, %v3792
      %v5345 = vpack.c.b16 %v3809, %v3793
      %v5346 = vpack.c.b16 %v3810, %v3794
      %v5347 = vpack.c.b16 %v3811, %v3795
      %v5348 = vpack.c.b16 %v3812, %v3796
      %v5349 = vpack.c.b16 %v3813, %v3797
      %v5350 = vpack.c.b16 %v3830, %v3814
      %v5351 = vpack.c.b16 %v3831, %v3815
      %v5352 = vpack.c.b16 %v3832, %v3816
      %v5353 = vpack.c.b16 %v3833, %v3817
      %v5354 = vpack.c.b16 %v3834, %v3818
      %v5355 = vpack.c.b16 %v3835, %v3819
      %v5356 = vpack.c.b16 %v3836, %v3820
      %v5357 = vpack.c.b16 %v3837, %v3821
      %v5358 = vpack.c.b16 %v3838, %v3822
      %v5359 = vpack.c.b16 %v3839, %v3823
      %v5360 = vpack.c.b16 %v3840, %v3824
      %v5361 = vpack.c.b16 %v3841, %v3825
      %v5362 = vpack.c.b16 %v3842, %v3826
      %v5363 = vpack.c.b16 %v3843, %v3827
      %v5364 = vpack.c.b16 %v3844, %v3828
      %v5365 = vpack.c.b16 %v3845, %v3829
      %v5366 = vpack.c.b16 %v3862, %v3846
      %v5367 = vpack.c.b16 %v3863, %v3847
      %v5368 = vpack.c.b16 %v3864, %v3848
      %v5369 = vpack.c.b16 %v3865, %v3849
      %v5370 = vpack.c.b16 %v3866, %v3850
      %v5371 = vpack.c.b16 %v3867, %v3851
      %v5372 = vpack.c.b16 %v3868, %v3852
      %v5373 = vpack.c.b16 %v3869, %v3853
      %v5374 = vpack.c.b16 %v3870, %v3854
      %v5375 = vpack.c.b16 %v3871, %v3855
      %v5376 = vpack.c.b16 %v3872, %v3856
      %v5377 = vpack.c.b16 %v3873, %v3857
      %v5378 = vpack.c.b16 %v3874, %v3858
      %v5379 = vpack.c.b16 %v3875, %v3859
      %v5380 = vpack.c.b16 %v3876, %v3860
      %v5381 = vpack.c.b16 %v3877, %v3861
      %v5382 = vpack.c.b16 %v3894, %v3878
      %v5383 = vpack.c.b16 %v3895, %v3879
      %v5384 = vpack.c.b16 %v3896, %v3880
      %v5385 = vpack.c.b16 %v3897, %v3881
      %v5386 = vpack.c.b16 %v3898, %v3882
      %v5387 = vpack.c.b16 %v3899, %v3883
      %v5388 = vpack.c.b16 %v3900, %v3884
      %v5389 = vpack.c.b16 %v3901, %v3885
      %v5390 = vpack.c.b16 %v3902, %v3886
      %v5391 = vpack.c.b16 %v3903, %v3887
      %v5392 = vpack.c.b16 %v3904, %v3888
      %v5393 = vpack.c.b16 %v3905, %v3889
      %v5394 = vpack.c.b16 %v3906, %v3890
      %v5395 = vpack.c.b16 %v3907, %v3891
      %v5396 = vpack.c.b16 %v3908, %v3892
      %v5397 = vpack.c.b16 %v3909, %v3893
      %v5398 = vpack.c.b16 %v3926, %v3910
      %v5399 = vpack.c.b16 %v3927, %v3911
      %v5400 = vpack.c.b16 %v3928, %v3912
      %v5401 = vpack.c.b16 %v3929, %v3913
      %v5402 = vpack.c.b16 %v3930, %v3914
      %v5403 = vpack.c.b16 %v3931, %v3915
      %v5404 = vpack.c.b16 %v3932, %v3916
      %v5405 = vpack.c.b16 %v3933, %v3917
      %v5406 = vpack.c.b16 %v3934, %v3918
      %v5407 = vpack.c.b16 %v3935, %v3919
      %v5408 = vpack.c.b16 %v3936, %v3920
      %v5409 = vpack.c.b16 %v3937, %v3921
      %v5410 = vpack.c.b16 %v3938, %v3922
      %v5411 = vpack.c.b16 %v3939, %v3923
      %v5412 = vpack.c.b16 %v3940, %v3924
      %v5413 = vpack.c.b16 %v3941, %v3925
      %v5414 = vpack.c.b16 %v3958, %v3942
      %v5415 = vpack.c.b16 %v3959, %v3943
      %v5416 = vpack.c.b16 %v3960, %v3944
      %v5417 = vpack.c.b16 %v3961, %v3945
      %v5418 = vpack.c.b16 %v3962, %v3946
      %v5419 = vpack.c.b16 %v3963, %v3947
      %v5420 = vpack.c.b16 %v3964, %v3948
      %v5421 = vpack.c.b16 %v3965, %v3949
      %v5422 = vpack.c.b16 %v3966, %v3950
      %v5423 = vpack.c.b16 %v3967, %v3951
      %v5424 = vpack.c.b16 %v3968, %v3952
      %v5425 = vpack.c.b16 %v3969, %v3953
      %v5426 = vpack.c.b16 %v3970, %v3954
      %v5427 = vpack.c.b16 %v3971, %v3955
      %v5428 = vpack.c.b16 %v3972, %v3956
      %v5429 = vpack.c.b16 %v3973, %v3957
      %v5430 = vpack.c.b16 %v3990, %v3974
      %v5431 = vpack.c.b16 %v3991, %v3975
      %v5432 = vpack.c.b16 %v3992, %v3976
      %v5433 = vpack.c.b16 %v3993, %v3977
      %v5434 = vpack.c.b16 %v3994, %v3978
      %v5435 = vpack.c.b16 %v3995, %v3979
      %v5436 = vpack.c.b16 %v3996, %v3980
      %v5437 = vpack.c.b16 %v3997, %v3981
      %v5438 = vpack.c.b16 %v3998, %v3982
      %v5439 = vpack.c.b16 %v3999, %v3983
      %v5440 = vpack.c.b16 %v4000, %v3984
      %v5441 = vpack.c.b16 %v4001, %v3985
      %v5442 = vpack.c.b16 %v4002, %v3986
      %v5443 = vpack.c.b16 %v4003, %v3987
      %v5444 = vpack.c.b16 %v4004, %v3988
      %v5445 = vpack.c.b16 %v4005, %v3989
      %v5446 = vpack.c.b16 %v4022, %v4006
      %v5447 = vpack.c.b16 %v4023, %v4007
      %v5448 = vpack.c.b16 %v4024, %v4008
      %v5449 = vpack.c.b16 %v4025, %v4009
      %v5450 = vpack.c.b16 %v4026, %v4010
      %v5451 = vpack.c.b16 %v4027, %v4011
      %v5452 = vpack.c.b16 %v4028, %v4012
      %v5453 = vpack.c.b16 %v4029, %v4013
      %v5454 = vpack.c.b16 %v4030, %v4014
      %v5455 = vpack.c.b16 %v4031, %v4015
      %v5456 = vpack.c.b16 %v4032, %v4016
      %v5457 = vpack.c.b16 %v4033, %v4017
      %v5458 = vpack.c.b16 %v4034, %v4018
      %v5459 = vpack.c.b16 %v4035, %v4019
      %v5460 = vpack.c.b16 %v4036, %v4020
      %v5461 = vpack.c.b16 %v4037, %v4021
      %v5462 = vpack.c.b16 %v4054, %v4038
      %v5463 = vpack.c.b16 %v4055, %v4039
      %v5464 = vpack.c.b16 %v4056, %v4040
      %v5465 = vpack.c.b16 %v4057, %v4041
      %v5466 = vpack.c.b16 %v4058, %v4042
      %v5467 = vpack.c.b16 %v4059, %v4043
      %v5468 = vpack.c.b16 %v4060, %v4044
      %v5469 = vpack.c.b16 %v4061, %v4045
      %v5470 = vpack.c.b16 %v4062, %v4046
      %v5471 = vpack.c.b16 %v4063, %v4047
      %v5472 = vpack.c.b16 %v4064, %v4048
      %v5473 = vpack.c.b16 %v4065, %v4049
      %v5474 = vpack.c.b16 %v4066, %v4050
      %v5475 = vpack.c.b16 %v4067, %v4051
      %v5476 = vpack.c.b16 %v4068, %v4052
      %v5477 = vpack.c.b16 %v4069, %v4053
      %v5478 = vpack.c.b16 %v4086, %v4070
      %v5479 = vpack.c.b16 %v4087, %v4071
      %v5480 = vpack.c.b16 %v4088, %v4072
      %v5481 = vpack.c.b16 %v4089, %v4073
      %v5482 = vpack.c.b16 %v4090, %v4074
      %v5483 = vpack.c.b16 %v4091, %v4075
      %v5484 = vpack.c.b16 %v4092, %v4076
      %v5485 = vpack.c.b16 %v4093, %v4077
      %v5486 = vpack.c.b16 %v4094, %v4078
      %v5487 = vpack.c.b16 %v4095, %v4079
      %v5488 = vpack.c.b16 %v4096, %v4080
      %v5489 = vpack.c.b16 %v4097, %v4081
      %v5490 = vpack.c.b16 %v4098, %v4082
      %v5491 = vpack.c.b16 %v4099, %v4083
      %v5492 = vpack.c.b16 %v4100, %v4084
      %v5493 = vpack.c.b16 %v4101, %v4085
      %v5494 = vpack.c.b16 %v4118, %v4102
      %v5495 = vpack.c.b16 %v4119, %v4103
      %v5496 = vpack.c.b16 %v4120, %v4104
      %v5497 = vpack.c.b16 %v4121, %v4105
      %v5498 = vpack.c.b16 %v4122, %v4106
      %v5499 = vpack.c.b16 %v4123, %v4107
      %v5500 = vpack.c.b16 %v4124, %v4108
      %v5501 = vpack.c.b16 %v4125, %v4109
      %v5502 = vpack.c.b16 %v4126, %v4110
      %v5503 = vpack.c.b16 %v4127, %v4111
      %v5504 = vpack.c.b16 %v4128, %v4112
      %v5505 = vpack.c.b16 %v4129, %v4113
      %v5506 = vpack.c.b16 %v4130, %v4114
      %v5507 = vpack.c.b16 %v4131, %v4115
      %v5508 = vpack.c.b16 %v4132, %v4116
      %v5509 = vpack.c.b16 %v4133, %v4117
      %v5510 = vpack.c.b16 %v4150, %v4134
      %v5511 = vpack.c.b16 %v4151, %v4135
      %v5512 = vpack.c.b16 %v4152, %v4136
      %v5513 = vpack.c.b16 %v4153, %v4137
      %v5514 = vpack.c.b16 %v4154, %v4138
      %v5515 = vpack.c.b16 %v4155, %v4139
      %v5516 = vpack.c.b16 %v4156, %v4140
      %v5517 = vpack.c.b16 %v4157, %v4141
      %v5518 = vpack.c.b16 %v4158, %v4142
      %v5519 = vpack.c.b16 %v4159, %v4143
      %v5520 = vpack.c.b16 %v4160, %v4144
      %v5521 = vpack.c.b16 %v4161, %v4145
      %v5522 = vpack.c.b16 %v4162, %v4146
      %v5523 = vpack.c.b16 %v4163, %v4147
      %v5524 = vpack.c.b16 %v4164, %v4148
      %v5525 = vpack.c.b16 %v4165, %v4149
      %v5526 = vpack.c.b16 %v4182, %v4166
      %v5527 = vpack.c.b16 %v4183, %v4167
      %v5528 = vpack.c.b16 %v4184, %v4168
      %v5529 = vpack.c.b16 %v4185, %v4169
      %v5530 = vpack.c.b16 %v4186, %v4170
      %v5531 = vpack.c.b16 %v4187, %v4171
      %v5532 = vpack.c.b16 %v4188, %v4172
      %v5533 = vpack.c.b16 %v4189, %v4173
      %v5534 = vpack.c.b16 %v4190, %v4174
      %v5535 = vpack.c.b16 %v4191, %v4175
      %v5536 = vpack.c.b16 %v4192, %v4176
      %v5537 = vpack.c.b16 %v4193, %v4177
      %v5538 = vpack.c.b16 %v4194, %v4178
      %v5539 = vpack.c.b16 %v4195, %v4179
      %v5540 = vpack.c.b16 %v4196, %v4180
      %v5541 = vpack.c.b16 %v4197, %v4181
      %v5542 = vpack.c.b16 %v4214, %v4198
      %v5543 = vpack.c.b16 %v4215, %v4199
      %v5544 = vpack.c.b16 %v4216, %v4200
      %v5545 = vpack.c.b16 %v4217, %v4201
      %v5546 = vpack.c.b16 %v4218, %v4202
      %v5547 = vpack.c.b16 %v4219, %v4203
      %v5548 = vpack.c.b16 %v4220, %v4204
      %v5549 = vpack.c.b16 %v4221, %v4205
      %v5550 = vpack.c.b16 %v4222, %v4206
      %v5551 = vpack.c.b16 %v4223, %v4207
      %v5552 = vpack.c.b16 %v4224, %v4208
      %v5553 = vpack.c.b16 %v4225, %v4209
      %v5554 = vpack.c.b16 %v4226, %v4210
      %v5555 = vpack.c.b16 %v4227, %v4211
      %v5556 = vpack.c.b16 %v4228, %v4212
      %v5557 = vpack.c.b16 %v4229, %v4213
      %v5558 = vpack.c.b16 %v4246, %v4230
      %v5559 = vpack.c.b16 %v4247, %v4231
      %v5560 = vpack.c.b16 %v4248, %v4232
      %v5561 = vpack.c.b16 %v4249, %v4233
      %v5562 = vpack.c.b16 %v4250, %v4234
      %v5563 = vpack.c.b16 %v4251, %v4235
      %v5564 = vpack.c.b16 %v4252, %v4236
      %v5565 = vpack.c.b16 %v4253, %v4237
      %v5566 = vpack.c.b16 %v4254, %v4238
      %v5567 = vpack.c.b16 %v4255, %v4239
      %v5568 = vpack.c.b16 %v4256, %v4240
      %v5569 = vpack.c.b16 %v4257, %v4241
      %v5570 = vpack.c.b16 %v4258, %v4242
      %v5571 = vpack.c.b16 %v4259, %v4243
      %v5572 = vpack.c.b16 %v4260, %v4244
      %v5573 = vpack.c.b16 %v4261, %v4245
      %v5574 = vpack.c.b16 %v4278, %v4262
      %v5575 = vpack.c.b16 %v4279, %v4263
      %v5576 = vpack.c.b16 %v4280, %v4264
      %v5577 = vpack.c.b16 %v4281, %v4265
      %v5578 = vpack.c.b16 %v4282, %v4266
      %v5579 = vpack.c.b16 %v4283, %v4267
      %v5580 = vpack.c.b16 %v4284, %v4268
      %v5581 = vpack.c.b16 %v4285, %v4269
      %v5582 = vpack.c.b16 %v4286, %v4270
      %v5583 = vpack.c.b16 %v4287, %v4271
      %v5584 = vpack.c.b16 %v4288, %v4272
      %v5585 = vpack.c.b16 %v4289, %v4273
      %v5586 = vpack.c.b16 %v4290, %v4274
      %v5587 = vpack.c.b16 %v4291, %v4275
      %v5588 = vpack.c.b16 %v4292, %v4276
      %v5589 = vpack.c.b16 %v4293, %v4277
      %v5590 = vpack.c.b16 %v4310, %v4294
      %v5591 = vpack.c.b16 %v4311, %v4295
      %v5592 = vpack.c.b16 %v4312, %v4296
      %v5593 = vpack.c.b16 %v4313, %v4297
      %v5594 = vpack.c.b16 %v4314, %v4298
      %v5595 = vpack.c.b16 %v4315, %v4299
      %v5596 = vpack.c.b16 %v4316, %v4300
      %v5597 = vpack.c.b16 %v4317, %v4301
      %v5598 = vpack.c.b16 %v4318, %v4302
      %v5599 = vpack.c.b16 %v4319, %v4303
      %v5600 = vpack.c.b16 %v4320, %v4304
      %v5601 = vpack.c.b16 %v4321, %v4305
      %v5602 = vpack.c.b16 %v4322, %v4306
      %v5603 = vpack.c.b16 %v4323, %v4307
      %v5604 = vpack.c.b16 %v4324, %v4308
      %v5605 = vpack.c.b16 %v4325, %v4309
      %v5606 = vpack.c.b16 %v4342, %v4326
      %v5607 = vpack.c.b16 %v4343, %v4327
      %v5608 = vpack.c.b16 %v4344, %v4328
      %v5609 = vpack.c.b16 %v4345, %v4329
      %v5610 = vpack.c.b16 %v4346, %v4330
      %v5611 = vpack.c.b16 %v4347, %v4331
      %v5612 = vpack.c.b16 %v4348, %v4332
      %v5613 = vpack.c.b16 %v4349, %v4333
      %v5614 = vpack.c.b16 %v4350, %v4334
      %v5615 = vpack.c.b16 %v4351, %v4335
      %v5616 = vpack.c.b16 %v4352, %v4336
      %v5617 = vpack.c.b16 %v4353, %v4337
      %v5618 = vpack.c.b16 %v4354, %v4338
      %v5619 = vpack.c.b16 %v4355, %v4339
      %v5620 = vpack.c.b16 %v4356, %v4340
      %v5621 = vpack.c.b16 %v4357, %v4341
      %v5622 = vpack.c.b16 %v4374, %v4358
      %v5623 = vpack.c.b16 %v4375, %v4359
      %v5624 = vpack.c.b16 %v4376, %v4360
      %v5625 = vpack.c.b16 %v4377, %v4361
      %v5626 = vpack.c.b16 %v4378, %v4362
      %v5627 = vpack.c.b16 %v4379, %v4363
      %v5628 = vpack.c.b16 %v4380, %v4364
      %v5629 = vpack.c.b16 %v4381, %v4365
      %v5630 = vpack.c.b16 %v4382, %v4366
      %v5631 = vpack.c.b16 %v4383, %v4367
      %v5632 = vpack.c.b16 %v4384, %v4368
      %v5633 = vpack.c.b16 %v4385, %v4369
      %v5634 = vpack.c.b16 %v4386, %v4370
      %v5635 = vpack.c.b16 %v4387, %v4371
      %v5636 = vpack.c.b16 %v4388, %v4372
      %v5637 = vpack.c.b16 %v4389, %v4373
      %v5638 = vpack.c.b16 %v4406, %v4390
      %v5639 = vpack.c.b16 %v4407, %v4391
      %v5640 = vpack.c.b16 %v4408, %v4392
      %v5641 = vpack.c.b16 %v4409, %v4393
      %v5642 = vpack.c.b16 %v4410, %v4394
      %v5643 = vpack.c.b16 %v4411, %v4395
      %v5644 = vpack.c.b16 %v4412, %v4396
      %v5645 = vpack.c.b16 %v4413, %v4397
      %v5646 = vpack.c.b16 %v4414, %v4398
      %v5647 = vpack.c.b16 %v4415, %v4399
      %v5648 = vpack.c.b16 %v4416, %v4400
      %v5649 = vpack.c.b16 %v4417, %v4401
      %v5650 = vpack.c.b16 %v4418, %v4402
      %v5651 = vpack.c.b16 %v4419, %v4403
      %v5652 = vpack.c.b16 %v4420, %v4404
      %v5653 = vpack.c.b16 %v4421, %v4405
      %v5654 = vpack.c.b16 %v4438, %v4422
      %v5655 = vpack.c.b16 %v4439, %v4423
      %v5656 = vpack.c.b16 %v4440, %v4424
      %v5657 = vpack.c.b16 %v4441, %v4425
      %v5658 = vpack.c.b16 %v4442, %v4426
      %v5659 = vpack.c.b16 %v4443, %v4427
      %v5660 = vpack.c.b16 %v4444, %v4428
      %v5661 = vpack.c.b16 %v4445, %v4429
      %v5662 = vpack.c.b16 %v4446, %v4430
      %v5663 = vpack.c.b16 %v4447, %v4431
      %v5664 = vpack.c.b16 %v4448, %v4432
      %v5665 = vpack.c.b16 %v4449, %v4433
      %v5666 = vpack.c.b16 %v4450, %v4434
      %v5667 = vpack.c.b16 %v4451, %v4435
      %v5668 = vpack.c.b16 %v4452, %v4436
      %v5669 = vpack.c.b16 %v4453, %v4437
      %v5670 = vpack.c.b16 %v4470, %v4454
      %v5671 = vpack.c.b16 %v4471, %v4455
      %v5672 = vpack.c.b16 %v4472, %v4456
      %v5673 = vpack.c.b16 %v4473, %v4457
      %v5674 = vpack.c.b16 %v4474, %v4458
      %v5675 = vpack.c.b16 %v4475, %v4459
      %v5676 = vpack.c.b16 %v4476, %v4460
      %v5677 = vpack.c.b16 %v4477, %v4461
      %v5678 = vpack.c.b16 %v4478, %v4462
      %v5679 = vpack.c.b16 %v4479, %v4463
      %v5680 = vpack.c.b16 %v4480, %v4464
      %v5681 = vpack.c.b16 %v4481, %v4465
      %v5682 = vpack.c.b16 %v4482, %v4466
      %v5683 = vpack.c.b16 %v4483, %v4467
      %v5684 = vpack.c.b16 %v4484, %v4468
      %v5685 = vpack.c.b16 %v4485, %v4469
      %v5686 = vpack.c.b16 %v4502, %v4486
      %v5687 = vpack.c.b16 %v4503, %v4487
      %v5688 = vpack.c.b16 %v4504, %v4488
      %v5689 = vpack.c.b16 %v4505, %v4489
      %v5690 = vpack.c.b16 %v4506, %v4490
      %v5691 = vpack.c.b16 %v4507, %v4491
      %v5692 = vpack.c.b16 %v4508, %v4492
      %v5693 = vpack.c.b16 %v4509, %v4493
      %v5694 = vpack.c.b16 %v4510, %v4494
      %v5695 = vpack.c.b16 %v4511, %v4495
      %v5696 = vpack.c.b16 %v4512, %v4496
      %v5697 = vpack.c.b16 %v4513, %v4497
      %v5698 = vpack.c.b16 %v4514, %v4498
      %v5699 = vpack.c.b16 %v4515, %v4499
      %v5700 = vpack.c.b16 %v4516, %v4500
      %v5701 = vpack.c.b16 %v4517, %v4501
      %v5702 = vpack.c.b16 %v4534, %v4518
      %v5703 = vpack.c.b16 %v4535, %v4519
      %v5704 = vpack.c.b16 %v4536, %v4520
      %v5705 = vpack.c.b16 %v4537, %v4521
      %v5706 = vpack.c.b16 %v4538, %v4522
      %v5707 = vpack.c.b16 %v4539, %v4523
      %v5708 = vpack.c.b16 %v4540, %v4524
      %v5709 = vpack.c.b16 %v4541, %v4525
      %v5710 = vpack.c.b16 %v4542, %v4526
      %v5711 = vpack.c.b16 %v4543, %v4527
      %v5712 = vpack.c.b16 %v4544, %v4528
      %v5713 = vpack.c.b16 %v4545, %v4529
      %v5714 = vpack.c.b16 %v4546, %v4530
      %v5715 = vpack.c.b16 %v4547, %v4531
      %v5716 = vpack.c.b16 %v4548, %v4532
      %v5717 = vpack.c.b16 %v4549, %v4533
      %v5718 = vpack.c.b16 %v4566, %v4550
      %v5719 = vpack.c.b16 %v4567, %v4551
      %v5720 = vpack.c.b16 %v4568, %v4552
      %v5721 = vpack.c.b16 %v4569, %v4553
      %v5722 = vpack.c.b16 %v4570, %v4554
      %v5723 = vpack.c.b16 %v4571, %v4555
      %v5724 = vpack.c.b16 %v4572, %v4556
      %v5725 = vpack.c.b16 %v4573, %v4557
      %v5726 = vpack.c.b16 %v4574, %v4558
      %v5727 = vpack.c.b16 %v4575, %v4559
      %v5728 = vpack.c.b16 %v4576, %v4560
      %v5729 = vpack.c.b16 %v4577, %v4561
      %v5730 = vpack.c.b16 %v4578, %v4562
      %v5731 = vpack.c.b16 %v4579, %v4563
      %v5732 = vpack.c.b16 %v4580, %v4564
      %v5733 = vpack.c.b16 %v4581, %v4565
      %v5734 = vpack.c.b16 %v4598, %v4582
      %v5735 = vpack.c.b16 %v4599, %v4583
      %v5736 = vpack.c.b16 %v4600, %v4584
      %v5737 = vpack.c.b16 %v4601, %v4585
      %v5738 = vpack.c.b16 %v4602, %v4586
      %v5739 = vpack.c.b16 %v4603, %v4587
      %v5740 = vpack.c.b16 %v4604, %v4588
      %v5741 = vpack.c.b16 %v4605, %v4589
      %v5742 = vpack.c.b16 %v4606, %v4590
      %v5743 = vpack.c.b16 %v4607, %v4591
      %v5744 = vpack.c.b16 %v4608, %v4592
      %v5745 = vpack.c.b16 %v4609, %v4593
      %v5746 = vpack.c.b16 %v4610, %v4594
      %v5747 = vpack.c.b16 %v4611, %v4595
      %v5748 = vpack.c.b16 %v4612, %v4596
      %v5749 = vpack.c.b16 %v4613, %v4597
      %v5750 = vpack.c.b16 %v4630, %v4614
      %v5751 = vpack.c.b16 %v4631, %v4615
      %v5752 = vpack.c.b16 %v4632, %v4616
      %v5753 = vpack.c.b16 %v4633, %v4617
      %v5754 = vpack.c.b16 %v4634, %v4618
      %v5755 = vpack.c.b16 %v4635, %v4619
      %v5756 = vpack.c.b16 %v4636, %v4620
      %v5757 = vpack.c.b16 %v4637, %v4621
      %v5758 = vpack.c.b16 %v4638, %v4622
      %v5759 = vpack.c.b16 %v4639, %v4623
      %v5760 = vpack.c.b16 %v4640, %v4624
      %v5761 = vpack.c.b16 %v4641, %v4625
      %v5762 = vpack.c.b16 %v4642, %v4626
      %v5763 = vpack.c.b16 %v4643, %v4627
      %v5764 = vpack.c.b16 %v4644, %v4628
      %v5765 = vpack.c.b16 %v4645, %v4629
      %v5766 = vpack.c.b16 %v4662, %v4646
      %v5767 = vpack.c.b16 %v4663, %v4647
      %v5768 = vpack.c.b16 %v4664, %v4648
      %v5769 = vpack.c.b16 %v4665, %v4649
      %v5770 = vpack.c.b16 %v4666, %v4650
      %v5771 = vpack.c.b16 %v4667, %v4651
      %v5772 = vpack.c.b16 %v4668, %v4652
      %v5773 = vpack.c.b16 %v4669, %v4653
      %v5774 = vpack.c.b16 %v4670, %v4654
      %v5775 = vpack.c.b16 %v4671, %v4655
      %v5776 = vpack.c.b16 %v4672, %v4656
      %v5777 = vpack.c.b16 %v4673, %v4657
      %v5778 = vpack.c.b16 %v4674, %v4658
      %v5779 = vpack.c.b16 %v4675, %v4659
      %v5780 = vpack.c.b16 %v4676, %v4660
      %v5781 = vpack.c.b16 %v4677, %v4661
      %v5782 = vpack.c.b16 %v4694, %v4678
      %v5783 = vpack.c.b16 %v4695, %v4679
      %v5784 = vpack.c.b16 %v4696, %v4680
      %v5785 = vpack.c.b16 %v4697, %v4681
      %v5786 = vpack.c.b16 %v4698, %v4682
      %v5787 = vpack.c.b16 %v4699, %v4683
      %v5788 = vpack.c.b16 %v4700, %v4684
      %v5789 = vpack.c.b16 %v4701, %v4685
      %v5790 = vpack.c.b16 %v4702, %v4686
      %v5791 = vpack.c.b16 %v4703, %v4687
      %v5792 = vpack.c.b16 %v4704, %v4688
      %v5793 = vpack.c.b16 %v4705, %v4689
      %v5794 = vpack.c.b16 %v4706, %v4690
      %v5795 = vpack.c.b16 %v4707, %v4691
      %v5796 = vpack.c.b16 %v4708, %v4692
      %v5797 = vpack.c.b16 %v4709, %v4693
      %v5798 = vpack.c.b16 %v4726, %v4710
      %v5799 = vpack.c.b16 %v4727, %v4711
      %v5800 = vpack.c.b16 %v4728, %v4712
      %v5801 = vpack.c.b16 %v4729, %v4713
      %v5802 = vpack.c.b16 %v4730, %v4714
      %v5803 = vpack.c.b16 %v4731, %v4715
      %v5804 = vpack.c.b16 %v4732, %v4716
      %v5805 = vpack.c.b16 %v4733, %v4717
      %v5806 = vpack.c.b16 %v4734, %v4718
      %v5807 = vpack.c.b16 %v4735, %v4719
      %v5808 = vpack.c.b16 %v4736, %v4720
      %v5809 = vpack.c.b16 %v4737, %v4721
      %v5810 = vpack.c.b16 %v4738, %v4722
      %v5811 = vpack.c.b16 %v4739, %v4723
      %v5812 = vpack.c.b16 %v4740, %v4724
      %v5813 = vpack.c.b16 %v4741, %v4725
      %v5814 = vpack.c.b16 %v4758, %v4742
      %v5815 = vpack.c.b16 %v4759, %v4743
      %v5816 = vpack.c.b16 %v4760, %v4744
      %v5817 = vpack.c.b16 %v4761, %v4745
      %v5818 = vpack.c.b16 %v4762, %v4746
      %v5819 = vpack.c.b16 %v4763, %v4747
      %v5820 = vpack.c.b16 %v4764, %v4748
      %v5821 = vpack.c.b16 %v4765, %v4749
      %v5822 = vpack.c.b16 %v4766, %v4750
      %v5823 = vpack.c.b16 %v4767, %v4751
      %v5824 = vpack.c.b16 %v4768, %v4752
      %v5825 = vpack.c.b16 %v4769, %v4753
      %v5826 = vpack.c.b16 %v4770, %v4754
      %v5827 = vpack.c.b16 %v4771, %v4755
      %v5828 = vpack.c.b16 %v4772, %v4756
      %v5829 = vpack.c.b16 %v4773, %v4757
      %v5830 = vpack.c.b16 %v4790, %v4774
      %v5831 = vpack.c.b16 %v4791, %v4775
      %v5832 = vpack.c.b16 %v4792, %v4776
      %v5833 = vpack.c.b16 %v4793, %v4777
      %v5834 = vpack.c.b16 %v4794, %v4778
      %v5835 = vpack.c.b16 %v4795, %v4779
      %v5836 = vpack.c.b16 %v4796, %v4780
      %v5837 = vpack.c.b16 %v4797, %v4781
      %v5838 = vpack.c.b16 %v4798, %v4782
      %v5839 = vpack.c.b16 %v4799, %v4783
      %v5840 = vpack.c.b16 %v4800, %v4784
      %v5841 = vpack.c.b16 %v4801, %v4785
      %v5842 = vpack.c.b16 %v4802, %v4786
      %v5843 = vpack.c.b16 %v4803, %v4787
      %v5844 = vpack.c.b16 %v4804, %v4788
      %v5845 = vpack.c.b16 %v4805, %v4789
      %v5846 = vpack.c.b16 %v4822, %v4806
      %v5847 = vpack.c.b16 %v4823, %v4807
      %v5848 = vpack.c.b16 %v4824, %v4808
      %v5849 = vpack.c.b16 %v4825, %v4809
      %v5850 = vpack.c.b16 %v4826, %v4810
      %v5851 = vpack.c.b16 %v4827, %v4811
      %v5852 = vpack.c.b16 %v4828, %v4812
      %v5853 = vpack.c.b16 %v4829, %v4813
      %v5854 = vpack.c.b16 %v4830, %v4814
      %v5855 = vpack.c.b16 %v4831, %v4815
      %v5856 = vpack.c.b16 %v4832, %v4816
      %v5857 = vpack.c.b16 %v4833, %v4817
      %v5858 = vpack.c.b16 %v4834, %v4818
      %v5859 = vpack.c.b16 %v4835, %v4819
      %v5860 = vpack.c.b16 %v4836, %v4820
      %v5861 = vpack.c.b16 %v4837, %v4821
      %6886 = vmatprep.subr.bf16.mxu0 %v4951
      %6887 = vmatpush1.bf16.msra.mxu0 %v4950
      %6888 = vmatprep.subr.bf16.mxu0 %v4935
      %6889 = vmatpush1.bf16.msra.mxu0 %v4934
      %6890 = vmatprep.subr.bf16.mxu0 %v4919
      %6891 = vmatpush1.bf16.msra.mxu0 %v4918
      %6892 = vmatprep.subr.bf16.mxu0 %v4903
      %6893 = vmatpush1.bf16.msra.mxu0 %v4902
      %6894 = vmatprep.subr.bf16.mxu0 %v4887
      %6895 = vmatpush1.bf16.msra.mxu0 %v4886
      %6896 = vmatprep.subr.bf16.mxu0 %v4871
      %6897 = vmatpush1.bf16.msra.mxu0 %v4870
      %6898 = vmatprep.subr.bf16.mxu0 %v4855
      %6899 = vmatpush1.bf16.msra.mxu0 %v4854
      %6900 = vmatprep.subr.bf16.mxu0 %v4839
      %6901 = vmatpush1.bf16.msra.mxu0 %v4838
      %6902 = vmatprep.subr.bf16.mxu0 %v5079
      %6903 = vmatpush2.bf16.msra.mxu0 %v5078
      %6904 = vmatprep.subr.bf16.mxu0 %v5063
      %6905 = vmatpush2.bf16.msra.mxu0 %v5062
      %6906 = vmatprep.subr.bf16.mxu0 %v5047
      %6907 = vmatpush2.bf16.msra.mxu0 %v5046
      %6908 = vmatprep.subr.bf16.mxu0 %v5031
      %6909 = vmatpush2.bf16.msra.mxu0 %v5030
      %6910 = vmatprep.subr.bf16.mxu0 %v5015
      %6911 = vmatpush2.bf16.msra.mxu0 %v5014
      %6912 = vmatprep.subr.bf16.mxu0 %v4999
      %6913 = vmatpush2.bf16.msra.mxu0 %v4998
      %6914 = vmatprep.subr.bf16.mxu0 %v4983
      %6915 = vmatpush2.bf16.msra.mxu0 %v4982
      %6916 = vmatprep.subr.bf16.mxu0 %v4967
      %6917 = vmatpush2.bf16.msra.mxu0 %v4966
      %6918 = vmatprep.mubr.bf16.mxu0 %v735
      %6919 = vmatmul.mubr.bf16.gmra.mxu0 %v734
      %v6920 = vpop.f32.mrf.mxu0
      %v6921 = vadd.f32 0.0, %v6920
      %v6922 = vpop.f32.mrf.mxu0
      %v6923 = vadd.f32 0.0, %v6922
      %v6924 = vpop.f32.mrf.mxu0
      %v6925 = vpop.f32.mrf.mxu0
      %6926 = vdwg.mxu0
      %6927 = vmatprep.subr.bf16.mxu0 %v5207
      %6928 = vmatpush1.bf16.msra.mxu0 %v5206
      %6929 = vmatprep.subr.bf16.mxu0 %v5191
      %6930 = vmatpush1.bf16.msra.mxu0 %v5190
      %6931 = vmatprep.subr.bf16.mxu0 %v5175
      %6932 = vmatpush1.bf16.msra.mxu0 %v5174
      %6933 = vmatprep.subr.bf16.mxu0 %v5159
      %6934 = vmatpush1.bf16.msra.mxu0 %v5158
      %6935 = vmatprep.subr.bf16.mxu0 %v5143
      %6936 = vmatpush1.bf16.msra.mxu0 %v5142
      %6937 = vmatprep.subr.bf16.mxu0 %v5127
      %6938 = vmatpush1.bf16.msra.mxu0 %v5126
      %6939 = vmatprep.subr.bf16.mxu0 %v5111
      %6940 = vmatpush1.bf16.msra.mxu0 %v5110
      %6941 = vmatprep.subr.bf16.mxu0 %v5095
      %6942 = vmatpush1.bf16.msra.mxu0 %v5094
      %6943 = vmatprep.subr.bf16.mxu0 %v5335
      %6944 = vmatpush2.bf16.msra.mxu0 %v5334
      %6945 = vmatprep.subr.bf16.mxu0 %v5319
      %6946 = vmatpush2.bf16.msra.mxu0 %v5318
      %6947 = vmatprep.subr.bf16.mxu0 %v5303
      %6948 = vmatpush2.bf16.msra.mxu0 %v5302
      %6949 = vmatprep.subr.bf16.mxu0 %v5287
      %6950 = vmatpush2.bf16.msra.mxu0 %v5286
      %6951 = vmatprep.subr.bf16.mxu0 %v5271
      %6952 = vmatpush2.bf16.msra.mxu0 %v5270
      %6953 = vmatprep.subr.bf16.mxu0 %v5255
      %6954 = vmatpush2.bf16.msra.mxu0 %v5254
      %6955 = vmatprep.subr.bf16.mxu0 %v5239
      %6956 = vmatpush2.bf16.msra.mxu0 %v5238
      %6957 = vmatprep.subr.bf16.mxu0 %v5223
      %6958 = vmatpush2.bf16.msra.mxu0 %v5222
      %6959 = vmatprep.mubr.bf16.mxu0 %v737
      %6960 = vmatmul.mubr.bf16.gmra.mxu0 %v736
      %v6961 = vpop.f32.mrf.mxu0
      %v6962 = vadd.f32 %v6921, %v6961
      %v6963 = vpop.f32.mrf.mxu0
      %v6964 = vadd.f32 %v6923, %v6963
      %v6965 = vpop.f32.mrf.mxu0
      %v6966 = vpop.f32.mrf.mxu0
      %6967 = vdwg.mxu0
      %6968 = vmatprep.subr.bf16.mxu0 %v5463
      %6969 = vmatpush1.bf16.msra.mxu0 %v5462
      %6970 = vmatprep.subr.bf16.mxu0 %v5447
      %6971 = vmatpush1.bf16.msra.mxu0 %v5446
      %6972 = vmatprep.subr.bf16.mxu0 %v5431
      %6973 = vmatpush1.bf16.msra.mxu0 %v5430
      %6974 = vmatprep.subr.bf16.mxu0 %v5415
      %6975 = vmatpush1.bf16.msra.mxu0 %v5414
      %6976 = vmatprep.subr.bf16.mxu0 %v5399
      %6977 = vmatpush1.bf16.msra.mxu0 %v5398
      %6978 = vmatprep.subr.bf16.mxu0 %v5383
      %6979 = vmatpush1.bf16.msra.mxu0 %v5382
      %6980 = vmatprep.subr.bf16.mxu0 %v5367
      %6981 = vmatpush1.bf16.msra.mxu0 %v5366
      %6982 = vmatprep.subr.bf16.mxu0 %v5351
      %6983 = vmatpush1.bf16.msra.mxu0 %v5350
      %6984 = vmatprep.subr.bf16.mxu0 %v5591
      %6985 = vmatpush2.bf16.msra.mxu0 %v5590
      %6986 = vmatprep.subr.bf16.mxu0 %v5575
      %6987 = vmatpush2.bf16.msra.mxu0 %v5574
      %6988 = vmatprep.subr.bf16.mxu0 %v5559
      %6989 = vmatpush2.bf16.msra.mxu0 %v5558
      %6990 = vmatprep.subr.bf16.mxu0 %v5543
      %6991 = vmatpush2.bf16.msra.mxu0 %v5542
      %6992 = vmatprep.subr.bf16.mxu0 %v5527
      %6993 = vmatpush2.bf16.msra.mxu0 %v5526
      %6994 = vmatprep.subr.bf16.mxu0 %v5511
      %6995 = vmatpush2.bf16.msra.mxu0 %v5510
      %6996 = vmatprep.subr.bf16.mxu0 %v5495
      %6997 = vmatpush2.bf16.msra.mxu0 %v5494
      %6998 = vmatprep.subr.bf16.mxu0 %v5479
      %6999 = vmatpush2.bf16.msra.mxu0 %v5478
      %7000 = vmatprep.mubr.bf16.mxu0 %v739
      %7001 = vmatmul.mubr.bf16.gmra.mxu0 %v738
      %v7002 = vpop.f32.mrf.mxu0
      %v7003 = vadd.f32 %v6962, %v7002
      %v7004 = vpop.f32.mrf.mxu0
      %v7005 = vadd.f32 %v6964, %v7004
      %v7006 = vpop.f32.mrf.mxu0
      %v7007 = vpop.f32.mrf.mxu0
      %7008 = vdwg.mxu0
      %7009 = vmatprep.subr.bf16.mxu0 %v5719
      %7010 = vmatpush1.bf16.msra.mxu0 %v5718
      %7011 = vmatprep.subr.bf16.mxu0 %v5703
      %7012 = vmatpush1.bf16.msra.mxu0 %v5702
      %7013 = vmatprep.subr.bf16.mxu0 %v5687
      %7014 = vmatpush1.bf16.msra.mxu0 %v5686
      %7015 = vmatprep.subr.bf16.mxu0 %v5671
      %7016 = vmatpush1.bf16.msra.mxu0 %v5670
      %7017 = vmatprep.subr.bf16.mxu0 %v5655
      %7018 = vmatpush1.bf16.msra.mxu0 %v5654
      %7019 = vmatprep.subr.bf16.mxu0 %v5639
      %7020 = vmatpush1.bf16.msra.mxu0 %v5638
      %7021 = vmatprep.subr.bf16.mxu0 %v5623
      %7022 = vmatpush1.bf16.msra.mxu0 %v5622
      %7023 = vmatprep.subr.bf16.mxu0 %v5607
      %7024 = vmatpush1.bf16.msra.mxu0 %v5606
      %7025 = vmatprep.subr.bf16.mxu0 %v5847
      %7026 = vmatpush2.bf16.msra.mxu0 %v5846
      %7027 = vmatprep.subr.bf16.mxu0 %v5831
      %7028 = vmatpush2.bf16.msra.mxu0 %v5830
      %7029 = vmatprep.subr.bf16.mxu0 %v5815
      %7030 = vmatpush2.bf16.msra.mxu0 %v5814
      %7031 = vmatprep.subr.bf16.mxu0 %v5799
      %7032 = vmatpush2.bf16.msra.mxu0 %v5798
      %7033 = vmatprep.subr.bf16.mxu0 %v5783
      %7034 = vmatpush2.bf16.msra.mxu0 %v5782
      %7035 = vmatprep.subr.bf16.mxu0 %v5767
      %7036 = vmatpush2.bf16.msra.mxu0 %v5766
      %7037 = vmatprep.subr.bf16.mxu0 %v5751
      %7038 = vmatpush2.bf16.msra.mxu0 %v5750
      %7039 = vmatprep.subr.bf16.mxu0 %v5735
      %7040 = vmatpush2.bf16.msra.mxu0 %v5734
      %7041 = vmatprep.mubr.bf16.mxu0 %v741
      %7042 = vmatmul.mubr.bf16.gmra.mxu0 %v740
      %v7043 = vpop.f32.mrf.mxu0
      %v7044 = vadd.f32 %v7003, %v7043
      %v7045 = vpop.f32.mrf.mxu0
      %v7046 = vadd.f32 %v7005, %v7045
      %v7047 = vpop.f32.mrf.mxu0
      %v7048 = vpop.f32.mrf.mxu0
      %7049 = vdwg.mxu0
      %7050 = vmatprep.subr.bf16.mxu0 %v4953
      %7051 = vmatpush1.bf16.msra.mxu0 %v4952
      %7052 = vmatprep.subr.bf16.mxu0 %v4937
      %7053 = vmatpush1.bf16.msra.mxu0 %v4936
      %7054 = vmatprep.subr.bf16.mxu0 %v4921
      %7055 = vmatpush1.bf16.msra.mxu0 %v4920
      %7056 = vmatprep.subr.bf16.mxu0 %v4905
      %7057 = vmatpush1.bf16.msra.mxu0 %v4904
      %7058 = vmatprep.subr.bf16.mxu0 %v4889
      %7059 = vmatpush1.bf16.msra.mxu0 %v4888
      %7060 = vmatprep.subr.bf16.mxu0 %v4873
      %7061 = vmatpush1.bf16.msra.mxu0 %v4872
      %7062 = vmatprep.subr.bf16.mxu0 %v4857
      %7063 = vmatpush1.bf16.msra.mxu0 %v4856
      %7064 = vmatprep.subr.bf16.mxu0 %v4841
      %7065 = vmatpush1.bf16.msra.mxu0 %v4840
      %7066 = vmatprep.subr.bf16.mxu0 %v5081
      %7067 = vmatpush2.bf16.msra.mxu0 %v5080
      %7068 = vmatprep.subr.bf16.mxu0 %v5065
      %7069 = vmatpush2.bf16.msra.mxu0 %v5064
      %7070 = vmatprep.subr.bf16.mxu0 %v5049
      %7071 = vmatpush2.bf16.msra.mxu0 %v5048
      %7072 = vmatprep.subr.bf16.mxu0 %v5033
      %7073 = vmatpush2.bf16.msra.mxu0 %v5032
      %7074 = vmatprep.subr.bf16.mxu0 %v5017
      %7075 = vmatpush2.bf16.msra.mxu0 %v5016
      %7076 = vmatprep.subr.bf16.mxu0 %v5001
      %7077 = vmatpush2.bf16.msra.mxu0 %v5000
      %7078 = vmatprep.subr.bf16.mxu0 %v4985
      %7079 = vmatpush2.bf16.msra.mxu0 %v4984
      %7080 = vmatprep.subr.bf16.mxu0 %v4969
      %7081 = vmatpush2.bf16.msra.mxu0 %v4968
      %7082 = vmatprep.mubr.bf16.mxu0 %v735
      %7083 = vmatmul.mubr.bf16.gmra.mxu0 %v734
      %v7084 = vpop.f32.mrf.mxu0
      %v7085 = vadd.f32 0.0, %v7084
      %v7086 = vpop.f32.mrf.mxu0
      %v7087 = vadd.f32 0.0, %v7086
      %v7088 = vpop.f32.mrf.mxu0
      %v7089 = vpop.f32.mrf.mxu0
      %7090 = vdwg.mxu0
      %7091 = vmatprep.subr.bf16.mxu0 %v5209
      %7092 = vmatpush1.bf16.msra.mxu0 %v5208
      %7093 = vmatprep.subr.bf16.mxu0 %v5193
      %7094 = vmatpush1.bf16.msra.mxu0 %v5192
      %7095 = vmatprep.subr.bf16.mxu0 %v5177
      %7096 = vmatpush1.bf16.msra.mxu0 %v5176
      %7097 = vmatprep.subr.bf16.mxu0 %v5161
      %7098 = vmatpush1.bf16.msra.mxu0 %v5160
      %7099 = vmatprep.subr.bf16.mxu0 %v5145
      %7100 = vmatpush1.bf16.msra.mxu0 %v5144
      %7101 = vmatprep.subr.bf16.mxu0 %v5129
      %7102 = vmatpush1.bf16.msra.mxu0 %v5128
      %7103 = vmatprep.subr.bf16.mxu0 %v5113
      %7104 = vmatpush1.bf16.msra.mxu0 %v5112
      %7105 = vmatprep.subr.bf16.mxu0 %v5097
      %7106 = vmatpush1.bf16.msra.mxu0 %v5096
      %7107 = vmatprep.subr.bf16.mxu0 %v5337
      %7108 = vmatpush2.bf16.msra.mxu0 %v5336
      %7109 = vmatprep.subr.bf16.mxu0 %v5321
      %7110 = vmatpush2.bf16.msra.mxu0 %v5320
      %7111 = vmatprep.subr.bf16.mxu0 %v5305
      %7112 = vmatpush2.bf16.msra.mxu0 %v5304
      %7113 = vmatprep.subr.bf16.mxu0 %v5289
      %7114 = vmatpush2.bf16.msra.mxu0 %v5288
      %7115 = vmatprep.subr.bf16.mxu0 %v5273
      %7116 = vmatpush2.bf16.msra.mxu0 %v5272
      %7117 = vmatprep.subr.bf16.mxu0 %v5257
      %7118 = vmatpush2.bf16.msra.mxu0 %v5256
      %7119 = vmatprep.subr.bf16.mxu0 %v5241
      %7120 = vmatpush2.bf16.msra.mxu0 %v5240
      %7121 = vmatprep.subr.bf16.mxu0 %v5225
      %7122 = vmatpush2.bf16.msra.mxu0 %v5224
      %7123 = vmatprep.mubr.bf16.mxu0 %v737
      %7124 = vmatmul.mubr.bf16.gmra.mxu0 %v736
      %v7125 = vpop.f32.mrf.mxu0
      %v7126 = vadd.f32 %v7085, %v7125
      %v7127 = vpop.f32.mrf.mxu0
      %v7128 = vadd.f32 %v7087, %v7127
      %v7129 = vpop.f32.mrf.mxu0
      %v7130 = vpop.f32.mrf.mxu0
      %7131 = vdwg.mxu0
      %7132 = vmatprep.subr.bf16.mxu0 %v5465
      %7133 = vmatpush1.bf16.msra.mxu0 %v5464
      %7134 = vmatprep.subr.bf16.mxu0 %v5449
      %7135 = vmatpush1.bf16.msra.mxu0 %v5448
      %7136 = vmatprep.subr.bf16.mxu0 %v5433
      %7137 = vmatpush1.bf16.msra.mxu0 %v5432
      %7138 = vmatprep.subr.bf16.mxu0 %v5417
      %7139 = vmatpush1.bf16.msra.mxu0 %v5416
      %7140 = vmatprep.subr.bf16.mxu0 %v5401
      %7141 = vmatpush1.bf16.msra.mxu0 %v5400
      %7142 = vmatprep.subr.bf16.mxu0 %v5385
      %7143 = vmatpush1.bf16.msra.mxu0 %v5384
      %7144 = vmatprep.subr.bf16.mxu0 %v5369
      %7145 = vmatpush1.bf16.msra.mxu0 %v5368
      %7146 = vmatprep.subr.bf16.mxu0 %v5353
      %7147 = vmatpush1.bf16.msra.mxu0 %v5352
      %7148 = vmatprep.subr.bf16.mxu0 %v5593
      %7149 = vmatpush2.bf16.msra.mxu0 %v5592
      %7150 = vmatprep.subr.bf16.mxu0 %v5577
      %7151 = vmatpush2.bf16.msra.mxu0 %v5576
      %7152 = vmatprep.subr.bf16.mxu0 %v5561
      %7153 = vmatpush2.bf16.msra.mxu0 %v5560
      %7154 = vmatprep.subr.bf16.mxu0 %v5545
      %7155 = vmatpush2.bf16.msra.mxu0 %v5544
      %7156 = vmatprep.subr.bf16.mxu0 %v5529
      %7157 = vmatpush2.bf16.msra.mxu0 %v5528
      %7158 = vmatprep.subr.bf16.mxu0 %v5513
      %7159 = vmatpush2.bf16.msra.mxu0 %v5512
      %7160 = vmatprep.subr.bf16.mxu0 %v5497
      %7161 = vmatpush2.bf16.msra.mxu0 %v5496
      %7162 = vmatprep.subr.bf16.mxu0 %v5481
      %7163 = vmatpush2.bf16.msra.mxu0 %v5480
      %7164 = vmatprep.mubr.bf16.mxu0 %v739
      %7165 = vmatmul.mubr.bf16.gmra.mxu0 %v738
      %v7166 = vpop.f32.mrf.mxu0
      %v7167 = vadd.f32 %v7126, %v7166
      %v7168 = vpop.f32.mrf.mxu0
      %v7169 = vadd.f32 %v7128, %v7168
      %v7170 = vpop.f32.mrf.mxu0
      %v7171 = vpop.f32.mrf.mxu0
      %7172 = vdwg.mxu0
      %7173 = vmatprep.subr.bf16.mxu0 %v5721
      %7174 = vmatpush1.bf16.msra.mxu0 %v5720
      %7175 = vmatprep.subr.bf16.mxu0 %v5705
      %7176 = vmatpush1.bf16.msra.mxu0 %v5704
      %7177 = vmatprep.subr.bf16.mxu0 %v5689
      %7178 = vmatpush1.bf16.msra.mxu0 %v5688
      %7179 = vmatprep.subr.bf16.mxu0 %v5673
      %7180 = vmatpush1.bf16.msra.mxu0 %v5672
      %7181 = vmatprep.subr.bf16.mxu0 %v5657
      %7182 = vmatpush1.bf16.msra.mxu0 %v5656
      %7183 = vmatprep.subr.bf16.mxu0 %v5641
      %7184 = vmatpush1.bf16.msra.mxu0 %v5640
      %7185 = vmatprep.subr.bf16.mxu0 %v5625
      %7186 = vmatpush1.bf16.msra.mxu0 %v5624
      %7187 = vmatprep.subr.bf16.mxu0 %v5609
      %7188 = vmatpush1.bf16.msra.mxu0 %v5608
      %7189 = vmatprep.subr.bf16.mxu0 %v5849
      %7190 = vmatpush2.bf16.msra.mxu0 %v5848
      %7191 = vmatprep.subr.bf16.mxu0 %v5833
      %7192 = vmatpush2.bf16.msra.mxu0 %v5832
      %7193 = vmatprep.subr.bf16.mxu0 %v5817
      %7194 = vmatpush2.bf16.msra.mxu0 %v5816
      %7195 = vmatprep.subr.bf16.mxu0 %v5801
      %7196 = vmatpush2.bf16.msra.mxu0 %v5800
      %7197 = vmatprep.subr.bf16.mxu0 %v5785
      %7198 = vmatpush2.bf16.msra.mxu0 %v5784
      %7199 = vmatprep.subr.bf16.mxu0 %v5769
      %7200 = vmatpush2.bf16.msra.mxu0 %v5768
      %7201 = vmatprep.subr.bf16.mxu0 %v5753
      %7202 = vmatpush2.bf16.msra.mxu0 %v5752
      %7203 = vmatprep.subr.bf16.mxu0 %v5737
      %7204 = vmatpush2.bf16.msra.mxu0 %v5736
      %7205 = vmatprep.mubr.bf16.mxu0 %v741
      %7206 = vmatmul.mubr.bf16.gmra.mxu0 %v740
      %v7207 = vpop.f32.mrf.mxu0
      %v7208 = vadd.f32 %v7167, %v7207
      %v7209 = vpop.f32.mrf.mxu0
      %v7210 = vadd.f32 %v7169, %v7209
      %v7211 = vpop.f32.mrf.mxu0
      %v7212 = vpop.f32.mrf.mxu0
      %7213 = vdwg.mxu0
      %7214 = vmatprep.subr.bf16.mxu0 %v4955
      %7215 = vmatpush1.bf16.msra.mxu0 %v4954
      %7216 = vmatprep.subr.bf16.mxu0 %v4939
      %7217 = vmatpush1.bf16.msra.mxu0 %v4938
      %7218 = vmatprep.subr.bf16.mxu0 %v4923
      %7219 = vmatpush1.bf16.msra.mxu0 %v4922
      %7220 = vmatprep.subr.bf16.mxu0 %v4907
      %7221 = vmatpush1.bf16.msra.mxu0 %v4906
      %7222 = vmatprep.subr.bf16.mxu0 %v4891
      %7223 = vmatpush1.bf16.msra.mxu0 %v4890
      %7224 = vmatprep.subr.bf16.mxu0 %v4875
      %7225 = vmatpush1.bf16.msra.mxu0 %v4874
      %7226 = vmatprep.subr.bf16.mxu0 %v4859
      %7227 = vmatpush1.bf16.msra.mxu0 %v4858
      %7228 = vmatprep.subr.bf16.mxu0 %v4843
      %7229 = vmatpush1.bf16.msra.mxu0 %v4842
      %7230 = vmatprep.subr.bf16.mxu0 %v5083
      %7231 = vmatpush2.bf16.msra.mxu0 %v5082
      %7232 = vmatprep.subr.bf16.mxu0 %v5067
      %7233 = vmatpush2.bf16.msra.mxu0 %v5066
      %7234 = vmatprep.subr.bf16.mxu0 %v5051
      %7235 = vmatpush2.bf16.msra.mxu0 %v5050
      %7236 = vmatprep.subr.bf16.mxu0 %v5035
      %7237 = vmatpush2.bf16.msra.mxu0 %v5034
      %7238 = vmatprep.subr.bf16.mxu0 %v5019
      %7239 = vmatpush2.bf16.msra.mxu0 %v5018
      %7240 = vmatprep.subr.bf16.mxu0 %v5003
      %7241 = vmatpush2.bf16.msra.mxu0 %v5002
      %7242 = vmatprep.subr.bf16.mxu0 %v4987
      %7243 = vmatpush2.bf16.msra.mxu0 %v4986
      %7244 = vmatprep.subr.bf16.mxu0 %v4971
      %7245 = vmatpush2.bf16.msra.mxu0 %v4970
      %7246 = vmatprep.mubr.bf16.mxu0 %v735
      %7247 = vmatmul.mubr.bf16.gmra.mxu0 %v734
      %v7248 = vpop.f32.mrf.mxu0
      %v7249 = vadd.f32 0.0, %v7248
      %v7250 = vpop.f32.mrf.mxu0
      %v7251 = vadd.f32 0.0, %v7250
      %v7252 = vpop.f32.mrf.mxu0
      %v7253 = vpop.f32.mrf.mxu0
      %7254 = vdwg.mxu0
      %7255 = vmatprep.subr.bf16.mxu0 %v5211
      %7256 = vmatpush1.bf16.msra.mxu0 %v5210
      %7257 = vmatprep.subr.bf16.mxu0 %v5195
      %7258 = vmatpush1.bf16.msra.mxu0 %v5194
      %7259 = vmatprep.subr.bf16.mxu0 %v5179
      %7260 = vmatpush1.bf16.msra.mxu0 %v5178
      %7261 = vmatprep.subr.bf16.mxu0 %v5163
      %7262 = vmatpush1.bf16.msra.mxu0 %v5162
      %7263 = vmatprep.subr.bf16.mxu0 %v5147
      %7264 = vmatpush1.bf16.msra.mxu0 %v5146
      %7265 = vmatprep.subr.bf16.mxu0 %v5131
      %7266 = vmatpush1.bf16.msra.mxu0 %v5130
      %7267 = vmatprep.subr.bf16.mxu0 %v5115
      %7268 = vmatpush1.bf16.msra.mxu0 %v5114
      %7269 = vmatprep.subr.bf16.mxu0 %v5099
      %7270 = vmatpush1.bf16.msra.mxu0 %v5098
      %7271 = vmatprep.subr.bf16.mxu0 %v5339
      %7272 = vmatpush2.bf16.msra.mxu0 %v5338
      %7273 = vmatprep.subr.bf16.mxu0 %v5323
      %7274 = vmatpush2.bf16.msra.mxu0 %v5322
      %7275 = vmatprep.subr.bf16.mxu0 %v5307
      %7276 = vmatpush2.bf16.msra.mxu0 %v5306
      %7277 = vmatprep.subr.bf16.mxu0 %v5291
      %7278 = vmatpush2.bf16.msra.mxu0 %v5290
      %7279 = vmatprep.subr.bf16.mxu0 %v5275
      %7280 = vmatpush2.bf16.msra.mxu0 %v5274
      %7281 = vmatprep.subr.bf16.mxu0 %v5259
      %7282 = vmatpush2.bf16.msra.mxu0 %v5258
      %7283 = vmatprep.subr.bf16.mxu0 %v5243
      %7284 = vmatpush2.bf16.msra.mxu0 %v5242
      %7285 = vmatprep.subr.bf16.mxu0 %v5227
      %7286 = vmatpush2.bf16.msra.mxu0 %v5226
      %7287 = vmatprep.mubr.bf16.mxu0 %v737
      %7288 = vmatmul.mubr.bf16.gmra.mxu0 %v736
      %v7289 = vpop.f32.mrf.mxu0
      %v7290 = vadd.f32 %v7249, %v7289
      %v7291 = vpop.f32.mrf.mxu0
      %v7292 = vadd.f32 %v7251, %v7291
      %v7293 = vpop.f32.mrf.mxu0
      %v7294 = vpop.f32.mrf.mxu0
      %7295 = vdwg.mxu0
      %7296 = vmatprep.subr.bf16.mxu0 %v5467
      %7297 = vmatpush1.bf16.msra.mxu0 %v5466
      %7298 = vmatprep.subr.bf16.mxu0 %v5451
      %7299 = vmatpush1.bf16.msra.mxu0 %v5450
      %7300 = vmatprep.subr.bf16.mxu0 %v5435
      %7301 = vmatpush1.bf16.msra.mxu0 %v5434
      %7302 = vmatprep.subr.bf16.mxu0 %v5419
      %7303 = vmatpush1.bf16.msra.mxu0 %v5418
      %7304 = vmatprep.subr.bf16.mxu0 %v5403
      %7305 = vmatpush1.bf16.msra.mxu0 %v5402
      %7306 = vmatprep.subr.bf16.mxu0 %v5387
      %7307 = vmatpush1.bf16.msra.mxu0 %v5386
      %7308 = vmatprep.subr.bf16.mxu0 %v5371
      %7309 = vmatpush1.bf16.msra.mxu0 %v5370
      %7310 = vmatprep.subr.bf16.mxu0 %v5355
      %7311 = vmatpush1.bf16.msra.mxu0 %v5354
      %7312 = vmatprep.subr.bf16.mxu0 %v5595
      %7313 = vmatpush2.bf16.msra.mxu0 %v5594
      %7314 = vmatprep.subr.bf16.mxu0 %v5579
      %7315 = vmatpush2.bf16.msra.mxu0 %v5578
      %7316 = vmatprep.subr.bf16.mxu0 %v5563
      %7317 = vmatpush2.bf16.msra.mxu0 %v5562
      %7318 = vmatprep.subr.bf16.mxu0 %v5547
      %7319 = vmatpush2.bf16.msra.mxu0 %v5546
      %7320 = vmatprep.subr.bf16.mxu0 %v5531
      %7321 = vmatpush2.bf16.msra.mxu0 %v5530
      %7322 = vmatprep.subr.bf16.mxu0 %v5515
      %7323 = vmatpush2.bf16.msra.mxu0 %v5514
      %7324 = vmatprep.subr.bf16.mxu0 %v5499
      %7325 = vmatpush2.bf16.msra.mxu0 %v5498
      %7326 = vmatprep.subr.bf16.mxu0 %v5483
      %7327 = vmatpush2.bf16.msra.mxu0 %v5482
      %7328 = vmatprep.mubr.bf16.mxu0 %v739
      %7329 = vmatmul.mubr.bf16.gmra.mxu0 %v738
      %v7330 = vpop.f32.mrf.mxu0
      %v7331 = vadd.f32 %v7290, %v7330
      %v7332 = vpop.f32.mrf.mxu0
      %v7333 = vadd.f32 %v7292, %v7332
      %v7334 = vpop.f32.mrf.mxu0
      %v7335 = vpop.f32.mrf.mxu0
      %7336 = vdwg.mxu0
      %7337 = vmatprep.subr.bf16.mxu0 %v5723
      %7338 = vmatpush1.bf16.msra.mxu0 %v5722
      %7339 = vmatprep.subr.bf16.mxu0 %v5707
      %7340 = vmatpush1.bf16.msra.mxu0 %v5706
      %7341 = vmatprep.subr.bf16.mxu0 %v5691
      %7342 = vmatpush1.bf16.msra.mxu0 %v5690
      %7343 = vmatprep.subr.bf16.mxu0 %v5675
      %7344 = vmatpush1.bf16.msra.mxu0 %v5674
      %7345 = vmatprep.subr.bf16.mxu0 %v5659
      %7346 = vmatpush1.bf16.msra.mxu0 %v5658
      %7347 = vmatprep.subr.bf16.mxu0 %v5643
      %7348 = vmatpush1.bf16.msra.mxu0 %v5642
      %7349 = vmatprep.subr.bf16.mxu0 %v5627
      %7350 = vmatpush1.bf16.msra.mxu0 %v5626
      %7351 = vmatprep.subr.bf16.mxu0 %v5611
      %7352 = vmatpush1.bf16.msra.mxu0 %v5610
      %7353 = vmatprep.subr.bf16.mxu0 %v5851
      %7354 = vmatpush2.bf16.msra.mxu0 %v5850
      %7355 = vmatprep.subr.bf16.mxu0 %v5835
      %7356 = vmatpush2.bf16.msra.mxu0 %v5834
      %7357 = vmatprep.subr.bf16.mxu0 %v5819
      %7358 = vmatpush2.bf16.msra.mxu0 %v5818
      %7359 = vmatprep.subr.bf16.mxu0 %v5803
      %7360 = vmatpush2.bf16.msra.mxu0 %v5802
      %7361 = vmatprep.subr.bf16.mxu0 %v5787
      %7362 = vmatpush2.bf16.msra.mxu0 %v5786
      %7363 = vmatprep.subr.bf16.mxu0 %v5771
      %7364 = vmatpush2.bf16.msra.mxu0 %v5770
      %7365 = vmatprep.subr.bf16.mxu0 %v5755
      %7366 = vmatpush2.bf16.msra.mxu0 %v5754
      %7367 = vmatprep.subr.bf16.mxu0 %v5739
      %7368 = vmatpush2.bf16.msra.mxu0 %v5738
      %7369 = vmatprep.mubr.bf16.mxu0 %v741
      %7370 = vmatmul.mubr.bf16.gmra.mxu0 %v740
      %v7371 = vpop.f32.mrf.mxu0
      %v7372 = vadd.f32 %v7331, %v7371
      %v7373 = vpop.f32.mrf.mxu0
      %v7374 = vadd.f32 %v7333, %v7373
      %v7375 = vpop.f32.mrf.mxu0
      %v7376 = vpop.f32.mrf.mxu0
      %7377 = vdwg.mxu0
      %7378 = vmatprep.subr.bf16.mxu0 %v4957
      %7379 = vmatpush1.bf16.msra.mxu0 %v4956
      %7380 = vmatprep.subr.bf16.mxu0 %v4941
      %7381 = vmatpush1.bf16.msra.mxu0 %v4940
      %7382 = vmatprep.subr.bf16.mxu0 %v4925
      %7383 = vmatpush1.bf16.msra.mxu0 %v4924
      %7384 = vmatprep.subr.bf16.mxu0 %v4909
      %7385 = vmatpush1.bf16.msra.mxu0 %v4908
      %7386 = vmatprep.subr.bf16.mxu0 %v4893
      %7387 = vmatpush1.bf16.msra.mxu0 %v4892
      %7388 = vmatprep.subr.bf16.mxu0 %v4877
      %7389 = vmatpush1.bf16.msra.mxu0 %v4876
      %7390 = vmatprep.subr.bf16.mxu0 %v4861
      %7391 = vmatpush1.bf16.msra.mxu0 %v4860
      %7392 = vmatprep.subr.bf16.mxu0 %v4845
      %7393 = vmatpush1.bf16.msra.mxu0 %v4844
      %7394 = vmatprep.subr.bf16.mxu0 %v5085
      %7395 = vmatpush2.bf16.msra.mxu0 %v5084
      %7396 = vmatprep.subr.bf16.mxu0 %v5069
      %7397 = vmatpush2.bf16.msra.mxu0 %v5068
      %7398 = vmatprep.subr.bf16.mxu0 %v5053
      %7399 = vmatpush2.bf16.msra.mxu0 %v5052
      %7400 = vmatprep.subr.bf16.mxu0 %v5037
      %7401 = vmatpush2.bf16.msra.mxu0 %v5036
      %7402 = vmatprep.subr.bf16.mxu0 %v5021
      %7403 = vmatpush2.bf16.msra.mxu0 %v5020
      %7404 = vmatprep.subr.bf16.mxu0 %v5005
      %7405 = vmatpush2.bf16.msra.mxu0 %v5004
      %7406 = vmatprep.subr.bf16.mxu0 %v4989
      %7407 = vmatpush2.bf16.msra.mxu0 %v4988
      %7408 = vmatprep.subr.bf16.mxu0 %v4973
      %7409 = vmatpush2.bf16.msra.mxu0 %v4972
      %7410 = vmatprep.mubr.bf16.mxu0 %v735
      %7411 = vmatmul.mubr.bf16.gmra.mxu0 %v734
      %v7412 = vpop.f32.mrf.mxu0
      %v7413 = vadd.f32 0.0, %v7412
      %v7414 = vpop.f32.mrf.mxu0
      %v7415 = vadd.f32 0.0, %v7414
      %v7416 = vpop.f32.mrf.mxu0
      %v7417 = vpop.f32.mrf.mxu0
      %7418 = vdwg.mxu0
      %7419 = vmatprep.subr.bf16.mxu0 %v5213
      %7420 = vmatpush1.bf16.msra.mxu0 %v5212
      %7421 = vmatprep.subr.bf16.mxu0 %v5197
      %7422 = vmatpush1.bf16.msra.mxu0 %v5196
      %7423 = vmatprep.subr.bf16.mxu0 %v5181
      %7424 = vmatpush1.bf16.msra.mxu0 %v5180
      %7425 = vmatprep.subr.bf16.mxu0 %v5165
      %7426 = vmatpush1.bf16.msra.mxu0 %v5164
      %7427 = vmatprep.subr.bf16.mxu0 %v5149
      %7428 = vmatpush1.bf16.msra.mxu0 %v5148
      %7429 = vmatprep.subr.bf16.mxu0 %v5133
      %7430 = vmatpush1.bf16.msra.mxu0 %v5132
      %7431 = vmatprep.subr.bf16.mxu0 %v5117
      %7432 = vmatpush1.bf16.msra.mxu0 %v5116
      %7433 = vmatprep.subr.bf16.mxu0 %v5101
      %7434 = vmatpush1.bf16.msra.mxu0 %v5100
      %7435 = vmatprep.subr.bf16.mxu0 %v5341
      %7436 = vmatpush2.bf16.msra.mxu0 %v5340
      %7437 = vmatprep.subr.bf16.mxu0 %v5325
      %7438 = vmatpush2.bf16.msra.mxu0 %v5324
      %7439 = vmatprep.subr.bf16.mxu0 %v5309
      %7440 = vmatpush2.bf16.msra.mxu0 %v5308
      %7441 = vmatprep.subr.bf16.mxu0 %v5293
      %7442 = vmatpush2.bf16.msra.mxu0 %v5292
      %7443 = vmatprep.subr.bf16.mxu0 %v5277
      %7444 = vmatpush2.bf16.msra.mxu0 %v5276
      %7445 = vmatprep.subr.bf16.mxu0 %v5261
      %7446 = vmatpush2.bf16.msra.mxu0 %v5260
      %7447 = vmatprep.subr.bf16.mxu0 %v5245
      %7448 = vmatpush2.bf16.msra.mxu0 %v5244
      %7449 = vmatprep.subr.bf16.mxu0 %v5229
      %7450 = vmatpush2.bf16.msra.mxu0 %v5228
      %7451 = vmatprep.mubr.bf16.mxu0 %v737
      %7452 = vmatmul.mubr.bf16.gmra.mxu0 %v736
      %v7453 = vpop.f32.mrf.mxu0
      %v7454 = vadd.f32 %v7413, %v7453
      %v7455 = vpop.f32.mrf.mxu0
      %v7456 = vadd.f32 %v7415, %v7455
      %v7457 = vpop.f32.mrf.mxu0
      %v7458 = vpop.f32.mrf.mxu0
      %7459 = vdwg.mxu0
      %7460 = vmatprep.subr.bf16.mxu0 %v5469
      %7461 = vmatpush1.bf16.msra.mxu0 %v5468
      %7462 = vmatprep.subr.bf16.mxu0 %v5453
      %7463 = vmatpush1.bf16.msra.mxu0 %v5452
      %7464 = vmatprep.subr.bf16.mxu0 %v5437
      %7465 = vmatpush1.bf16.msra.mxu0 %v5436
      %7466 = vmatprep.subr.bf16.mxu0 %v5421
      %7467 = vmatpush1.bf16.msra.mxu0 %v5420
      %7468 = vmatprep.subr.bf16.mxu0 %v5405
      %7469 = vmatpush1.bf16.msra.mxu0 %v5404
      %7470 = vmatprep.subr.bf16.mxu0 %v5389
      %7471 = vmatpush1.bf16.msra.mxu0 %v5388
      %7472 = vmatprep.subr.bf16.mxu0 %v5373
      %7473 = vmatpush1.bf16.msra.mxu0 %v5372
      %7474 = vmatprep.subr.bf16.mxu0 %v5357
      %7475 = vmatpush1.bf16.msra.mxu0 %v5356
      %7476 = vmatprep.subr.bf16.mxu0 %v5597
      %7477 = vmatpush2.bf16.msra.mxu0 %v5596
      %7478 = vmatprep.subr.bf16.mxu0 %v5581
      %7479 = vmatpush2.bf16.msra.mxu0 %v5580
      %7480 = vmatprep.subr.bf16.mxu0 %v5565
      %7481 = vmatpush2.bf16.msra.mxu0 %v5564
      %7482 = vmatprep.subr.bf16.mxu0 %v5549
      %7483 = vmatpush2.bf16.msra.mxu0 %v5548
      %7484 = vmatprep.subr.bf16.mxu0 %v5533
      %7485 = vmatpush2.bf16.msra.mxu0 %v5532
      %7486 = vmatprep.subr.bf16.mxu0 %v5517
      %7487 = vmatpush2.bf16.msra.mxu0 %v5516
      %7488 = vmatprep.subr.bf16.mxu0 %v5501
      %7489 = vmatpush2.bf16.msra.mxu0 %v5500
      %7490 = vmatprep.subr.bf16.mxu0 %v5485
      %7491 = vmatpush2.bf16.msra.mxu0 %v5484
      %7492 = vmatprep.mubr.bf16.mxu0 %v739
      %7493 = vmatmul.mubr.bf16.gmra.mxu0 %v738
      %v7494 = vpop.f32.mrf.mxu0
      %v7495 = vadd.f32 %v7454, %v7494
      %v7496 = vpop.f32.mrf.mxu0
      %v7497 = vadd.f32 %v7456, %v7496
      %v7498 = vpop.f32.mrf.mxu0
      %v7499 = vpop.f32.mrf.mxu0
      %7500 = vdwg.mxu0
      %7501 = vmatprep.subr.bf16.mxu0 %v5725
      %7502 = vmatpush1.bf16.msra.mxu0 %v5724
      %7503 = vmatprep.subr.bf16.mxu0 %v5709
      %7504 = vmatpush1.bf16.msra.mxu0 %v5708
      %7505 = vmatprep.subr.bf16.mxu0 %v5693
      %7506 = vmatpush1.bf16.msra.mxu0 %v5692
      %7507 = vmatprep.subr.bf16.mxu0 %v5677
      %7508 = vmatpush1.bf16.msra.mxu0 %v5676
      %7509 = vmatprep.subr.bf16.mxu0 %v5661
      %7510 = vmatpush1.bf16.msra.mxu0 %v5660
      %7511 = vmatprep.subr.bf16.mxu0 %v5645
      %7512 = vmatpush1.bf16.msra.mxu0 %v5644
      %7513 = vmatprep.subr.bf16.mxu0 %v5629
      %7514 = vmatpush1.bf16.msra.mxu0 %v5628
      %7515 = vmatprep.subr.bf16.mxu0 %v5613
      %7516 = vmatpush1.bf16.msra.mxu0 %v5612
      %7517 = vmatprep.subr.bf16.mxu0 %v5853
      %7518 = vmatpush2.bf16.msra.mxu0 %v5852
      %7519 = vmatprep.subr.bf16.mxu0 %v5837
      %7520 = vmatpush2.bf16.msra.mxu0 %v5836
      %7521 = vmatprep.subr.bf16.mxu0 %v5821
      %7522 = vmatpush2.bf16.msra.mxu0 %v5820
      %7523 = vmatprep.subr.bf16.mxu0 %v5805
      %7524 = vmatpush2.bf16.msra.mxu0 %v5804
      %7525 = vmatprep.subr.bf16.mxu0 %v5789
      %7526 = vmatpush2.bf16.msra.mxu0 %v5788
      %7527 = vmatprep.subr.bf16.mxu0 %v5773
      %7528 = vmatpush2.bf16.msra.mxu0 %v5772
      %7529 = vmatprep.subr.bf16.mxu0 %v5757
      %7530 = vmatpush2.bf16.msra.mxu0 %v5756
      %7531 = vmatprep.subr.bf16.mxu0 %v5741
      %7532 = vmatpush2.bf16.msra.mxu0 %v5740
      %7533 = vmatprep.mubr.bf16.mxu0 %v741
      %7534 = vmatmul.mubr.bf16.gmra.mxu0 %v740
      %v7535 = vpop.f32.mrf.mxu0
      %v7536 = vadd.f32 %v7495, %v7535
      %v7537 = vpop.f32.mrf.mxu0
      %v7538 = vadd.f32 %v7497, %v7537
      %v7539 = vpop.f32.mrf.mxu0
      %v7540 = vpop.f32.mrf.mxu0
      %7541 = vdwg.mxu0
      %7542 = vmatprep.subr.bf16.mxu0 %v4959
      %7543 = vmatpush1.bf16.msra.mxu0 %v4958
      %7544 = vmatprep.subr.bf16.mxu0 %v4943
      %7545 = vmatpush1.bf16.msra.mxu0 %v4942
      %7546 = vmatprep.subr.bf16.mxu0 %v4927
      %7547 = vmatpush1.bf16.msra.mxu0 %v4926
      %7548 = vmatprep.subr.bf16.mxu0 %v4911
      %7549 = vmatpush1.bf16.msra.mxu0 %v4910
      %7550 = vmatprep.subr.bf16.mxu0 %v4895
      %7551 = vmatpush1.bf16.msra.mxu0 %v4894
      %7552 = vmatprep.subr.bf16.mxu0 %v4879
      %7553 = vmatpush1.bf16.msra.mxu0 %v4878
      %7554 = vmatprep.subr.bf16.mxu0 %v4863
      %7555 = vmatpush1.bf16.msra.mxu0 %v4862
      %7556 = vmatprep.subr.bf16.mxu0 %v4847
      %7557 = vmatpush1.bf16.msra.mxu0 %v4846
      %7558 = vmatprep.subr.bf16.mxu0 %v5087
      %7559 = vmatpush2.bf16.msra.mxu0 %v5086
      %7560 = vmatprep.subr.bf16.mxu0 %v5071
      %7561 = vmatpush2.bf16.msra.mxu0 %v5070
      %7562 = vmatprep.subr.bf16.mxu0 %v5055
      %7563 = vmatpush2.bf16.msra.mxu0 %v5054
      %7564 = vmatprep.subr.bf16.mxu0 %v5039
      %7565 = vmatpush2.bf16.msra.mxu0 %v5038
      %7566 = vmatprep.subr.bf16.mxu0 %v5023
      %7567 = vmatpush2.bf16.msra.mxu0 %v5022
      %7568 = vmatprep.subr.bf16.mxu0 %v5007
      %7569 = vmatpush2.bf16.msra.mxu0 %v5006
      %7570 = vmatprep.subr.bf16.mxu0 %v4991
      %7571 = vmatpush2.bf16.msra.mxu0 %v4990
      %7572 = vmatprep.subr.bf16.mxu0 %v4975
      %7573 = vmatpush2.bf16.msra.mxu0 %v4974
      %7574 = vmatprep.mubr.bf16.mxu0 %v735
      %7575 = vmatmul.mubr.bf16.gmra.mxu0 %v734
      %v7576 = vpop.f32.mrf.mxu0
      %v7577 = vadd.f32 0.0, %v7576
      %v7578 = vpop.f32.mrf.mxu0
      %v7579 = vadd.f32 0.0, %v7578
      %v7580 = vpop.f32.mrf.mxu0
      %v7581 = vpop.f32.mrf.mxu0
      %7582 = vdwg.mxu0
      %7583 = vmatprep.subr.bf16.mxu0 %v5215
      %7584 = vmatpush1.bf16.msra.mxu0 %v5214
      %7585 = vmatprep.subr.bf16.mxu0 %v5199
      %7586 = vmatpush1.bf16.msra.mxu0 %v5198
      %7587 = vmatprep.subr.bf16.mxu0 %v5183
      %7588 = vmatpush1.bf16.msra.mxu0 %v5182
      %7589 = vmatprep.subr.bf16.mxu0 %v5167
      %7590 = vmatpush1.bf16.msra.mxu0 %v5166
      %7591 = vmatprep.subr.bf16.mxu0 %v5151
      %7592 = vmatpush1.bf16.msra.mxu0 %v5150
      %7593 = vmatprep.subr.bf16.mxu0 %v5135
      %7594 = vmatpush1.bf16.msra.mxu0 %v5134
      %7595 = vmatprep.subr.bf16.mxu0 %v5119
      %7596 = vmatpush1.bf16.msra.mxu0 %v5118
      %7597 = vmatprep.subr.bf16.mxu0 %v5103
      %7598 = vmatpush1.bf16.msra.mxu0 %v5102
      %7599 = vmatprep.subr.bf16.mxu0 %v5343
      %7600 = vmatpush2.bf16.msra.mxu0 %v5342
      %7601 = vmatprep.subr.bf16.mxu0 %v5327
      %7602 = vmatpush2.bf16.msra.mxu0 %v5326
      %7603 = vmatprep.subr.bf16.mxu0 %v5311
      %7604 = vmatpush2.bf16.msra.mxu0 %v5310
      %7605 = vmatprep.subr.bf16.mxu0 %v5295
      %7606 = vmatpush2.bf16.msra.mxu0 %v5294
      %7607 = vmatprep.subr.bf16.mxu0 %v5279
      %7608 = vmatpush2.bf16.msra.mxu0 %v5278
      %7609 = vmatprep.subr.bf16.mxu0 %v5263
      %7610 = vmatpush2.bf16.msra.mxu0 %v5262
      %7611 = vmatprep.subr.bf16.mxu0 %v5247
      %7612 = vmatpush2.bf16.msra.mxu0 %v5246
      %7613 = vmatprep.subr.bf16.mxu0 %v5231
      %7614 = vmatpush2.bf16.msra.mxu0 %v5230
      %7615 = vmatprep.mubr.bf16.mxu0 %v737
      %7616 = vmatmul.mubr.bf16.gmra.mxu0 %v736
      %v7617 = vpop.f32.mrf.mxu0
      %v7618 = vadd.f32 %v7577, %v7617
      %v7619 = vpop.f32.mrf.mxu0
      %v7620 = vadd.f32 %v7579, %v7619
      %v7621 = vpop.f32.mrf.mxu0
      %v7622 = vpop.f32.mrf.mxu0
      %7623 = vdwg.mxu0
      %7624 = vmatprep.subr.bf16.mxu0 %v5471
      %7625 = vmatpush1.bf16.msra.mxu0 %v5470
      %7626 = vmatprep.subr.bf16.mxu0 %v5455
      %7627 = vmatpush1.bf16.msra.mxu0 %v5454
      %7628 = vmatprep.subr.bf16.mxu0 %v5439
      %7629 = vmatpush1.bf16.msra.mxu0 %v5438
      %7630 = vmatprep.subr.bf16.mxu0 %v5423
      %7631 = vmatpush1.bf16.msra.mxu0 %v5422
      %7632 = vmatprep.subr.bf16.mxu0 %v5407
      %7633 = vmatpush1.bf16.msra.mxu0 %v5406
      %7634 = vmatprep.subr.bf16.mxu0 %v5391
      %7635 = vmatpush1.bf16.msra.mxu0 %v5390
      %7636 = vmatprep.subr.bf16.mxu0 %v5375
      %7637 = vmatpush1.bf16.msra.mxu0 %v5374
      %7638 = vmatprep.subr.bf16.mxu0 %v5359
      %7639 = vmatpush1.bf16.msra.mxu0 %v5358
      %7640 = vmatprep.subr.bf16.mxu0 %v5599
      %7641 = vmatpush2.bf16.msra.mxu0 %v5598
      %7642 = vmatprep.subr.bf16.mxu0 %v5583
      %7643 = vmatpush2.bf16.msra.mxu0 %v5582
      %7644 = vmatprep.subr.bf16.mxu0 %v5567
      %7645 = vmatpush2.bf16.msra.mxu0 %v5566
      %7646 = vmatprep.subr.bf16.mxu0 %v5551
      %7647 = vmatpush2.bf16.msra.mxu0 %v5550
      %7648 = vmatprep.subr.bf16.mxu0 %v5535
      %7649 = vmatpush2.bf16.msra.mxu0 %v5534
      %7650 = vmatprep.subr.bf16.mxu0 %v5519
      %7651 = vmatpush2.bf16.msra.mxu0 %v5518
      %7652 = vmatprep.subr.bf16.mxu0 %v5503
      %7653 = vmatpush2.bf16.msra.mxu0 %v5502
      %7654 = vmatprep.subr.bf16.mxu0 %v5487
      %7655 = vmatpush2.bf16.msra.mxu0 %v5486
      %7656 = vmatprep.mubr.bf16.mxu0 %v739
      %7657 = vmatmul.mubr.bf16.gmra.mxu0 %v738
      %v7658 = vpop.f32.mrf.mxu0
      %v7659 = vadd.f32 %v7618, %v7658
      %v7660 = vpop.f32.mrf.mxu0
      %v7661 = vadd.f32 %v7620, %v7660
      %v7662 = vpop.f32.mrf.mxu0
      %v7663 = vpop.f32.mrf.mxu0
      %7664 = vdwg.mxu0
      %7665 = vmatprep.subr.bf16.mxu0 %v5727
      %7666 = vmatpush1.bf16.msra.mxu0 %v5726
      %7667 = vmatprep.subr.bf16.mxu0 %v5711
      %7668 = vmatpush1.bf16.msra.mxu0 %v5710
      %7669 = vmatprep.subr.bf16.mxu0 %v5695
      %7670 = vmatpush1.bf16.msra.mxu0 %v5694
      %7671 = vmatprep.subr.bf16.mxu0 %v5679
      %7672 = vmatpush1.bf16.msra.mxu0 %v5678
      %7673 = vmatprep.subr.bf16.mxu0 %v5663
      %7674 = vmatpush1.bf16.msra.mxu0 %v5662
      %7675 = vmatprep.subr.bf16.mxu0 %v5647
      %7676 = vmatpush1.bf16.msra.mxu0 %v5646
      %7677 = vmatprep.subr.bf16.mxu0 %v5631
      %7678 = vmatpush1.bf16.msra.mxu0 %v5630
      %7679 = vmatprep.subr.bf16.mxu0 %v5615
      %7680 = vmatpush1.bf16.msra.mxu0 %v5614
      %7681 = vmatprep.subr.bf16.mxu0 %v5855
      %7682 = vmatpush2.bf16.msra.mxu0 %v5854
      %7683 = vmatprep.subr.bf16.mxu0 %v5839
      %7684 = vmatpush2.bf16.msra.mxu0 %v5838
      %7685 = vmatprep.subr.bf16.mxu0 %v5823
      %7686 = vmatpush2.bf16.msra.mxu0 %v5822
      %7687 = vmatprep.subr.bf16.mxu0 %v5807
      %7688 = vmatpush2.bf16.msra.mxu0 %v5806
      %7689 = vmatprep.subr.bf16.mxu0 %v5791
      %7690 = vmatpush2.bf16.msra.mxu0 %v5790
      %7691 = vmatprep.subr.bf16.mxu0 %v5775
      %7692 = vmatpush2.bf16.msra.mxu0 %v5774
      %7693 = vmatprep.subr.bf16.mxu0 %v5759
      %7694 = vmatpush2.bf16.msra.mxu0 %v5758
      %7695 = vmatprep.subr.bf16.mxu0 %v5743
      %7696 = vmatpush2.bf16.msra.mxu0 %v5742
      %7697 = vmatprep.mubr.bf16.mxu0 %v741
      %7698 = vmatmul.mubr.bf16.gmra.mxu0 %v740
      %v7699 = vpop.f32.mrf.mxu0
      %v7700 = vadd.f32 %v7659, %v7699
      %v7701 = vpop.f32.mrf.mxu0
      %v7702 = vadd.f32 %v7661, %v7701
      %v7703 = vpop.f32.mrf.mxu0
      %v7704 = vpop.f32.mrf.mxu0
      %7705 = vdwg.mxu0
      %7706 = vmatprep.subr.bf16.mxu0 %v4961
      %7707 = vmatpush1.bf16.msra.mxu0 %v4960
      %7708 = vmatprep.subr.bf16.mxu0 %v4945
      %7709 = vmatpush1.bf16.msra.mxu0 %v4944
      %7710 = vmatprep.subr.bf16.mxu0 %v4929
      %7711 = vmatpush1.bf16.msra.mxu0 %v4928
      %7712 = vmatprep.subr.bf16.mxu0 %v4913
      %7713 = vmatpush1.bf16.msra.mxu0 %v4912
      %7714 = vmatprep.subr.bf16.mxu0 %v4897
      %7715 = vmatpush1.bf16.msra.mxu0 %v4896
      %7716 = vmatprep.subr.bf16.mxu0 %v4881
      %7717 = vmatpush1.bf16.msra.mxu0 %v4880
      %7718 = vmatprep.subr.bf16.mxu0 %v4865
      %7719 = vmatpush1.bf16.msra.mxu0 %v4864
      %7720 = vmatprep.subr.bf16.mxu0 %v4849
      %7721 = vmatpush1.bf16.msra.mxu0 %v4848
      %7722 = vmatprep.subr.bf16.mxu0 %v5089
      %7723 = vmatpush2.bf16.msra.mxu0 %v5088
      %7724 = vmatprep.subr.bf16.mxu0 %v5073
      %7725 = vmatpush2.bf16.msra.mxu0 %v5072
      %7726 = vmatprep.subr.bf16.mxu0 %v5057
      %7727 = vmatpush2.bf16.msra.mxu0 %v5056
      %7728 = vmatprep.subr.bf16.mxu0 %v5041
      %7729 = vmatpush2.bf16.msra.mxu0 %v5040
      %7730 = vmatprep.subr.bf16.mxu0 %v5025
      %7731 = vmatpush2.bf16.msra.mxu0 %v5024
      %7732 = vmatprep.subr.bf16.mxu0 %v5009
      %7733 = vmatpush2.bf16.msra.mxu0 %v5008
      %7734 = vmatprep.subr.bf16.mxu0 %v4993
      %7735 = vmatpush2.bf16.msra.mxu0 %v4992
      %7736 = vmatprep.subr.bf16.mxu0 %v4977
      %7737 = vmatpush2.bf16.msra.mxu0 %v4976
      %7738 = vmatprep.mubr.bf16.mxu0 %v735
      %7739 = vmatmul.mubr.bf16.gmra.mxu0 %v734
      %v7740 = vpop.f32.mrf.mxu0
      %v7741 = vadd.f32 0.0, %v7740
      %v7742 = vpop.f32.mrf.mxu0
      %v7743 = vadd.f32 0.0, %v7742
      %v7744 = vpop.f32.mrf.mxu0
      %v7745 = vpop.f32.mrf.mxu0
      %7746 = vdwg.mxu0
      %7747 = vmatprep.subr.bf16.mxu0 %v5217
      %7748 = vmatpush1.bf16.msra.mxu0 %v5216
      %7749 = vmatprep.subr.bf16.mxu0 %v5201
      %7750 = vmatpush1.bf16.msra.mxu0 %v5200
      %7751 = vmatprep.subr.bf16.mxu0 %v5185
      %7752 = vmatpush1.bf16.msra.mxu0 %v5184
      %7753 = vmatprep.subr.bf16.mxu0 %v5169
      %7754 = vmatpush1.bf16.msra.mxu0 %v5168
      %7755 = vmatprep.subr.bf16.mxu0 %v5153
      %7756 = vmatpush1.bf16.msra.mxu0 %v5152
      %7757 = vmatprep.subr.bf16.mxu0 %v5137
      %7758 = vmatpush1.bf16.msra.mxu0 %v5136
      %7759 = vmatprep.subr.bf16.mxu0 %v5121
      %7760 = vmatpush1.bf16.msra.mxu0 %v5120
      %7761 = vmatprep.subr.bf16.mxu0 %v5105
      %7762 = vmatpush1.bf16.msra.mxu0 %v5104
      %7763 = vmatprep.subr.bf16.mxu0 %v5345
      %7764 = vmatpush2.bf16.msra.mxu0 %v5344
      %7765 = vmatprep.subr.bf16.mxu0 %v5329
      %7766 = vmatpush2.bf16.msra.mxu0 %v5328
      %7767 = vmatprep.subr.bf16.mxu0 %v5313
      %7768 = vmatpush2.bf16.msra.mxu0 %v5312
      %7769 = vmatprep.subr.bf16.mxu0 %v5297
      %7770 = vmatpush2.bf16.msra.mxu0 %v5296
      %7771 = vmatprep.subr.bf16.mxu0 %v5281
      %7772 = vmatpush2.bf16.msra.mxu0 %v5280
      %7773 = vmatprep.subr.bf16.mxu0 %v5265
      %7774 = vmatpush2.bf16.msra.mxu0 %v5264
      %7775 = vmatprep.subr.bf16.mxu0 %v5249
      %7776 = vmatpush2.bf16.msra.mxu0 %v5248
      %7777 = vmatprep.subr.bf16.mxu0 %v5233
      %7778 = vmatpush2.bf16.msra.mxu0 %v5232
      %7779 = vmatprep.mubr.bf16.mxu0 %v737
      %7780 = vmatmul.mubr.bf16.gmra.mxu0 %v736
      %v7781 = vpop.f32.mrf.mxu0
      %v7782 = vadd.f32 %v7741, %v7781
      %v7783 = vpop.f32.mrf.mxu0
      %v7784 = vadd.f32 %v7743, %v7783
      %v7785 = vpop.f32.mrf.mxu0
      %v7786 = vpop.f32.mrf.mxu0
      %7787 = vdwg.mxu0
      %7788 = vmatprep.subr.bf16.mxu0 %v5473
      %7789 = vmatpush1.bf16.msra.mxu0 %v5472
      %7790 = vmatprep.subr.bf16.mxu0 %v5457
      %7791 = vmatpush1.bf16.msra.mxu0 %v5456
      %7792 = vmatprep.subr.bf16.mxu0 %v5441
      %7793 = vmatpush1.bf16.msra.mxu0 %v5440
      %7794 = vmatprep.subr.bf16.mxu0 %v5425
      %7795 = vmatpush1.bf16.msra.mxu0 %v5424
      %7796 = vmatprep.subr.bf16.mxu0 %v5409
      %7797 = vmatpush1.bf16.msra.mxu0 %v5408
      %7798 = vmatprep.subr.bf16.mxu0 %v5393
      %7799 = vmatpush1.bf16.msra.mxu0 %v5392
      %7800 = vmatprep.subr.bf16.mxu0 %v5377
      %7801 = vmatpush1.bf16.msra.mxu0 %v5376
      %7802 = vmatprep.subr.bf16.mxu0 %v5361
      %7803 = vmatpush1.bf16.msra.mxu0 %v5360
      %7804 = vmatprep.subr.bf16.mxu0 %v5601
      %7805 = vmatpush2.bf16.msra.mxu0 %v5600
      %7806 = vmatprep.subr.bf16.mxu0 %v5585
      %7807 = vmatpush2.bf16.msra.mxu0 %v5584
      %7808 = vmatprep.subr.bf16.mxu0 %v5569
      %7809 = vmatpush2.bf16.msra.mxu0 %v5568
      %7810 = vmatprep.subr.bf16.mxu0 %v5553
      %7811 = vmatpush2.bf16.msra.mxu0 %v5552
      %7812 = vmatprep.subr.bf16.mxu0 %v5537
      %7813 = vmatpush2.bf16.msra.mxu0 %v5536
      %7814 = vmatprep.subr.bf16.mxu0 %v5521
      %7815 = vmatpush2.bf16.msra.mxu0 %v5520
      %7816 = vmatprep.subr.bf16.mxu0 %v5505
      %7817 = vmatpush2.bf16.msra.mxu0 %v5504
      %7818 = vmatprep.subr.bf16.mxu0 %v5489
      %7819 = vmatpush2.bf16.msra.mxu0 %v5488
      %7820 = vmatprep.mubr.bf16.mxu0 %v739
      %7821 = vmatmul.mubr.bf16.gmra.mxu0 %v738
      %v7822 = vpop.f32.mrf.mxu0
      %v7823 = vadd.f32 %v7782, %v7822
      %v7824 = vpop.f32.mrf.mxu0
      %v7825 = vadd.f32 %v7784, %v7824
      %v7826 = vpop.f32.mrf.mxu0
      %v7827 = vpop.f32.mrf.mxu0
      %7828 = vdwg.mxu0
      %7829 = vmatprep.subr.bf16.mxu0 %v5729
      %7830 = vmatpush1.bf16.msra.mxu0 %v5728
      %7831 = vmatprep.subr.bf16.mxu0 %v5713
      %7832 = vmatpush1.bf16.msra.mxu0 %v5712
      %7833 = vmatprep.subr.bf16.mxu0 %v5697
      %7834 = vmatpush1.bf16.msra.mxu0 %v5696
      %7835 = vmatprep.subr.bf16.mxu0 %v5681
      %7836 = vmatpush1.bf16.msra.mxu0 %v5680
      %7837 = vmatprep.subr.bf16.mxu0 %v5665
      %7838 = vmatpush1.bf16.msra.mxu0 %v5664
      %7839 = vmatprep.subr.bf16.mxu0 %v5649
      %7840 = vmatpush1.bf16.msra.mxu0 %v5648
      %7841 = vmatprep.subr.bf16.mxu0 %v5633
      %7842 = vmatpush1.bf16.msra.mxu0 %v5632
      %7843 = vmatprep.subr.bf16.mxu0 %v5617
      %7844 = vmatpush1.bf16.msra.mxu0 %v5616
      %7845 = vmatprep.subr.bf16.mxu0 %v5857
      %7846 = vmatpush2.bf16.msra.mxu0 %v5856
      %7847 = vmatprep.subr.bf16.mxu0 %v5841
      %7848 = vmatpush2.bf16.msra.mxu0 %v5840
      %7849 = vmatprep.subr.bf16.mxu0 %v5825
      %7850 = vmatpush2.bf16.msra.mxu0 %v5824
      %7851 = vmatprep.subr.bf16.mxu0 %v5809
      %7852 = vmatpush2.bf16.msra.mxu0 %v5808
      %7853 = vmatprep.subr.bf16.mxu0 %v5793
      %7854 = vmatpush2.bf16.msra.mxu0 %v5792
      %7855 = vmatprep.subr.bf16.mxu0 %v5777
      %7856 = vmatpush2.bf16.msra.mxu0 %v5776
      %7857 = vmatprep.subr.bf16.mxu0 %v5761
      %7858 = vmatpush2.bf16.msra.mxu0 %v5760
      %7859 = vmatprep.subr.bf16.mxu0 %v5745
      %7860 = vmatpush2.bf16.msra.mxu0 %v5744
      %7861 = vmatprep.mubr.bf16.mxu0 %v741
      %7862 = vmatmul.mubr.bf16.gmra.mxu0 %v740
      %v7863 = vpop.f32.mrf.mxu0
      %v7864 = vadd.f32 %v7823, %v7863
      %v7865 = vpop.f32.mrf.mxu0
      %v7866 = vadd.f32 %v7825, %v7865
      %v7867 = vpop.f32.mrf.mxu0
      %v7868 = vpop.f32.mrf.mxu0
      %7869 = vdwg.mxu0
      %7870 = vmatprep.subr.bf16.mxu0 %v4963
      %7871 = vmatpush1.bf16.msra.mxu0 %v4962
      %7872 = vmatprep.subr.bf16.mxu0 %v4947
      %7873 = vmatpush1.bf16.msra.mxu0 %v4946
      %7874 = vmatprep.subr.bf16.mxu0 %v4931
      %7875 = vmatpush1.bf16.msra.mxu0 %v4930
      %7876 = vmatprep.subr.bf16.mxu0 %v4915
      %7877 = vmatpush1.bf16.msra.mxu0 %v4914
      %7878 = vmatprep.subr.bf16.mxu0 %v4899
      %7879 = vmatpush1.bf16.msra.mxu0 %v4898
      %7880 = vmatprep.subr.bf16.mxu0 %v4883
      %7881 = vmatpush1.bf16.msra.mxu0 %v4882
      %7882 = vmatprep.subr.bf16.mxu0 %v4867
      %7883 = vmatpush1.bf16.msra.mxu0 %v4866
      %7884 = vmatprep.subr.bf16.mxu0 %v4851
      %7885 = vmatpush1.bf16.msra.mxu0 %v4850
      %7886 = vmatprep.subr.bf16.mxu0 %v5091
      %7887 = vmatpush2.bf16.msra.mxu0 %v5090
      %7888 = vmatprep.subr.bf16.mxu0 %v5075
      %7889 = vmatpush2.bf16.msra.mxu0 %v5074
      %7890 = vmatprep.subr.bf16.mxu0 %v5059
      %7891 = vmatpush2.bf16.msra.mxu0 %v5058
      %7892 = vmatprep.subr.bf16.mxu0 %v5043
      %7893 = vmatpush2.bf16.msra.mxu0 %v5042
      %7894 = vmatprep.subr.bf16.mxu0 %v5027
      %7895 = vmatpush2.bf16.msra.mxu0 %v5026
      %7896 = vmatprep.subr.bf16.mxu0 %v5011
      %7897 = vmatpush2.bf16.msra.mxu0 %v5010
      %7898 = vmatprep.subr.bf16.mxu0 %v4995
      %7899 = vmatpush2.bf16.msra.mxu0 %v4994
      %7900 = vmatprep.subr.bf16.mxu0 %v4979
      %7901 = vmatpush2.bf16.msra.mxu0 %v4978
      %7902 = vmatprep.mubr.bf16.mxu0 %v735
      %7903 = vmatmul.mubr.bf16.gmra.mxu0 %v734
      %v7904 = vpop.f32.mrf.mxu0
      %v7905 = vadd.f32 0.0, %v7904
      %v7906 = vpop.f32.mrf.mxu0
      %v7907 = vadd.f32 0.0, %v7906
      %v7908 = vpop.f32.mrf.mxu0
      %v7909 = vpop.f32.mrf.mxu0
      %7910 = vdwg.mxu0
      %7911 = vmatprep.subr.bf16.mxu0 %v5219
      %7912 = vmatpush1.bf16.msra.mxu0 %v5218
      %7913 = vmatprep.subr.bf16.mxu0 %v5203
      %7914 = vmatpush1.bf16.msra.mxu0 %v5202
      %7915 = vmatprep.subr.bf16.mxu0 %v5187
      %7916 = vmatpush1.bf16.msra.mxu0 %v5186
      %7917 = vmatprep.subr.bf16.mxu0 %v5171
      %7918 = vmatpush1.bf16.msra.mxu0 %v5170
      %7919 = vmatprep.subr.bf16.mxu0 %v5155
      %7920 = vmatpush1.bf16.msra.mxu0 %v5154
      %7921 = vmatprep.subr.bf16.mxu0 %v5139
      %7922 = vmatpush1.bf16.msra.mxu0 %v5138
      %7923 = vmatprep.subr.bf16.mxu0 %v5123
      %7924 = vmatpush1.bf16.msra.mxu0 %v5122
      %7925 = vmatprep.subr.bf16.mxu0 %v5107
      %7926 = vmatpush1.bf16.msra.mxu0 %v5106
      %7927 = vmatprep.subr.bf16.mxu0 %v5347
      %7928 = vmatpush2.bf16.msra.mxu0 %v5346
      %7929 = vmatprep.subr.bf16.mxu0 %v5331
      %7930 = vmatpush2.bf16.msra.mxu0 %v5330
      %7931 = vmatprep.subr.bf16.mxu0 %v5315
      %7932 = vmatpush2.bf16.msra.mxu0 %v5314
      %7933 = vmatprep.subr.bf16.mxu0 %v5299
      %7934 = vmatpush2.bf16.msra.mxu0 %v5298
      %7935 = vmatprep.subr.bf16.mxu0 %v5283
      %7936 = vmatpush2.bf16.msra.mxu0 %v5282
      %7937 = vmatprep.subr.bf16.mxu0 %v5267
      %7938 = vmatpush2.bf16.msra.mxu0 %v5266
      %7939 = vmatprep.subr.bf16.mxu0 %v5251
      %7940 = vmatpush2.bf16.msra.mxu0 %v5250
      %7941 = vmatprep.subr.bf16.mxu0 %v5235
      %7942 = vmatpush2.bf16.msra.mxu0 %v5234
      %7943 = vmatprep.mubr.bf16.mxu0 %v737
      %7944 = vmatmul.mubr.bf16.gmra.mxu0 %v736
      %v7945 = vpop.f32.mrf.mxu0
      %v7946 = vadd.f32 %v7905, %v7945
      %v7947 = vpop.f32.mrf.mxu0
      %v7948 = vadd.f32 %v7907, %v7947
      %v7949 = vpop.f32.mrf.mxu0
      %v7950 = vpop.f32.mrf.mxu0
      %7951 = vdwg.mxu0
      %7952 = vmatprep.subr.bf16.mxu0 %v5475
      %7953 = vmatpush1.bf16.msra.mxu0 %v5474
      %7954 = vmatprep.subr.bf16.mxu0 %v5459
      %7955 = vmatpush1.bf16.msra.mxu0 %v5458
      %7956 = vmatprep.subr.bf16.mxu0 %v5443
      %7957 = vmatpush1.bf16.msra.mxu0 %v5442
      %7958 = vmatprep.subr.bf16.mxu0 %v5427
      %7959 = vmatpush1.bf16.msra.mxu0 %v5426
      %7960 = vmatprep.subr.bf16.mxu0 %v5411
      %7961 = vmatpush1.bf16.msra.mxu0 %v5410
      %7962 = vmatprep.subr.bf16.mxu0 %v5395
      %7963 = vmatpush1.bf16.msra.mxu0 %v5394
      %7964 = vmatprep.subr.bf16.mxu0 %v5379
      %7965 = vmatpush1.bf16.msra.mxu0 %v5378
      %7966 = vmatprep.subr.bf16.mxu0 %v5363
      %7967 = vmatpush1.bf16.msra.mxu0 %v5362
      %7968 = vmatprep.subr.bf16.mxu0 %v5603
      %7969 = vmatpush2.bf16.msra.mxu0 %v5602
      %7970 = vmatprep.subr.bf16.mxu0 %v5587
      %7971 = vmatpush2.bf16.msra.mxu0 %v5586
      %7972 = vmatprep.subr.bf16.mxu0 %v5571
      %7973 = vmatpush2.bf16.msra.mxu0 %v5570
      %7974 = vmatprep.subr.bf16.mxu0 %v5555
      %7975 = vmatpush2.bf16.msra.mxu0 %v5554
      %7976 = vmatprep.subr.bf16.mxu0 %v5539
      %7977 = vmatpush2.bf16.msra.mxu0 %v5538
      %7978 = vmatprep.subr.bf16.mxu0 %v5523
      %7979 = vmatpush2.bf16.msra.mxu0 %v5522
      %7980 = vmatprep.subr.bf16.mxu0 %v5507
      %7981 = vmatpush2.bf16.msra.mxu0 %v5506
      %7982 = vmatprep.subr.bf16.mxu0 %v5491
      %7983 = vmatpush2.bf16.msra.mxu0 %v5490
      %7984 = vmatprep.mubr.bf16.mxu0 %v739
      %7985 = vmatmul.mubr.bf16.gmra.mxu0 %v738
      %v7986 = vpop.f32.mrf.mxu0
      %v7987 = vadd.f32 %v7946, %v7986
      %v7988 = vpop.f32.mrf.mxu0
      %v7989 = vadd.f32 %v7948, %v7988
      %v7990 = vpop.f32.mrf.mxu0
      %v7991 = vpop.f32.mrf.mxu0
      %7992 = vdwg.mxu0
      %7993 = vmatprep.subr.bf16.mxu0 %v5731
      %7994 = vmatpush1.bf16.msra.mxu0 %v5730
      %7995 = vmatprep.subr.bf16.mxu0 %v5715
      %7996 = vmatpush1.bf16.msra.mxu0 %v5714
      %7997 = vmatprep.subr.bf16.mxu0 %v5699
      %7998 = vmatpush1.bf16.msra.mxu0 %v5698
      %7999 = vmatprep.subr.bf16.mxu0 %v5683
      %8000 = vmatpush1.bf16.msra.mxu0 %v5682
      %8001 = vmatprep.subr.bf16.mxu0 %v5667
      %8002 = vmatpush1.bf16.msra.mxu0 %v5666
      %8003 = vmatprep.subr.bf16.mxu0 %v5651
      %8004 = vmatpush1.bf16.msra.mxu0 %v5650
      %8005 = vmatprep.subr.bf16.mxu0 %v5635
      %8006 = vmatpush1.bf16.msra.mxu0 %v5634
      %8007 = vmatprep.subr.bf16.mxu0 %v5619
      %8008 = vmatpush1.bf16.msra.mxu0 %v5618
      %8009 = vmatprep.subr.bf16.mxu0 %v5859
      %8010 = vmatpush2.bf16.msra.mxu0 %v5858
      %8011 = vmatprep.subr.bf16.mxu0 %v5843
      %8012 = vmatpush2.bf16.msra.mxu0 %v5842
      %8013 = vmatprep.subr.bf16.mxu0 %v5827
      %8014 = vmatpush2.bf16.msra.mxu0 %v5826
      %8015 = vmatprep.subr.bf16.mxu0 %v5811
      %8016 = vmatpush2.bf16.msra.mxu0 %v5810
      %8017 = vmatprep.subr.bf16.mxu0 %v5795
      %8018 = vmatpush2.bf16.msra.mxu0 %v5794
      %8019 = vmatprep.subr.bf16.mxu0 %v5779
      %8020 = vmatpush2.bf16.msra.mxu0 %v5778
      %8021 = vmatprep.subr.bf16.mxu0 %v5763
      %8022 = vmatpush2.bf16.msra.mxu0 %v5762
      %8023 = vmatprep.subr.bf16.mxu0 %v5747
      %8024 = vmatpush2.bf16.msra.mxu0 %v5746
      %8025 = vmatprep.mubr.bf16.mxu0 %v741
      %8026 = vmatmul.mubr.bf16.gmra.mxu0 %v740
      %v8027 = vpop.f32.mrf.mxu0
      %v8028 = vadd.f32 %v7987, %v8027
      %v8029 = vpop.f32.mrf.mxu0
      %v8030 = vadd.f32 %v7989, %v8029
      %v8031 = vpop.f32.mrf.mxu0
      %v8032 = vpop.f32.mrf.mxu0
      %8033 = vdwg.mxu0
      %8034 = vmatprep.subr.bf16.mxu0 %v4965
      %8035 = vmatpush1.bf16.msra.mxu0 %v4964
      %8036 = vmatprep.subr.bf16.mxu0 %v4949
      %8037 = vmatpush1.bf16.msra.mxu0 %v4948
      %8038 = vmatprep.subr.bf16.mxu0 %v4933
      %8039 = vmatpush1.bf16.msra.mxu0 %v4932
      %8040 = vmatprep.subr.bf16.mxu0 %v4917
      %8041 = vmatpush1.bf16.msra.mxu0 %v4916
      %8042 = vmatprep.subr.bf16.mxu0 %v4901
      %8043 = vmatpush1.bf16.msra.mxu0 %v4900
      %8044 = vmatprep.subr.bf16.mxu0 %v4885
      %8045 = vmatpush1.bf16.msra.mxu0 %v4884
      %8046 = vmatprep.subr.bf16.mxu0 %v4869
      %8047 = vmatpush1.bf16.msra.mxu0 %v4868
      %8048 = vmatprep.subr.bf16.mxu0 %v4853
      %8049 = vmatpush1.bf16.msra.mxu0 %v4852
      %8050 = vmatprep.subr.bf16.mxu0 %v5093
      %8051 = vmatpush2.bf16.msra.mxu0 %v5092
      %8052 = vmatprep.subr.bf16.mxu0 %v5077
      %8053 = vmatpush2.bf16.msra.mxu0 %v5076
      %8054 = vmatprep.subr.bf16.mxu0 %v5061
      %8055 = vmatpush2.bf16.msra.mxu0 %v5060
      %8056 = vmatprep.subr.bf16.mxu0 %v5045
      %8057 = vmatpush2.bf16.msra.mxu0 %v5044
      %8058 = vmatprep.subr.bf16.mxu0 %v5029
      %8059 = vmatpush2.bf16.msra.mxu0 %v5028
      %8060 = vmatprep.subr.bf16.mxu0 %v5013
      %8061 = vmatpush2.bf16.msra.mxu0 %v5012
      %8062 = vmatprep.subr.bf16.mxu0 %v4997
      %8063 = vmatpush2.bf16.msra.mxu0 %v4996
      %8064 = vmatprep.subr.bf16.mxu0 %v4981
      %8065 = vmatpush2.bf16.msra.mxu0 %v4980
      %8066 = vmatprep.mubr.bf16.mxu0 %v735
      %8067 = vmatmul.mubr.bf16.gmra.mxu0 %v734
      %v8068 = vpop.f32.mrf.mxu0
      %v8069 = vadd.f32 0.0, %v8068
      %v8070 = vpop.f32.mrf.mxu0
      %v8071 = vadd.f32 0.0, %v8070
      %v8072 = vpop.f32.mrf.mxu0
      %v8073 = vpop.f32.mrf.mxu0
      %8074 = vdwg.mxu0
      %8075 = vmatprep.subr.bf16.mxu0 %v5221
      %8076 = vmatpush1.bf16.msra.mxu0 %v5220
      %8077 = vmatprep.subr.bf16.mxu0 %v5205
      %8078 = vmatpush1.bf16.msra.mxu0 %v5204
      %8079 = vmatprep.subr.bf16.mxu0 %v5189
      %8080 = vmatpush1.bf16.msra.mxu0 %v5188
      %8081 = vmatprep.subr.bf16.mxu0 %v5173
      %8082 = vmatpush1.bf16.msra.mxu0 %v5172
      %8083 = vmatprep.subr.bf16.mxu0 %v5157
      %8084 = vmatpush1.bf16.msra.mxu0 %v5156
      %8085 = vmatprep.subr.bf16.mxu0 %v5141
      %8086 = vmatpush1.bf16.msra.mxu0 %v5140
      %8087 = vmatprep.subr.bf16.mxu0 %v5125
      %8088 = vmatpush1.bf16.msra.mxu0 %v5124
      %8089 = vmatprep.subr.bf16.mxu0 %v5109
      %8090 = vmatpush1.bf16.msra.mxu0 %v5108
      %8091 = vmatprep.subr.bf16.mxu0 %v5349
      %8092 = vmatpush2.bf16.msra.mxu0 %v5348
      %8093 = vmatprep.subr.bf16.mxu0 %v5333
      %8094 = vmatpush2.bf16.msra.mxu0 %v5332
      %8095 = vmatprep.subr.bf16.mxu0 %v5317
      %8096 = vmatpush2.bf16.msra.mxu0 %v5316
      %8097 = vmatprep.subr.bf16.mxu0 %v5301
      %8098 = vmatpush2.bf16.msra.mxu0 %v5300
      %8099 = vmatprep.subr.bf16.mxu0 %v5285
      %8100 = vmatpush2.bf16.msra.mxu0 %v5284
      %8101 = vmatprep.subr.bf16.mxu0 %v5269
      %8102 = vmatpush2.bf16.msra.mxu0 %v5268
      %8103 = vmatprep.subr.bf16.mxu0 %v5253
      %8104 = vmatpush2.bf16.msra.mxu0 %v5252
      %8105 = vmatprep.subr.bf16.mxu0 %v5237
      %8106 = vmatpush2.bf16.msra.mxu0 %v5236
      %8107 = vmatprep.mubr.bf16.mxu0 %v737
      %8108 = vmatmul.mubr.bf16.gmra.mxu0 %v736
      %v8109 = vpop.f32.mrf.mxu0
      %v8110 = vadd.f32 %v8069, %v8109
      %v8111 = vpop.f32.mrf.mxu0
      %v8112 = vadd.f32 %v8071, %v8111
      %v8113 = vpop.f32.mrf.mxu0
      %v8114 = vpop.f32.mrf.mxu0
      %8115 = vdwg.mxu0
      %8116 = vmatprep.subr.bf16.mxu0 %v5477
      %8117 = vmatpush1.bf16.msra.mxu0 %v5476
      %8118 = vmatprep.subr.bf16.mxu0 %v5461
      %8119 = vmatpush1.bf16.msra.mxu0 %v5460
      %8120 = vmatprep.subr.bf16.mxu0 %v5445
      %8121 = vmatpush1.bf16.msra.mxu0 %v5444
      %8122 = vmatprep.subr.bf16.mxu0 %v5429
      %8123 = vmatpush1.bf16.msra.mxu0 %v5428
      %8124 = vmatprep.subr.bf16.mxu0 %v5413
      %8125 = vmatpush1.bf16.msra.mxu0 %v5412
      %8126 = vmatprep.subr.bf16.mxu0 %v5397
      %8127 = vmatpush1.bf16.msra.mxu0 %v5396
      %8128 = vmatprep.subr.bf16.mxu0 %v5381
      %8129 = vmatpush1.bf16.msra.mxu0 %v5380
      %8130 = vmatprep.subr.bf16.mxu0 %v5365
      %8131 = vmatpush1.bf16.msra.mxu0 %v5364
      %8132 = vmatprep.subr.bf16.mxu0 %v5605
      %8133 = vmatpush2.bf16.msra.mxu0 %v5604
      %8134 = vmatprep.subr.bf16.mxu0 %v5589
      %8135 = vmatpush2.bf16.msra.mxu0 %v5588
      %8136 = vmatprep.subr.bf16.mxu0 %v5573
      %8137 = vmatpush2.bf16.msra.mxu0 %v5572
      %8138 = vmatprep.subr.bf16.mxu0 %v5557
      %8139 = vmatpush2.bf16.msra.mxu0 %v5556
      %8140 = vmatprep.subr.bf16.mxu0 %v5541
      %8141 = vmatpush2.bf16.msra.mxu0 %v5540
      %8142 = vmatprep.subr.bf16.mxu0 %v5525
      %8143 = vmatpush2.bf16.msra.mxu0 %v5524
      %8144 = vmatprep.subr.bf16.mxu0 %v5509
      %8145 = vmatpush2.bf16.msra.mxu0 %v5508
      %8146 = vmatprep.subr.bf16.mxu0 %v5493
      %8147 = vmatpush2.bf16.msra.mxu0 %v5492
      %8148 = vmatprep.mubr.bf16.mxu0 %v739
      %8149 = vmatmul.mubr.bf16.gmra.mxu0 %v738
      %v8150 = vpop.f32.mrf.mxu0
      %v8151 = vadd.f32 %v8110, %v8150
      %v8152 = vpop.f32.mrf.mxu0
      %v8153 = vadd.f32 %v8112, %v8152
      %v8154 = vpop.f32.mrf.mxu0
      %v8155 = vpop.f32.mrf.mxu0
      %8156 = vdwg.mxu0
      %8157 = vmatprep.subr.bf16.mxu0 %v5733
      %8158 = vmatpush1.bf16.msra.mxu0 %v5732
      %8159 = vmatprep.subr.bf16.mxu0 %v5717
      %8160 = vmatpush1.bf16.msra.mxu0 %v5716
      %8161 = vmatprep.subr.bf16.mxu0 %v5701
      %8162 = vmatpush1.bf16.msra.mxu0 %v5700
      %8163 = vmatprep.subr.bf16.mxu0 %v5685
      %8164 = vmatpush1.bf16.msra.mxu0 %v5684
      %8165 = vmatprep.subr.bf16.mxu0 %v5669
      %8166 = vmatpush1.bf16.msra.mxu0 %v5668
      %8167 = vmatprep.subr.bf16.mxu0 %v5653
      %8168 = vmatpush1.bf16.msra.mxu0 %v5652
      %8169 = vmatprep.subr.bf16.mxu0 %v5637
      %8170 = vmatpush1.bf16.msra.mxu0 %v5636
      %8171 = vmatprep.subr.bf16.mxu0 %v5621
      %8172 = vmatpush1.bf16.msra.mxu0 %v5620
      %8173 = vmatprep.subr.bf16.mxu0 %v5861
      %8174 = vmatpush2.bf16.msra.mxu0 %v5860
      %8175 = vmatprep.subr.bf16.mxu0 %v5845
      %8176 = vmatpush2.bf16.msra.mxu0 %v5844
      %8177 = vmatprep.subr.bf16.mxu0 %v5829
      %8178 = vmatpush2.bf16.msra.mxu0 %v5828
      %8179 = vmatprep.subr.bf16.mxu0 %v5813
      %8180 = vmatpush2.bf16.msra.mxu0 %v5812
      %8181 = vmatprep.subr.bf16.mxu0 %v5797
      %8182 = vmatpush2.bf16.msra.mxu0 %v5796
      %8183 = vmatprep.subr.bf16.mxu0 %v5781
      %8184 = vmatpush2.bf16.msra.mxu0 %v5780
      %8185 = vmatprep.subr.bf16.mxu0 %v5765
      %8186 = vmatpush2.bf16.msra.mxu0 %v5764
      %8187 = vmatprep.subr.bf16.mxu0 %v5749
      %8188 = vmatpush2.bf16.msra.mxu0 %v5748
      %8189 = vmatprep.mubr.bf16.mxu0 %v741
      %8190 = vmatmul.mubr.bf16.gmra.mxu0 %v740
      %v8191 = vpop.f32.mrf.mxu0
      %v8192 = vadd.f32 %v8151, %v8191
      %v8193 = vpop.f32.mrf.mxu0
      %v8194 = vadd.f32 %v8153, %v8193
      %v8195 = vpop.f32.mrf.mxu0
      %v8196 = vpop.f32.mrf.mxu0
      %8197 = vdwg.mxu0
      %v8198 = vadd.f32 %v718, %v7044
      %v8199 = vadd.f32 %v719, %v7046
      %v8200 = vadd.f32 %v720, %v7208
      %v8201 = vadd.f32 %v721, %v7210
      %v8202 = vadd.f32 %v722, %v7372
      %v8203 = vadd.f32 %v723, %v7374
      %v8204 = vadd.f32 %v724, %v7536
      %v8205 = vadd.f32 %v725, %v7538
      %v8206 = vadd.f32 %v726, %v7700
      %v8207 = vadd.f32 %v727, %v7702
      %v8208 = vadd.f32 %v728, %v7864
      %v8209 = vadd.f32 %v729, %v7866
      %v8210 = vadd.f32 %v730, %v8028
      %v8211 = vadd.f32 %v731, %v8030
      %v8212 = vadd.f32 %v732, %v8192
      %v8213 = vadd.f32 %v733, %v8194
      %8214 = vst [vmem:[#allocation2] sm:$0xff] %v8198
      %8215 = vst [vmem:[#allocation2 + $0x8] sm:$0xff] %v8199
      %8216 = vst [vmem:[#allocation2 + $0x10] sm:$0xff] %v8200
      %8217 = vst [vmem:[#allocation2 + $0x18] sm:$0xff] %v8201
      %8218 = vst [vmem:[#allocation2 + $0x20] sm:$0xff] %v8202
      %8219 = vst [vmem:[#allocation2 + $0x28] sm:$0xff] %v8203
      %8220 = vst [vmem:[#allocation2 + $0x30] sm:$0xff] %v8204
      %8221 = vst [vmem:[#allocation2 + $0x38] sm:$0xff] %v8205
      %8222 = vst [vmem:[#allocation2 + $0x40] sm:$0xff] %v8206
      %8223 = vst [vmem:[#allocation2 + $0x48] sm:$0xff] %v8207
      %8224 = vst [vmem:[#allocation2 + $0x50] sm:$0xff] %v8208
      %8225 = vst [vmem:[#allocation2 + $0x58] sm:$0xff] %v8209
      %8226 = vst [vmem:[#allocation2 + $0x60] sm:$0xff] %v8210
      %8227 = vst [vmem:[#allocation2 + $0x68] sm:$0xff] %v8211
      %8228 = vst [vmem:[#allocation2 + $0x70] sm:$0xff] %v8212
      %8229 = vst [vmem:[#allocation2 + $0x78] sm:$0xff] %v8213
      %p8230 = scmp.eq.s32.totalorder %s22, 1
      // Predicated region
      $region49: #{robot2d_calibration_nn.1} parent=43 // pred_check
        %p8231 = pneg %p8230
      $region50: #{robot2d_calibration_nn.1} parent=43 // pred_check_branch
        %8233 = sbr.rel (%p8231) target = $region52
      $region51: #{robot2d_calibration_nn.1} parent=43 // pred_region
        %v8234 = vld [vmem:[#allocation2] sm:$0xff]
        %v8235 = vld [vmem:[#allocation2 + $0x8] sm:$0xff]
        %v8236 = vld [vmem:[#allocation2 + $0x10] sm:$0xff]
        %v8237 = vld [vmem:[#allocation2 + $0x18] sm:$0xff]
        %v8238 = vld [vmem:[#allocation2 + $0x20] sm:$0xff]
        %v8239 = vld [vmem:[#allocation2 + $0x28] sm:$0xff]
        %v8240 = vld [vmem:[#allocation2 + $0x30] sm:$0xff]
        %v8241 = vld [vmem:[#allocation2 + $0x38] sm:$0xff]
        %v8242 = vld [vmem:[#allocation2 + $0x40] sm:$0xff]
        %v8243 = vld [vmem:[#allocation2 + $0x48] sm:$0xff]
        %v8244 = vld [vmem:[#allocation2 + $0x50] sm:$0xff]
        %v8245 = vld [vmem:[#allocation2 + $0x58] sm:$0xff]
        %v8246 = vld [vmem:[#allocation2 + $0x60] sm:$0xff]
        %v8247 = vld [vmem:[#allocation2 + $0x68] sm:$0xff]
        %v8248 = vld [vmem:[#allocation2 + $0x70] sm:$0xff]
        %v8249 = vld [vmem:[#allocation2 + $0x78] sm:$0xff]
        %v8250 = vld [vmem:[%s312] sm:$0xff]
        %v8251 = vld [vmem:[%s312 + $0x8] sm:$0xff]
        %v8254 = vlaneseq
        %v8255 = vshrl.u32 %v8254, 7
        %v8256 = vsub.s32 0, %v8255
        %v8257 = vrot.slane %v8250, %v8256
        %v8258 = vlaneseq
        %v8259 = vshrl.u32 %v8258, 7
        %v8260 = vsub.s32 1, %v8259
        %v8261 = vrot.slane %v8250, %v8260
        %v8262 = vlaneseq
        %v8263 = vshrl.u32 %v8262, 7
        %v8264 = vsub.s32 2, %v8263
        %v8265 = vrot.slane %v8250, %v8264
        %v8266 = vlaneseq
        %v8267 = vshrl.u32 %v8266, 7
        %v8268 = vsub.s32 3, %v8267
        %v8269 = vrot.slane %v8250, %v8268
        %v8270 = vlaneseq
        %v8271 = vshrl.u32 %v8270, 7
        %v8272 = vsub.s32 4, %v8271
        %v8273 = vrot.slane %v8250, %v8272
        %v8274 = vlaneseq
        %v8275 = vshrl.u32 %v8274, 7
        %v8276 = vsub.s32 5, %v8275
        %v8277 = vrot.slane %v8250, %v8276
        %v8278 = vlaneseq
        %v8279 = vshrl.u32 %v8278, 7
        %v8280 = vsub.s32 6, %v8279
        %v8281 = vrot.slane %v8250, %v8280
        %v8282 = vlaneseq
        %v8283 = vshrl.u32 %v8282, 7
        %v8284 = vsub.s32 7, %v8283
        %v8285 = vrot.slane %v8250, %v8284
        %v8286 = vlaneseq
        %v8287 = vshrl.u32 %v8286, 7
        %v8288 = vsub.s32 0, %v8287
        %v8289 = vrot.slane %v8251, %v8288
        %v8290 = vlaneseq
        %v8291 = vshrl.u32 %v8290, 7
        %v8292 = vsub.s32 1, %v8291
        %v8293 = vrot.slane %v8251, %v8292
        %v8294 = vlaneseq
        %v8295 = vshrl.u32 %v8294, 7
        %v8296 = vsub.s32 2, %v8295
        %v8297 = vrot.slane %v8251, %v8296
        %v8298 = vlaneseq
        %v8299 = vshrl.u32 %v8298, 7
        %v8300 = vsub.s32 3, %v8299
        %v8301 = vrot.slane %v8251, %v8300
        %v8302 = vlaneseq
        %v8303 = vshrl.u32 %v8302, 7
        %v8304 = vsub.s32 4, %v8303
        %v8305 = vrot.slane %v8251, %v8304
        %v8306 = vlaneseq
        %v8307 = vshrl.u32 %v8306, 7
        %v8308 = vsub.s32 5, %v8307
        %v8309 = vrot.slane %v8251, %v8308
        %v8310 = vlaneseq
        %v8311 = vshrl.u32 %v8310, 7
        %v8312 = vsub.s32 6, %v8311
        %v8313 = vrot.slane %v8251, %v8312
        %v8314 = vlaneseq
        %v8315 = vshrl.u32 %v8314, 7
        %v8316 = vsub.s32 7, %v8315
        %v8317 = vrot.slane %v8251, %v8316
        %v8334 = vadd.f32 %v8234, %v8257
        %v8335 = vadd.f32 %v8235, %v8261
        %v8336 = vadd.f32 %v8236, %v8265
        %v8337 = vadd.f32 %v8237, %v8269
        %v8338 = vadd.f32 %v8238, %v8273
        %v8339 = vadd.f32 %v8239, %v8277
        %v8340 = vadd.f32 %v8240, %v8281
        %v8341 = vadd.f32 %v8241, %v8285
        %v8342 = vadd.f32 %v8242, %v8289
        %v8343 = vadd.f32 %v8243, %v8293
        %v8344 = vadd.f32 %v8244, %v8297
        %v8345 = vadd.f32 %v8245, %v8301
        %v8346 = vadd.f32 %v8246, %v8305
        %v8347 = vadd.f32 %v8247, %v8309
        %v8348 = vadd.f32 %v8248, %v8313
        %v8349 = vadd.f32 %v8249, %v8317
        %v8350 = vtanh.pop %v8334
        %v8351 = vtanh.pop %v8335
        %v8352 = vtanh.pop %v8336
        %v8353 = vtanh.pop %v8337
        %v8354 = vtanh.pop %v8338
        %v8355 = vtanh.pop %v8339
        %v8356 = vtanh.pop %v8340
        %v8357 = vtanh.pop %v8341
        %v8358 = vtanh.pop %v8342
        %v8359 = vtanh.pop %v8343
        %v8360 = vtanh.pop %v8344
        %v8361 = vtanh.pop %v8345
        %v8362 = vtanh.pop %v8346
        %v8363 = vtanh.pop %v8347
        %v8364 = vtanh.pop %v8348
        %v8365 = vtanh.pop %v8349
        %v8366 = vld [vmem:[%s318] sm:$0xff]
        %v8367 = vld [vmem:[%s318 + $0x8] sm:$0xff]
        %v8368 = vld [vmem:[%s318 + $0x10] sm:$0xff]
        %v8369 = vld [vmem:[%s318 + $0x18] sm:$0xff]
        %v8370 = vld [vmem:[%s318 + $0x20] sm:$0xff]
        %v8371 = vld [vmem:[%s318 + $0x28] sm:$0xff]
        %v8372 = vld [vmem:[%s318 + $0x30] sm:$0xff]
        %v8373 = vld [vmem:[%s318 + $0x38] sm:$0xff]
        %v8374 = vld [vmem:[%s318 + $0x40] sm:$0xff]
        %v8375 = vld [vmem:[%s318 + $0x48] sm:$0xff]
        %v8376 = vld [vmem:[%s318 + $0x50] sm:$0xff]
        %v8377 = vld [vmem:[%s318 + $0x58] sm:$0xff]
        %v8378 = vld [vmem:[%s318 + $0x60] sm:$0xff]
        %v8379 = vld [vmem:[%s318 + $0x68] sm:$0xff]
        %v8380 = vld [vmem:[%s318 + $0x70] sm:$0xff]
        %v8381 = vld [vmem:[%s318 + $0x78] sm:$0xff]
        %v8382 = vld [vmem:[%s318 + $0x80] sm:$0xff]
        %v8383 = vld [vmem:[%s318 + $0x88] sm:$0xff]
        %v8384 = vld [vmem:[%s318 + $0x90] sm:$0xff]
        %v8385 = vld [vmem:[%s318 + $0x98] sm:$0xff]
        %v8386 = vld [vmem:[%s318 + $0xa0] sm:$0xff]
        %v8387 = vld [vmem:[%s318 + $0xa8] sm:$0xff]
        %v8388 = vld [vmem:[%s318 + $0xb0] sm:$0xff]
        %v8389 = vld [vmem:[%s318 + $0xb8] sm:$0xff]
        %v8390 = vld [vmem:[%s318 + $0xc0] sm:$0xff]
        %v8391 = vld [vmem:[%s318 + $0xc8] sm:$0xff]
        %v8392 = vld [vmem:[%s318 + $0xd0] sm:$0xff]
        %v8393 = vld [vmem:[%s318 + $0xd8] sm:$0xff]
        %v8394 = vld [vmem:[%s318 + $0xe0] sm:$0xff]
        %v8395 = vld [vmem:[%s318 + $0xe8] sm:$0xff]
        %v8396 = vld [vmem:[%s318 + $0xf0] sm:$0xff]
        %v8397 = vld [vmem:[%s318 + $0xf8] sm:$0xff]
        %v8398 = vld [vmem:[%s318 + $0x100] sm:$0xff]
        %v8399 = vld [vmem:[%s318 + $0x108] sm:$0xff]
        %v8400 = vld [vmem:[%s318 + $0x110] sm:$0xff]
        %v8401 = vld [vmem:[%s318 + $0x118] sm:$0xff]
        %v8402 = vld [vmem:[%s318 + $0x120] sm:$0xff]
        %v8403 = vld [vmem:[%s318 + $0x128] sm:$0xff]
        %v8404 = vld [vmem:[%s318 + $0x130] sm:$0xff]
        %v8405 = vld [vmem:[%s318 + $0x138] sm:$0xff]
        %v8406 = vld [vmem:[%s318 + $0x140] sm:$0xff]
        %v8407 = vld [vmem:[%s318 + $0x148] sm:$0xff]
        %v8408 = vld [vmem:[%s318 + $0x150] sm:$0xff]
        %v8409 = vld [vmem:[%s318 + $0x158] sm:$0xff]
        %v8410 = vld [vmem:[%s318 + $0x160] sm:$0xff]
        %v8411 = vld [vmem:[%s318 + $0x168] sm:$0xff]
        %v8412 = vld [vmem:[%s318 + $0x170] sm:$0xff]
        %v8413 = vld [vmem:[%s318 + $0x178] sm:$0xff]
        %v8414 = vld [vmem:[%s318 + $0x180] sm:$0xff]
        %v8415 = vld [vmem:[%s318 + $0x188] sm:$0xff]
        %v8416 = vld [vmem:[%s318 + $0x190] sm:$0xff]
        %v8417 = vld [vmem:[%s318 + $0x198] sm:$0xff]
        %v8418 = vld [vmem:[%s318 + $0x1a0] sm:$0xff]
        %v8419 = vld [vmem:[%s318 + $0x1a8] sm:$0xff]
        %v8420 = vld [vmem:[%s318 + $0x1b0] sm:$0xff]
        %v8421 = vld [vmem:[%s318 + $0x1b8] sm:$0xff]
        %v8422 = vld [vmem:[%s318 + $0x1c0] sm:$0xff]
        %v8423 = vld [vmem:[%s318 + $0x1c8] sm:$0xff]
        %v8424 = vld [vmem:[%s318 + $0x1d0] sm:$0xff]
        %v8425 = vld [vmem:[%s318 + $0x1d8] sm:$0xff]
        %v8426 = vld [vmem:[%s318 + $0x1e0] sm:$0xff]
        %v8427 = vld [vmem:[%s318 + $0x1e8] sm:$0xff]
        %v8428 = vld [vmem:[%s318 + $0x1f0] sm:$0xff]
        %v8429 = vld [vmem:[%s318 + $0x1f8] sm:$0xff]
        %v8430 = vld [vmem:[%s318 + $0x200] sm:$0xff]
        %v8431 = vld [vmem:[%s318 + $0x208] sm:$0xff]
        %v8432 = vld [vmem:[%s318 + $0x210] sm:$0xff]
        %v8433 = vld [vmem:[%s318 + $0x218] sm:$0xff]
        %v8434 = vld [vmem:[%s318 + $0x220] sm:$0xff]
        %v8435 = vld [vmem:[%s318 + $0x228] sm:$0xff]
        %v8436 = vld [vmem:[%s318 + $0x230] sm:$0xff]
        %v8437 = vld [vmem:[%s318 + $0x238] sm:$0xff]
        %v8438 = vld [vmem:[%s318 + $0x240] sm:$0xff]
        %v8439 = vld [vmem:[%s318 + $0x248] sm:$0xff]
        %v8440 = vld [vmem:[%s318 + $0x250] sm:$0xff]
        %v8441 = vld [vmem:[%s318 + $0x258] sm:$0xff]
        %v8442 = vld [vmem:[%s318 + $0x260] sm:$0xff]
        %v8443 = vld [vmem:[%s318 + $0x268] sm:$0xff]
        %v8444 = vld [vmem:[%s318 + $0x270] sm:$0xff]
        %v8445 = vld [vmem:[%s318 + $0x278] sm:$0xff]
        %v8446 = vld [vmem:[%s318 + $0x280] sm:$0xff]
        %v8447 = vld [vmem:[%s318 + $0x288] sm:$0xff]
        %v8448 = vld [vmem:[%s318 + $0x290] sm:$0xff]
        %v8449 = vld [vmem:[%s318 + $0x298] sm:$0xff]
        %v8450 = vld [vmem:[%s318 + $0x2a0] sm:$0xff]
        %v8451 = vld [vmem:[%s318 + $0x2a8] sm:$0xff]
        %v8452 = vld [vmem:[%s318 + $0x2b0] sm:$0xff]
        %v8453 = vld [vmem:[%s318 + $0x2b8] sm:$0xff]
        %v8454 = vld [vmem:[%s318 + $0x2c0] sm:$0xff]
        %v8455 = vld [vmem:[%s318 + $0x2c8] sm:$0xff]
        %v8456 = vld [vmem:[%s318 + $0x2d0] sm:$0xff]
        %v8457 = vld [vmem:[%s318 + $0x2d8] sm:$0xff]
        %v8458 = vld [vmem:[%s318 + $0x2e0] sm:$0xff]
        %v8459 = vld [vmem:[%s318 + $0x2e8] sm:$0xff]
        %v8460 = vld [vmem:[%s318 + $0x2f0] sm:$0xff]
        %v8461 = vld [vmem:[%s318 + $0x2f8] sm:$0xff]
        %v8462 = vld [vmem:[%s318 + $0x300] sm:$0xff]
        %v8463 = vld [vmem:[%s318 + $0x308] sm:$0xff]
        %v8464 = vld [vmem:[%s318 + $0x310] sm:$0xff]
        %v8465 = vld [vmem:[%s318 + $0x318] sm:$0xff]
        %v8466 = vld [vmem:[%s318 + $0x320] sm:$0xff]
        %v8467 = vld [vmem:[%s318 + $0x328] sm:$0xff]
        %v8468 = vld [vmem:[%s318 + $0x330] sm:$0xff]
        %v8469 = vld [vmem:[%s318 + $0x338] sm:$0xff]
        %v8470 = vld [vmem:[%s318 + $0x340] sm:$0xff]
        %v8471 = vld [vmem:[%s318 + $0x348] sm:$0xff]
        %v8472 = vld [vmem:[%s318 + $0x350] sm:$0xff]
        %v8473 = vld [vmem:[%s318 + $0x358] sm:$0xff]
        %v8474 = vld [vmem:[%s318 + $0x360] sm:$0xff]
        %v8475 = vld [vmem:[%s318 + $0x368] sm:$0xff]
        %v8476 = vld [vmem:[%s318 + $0x370] sm:$0xff]
        %v8477 = vld [vmem:[%s318 + $0x378] sm:$0xff]
        %v8478 = vld [vmem:[%s318 + $0x380] sm:$0xff]
        %v8479 = vld [vmem:[%s318 + $0x388] sm:$0xff]
        %v8480 = vld [vmem:[%s318 + $0x390] sm:$0xff]
        %v8481 = vld [vmem:[%s318 + $0x398] sm:$0xff]
        %v8482 = vld [vmem:[%s318 + $0x3a0] sm:$0xff]
        %v8483 = vld [vmem:[%s318 + $0x3a8] sm:$0xff]
        %v8484 = vld [vmem:[%s318 + $0x3b0] sm:$0xff]
        %v8485 = vld [vmem:[%s318 + $0x3b8] sm:$0xff]
        %v8486 = vld [vmem:[%s318 + $0x3c0] sm:$0xff]
        %v8487 = vld [vmem:[%s318 + $0x3c8] sm:$0xff]
        %v8488 = vld [vmem:[%s318 + $0x3d0] sm:$0xff]
        %v8489 = vld [vmem:[%s318 + $0x3d8] sm:$0xff]
        %v8490 = vld [vmem:[%s318 + $0x3e0] sm:$0xff]
        %v8491 = vld [vmem:[%s318 + $0x3e8] sm:$0xff]
        %v8492 = vld [vmem:[%s318 + $0x3f0] sm:$0xff]
        %v8493 = vld [vmem:[%s318 + $0x3f8] sm:$0xff]
        %v8494 = vld [vmem:[%s318 + $0x400] sm:$0xff]
        %v8495 = vld [vmem:[%s318 + $0x408] sm:$0xff]
        %v8496 = vld [vmem:[%s318 + $0x410] sm:$0xff]
        %v8497 = vld [vmem:[%s318 + $0x418] sm:$0xff]
        %v8498 = vld [vmem:[%s318 + $0x420] sm:$0xff]
        %v8499 = vld [vmem:[%s318 + $0x428] sm:$0xff]
        %v8500 = vld [vmem:[%s318 + $0x430] sm:$0xff]
        %v8501 = vld [vmem:[%s318 + $0x438] sm:$0xff]
        %v8502 = vld [vmem:[%s318 + $0x440] sm:$0xff]
        %v8503 = vld [vmem:[%s318 + $0x448] sm:$0xff]
        %v8504 = vld [vmem:[%s318 + $0x450] sm:$0xff]
        %v8505 = vld [vmem:[%s318 + $0x458] sm:$0xff]
        %v8506 = vld [vmem:[%s318 + $0x460] sm:$0xff]
        %v8507 = vld [vmem:[%s318 + $0x468] sm:$0xff]
        %v8508 = vld [vmem:[%s318 + $0x470] sm:$0xff]
        %v8509 = vld [vmem:[%s318 + $0x478] sm:$0xff]
        %v8510 = vld [vmem:[%s318 + $0x480] sm:$0xff]
        %v8511 = vld [vmem:[%s318 + $0x488] sm:$0xff]
        %v8512 = vld [vmem:[%s318 + $0x490] sm:$0xff]
        %v8513 = vld [vmem:[%s318 + $0x498] sm:$0xff]
        %v8514 = vld [vmem:[%s318 + $0x4a0] sm:$0xff]
        %v8515 = vld [vmem:[%s318 + $0x4a8] sm:$0xff]
        %v8516 = vld [vmem:[%s318 + $0x4b0] sm:$0xff]
        %v8517 = vld [vmem:[%s318 + $0x4b8] sm:$0xff]
        %v8518 = vld [vmem:[%s318 + $0x4c0] sm:$0xff]
        %v8519 = vld [vmem:[%s318 + $0x4c8] sm:$0xff]
        %v8520 = vld [vmem:[%s318 + $0x4d0] sm:$0xff]
        %v8521 = vld [vmem:[%s318 + $0x4d8] sm:$0xff]
        %v8522 = vld [vmem:[%s318 + $0x4e0] sm:$0xff]
        %v8523 = vld [vmem:[%s318 + $0x4e8] sm:$0xff]
        %v8524 = vld [vmem:[%s318 + $0x4f0] sm:$0xff]
        %v8525 = vld [vmem:[%s318 + $0x4f8] sm:$0xff]
        %v8526 = vld [vmem:[%s318 + $0x500] sm:$0xff]
        %v8527 = vld [vmem:[%s318 + $0x508] sm:$0xff]
        %v8528 = vld [vmem:[%s318 + $0x510] sm:$0xff]
        %v8529 = vld [vmem:[%s318 + $0x518] sm:$0xff]
        %v8530 = vld [vmem:[%s318 + $0x520] sm:$0xff]
        %v8531 = vld [vmem:[%s318 + $0x528] sm:$0xff]
        %v8532 = vld [vmem:[%s318 + $0x530] sm:$0xff]
        %v8533 = vld [vmem:[%s318 + $0x538] sm:$0xff]
        %v8534 = vld [vmem:[%s318 + $0x540] sm:$0xff]
        %v8535 = vld [vmem:[%s318 + $0x548] sm:$0xff]
        %v8536 = vld [vmem:[%s318 + $0x550] sm:$0xff]
        %v8537 = vld [vmem:[%s318 + $0x558] sm:$0xff]
        %v8538 = vld [vmem:[%s318 + $0x560] sm:$0xff]
        %v8539 = vld [vmem:[%s318 + $0x568] sm:$0xff]
        %v8540 = vld [vmem:[%s318 + $0x570] sm:$0xff]
        %v8541 = vld [vmem:[%s318 + $0x578] sm:$0xff]
        %v8542 = vld [vmem:[%s318 + $0x580] sm:$0xff]
        %v8543 = vld [vmem:[%s318 + $0x588] sm:$0xff]
        %v8544 = vld [vmem:[%s318 + $0x590] sm:$0xff]
        %v8545 = vld [vmem:[%s318 + $0x598] sm:$0xff]
        %v8546 = vld [vmem:[%s318 + $0x5a0] sm:$0xff]
        %v8547 = vld [vmem:[%s318 + $0x5a8] sm:$0xff]
        %v8548 = vld [vmem:[%s318 + $0x5b0] sm:$0xff]
        %v8549 = vld [vmem:[%s318 + $0x5b8] sm:$0xff]
        %v8550 = vld [vmem:[%s318 + $0x5c0] sm:$0xff]
        %v8551 = vld [vmem:[%s318 + $0x5c8] sm:$0xff]
        %v8552 = vld [vmem:[%s318 + $0x5d0] sm:$0xff]
        %v8553 = vld [vmem:[%s318 + $0x5d8] sm:$0xff]
        %v8554 = vld [vmem:[%s318 + $0x5e0] sm:$0xff]
        %v8555 = vld [vmem:[%s318 + $0x5e8] sm:$0xff]
        %v8556 = vld [vmem:[%s318 + $0x5f0] sm:$0xff]
        %v8557 = vld [vmem:[%s318 + $0x5f8] sm:$0xff]
        %v8558 = vld [vmem:[%s318 + $0x600] sm:$0xff]
        %v8559 = vld [vmem:[%s318 + $0x608] sm:$0xff]
        %v8560 = vld [vmem:[%s318 + $0x610] sm:$0xff]
        %v8561 = vld [vmem:[%s318 + $0x618] sm:$0xff]
        %v8562 = vld [vmem:[%s318 + $0x620] sm:$0xff]
        %v8563 = vld [vmem:[%s318 + $0x628] sm:$0xff]
        %v8564 = vld [vmem:[%s318 + $0x630] sm:$0xff]
        %v8565 = vld [vmem:[%s318 + $0x638] sm:$0xff]
        %v8566 = vld [vmem:[%s318 + $0x640] sm:$0xff]
        %v8567 = vld [vmem:[%s318 + $0x648] sm:$0xff]
        %v8568 = vld [vmem:[%s318 + $0x650] sm:$0xff]
        %v8569 = vld [vmem:[%s318 + $0x658] sm:$0xff]
        %v8570 = vld [vmem:[%s318 + $0x660] sm:$0xff]
        %v8571 = vld [vmem:[%s318 + $0x668] sm:$0xff]
        %v8572 = vld [vmem:[%s318 + $0x670] sm:$0xff]
        %v8573 = vld [vmem:[%s318 + $0x678] sm:$0xff]
        %v8574 = vld [vmem:[%s318 + $0x680] sm:$0xff]
        %v8575 = vld [vmem:[%s318 + $0x688] sm:$0xff]
        %v8576 = vld [vmem:[%s318 + $0x690] sm:$0xff]
        %v8577 = vld [vmem:[%s318 + $0x698] sm:$0xff]
        %v8578 = vld [vmem:[%s318 + $0x6a0] sm:$0xff]
        %v8579 = vld [vmem:[%s318 + $0x6a8] sm:$0xff]
        %v8580 = vld [vmem:[%s318 + $0x6b0] sm:$0xff]
        %v8581 = vld [vmem:[%s318 + $0x6b8] sm:$0xff]
        %v8582 = vld [vmem:[%s318 + $0x6c0] sm:$0xff]
        %v8583 = vld [vmem:[%s318 + $0x6c8] sm:$0xff]
        %v8584 = vld [vmem:[%s318 + $0x6d0] sm:$0xff]
        %v8585 = vld [vmem:[%s318 + $0x6d8] sm:$0xff]
        %v8586 = vld [vmem:[%s318 + $0x6e0] sm:$0xff]
        %v8587 = vld [vmem:[%s318 + $0x6e8] sm:$0xff]
        %v8588 = vld [vmem:[%s318 + $0x6f0] sm:$0xff]
        %v8589 = vld [vmem:[%s318 + $0x6f8] sm:$0xff]
        %v8590 = vld [vmem:[%s318 + $0x700] sm:$0xff]
        %v8591 = vld [vmem:[%s318 + $0x708] sm:$0xff]
        %v8592 = vld [vmem:[%s318 + $0x710] sm:$0xff]
        %v8593 = vld [vmem:[%s318 + $0x718] sm:$0xff]
        %v8594 = vld [vmem:[%s318 + $0x720] sm:$0xff]
        %v8595 = vld [vmem:[%s318 + $0x728] sm:$0xff]
        %v8596 = vld [vmem:[%s318 + $0x730] sm:$0xff]
        %v8597 = vld [vmem:[%s318 + $0x738] sm:$0xff]
        %v8598 = vld [vmem:[%s318 + $0x740] sm:$0xff]
        %v8599 = vld [vmem:[%s318 + $0x748] sm:$0xff]
        %v8600 = vld [vmem:[%s318 + $0x750] sm:$0xff]
        %v8601 = vld [vmem:[%s318 + $0x758] sm:$0xff]
        %v8602 = vld [vmem:[%s318 + $0x760] sm:$0xff]
        %v8603 = vld [vmem:[%s318 + $0x768] sm:$0xff]
        %v8604 = vld [vmem:[%s318 + $0x770] sm:$0xff]
        %v8605 = vld [vmem:[%s318 + $0x778] sm:$0xff]
        %v8606 = vld [vmem:[%s318 + $0x780] sm:$0xff]
        %v8607 = vld [vmem:[%s318 + $0x788] sm:$0xff]
        %v8608 = vld [vmem:[%s318 + $0x790] sm:$0xff]
        %v8609 = vld [vmem:[%s318 + $0x798] sm:$0xff]
        %v8610 = vld [vmem:[%s318 + $0x7a0] sm:$0xff]
        %v8611 = vld [vmem:[%s318 + $0x7a8] sm:$0xff]
        %v8612 = vld [vmem:[%s318 + $0x7b0] sm:$0xff]
        %v8613 = vld [vmem:[%s318 + $0x7b8] sm:$0xff]
        %v8614 = vld [vmem:[%s318 + $0x7c0] sm:$0xff]
        %v8615 = vld [vmem:[%s318 + $0x7c8] sm:$0xff]
        %v8616 = vld [vmem:[%s318 + $0x7d0] sm:$0xff]
        %v8617 = vld [vmem:[%s318 + $0x7d8] sm:$0xff]
        %v8618 = vld [vmem:[%s318 + $0x7e0] sm:$0xff]
        %v8619 = vld [vmem:[%s318 + $0x7e8] sm:$0xff]
        %v8620 = vld [vmem:[%s318 + $0x7f0] sm:$0xff]
        %v8621 = vld [vmem:[%s318 + $0x7f8] sm:$0xff]
        %8622 = vmatprep.subr.mxu0 0.0
        %8623 = vmatpush1.msra.mxu0 %v8381
        %8624 = vmatprep.subr.mxu0 0.0
        %8625 = vmatpush1.msra.mxu0 %v8380
        %8626 = vmatprep.subr.mxu0 0.0
        %8627 = vmatpush1.msra.mxu0 %v8379
        %8628 = vmatprep.subr.mxu0 0.0
        %8629 = vmatpush1.msra.mxu0 %v8378
        %8630 = vmatprep.subr.mxu0 0.0
        %8631 = vmatpush1.msra.mxu0 %v8377
        %8632 = vmatprep.subr.mxu0 0.0
        %8633 = vmatpush1.msra.mxu0 %v8376
        %8634 = vmatprep.subr.mxu0 0.0
        %8635 = vmatpush1.msra.mxu0 %v8375
        %8636 = vmatprep.subr.mxu0 0.0
        %8637 = vmatpush1.msra.mxu0 %v8374
        %8638 = vmatprep.subr.mxu0 0.0
        %8639 = vmatpush1.msra.mxu0 %v8373
        %8640 = vmatprep.subr.mxu0 0.0
        %8641 = vmatpush1.msra.mxu0 %v8372
        %8642 = vmatprep.subr.mxu0 0.0
        %8643 = vmatpush1.msra.mxu0 %v8371
        %8644 = vmatprep.subr.mxu0 0.0
        %8645 = vmatpush1.msra.mxu0 %v8370
        %8646 = vmatprep.subr.mxu0 0.0
        %8647 = vmatpush1.msra.mxu0 %v8369
        %8648 = vmatprep.subr.mxu0 0.0
        %8649 = vmatpush1.msra.mxu0 %v8368
        %8650 = vmatprep.subr.mxu0 0.0
        %8651 = vmatpush1.msra.mxu0 %v8367
        %8652 = vmatprep.subr.mxu0 0.0
        %8653 = vmatpush1.msra.mxu0 %v8366
        %8654 = vmatprep.subr.mxu0 0.0
        %8655 = vmatpush2.msra.mxu0 %v8397
        %8656 = vmatprep.subr.mxu0 0.0
        %8657 = vmatpush2.msra.mxu0 %v8396
        %8658 = vmatprep.subr.mxu0 0.0
        %8659 = vmatpush2.msra.mxu0 %v8395
        %8660 = vmatprep.subr.mxu0 0.0
        %8661 = vmatpush2.msra.mxu0 %v8394
        %8662 = vmatprep.subr.mxu0 0.0
        %8663 = vmatpush2.msra.mxu0 %v8393
        %8664 = vmatprep.subr.mxu0 0.0
        %8665 = vmatpush2.msra.mxu0 %v8392
        %8666 = vmatprep.subr.mxu0 0.0
        %8667 = vmatpush2.msra.mxu0 %v8391
        %8668 = vmatprep.subr.mxu0 0.0
        %8669 = vmatpush2.msra.mxu0 %v8390
        %8670 = vmatprep.subr.mxu0 0.0
        %8671 = vmatpush2.msra.mxu0 %v8389
        %8672 = vmatprep.subr.mxu0 0.0
        %8673 = vmatpush2.msra.mxu0 %v8388
        %8674 = vmatprep.subr.mxu0 0.0
        %8675 = vmatpush2.msra.mxu0 %v8387
        %8676 = vmatprep.subr.mxu0 0.0
        %8677 = vmatpush2.msra.mxu0 %v8386
        %8678 = vmatprep.subr.mxu0 0.0
        %8679 = vmatpush2.msra.mxu0 %v8385
        %8680 = vmatprep.subr.mxu0 0.0
        %8681 = vmatpush2.msra.mxu0 %v8384
        %8682 = vmatprep.subr.mxu0 0.0
        %8683 = vmatpush2.msra.mxu0 %v8383
        %8684 = vmatprep.subr.mxu0 0.0
        %8685 = vmatpush2.msra.mxu0 %v8382
        %8686 = vmatprep.mubr.f32.mxu0 %v8351
        %8687 = vmatmul.mubr.f32.gmra.mxu0 %v8350
        %v8688 = vpop.f32.mrf.mxu0
        %v8689 = vadd.f32 0.0, %v8688
        %v8690 = vpop.f32.mrf.mxu0
        %8691 = vdwg.mxu0
        %8692 = vmatprep.subr.mxu0 0.0
        %8693 = vmatpush1.msra.mxu0 %v8413
        %8694 = vmatprep.subr.mxu0 0.0
        %8695 = vmatpush1.msra.mxu0 %v8412
        %8696 = vmatprep.subr.mxu0 0.0
        %8697 = vmatpush1.msra.mxu0 %v8411
        %8698 = vmatprep.subr.mxu0 0.0
        %8699 = vmatpush1.msra.mxu0 %v8410
        %8700 = vmatprep.subr.mxu0 0.0
        %8701 = vmatpush1.msra.mxu0 %v8409
        %8702 = vmatprep.subr.mxu0 0.0
        %8703 = vmatpush1.msra.mxu0 %v8408
        %8704 = vmatprep.subr.mxu0 0.0
        %8705 = vmatpush1.msra.mxu0 %v8407
        %8706 = vmatprep.subr.mxu0 0.0
        %8707 = vmatpush1.msra.mxu0 %v8406
        %8708 = vmatprep.subr.mxu0 0.0
        %8709 = vmatpush1.msra.mxu0 %v8405
        %8710 = vmatprep.subr.mxu0 0.0
        %8711 = vmatpush1.msra.mxu0 %v8404
        %8712 = vmatprep.subr.mxu0 0.0
        %8713 = vmatpush1.msra.mxu0 %v8403
        %8714 = vmatprep.subr.mxu0 0.0
        %8715 = vmatpush1.msra.mxu0 %v8402
        %8716 = vmatprep.subr.mxu0 0.0
        %8717 = vmatpush1.msra.mxu0 %v8401
        %8718 = vmatprep.subr.mxu0 0.0
        %8719 = vmatpush1.msra.mxu0 %v8400
        %8720 = vmatprep.subr.mxu0 0.0
        %8721 = vmatpush1.msra.mxu0 %v8399
        %8722 = vmatprep.subr.mxu0 0.0
        %8723 = vmatpush1.msra.mxu0 %v8398
        %8724 = vmatprep.subr.mxu0 0.0
        %8725 = vmatpush2.msra.mxu0 %v8429
        %8726 = vmatprep.subr.mxu0 0.0
        %8727 = vmatpush2.msra.mxu0 %v8428
        %8728 = vmatprep.subr.mxu0 0.0
        %8729 = vmatpush2.msra.mxu0 %v8427
        %8730 = vmatprep.subr.mxu0 0.0
        %8731 = vmatpush2.msra.mxu0 %v8426
        %8732 = vmatprep.subr.mxu0 0.0
        %8733 = vmatpush2.msra.mxu0 %v8425
        %8734 = vmatprep.subr.mxu0 0.0
        %8735 = vmatpush2.msra.mxu0 %v8424
        %8736 = vmatprep.subr.mxu0 0.0
        %8737 = vmatpush2.msra.mxu0 %v8423
        %8738 = vmatprep.subr.mxu0 0.0
        %8739 = vmatpush2.msra.mxu0 %v8422
        %8740 = vmatprep.subr.mxu0 0.0
        %8741 = vmatpush2.msra.mxu0 %v8421
        %8742 = vmatprep.subr.mxu0 0.0
        %8743 = vmatpush2.msra.mxu0 %v8420
        %8744 = vmatprep.subr.mxu0 0.0
        %8745 = vmatpush2.msra.mxu0 %v8419
        %8746 = vmatprep.subr.mxu0 0.0
        %8747 = vmatpush2.msra.mxu0 %v8418
        %8748 = vmatprep.subr.mxu0 0.0
        %8749 = vmatpush2.msra.mxu0 %v8417
        %8750 = vmatprep.subr.mxu0 0.0
        %8751 = vmatpush2.msra.mxu0 %v8416
        %8752 = vmatprep.subr.mxu0 0.0
        %8753 = vmatpush2.msra.mxu0 %v8415
        %8754 = vmatprep.subr.mxu0 0.0
        %8755 = vmatpush2.msra.mxu0 %v8414
        %8756 = vmatprep.mubr.f32.mxu0 %v8353
        %8757 = vmatmul.mubr.f32.gmra.mxu0 %v8352
        %v8758 = vpop.f32.mrf.mxu0
        %v8759 = vadd.f32 %v8689, %v8758
        %v8760 = vpop.f32.mrf.mxu0
        %8761 = vdwg.mxu0
        %8762 = vmatprep.subr.mxu0 0.0
        %8763 = vmatpush1.msra.mxu0 %v8445
        %8764 = vmatprep.subr.mxu0 0.0
        %8765 = vmatpush1.msra.mxu0 %v8444
        %8766 = vmatprep.subr.mxu0 0.0
        %8767 = vmatpush1.msra.mxu0 %v8443
        %8768 = vmatprep.subr.mxu0 0.0
        %8769 = vmatpush1.msra.mxu0 %v8442
        %8770 = vmatprep.subr.mxu0 0.0
        %8771 = vmatpush1.msra.mxu0 %v8441
        %8772 = vmatprep.subr.mxu0 0.0
        %8773 = vmatpush1.msra.mxu0 %v8440
        %8774 = vmatprep.subr.mxu0 0.0
        %8775 = vmatpush1.msra.mxu0 %v8439
        %8776 = vmatprep.subr.mxu0 0.0
        %8777 = vmatpush1.msra.mxu0 %v8438
        %8778 = vmatprep.subr.mxu0 0.0
        %8779 = vmatpush1.msra.mxu0 %v8437
        %8780 = vmatprep.subr.mxu0 0.0
        %8781 = vmatpush1.msra.mxu0 %v8436
        %8782 = vmatprep.subr.mxu0 0.0
        %8783 = vmatpush1.msra.mxu0 %v8435
        %8784 = vmatprep.subr.mxu0 0.0
        %8785 = vmatpush1.msra.mxu0 %v8434
        %8786 = vmatprep.subr.mxu0 0.0
        %8787 = vmatpush1.msra.mxu0 %v8433
        %8788 = vmatprep.subr.mxu0 0.0
        %8789 = vmatpush1.msra.mxu0 %v8432
        %8790 = vmatprep.subr.mxu0 0.0
        %8791 = vmatpush1.msra.mxu0 %v8431
        %8792 = vmatprep.subr.mxu0 0.0
        %8793 = vmatpush1.msra.mxu0 %v8430
        %8794 = vmatprep.subr.mxu0 0.0
        %8795 = vmatpush2.msra.mxu0 %v8461
        %8796 = vmatprep.subr.mxu0 0.0
        %8797 = vmatpush2.msra.mxu0 %v8460
        %8798 = vmatprep.subr.mxu0 0.0
        %8799 = vmatpush2.msra.mxu0 %v8459
        %8800 = vmatprep.subr.mxu0 0.0
        %8801 = vmatpush2.msra.mxu0 %v8458
        %8802 = vmatprep.subr.mxu0 0.0
        %8803 = vmatpush2.msra.mxu0 %v8457
        %8804 = vmatprep.subr.mxu0 0.0
        %8805 = vmatpush2.msra.mxu0 %v8456
        %8806 = vmatprep.subr.mxu0 0.0
        %8807 = vmatpush2.msra.mxu0 %v8455
        %8808 = vmatprep.subr.mxu0 0.0
        %8809 = vmatpush2.msra.mxu0 %v8454
        %8810 = vmatprep.subr.mxu0 0.0
        %8811 = vmatpush2.msra.mxu0 %v8453
        %8812 = vmatprep.subr.mxu0 0.0
        %8813 = vmatpush2.msra.mxu0 %v8452
        %8814 = vmatprep.subr.mxu0 0.0
        %8815 = vmatpush2.msra.mxu0 %v8451
        %8816 = vmatprep.subr.mxu0 0.0
        %8817 = vmatpush2.msra.mxu0 %v8450
        %8818 = vmatprep.subr.mxu0 0.0
        %8819 = vmatpush2.msra.mxu0 %v8449
        %8820 = vmatprep.subr.mxu0 0.0
        %8821 = vmatpush2.msra.mxu0 %v8448
        %8822 = vmatprep.subr.mxu0 0.0
        %8823 = vmatpush2.msra.mxu0 %v8447
        %8824 = vmatprep.subr.mxu0 0.0
        %8825 = vmatpush2.msra.mxu0 %v8446
        %8826 = vmatprep.mubr.f32.mxu0 %v8355
        %8827 = vmatmul.mubr.f32.gmra.mxu0 %v8354
        %v8828 = vpop.f32.mrf.mxu0
        %v8829 = vadd.f32 %v8759, %v8828
        %v8830 = vpop.f32.mrf.mxu0
        %8831 = vdwg.mxu0
        %8832 = vmatprep.subr.mxu0 0.0
        %8833 = vmatpush1.msra.mxu0 %v8477
        %8834 = vmatprep.subr.mxu0 0.0
        %8835 = vmatpush1.msra.mxu0 %v8476
        %8836 = vmatprep.subr.mxu0 0.0
        %8837 = vmatpush1.msra.mxu0 %v8475
        %8838 = vmatprep.subr.mxu0 0.0
        %8839 = vmatpush1.msra.mxu0 %v8474
        %8840 = vmatprep.subr.mxu0 0.0
        %8841 = vmatpush1.msra.mxu0 %v8473
        %8842 = vmatprep.subr.mxu0 0.0
        %8843 = vmatpush1.msra.mxu0 %v8472
        %8844 = vmatprep.subr.mxu0 0.0
        %8845 = vmatpush1.msra.mxu0 %v8471
        %8846 = vmatprep.subr.mxu0 0.0
        %8847 = vmatpush1.msra.mxu0 %v8470
        %8848 = vmatprep.subr.mxu0 0.0
        %8849 = vmatpush1.msra.mxu0 %v8469
        %8850 = vmatprep.subr.mxu0 0.0
        %8851 = vmatpush1.msra.mxu0 %v8468
        %8852 = vmatprep.subr.mxu0 0.0
        %8853 = vmatpush1.msra.mxu0 %v8467
        %8854 = vmatprep.subr.mxu0 0.0
        %8855 = vmatpush1.msra.mxu0 %v8466
        %8856 = vmatprep.subr.mxu0 0.0
        %8857 = vmatpush1.msra.mxu0 %v8465
        %8858 = vmatprep.subr.mxu0 0.0
        %8859 = vmatpush1.msra.mxu0 %v8464
        %8860 = vmatprep.subr.mxu0 0.0
        %8861 = vmatpush1.msra.mxu0 %v8463
        %8862 = vmatprep.subr.mxu0 0.0
        %8863 = vmatpush1.msra.mxu0 %v8462
        %8864 = vmatprep.subr.mxu0 0.0
        %8865 = vmatpush2.msra.mxu0 %v8493
        %8866 = vmatprep.subr.mxu0 0.0
        %8867 = vmatpush2.msra.mxu0 %v8492
        %8868 = vmatprep.subr.mxu0 0.0
        %8869 = vmatpush2.msra.mxu0 %v8491
        %8870 = vmatprep.subr.mxu0 0.0
        %8871 = vmatpush2.msra.mxu0 %v8490
        %8872 = vmatprep.subr.mxu0 0.0
        %8873 = vmatpush2.msra.mxu0 %v8489
        %8874 = vmatprep.subr.mxu0 0.0
        %8875 = vmatpush2.msra.mxu0 %v8488
        %8876 = vmatprep.subr.mxu0 0.0
        %8877 = vmatpush2.msra.mxu0 %v8487
        %8878 = vmatprep.subr.mxu0 0.0
        %8879 = vmatpush2.msra.mxu0 %v8486
        %8880 = vmatprep.subr.mxu0 0.0
        %8881 = vmatpush2.msra.mxu0 %v8485
        %8882 = vmatprep.subr.mxu0 0.0
        %8883 = vmatpush2.msra.mxu0 %v8484
        %8884 = vmatprep.subr.mxu0 0.0
        %8885 = vmatpush2.msra.mxu0 %v8483
        %8886 = vmatprep.subr.mxu0 0.0
        %8887 = vmatpush2.msra.mxu0 %v8482
        %8888 = vmatprep.subr.mxu0 0.0
        %8889 = vmatpush2.msra.mxu0 %v8481
        %8890 = vmatprep.subr.mxu0 0.0
        %8891 = vmatpush2.msra.mxu0 %v8480
        %8892 = vmatprep.subr.mxu0 0.0
        %8893 = vmatpush2.msra.mxu0 %v8479
        %8894 = vmatprep.subr.mxu0 0.0
        %8895 = vmatpush2.msra.mxu0 %v8478
        %8896 = vmatprep.mubr.f32.mxu0 %v8357
        %8897 = vmatmul.mubr.f32.gmra.mxu0 %v8356
        %v8898 = vpop.f32.mrf.mxu0
        %v8899 = vadd.f32 %v8829, %v8898
        %v8900 = vpop.f32.mrf.mxu0
        %8901 = vdwg.mxu0
        %8902 = vmatprep.subr.mxu0 0.0
        %8903 = vmatpush1.msra.mxu0 %v8509
        %8904 = vmatprep.subr.mxu0 0.0
        %8905 = vmatpush1.msra.mxu0 %v8508
        %8906 = vmatprep.subr.mxu0 0.0
        %8907 = vmatpush1.msra.mxu0 %v8507
        %8908 = vmatprep.subr.mxu0 0.0
        %8909 = vmatpush1.msra.mxu0 %v8506
        %8910 = vmatprep.subr.mxu0 0.0
        %8911 = vmatpush1.msra.mxu0 %v8505
        %8912 = vmatprep.subr.mxu0 0.0
        %8913 = vmatpush1.msra.mxu0 %v8504
        %8914 = vmatprep.subr.mxu0 0.0
        %8915 = vmatpush1.msra.mxu0 %v8503
        %8916 = vmatprep.subr.mxu0 0.0
        %8917 = vmatpush1.msra.mxu0 %v8502
        %8918 = vmatprep.subr.mxu0 0.0
        %8919 = vmatpush1.msra.mxu0 %v8501
        %8920 = vmatprep.subr.mxu0 0.0
        %8921 = vmatpush1.msra.mxu0 %v8500
        %8922 = vmatprep.subr.mxu0 0.0
        %8923 = vmatpush1.msra.mxu0 %v8499
        %8924 = vmatprep.subr.mxu0 0.0
        %8925 = vmatpush1.msra.mxu0 %v8498
        %8926 = vmatprep.subr.mxu0 0.0
        %8927 = vmatpush1.msra.mxu0 %v8497
        %8928 = vmatprep.subr.mxu0 0.0
        %8929 = vmatpush1.msra.mxu0 %v8496
        %8930 = vmatprep.subr.mxu0 0.0
        %8931 = vmatpush1.msra.mxu0 %v8495
        %8932 = vmatprep.subr.mxu0 0.0
        %8933 = vmatpush1.msra.mxu0 %v8494
        %8934 = vmatprep.subr.mxu0 0.0
        %8935 = vmatpush2.msra.mxu0 %v8525
        %8936 = vmatprep.subr.mxu0 0.0
        %8937 = vmatpush2.msra.mxu0 %v8524
        %8938 = vmatprep.subr.mxu0 0.0
        %8939 = vmatpush2.msra.mxu0 %v8523
        %8940 = vmatprep.subr.mxu0 0.0
        %8941 = vmatpush2.msra.mxu0 %v8522
        %8942 = vmatprep.subr.mxu0 0.0
        %8943 = vmatpush2.msra.mxu0 %v8521
        %8944 = vmatprep.subr.mxu0 0.0
        %8945 = vmatpush2.msra.mxu0 %v8520
        %8946 = vmatprep.subr.mxu0 0.0
        %8947 = vmatpush2.msra.mxu0 %v8519
        %8948 = vmatprep.subr.mxu0 0.0
        %8949 = vmatpush2.msra.mxu0 %v8518
        %8950 = vmatprep.subr.mxu0 0.0
        %8951 = vmatpush2.msra.mxu0 %v8517
        %8952 = vmatprep.subr.mxu0 0.0
        %8953 = vmatpush2.msra.mxu0 %v8516
        %8954 = vmatprep.subr.mxu0 0.0
        %8955 = vmatpush2.msra.mxu0 %v8515
        %8956 = vmatprep.subr.mxu0 0.0
        %8957 = vmatpush2.msra.mxu0 %v8514
        %8958 = vmatprep.subr.mxu0 0.0
        %8959 = vmatpush2.msra.mxu0 %v8513
        %8960 = vmatprep.subr.mxu0 0.0
        %8961 = vmatpush2.msra.mxu0 %v8512
        %8962 = vmatprep.subr.mxu0 0.0
        %8963 = vmatpush2.msra.mxu0 %v8511
        %8964 = vmatprep.subr.mxu0 0.0
        %8965 = vmatpush2.msra.mxu0 %v8510
        %8966 = vmatprep.mubr.f32.mxu0 %v8359
        %8967 = vmatmul.mubr.f32.gmra.mxu0 %v8358
        %v8968 = vpop.f32.mrf.mxu0
        %v8969 = vadd.f32 %v8899, %v8968
        %v8970 = vpop.f32.mrf.mxu0
        %8971 = vdwg.mxu0
        %8972 = vmatprep.subr.mxu0 0.0
        %8973 = vmatpush1.msra.mxu0 %v8541
        %8974 = vmatprep.subr.mxu0 0.0
        %8975 = vmatpush1.msra.mxu0 %v8540
        %8976 = vmatprep.subr.mxu0 0.0
        %8977 = vmatpush1.msra.mxu0 %v8539
        %8978 = vmatprep.subr.mxu0 0.0
        %8979 = vmatpush1.msra.mxu0 %v8538
        %8980 = vmatprep.subr.mxu0 0.0
        %8981 = vmatpush1.msra.mxu0 %v8537
        %8982 = vmatprep.subr.mxu0 0.0
        %8983 = vmatpush1.msra.mxu0 %v8536
        %8984 = vmatprep.subr.mxu0 0.0
        %8985 = vmatpush1.msra.mxu0 %v8535
        %8986 = vmatprep.subr.mxu0 0.0
        %8987 = vmatpush1.msra.mxu0 %v8534
        %8988 = vmatprep.subr.mxu0 0.0
        %8989 = vmatpush1.msra.mxu0 %v8533
        %8990 = vmatprep.subr.mxu0 0.0
        %8991 = vmatpush1.msra.mxu0 %v8532
        %8992 = vmatprep.subr.mxu0 0.0
        %8993 = vmatpush1.msra.mxu0 %v8531
        %8994 = vmatprep.subr.mxu0 0.0
        %8995 = vmatpush1.msra.mxu0 %v8530
        %8996 = vmatprep.subr.mxu0 0.0
        %8997 = vmatpush1.msra.mxu0 %v8529
        %8998 = vmatprep.subr.mxu0 0.0
        %8999 = vmatpush1.msra.mxu0 %v8528
        %9000 = vmatprep.subr.mxu0 0.0
        %9001 = vmatpush1.msra.mxu0 %v8527
        %9002 = vmatprep.subr.mxu0 0.0
        %9003 = vmatpush1.msra.mxu0 %v8526
        %9004 = vmatprep.subr.mxu0 0.0
        %9005 = vmatpush2.msra.mxu0 %v8557
        %9006 = vmatprep.subr.mxu0 0.0
        %9007 = vmatpush2.msra.mxu0 %v8556
        %9008 = vmatprep.subr.mxu0 0.0
        %9009 = vmatpush2.msra.mxu0 %v8555
        %9010 = vmatprep.subr.mxu0 0.0
        %9011 = vmatpush2.msra.mxu0 %v8554
        %9012 = vmatprep.subr.mxu0 0.0
        %9013 = vmatpush2.msra.mxu0 %v8553
        %9014 = vmatprep.subr.mxu0 0.0
        %9015 = vmatpush2.msra.mxu0 %v8552
        %9016 = vmatprep.subr.mxu0 0.0
        %9017 = vmatpush2.msra.mxu0 %v8551
        %9018 = vmatprep.subr.mxu0 0.0
        %9019 = vmatpush2.msra.mxu0 %v8550
        %9020 = vmatprep.subr.mxu0 0.0
        %9021 = vmatpush2.msra.mxu0 %v8549
        %9022 = vmatprep.subr.mxu0 0.0
        %9023 = vmatpush2.msra.mxu0 %v8548
        %9024 = vmatprep.subr.mxu0 0.0
        %9025 = vmatpush2.msra.mxu0 %v8547
        %9026 = vmatprep.subr.mxu0 0.0
        %9027 = vmatpush2.msra.mxu0 %v8546
        %9028 = vmatprep.subr.mxu0 0.0
        %9029 = vmatpush2.msra.mxu0 %v8545
        %9030 = vmatprep.subr.mxu0 0.0
        %9031 = vmatpush2.msra.mxu0 %v8544
        %9032 = vmatprep.subr.mxu0 0.0
        %9033 = vmatpush2.msra.mxu0 %v8543
        %9034 = vmatprep.subr.mxu0 0.0
        %9035 = vmatpush2.msra.mxu0 %v8542
        %9036 = vmatprep.mubr.f32.mxu0 %v8361
        %9037 = vmatmul.mubr.f32.gmra.mxu0 %v8360
        %v9038 = vpop.f32.mrf.mxu0
        %v9039 = vadd.f32 %v8969, %v9038
        %v9040 = vpop.f32.mrf.mxu0
        %9041 = vdwg.mxu0
        %9042 = vmatprep.subr.mxu0 0.0
        %9043 = vmatpush1.msra.mxu0 %v8573
        %9044 = vmatprep.subr.mxu0 0.0
        %9045 = vmatpush1.msra.mxu0 %v8572
        %9046 = vmatprep.subr.mxu0 0.0
        %9047 = vmatpush1.msra.mxu0 %v8571
        %9048 = vmatprep.subr.mxu0 0.0
        %9049 = vmatpush1.msra.mxu0 %v8570
        %9050 = vmatprep.subr.mxu0 0.0
        %9051 = vmatpush1.msra.mxu0 %v8569
        %9052 = vmatprep.subr.mxu0 0.0
        %9053 = vmatpush1.msra.mxu0 %v8568
        %9054 = vmatprep.subr.mxu0 0.0
        %9055 = vmatpush1.msra.mxu0 %v8567
        %9056 = vmatprep.subr.mxu0 0.0
        %9057 = vmatpush1.msra.mxu0 %v8566
        %9058 = vmatprep.subr.mxu0 0.0
        %9059 = vmatpush1.msra.mxu0 %v8565
        %9060 = vmatprep.subr.mxu0 0.0
        %9061 = vmatpush1.msra.mxu0 %v8564
        %9062 = vmatprep.subr.mxu0 0.0
        %9063 = vmatpush1.msra.mxu0 %v8563
        %9064 = vmatprep.subr.mxu0 0.0
        %9065 = vmatpush1.msra.mxu0 %v8562
        %9066 = vmatprep.subr.mxu0 0.0
        %9067 = vmatpush1.msra.mxu0 %v8561
        %9068 = vmatprep.subr.mxu0 0.0
        %9069 = vmatpush1.msra.mxu0 %v8560
        %9070 = vmatprep.subr.mxu0 0.0
        %9071 = vmatpush1.msra.mxu0 %v8559
        %9072 = vmatprep.subr.mxu0 0.0
        %9073 = vmatpush1.msra.mxu0 %v8558
        %9074 = vmatprep.subr.mxu0 0.0
        %9075 = vmatpush2.msra.mxu0 %v8589
        %9076 = vmatprep.subr.mxu0 0.0
        %9077 = vmatpush2.msra.mxu0 %v8588
        %9078 = vmatprep.subr.mxu0 0.0
        %9079 = vmatpush2.msra.mxu0 %v8587
        %9080 = vmatprep.subr.mxu0 0.0
        %9081 = vmatpush2.msra.mxu0 %v8586
        %9082 = vmatprep.subr.mxu0 0.0
        %9083 = vmatpush2.msra.mxu0 %v8585
        %9084 = vmatprep.subr.mxu0 0.0
        %9085 = vmatpush2.msra.mxu0 %v8584
        %9086 = vmatprep.subr.mxu0 0.0
        %9087 = vmatpush2.msra.mxu0 %v8583
        %9088 = vmatprep.subr.mxu0 0.0
        %9089 = vmatpush2.msra.mxu0 %v8582
        %9090 = vmatprep.subr.mxu0 0.0
        %9091 = vmatpush2.msra.mxu0 %v8581
        %9092 = vmatprep.subr.mxu0 0.0
        %9093 = vmatpush2.msra.mxu0 %v8580
        %9094 = vmatprep.subr.mxu0 0.0
        %9095 = vmatpush2.msra.mxu0 %v8579
        %9096 = vmatprep.subr.mxu0 0.0
        %9097 = vmatpush2.msra.mxu0 %v8578
        %9098 = vmatprep.subr.mxu0 0.0
        %9099 = vmatpush2.msra.mxu0 %v8577
        %9100 = vmatprep.subr.mxu0 0.0
        %9101 = vmatpush2.msra.mxu0 %v8576
        %9102 = vmatprep.subr.mxu0 0.0
        %9103 = vmatpush2.msra.mxu0 %v8575
        %9104 = vmatprep.subr.mxu0 0.0
        %9105 = vmatpush2.msra.mxu0 %v8574
        %9106 = vmatprep.mubr.f32.mxu0 %v8363
        %9107 = vmatmul.mubr.f32.gmra.mxu0 %v8362
        %v9108 = vpop.f32.mrf.mxu0
        %v9109 = vadd.f32 %v9039, %v9108
        %v9110 = vpop.f32.mrf.mxu0
        %9111 = vdwg.mxu0
        %9112 = vmatprep.subr.mxu0 0.0
        %9113 = vmatpush1.msra.mxu0 %v8605
        %9114 = vmatprep.subr.mxu0 0.0
        %9115 = vmatpush1.msra.mxu0 %v8604
        %9116 = vmatprep.subr.mxu0 0.0
        %9117 = vmatpush1.msra.mxu0 %v8603
        %9118 = vmatprep.subr.mxu0 0.0
        %9119 = vmatpush1.msra.mxu0 %v8602
        %9120 = vmatprep.subr.mxu0 0.0
        %9121 = vmatpush1.msra.mxu0 %v8601
        %9122 = vmatprep.subr.mxu0 0.0
        %9123 = vmatpush1.msra.mxu0 %v8600
        %9124 = vmatprep.subr.mxu0 0.0
        %9125 = vmatpush1.msra.mxu0 %v8599
        %9126 = vmatprep.subr.mxu0 0.0
        %9127 = vmatpush1.msra.mxu0 %v8598
        %9128 = vmatprep.subr.mxu0 0.0
        %9129 = vmatpush1.msra.mxu0 %v8597
        %9130 = vmatprep.subr.mxu0 0.0
        %9131 = vmatpush1.msra.mxu0 %v8596
        %9132 = vmatprep.subr.mxu0 0.0
        %9133 = vmatpush1.msra.mxu0 %v8595
        %9134 = vmatprep.subr.mxu0 0.0
        %9135 = vmatpush1.msra.mxu0 %v8594
        %9136 = vmatprep.subr.mxu0 0.0
        %9137 = vmatpush1.msra.mxu0 %v8593
        %9138 = vmatprep.subr.mxu0 0.0
        %9139 = vmatpush1.msra.mxu0 %v8592
        %9140 = vmatprep.subr.mxu0 0.0
        %9141 = vmatpush1.msra.mxu0 %v8591
        %9142 = vmatprep.subr.mxu0 0.0
        %9143 = vmatpush1.msra.mxu0 %v8590
        %9144 = vmatprep.subr.mxu0 0.0
        %9145 = vmatpush2.msra.mxu0 %v8621
        %9146 = vmatprep.subr.mxu0 0.0
        %9147 = vmatpush2.msra.mxu0 %v8620
        %9148 = vmatprep.subr.mxu0 0.0
        %9149 = vmatpush2.msra.mxu0 %v8619
        %9150 = vmatprep.subr.mxu0 0.0
        %9151 = vmatpush2.msra.mxu0 %v8618
        %9152 = vmatprep.subr.mxu0 0.0
        %9153 = vmatpush2.msra.mxu0 %v8617
        %9154 = vmatprep.subr.mxu0 0.0
        %9155 = vmatpush2.msra.mxu0 %v8616
        %9156 = vmatprep.subr.mxu0 0.0
        %9157 = vmatpush2.msra.mxu0 %v8615
        %9158 = vmatprep.subr.mxu0 0.0
        %9159 = vmatpush2.msra.mxu0 %v8614
        %9160 = vmatprep.subr.mxu0 0.0
        %9161 = vmatpush2.msra.mxu0 %v8613
        %9162 = vmatprep.subr.mxu0 0.0
        %9163 = vmatpush2.msra.mxu0 %v8612
        %9164 = vmatprep.subr.mxu0 0.0
        %9165 = vmatpush2.msra.mxu0 %v8611
        %9166 = vmatprep.subr.mxu0 0.0
        %9167 = vmatpush2.msra.mxu0 %v8610
        %9168 = vmatprep.subr.mxu0 0.0
        %9169 = vmatpush2.msra.mxu0 %v8609
        %9170 = vmatprep.subr.mxu0 0.0
        %9171 = vmatpush2.msra.mxu0 %v8608
        %9172 = vmatprep.subr.mxu0 0.0
        %9173 = vmatpush2.msra.mxu0 %v8607
        %9174 = vmatprep.subr.mxu0 0.0
        %9175 = vmatpush2.msra.mxu0 %v8606
        %9176 = vmatprep.mubr.f32.mxu0 %v8365
        %9177 = vmatmul.mubr.f32.gmra.mxu0 %v8364
        %v9178 = vpop.f32.mrf.mxu0
        %v9179 = vadd.f32 %v9109, %v9178
        %v9180 = vpop.f32.mrf.mxu0
        %9181 = vdwg.mxu0
        %vm9182 = vcmask 15360
        %9183 = vst.msk [vmem:[%s323] sm:$0xff] %vm9182, %v9179
      $region52: #{robot2d_calibration_nn.1} parent=43 // pred_fallthru
        _
      %p9184 = scmp.lt.s32.totalorder %s21, 0
      %s9185 = scalar_select %p9184, %s21, 0
      %s9186 = smul.addr %s9185, 8
      %s9187 = scalar_lea.vmem %s6, %s9186
      // Predicated region
      $region53: #{robot2d_calibration_nn.1} parent=43 // pred_check
        %p9188 = pneg %p190
      $region54: #{robot2d_calibration_nn.1} parent=43 // pred_check_branch
        %9190 = sbr.rel (%p9188) target = $region56
      $region55: #{robot2d_calibration_nn.1} parent=43 // pred_region
        _
      $region56: #{robot2d_calibration_nn.1} parent=43 // pred_fallthru
        _
      // Predicated region
      $region57: #{robot2d_calibration_nn.1} parent=43 // pred_check
        %p9191 = pneg %p190
      $region58: #{robot2d_calibration_nn.1} parent=43 // pred_check_branch
        %9193 = sbr.rel (%p9191) target = $region60
      $region59: #{robot2d_calibration_nn.1} parent=43 // pred_region
        %p9194 = scmp.lt.s32.totalorder %s21, 0
        %s9195 = scalar_select %p9194, %s21, 0
        %s9196 = smul.addr %s9195, 8
        %s9197 = scalar_lea.vmem %s6, %s9196
      $region60: #{robot2d_calibration_nn.1} parent=43 // pred_fallthru
        _
    $region44: #{robot2d_calibration_nn.1} parent=5 // pred_fallthru
      _
    %p9198 = scmp.le.s32.totalorder 2, %s12
    // Predicated region
    $region61: #{robot2d_calibration_nn.1} parent=5 // pred_check
      %p9199 = pneg %p9198
    $region62: #{robot2d_calibration_nn.1} parent=5 // pred_check_branch
      %9201 = sbr.rel (%p9199) target = $region64
    $region63: #{robot2d_calibration_nn.1} parent=5 // pred_region
      %s9202 = ssub.s32 %s12, 2
    $region64: #{robot2d_calibration_nn.1} parent=5 // pred_fallthru
      _
  $region6: #{robot2d_calibration_nn.1} parent=0 // loop_footer
    %s16 = sadd.s32 1, %s12
  $region7: #{robot2d_calibration_nn.1} parent=0 // loop_footer_branch
    %11 = sbr.rel target = $region3
  $region8: #{robot2d_calibration_nn.1} parent=0 // loop_exit
    _

</llo_original>
